<compile_context>
chip_gen: v6e
topology: v6e:2x2x1
jax: 0.10.0
libtpu: 0.0.40
codegen_flags: <defaults>
</compile_context>

<pallas_src>
import numpy as np

import jax
import jax.numpy as jnp
from jax.experimental import pallas as pl
from jax.experimental.pallas import tpu as pltpu


def _round_up(x, m):
    return (x + m - 1) // m * m


# ---------------------------------------------------------------------------
# Host-side constant-matrix construction (run once in prepare_params)
# ---------------------------------------------------------------------------
def _conv_selection(n, h_in, w_in, k, stride, pad, m_out_pad=None):
    """One-hot row-selection matrices, one per (kh, kw) tap.

    S[t, r_out, r_in] = 1 iff conv output position r_out (= flat (n, oh, ow))
    reads input position r_in (= flat (n, ih, iw)) for tap t = kh*k + kw;
    taps that land in the zero padding stay 0.
    """
    h_out = (h_in + 2 * pad - k) // stride + 1
    w_out = (w_in + 2 * pad - k) // stride + 1
    m_out = n * h_out * w_out
    m_pad = m_out if m_out_pad is None else m_out_pad
    s = np.zeros((k * k, m_pad, n * h_in * w_in), np.float32)
    for b in range(n):
        for oh in range(h_out):
            for ow in range(w_out):
                r_out = (b * h_out + oh) * w_out + ow
                for kh in range(k):
                    for kw in range(k):
                        ih = stride * oh - pad + kh
                        iw = stride * ow - pad + kw
                        if 0 <= ih < h_in and 0 <= iw < w_in:
                            s[kh * k + kw, r_out,
                              (b * h_in + ih) * w_in + iw] = 1.0
    return s


def _phase_gather(n, h, w, m_src_pad):
    """One-hot gather matrices for the ConvTranspose phase re-interleave.

    Output position (n, 2a+r, 2b+s) of phase p = r*2+s reads phase-conv row
    q = (n, a+r, b+s) over the (h+1, w+1) phase grid.
    """
    hq, wq = h + 1, w + 1
    g = np.zeros((4, n * 2 * h * 2 * w, m_src_pad), np.float32)
    for b in range(n):
        for oh in range(2 * h):
            for ow in range(2 * w):
                m = (b * 2 * h + oh) * 2 * w + ow
                r, s = oh % 2, ow % 2
                q = (b * hq + (oh // 2 + r)) * wq + (ow // 2 + s)
                g[r * 2 + s, m, q] = 1.0
    return g


# sel[r, th] -> kernel index kh used by output phase r, tap th (k=4, s=2, p=1)
_SEL = np.array([[3, 1], [2, 0]])


# ---------------------------------------------------------------------------
# The single fused Pallas kernel: whole Generator forward, VMEM-resident
# ---------------------------------------------------------------------------
def _generator_kernel(a1_ref, w1_ref, b1_ref,
                      s2_ref, w2_ref, b2_ref, g1_ref, be1_ref,
                      s3_ref, w3_ref, g3_ref, b3_ref, g2_ref, be2_ref,
                      s4_ref, w4_ref, g4_ref, b4_ref,
                      o_ref):
    f32, bf16 = jnp.float32, jnp.bfloat16
    eps = 1e-5

    def bn_relu(x, gamma, beta):
        # Training-mode BatchNorm2d (biased batch variance) + ReLU.  Rows of x
        # are exactly the N*H*W positions, so the stats match PyTorch.
        mu = jnp.mean(x, axis=0, keepdims=True)
        xc = x - mu
        var = jnp.mean(xc * xc, axis=0, keepdims=True)
        y = xc * (gamma * jax.lax.rsqrt(var + eps)) + beta
        return jnp.maximum(y, 0.0)

    # ---- Conv2d(3, 64, 4, 2, 1) + ReLU : im2col'd input @ packed weight ----
    h1 = jnp.dot(a1_ref[...], w1_ref[...], preferred_element_type=f32)
    h1 = jnp.maximum(h1 + b1_ref[...], 0.0).astype(bf16)          # (128, 64)

    # ---- Conv2d(64, 128, 4, 2, 1): 16 taps as selection matmuls ------------
    nt2 = w2_ref.shape[0]                                          # 16 taps
    m2 = s2_ref.shape[0] // nt2                                    # 32 rows
    p2 = jnp.dot(s2_ref[...], h1, preferred_element_type=f32)      # (512, 64)
    acc2 = jnp.zeros((m2, w2_ref.shape[2]), f32)
    for t in range(nt2):
        acc2 = acc2 + jnp.dot(p2[t * m2:(t + 1) * m2].astype(bf16),
                              w2_ref[t], preferred_element_type=f32)
    acc2 = acc2 + b2_ref[...]

    # ---- BatchNorm2d(128) + ReLU (fused on the f32 accumulator) ------------
    h2 = bn_relu(acc2, g1_ref[...], be1_ref[...]).astype(bf16)     # (32, 128)

    # ---- ConvTranspose2d(128, 64, 4, 2, 1): phase conv + in-kernel gather --
    mq3 = s3_ref.shape[0] // 4                                     # 56 rows
    c3 = w3_ref.shape[2] // 4                                      # 64 chans
    p3 = jnp.dot(s3_ref[...], h2, preferred_element_type=f32)      # (224, 128)
    acc3 = jnp.zeros((mq3, 4 * c3), f32)
    for t in range(4):
        acc3 = acc3 + jnp.dot(p3[t * mq3:(t + 1) * mq3].astype(bf16),
                              w3_ref[t], preferred_element_type=f32)
    y3 = jnp.zeros((g3_ref.shape[1], c3), f32)                     # (128, 64)
    for ph in range(4):
        y3 = y3 + jnp.dot(g3_ref[ph], acc3[:, ph * c3:(ph + 1) * c3],
                          preferred_element_type=f32)
    y3 = y3 + b3_ref[...]

    # ---- BatchNorm2d(64) + ReLU --------------------------------------------
    h3 = bn_relu(y3, g2_ref[...], be2_ref[...]).astype(bf16)       # (128, 64)

    # ---- ConvTranspose2d(64, 3, 4, 2, 1) + Sigmoid --------------------------
    mq4 = s4_ref.shape[0] // 4                                     # 168 rows
    c4 = w4_ref.shape[2] // 4                                      # 3 chans
    p4 = jnp.dot(s4_ref[...], h3, preferred_element_type=f32)      # (672, 64)
    acc4 = jnp.zeros((mq4, 4 * c4), f32)
    for t in range(4):
        acc4 = acc4 + jnp.dot(p4[t * mq4:(t + 1) * mq4].astype(bf16),
                              w4_ref[t], preferred_element_type=f32)
    y4 = jnp.zeros((g4_ref.shape[1], c4), f32)                     # (512, 3)
    for ph in range(4):
        y4 = y4 + jnp.dot(g4_ref[ph], acc4[:, ph * c4:(ph + 1) * c4],
                          preferred_element_type=f32)
    o_ref[...] = jax.nn.sigmoid(y4 + b4_ref[...])


# ---------------------------------------------------------------------------
# Parameters (PyTorch layouts) + one-time packing
# ---------------------------------------------------------------------------
def init_params(key):
    ks = jax.random.split(key, 12)

    def w(k, shape, scale=0.05):
        return jax.random.normal(k, shape, jnp.float32) * scale

    return {
        "conv1_w": w(ks[0], (64, 3, 4, 4)),
        "conv1_b": w(ks[1], (64,)),
        "conv2_w": w(ks[2], (128, 64, 4, 4)),
        "conv2_b": w(ks[3], (128,)),
        "bn1_g": 1.0 + w(ks[8], (128,), 0.1),
        "bn1_b": w(ks[9], (128,), 0.1),
        "ct1_w": w(ks[4], (128, 64, 4, 4)),   # ConvTranspose2d: (C_in, C_out, k, k)
        "ct1_b": w(ks[5], (64,)),
        "bn2_g": 1.0 + w(ks[10], (64,), 0.1),
        "bn2_b": w(ks[11], (64,), 0.1),
        "ct2_w": w(ks[6], (64, 3, 4, 4)),
        "ct2_b": w(ks[7], (3,)),
    }


def prepare_params(raw, n, h, w):
    """One-time packing: weights to per-tap matmul form (bf16), plus the
    constant one-hot selection / phase-gather matrices for this geometry."""
    bf16, f32 = jnp.bfloat16, jnp.float32
    h1s, w1s = h // 2, w // 2          # conv1 output spatial (8, 8)
    h2s, w2s = h // 4, w // 4          # conv2 output spatial (4, 4)

    p = {}
    # conv1: im2col weight, columns ordered (kh, kw, c_in)
    w1 = np.asarray(raw["conv1_w"])
    p["w1"] = jnp.asarray(w1.transpose(2, 3, 1, 0).reshape(48, 64), bf16)
    p["b1"] = jnp.asarray(np.asarray(raw["conv1_b"]).reshape(1, 64), f32)

    # conv2: per-tap selection over conv1's (n, h1s, w1s) grid + per-tap weights
    s2 = _conv_selection(n, h1s, w1s, k=4, stride=2, pad=1)
    p["s2"] = jnp.asarray(s2.reshape(16 * n * h2s * w2s, n * h1s * w1s), bf16)
    w2 = np.asarray(raw["conv2_w"])
    p["w2"] = jnp.asarray(w2.transpose(2, 3, 1, 0).reshape(16, 64, 128), bf16)
    p["b2"] = jnp.asarray(np.asarray(raw["conv2_b"]).reshape(1, 128), f32)
    p["g1"] = jnp.asarray(np.asarray(raw["bn1_g"]).reshape(1, 128), f32)
    p["be1"] = jnp.asarray(np.asarray(raw["bn1_b"]).reshape(1, 128), f32)

    def pack_convT(w_t, c_out):
        # Phase-decomposed ConvTranspose weights: tap t=(th,tw), column block
        # p=(r,s): W[t][ci, p*c_out + co] = w_t[ci, co, SEL[r,th], SEL[s,tw]].
        c_in = w_t.shape[0]
        wc = np.zeros((4, c_in, 4 * c_out), np.float32)
        for th in range(2):
            for tw in range(2):
                for r in range(2):
                    for s in range(2):
                        blk = (r * 2 + s) * c_out
                        wc[th * 2 + tw, :, blk:blk + c_out] = \
                            w_t[:, :, _SEL[r, th], _SEL[s, tw]]
        return wc

    # ct1: phase conv over conv2's (n, h2s, w2s) grid -> (n, h1s, w1s, 64)
    mq3p = _round_up(n * (h2s + 1) * (w2s + 1), 8)                  # 56
    s3 = _conv_selection(n, h2s, w2s, k=2, stride=1, pad=1, m_out_pad=mq3p)
    p["s3"] = jnp.asarray(s3.reshape(4 * mq3p, n * h2s * w2s), bf16)
    p["w3"] = jnp.asarray(pack_convT(np.asarray(raw["ct1_w"]), 64), bf16)
    p["g3"] = jnp.asarray(_phase_gather(n, h2s, w2s, mq3p), f32)    # (4,128,56)
    p["b3"] = jnp.asarray(np.asarray(raw["ct1_b"]).reshape(1, 64), f32)
    p["g2"] = jnp.asarray(np.asarray(raw["bn2_g"]).reshape(1, 64), f32)
    p["be2"] = jnp.asarray(np.asarray(raw["bn2_b"]).reshape(1, 64), f32)

    # ct2: phase conv over ct1's (n, h1s, w1s) grid -> (n, h, w, 3)
    mq4p = _round_up(n * (h1s + 1) * (w1s + 1), 8)                  # 168
    s4 = _conv_selection(n, h1s, w1s, k=2, stride=1, pad=1, m_out_pad=mq4p)
    p["s4"] = jnp.asarray(s4.reshape(4 * mq4p, n * h1s * w1s), bf16)
    p["w4"] = jnp.asarray(pack_convT(np.asarray(raw["ct2_w"]), 3), bf16)
    p["g4"] = jnp.asarray(_phase_gather(n, h1s, w1s, mq4p), f32)    # (4,512,168)
    p["b4"] = jnp.asarray(np.asarray(raw["ct2_b"]).reshape(1, 3), f32)
    return p


# ---------------------------------------------------------------------------
# Forward: NCHW in / NCHW out, one fused pallas_call in the middle
# ---------------------------------------------------------------------------
def _im2col(x, k, stride):
    n, h, w, c = x.shape
    ho = (h - k) // stride + 1
    wo = (w - k) // stride + 1
    cols = []
    for kh in range(k):
        for kw in range(k):
            cols.append(x[:, kh:kh + stride * ho:stride,
                          kw:kw + stride * wo:stride, :])
    return jnp.concatenate(cols, axis=-1).reshape(n * ho * wo, k * k * c)


def generator_forward(params, x_nchw):
    n, _, h, w = x_nchw.shape
    # conv1 im2col on the network input (tiny XLA glue; everything downstream
    # runs inside the single VMEM-resident kernel below).
    x = jnp.transpose(x_nchw, (0, 2, 3, 1)).astype(jnp.bfloat16)
    x = jnp.pad(x, ((0, 0), (1, 1), (1, 1), (0, 0)))
    a1 = _im2col(x, 4, 2)                                    # (n*h/2*w/2, 48)

    operands = (a1,
                params["w1"], params["b1"],
                params["s2"], params["w2"], params["b2"],
                params["g1"], params["be1"],
                params["s3"], params["w3"], params["g3"], params["b3"],
                params["g2"], params["be2"],
                params["s4"], params["w4"], params["g4"], params["b4"])
    out = pl.pallas_call(
        _generator_kernel,
        out_shape=jax.ShapeDtypeStruct((n * h * w, 3), jnp.float32),
        in_specs=[pl.BlockSpec(memory_space=pltpu.MemorySpace.VMEM)]
        * len(operands),
        out_specs=pl.BlockSpec(memory_space=pltpu.MemorySpace.VMEM),
    )(*operands)
    return jnp.transpose(out.reshape(n, h, w, 3), (0, 3, 1, 2))


# ---------------------------------------------------------------------------
# Pure-JAX (XLA) reference for correctness checking
# ---------------------------------------------------------------------------
def _ref_conv(x, w, b, stride, padding):
    out = jax.lax.conv_general_dilated(
        x, w, window_strides=(stride, stride),
        padding=((padding, padding), (padding, padding)),
        dimension_numbers=("NCHW", "OIHW", "NCHW"))
    return out + b.reshape(1, -1, 1, 1)


def _ref_convT(x, w, b, stride, padding):
    k = w.shape[-1]
    w_eq = jnp.transpose(w[:, :, ::-1, ::-1], (1, 0, 2, 3))
    pad = k - 1 - padding
    out = jax.lax.conv_general_dilated(
        x, w_eq, window_strides=(1, 1),
        padding=((pad, pad), (pad, pad)), lhs_dilation=(stride, stride),
        dimension_numbers=("NCHW", "OIHW", "NCHW"))
    return out + b.reshape(1, -1, 1, 1)


def _ref_bn_relu(x, g, b, eps=1e-5):
    mean = x.mean(axis=(0, 2, 3), keepdims=True)
    var = ((x - mean) ** 2).mean(axis=(0, 2, 3), keepdims=True)
    y = (x - mean) * jax.lax.rsqrt(var + eps) * g.reshape(1, -1, 1, 1) \
        + b.reshape(1, -1, 1, 1)
    return jnp.maximum(y, 0.0)


def reference_forward(raw, x):
    x = jnp.maximum(_ref_conv(x, raw["conv1_w"], raw["conv1_b"], 2, 1), 0.0)
    x = _ref_conv(x, raw["conv2_w"], raw["conv2_b"], 2, 1)
    x = _ref_bn_relu(x, raw["bn1_g"], raw["bn1_b"])
    x = _ref_convT(x, raw["ct1_w"], raw["ct1_b"], 2, 1)
    x = _ref_bn_relu(x, raw["bn2_g"], raw["bn2_b"])
    x = _ref_convT(x, raw["ct2_w"], raw["ct2_b"], 2, 1)
    return jax.nn.sigmoid(x)


if __name__ == "__main__":
    key = jax.random.PRNGKey(0)
    k_x, k_p = jax.random.split(key)
    x = jax.random.normal(k_x, (2, 3, 16, 16), jnp.float32)  # NCHW, like PyTorch
    raw = init_params(k_p)
    params = prepare_params(raw, n=2, h=16, w=16)   # one-time packing

    fwd = jax.jit(generator_forward)
    out = jax.block_until_ready(fwd(params, x))

    assert out.shape == (2, 3, 16, 16), out.shape
    assert bool(jnp.all(jnp.isfinite(out)))
    assert bool(jnp.all((out >= 0.0) & (out <= 1.0)))  # sigmoid output range

    ref = jax.block_until_ready(jax.jit(reference_forward)(raw, x))
    max_err = float(jnp.max(jnp.abs(out - ref)))
    assert max_err < 8e-2, f"max abs err vs reference: {max_err}"

    print("KERNEL_OK")
</pallas_src>

<mosaic_0001>
module attributes {stable_mosaic.version = 11 : i64} {
  func.func @_generator_kernel(%arg0: memref<128x48xbf16, #tpu.memory_space<vmem>>, %arg1: memref<48x64xbf16, #tpu.memory_space<vmem>>, %arg2: memref<1x64xf32, #tpu.memory_space<vmem>>, %arg3: memref<512x128xbf16, #tpu.memory_space<vmem>>, %arg4: memref<16x64x128xbf16, #tpu.memory_space<vmem>>, %arg5: memref<1x128xf32, #tpu.memory_space<vmem>>, %arg6: memref<1x128xf32, #tpu.memory_space<vmem>>, %arg7: memref<1x128xf32, #tpu.memory_space<vmem>>, %arg8: memref<224x32xbf16, #tpu.memory_space<vmem>>, %arg9: memref<4x128x256xbf16, #tpu.memory_space<vmem>>, %arg10: memref<4x128x56xf32, #tpu.memory_space<vmem>>, %arg11: memref<1x64xf32, #tpu.memory_space<vmem>>, %arg12: memref<1x64xf32, #tpu.memory_space<vmem>>, %arg13: memref<1x64xf32, #tpu.memory_space<vmem>>, %arg14: memref<672x128xbf16, #tpu.memory_space<vmem>>, %arg15: memref<4x64x12xbf16, #tpu.memory_space<vmem>>, %arg16: memref<4x512x168xf32, #tpu.memory_space<vmem>>, %arg17: memref<1x3xf32, #tpu.memory_space<vmem>>, %arg18: memref<512x3xf32, #tpu.memory_space<vmem>>) attributes {dimension_semantics = [], scalar_prefetch = 0 : i64, scratch_operands = 0 : i64, tpu.core_type = #tpu.core_type<tc>} {
    %c0 = arith.constant 0 : index
    %c0_0 = arith.constant 0 : index
    %0 = vector.load %arg0[%c0, %c0_0] : memref<128x48xbf16, #tpu.memory_space<vmem>>, vector<128x48xbf16>
    %c0_1 = arith.constant 0 : index
    %c0_2 = arith.constant 0 : index
    %1 = vector.load %arg1[%c0_1, %c0_2] : memref<48x64xbf16, #tpu.memory_space<vmem>>, vector<48x64xbf16>
    %cst = arith.constant dense<0.000000e+00> : vector<128x64xf32>
    %2 = tpu.matmul %0, %1, %cst {dimension_numbers = #tpu.dot_dimension_numbers<[1], [0], [0], [1], [0, 0, 1, 1], [], []>} : vector<128x48xbf16>, vector<48x64xbf16>, vector<128x64xf32> -> vector<128x64xf32>
    %c0_3 = arith.constant 0 : index
    %c0_4 = arith.constant 0 : index
    %3 = vector.load %arg2[%c0_3, %c0_4] : memref<1x64xf32, #tpu.memory_space<vmem>>, vector<1x64xf32>
    %4 = vector.broadcast %3 : vector<1x64xf32> to vector<128x64xf32>
    %5 = arith.addf %2, %4 : vector<128x64xf32>
    %cst_5 = arith.constant 0.000000e+00 : f32
    %6 = vector.broadcast %cst_5 : f32 to vector<128x64xf32>
    %7 = arith.maximumf %5, %6 : vector<128x64xf32>
    %8 = arith.truncf %7 : vector<128x64xf32> to vector<128x64xbf16>
    %c0_6 = arith.constant 0 : index
    %c0_7 = arith.constant 0 : index
    %9 = vector.load %arg3[%c0_6, %c0_7] : memref<512x128xbf16, #tpu.memory_space<vmem>>, vector<512x128xbf16>
    %cst_8 = arith.constant dense<0.000000e+00> : vector<512x64xf32>
    %10 = tpu.matmul %9, %8, %cst_8 {dimension_numbers = #tpu.dot_dimension_numbers<[1], [0], [0], [1], [0, 0, 1, 1], [], []>} : vector<512x128xbf16>, vector<128x64xbf16>, vector<512x64xf32> -> vector<512x64xf32>
    %cst_9 = arith.constant 0.000000e+00 : f32
    %11 = vector.broadcast %cst_9 : f32 to vector<32x128xf32>
    %12 = vector.extract_strided_slice %10 {offsets = [0, 0], sizes = [32, 64], strides = [1, 1]} : vector<512x64xf32> to vector<32x64xf32>
    %13 = arith.truncf %12 : vector<32x64xf32> to vector<32x64xbf16>
    %c0_10 = arith.constant 0 : index
    %c0_11 = arith.constant 0 : index
    %c0_12 = arith.constant 0 : index
    %14 = vector.load %arg4[%c0_10, %c0_11, %c0_12] : memref<16x64x128xbf16, #tpu.memory_space<vmem>>, vector<1x64x128xbf16>
    %15 = vector.shape_cast %14 : vector<1x64x128xbf16> to vector<64x128xbf16>
    %cst_13 = arith.constant dense<0.000000e+00> : vector<32x128xf32>
    %16 = tpu.matmul %13, %15, %cst_13 {dimension_numbers = #tpu.dot_dimension_numbers<[1], [0], [0], [1], [0, 0, 1, 1], [], []>} : vector<32x64xbf16>, vector<64x128xbf16>, vector<32x128xf32> -> vector<32x128xf32>
    %17 = arith.addf %11, %16 : vector<32x128xf32>
    %18 = vector.extract_strided_slice %10 {offsets = [32, 0], sizes = [32, 64], strides = [1, 1]} : vector<512x64xf32> to vector<32x64xf32>
    %19 = arith.truncf %18 : vector<32x64xf32> to vector<32x64xbf16>
    %c1 = arith.constant 1 : index
    %c0_14 = arith.constant 0 : index
    %c0_15 = arith.constant 0 : index
    %20 = vector.load %arg4[%c1, %c0_14, %c0_15] : memref<16x64x128xbf16, #tpu.memory_space<vmem>>, vector<1x64x128xbf16>
    %21 = vector.shape_cast %20 : vector<1x64x128xbf16> to vector<64x128xbf16>
    %cst_16 = arith.constant dense<0.000000e+00> : vector<32x128xf32>
    %22 = tpu.matmul %19, %21, %cst_16 {dimension_numbers = #tpu.dot_dimension_numbers<[1], [0], [0], [1], [0, 0, 1, 1], [], []>} : vector<32x64xbf16>, vector<64x128xbf16>, vector<32x128xf32> -> vector<32x128xf32>
    %23 = arith.addf %17, %22 : vector<32x128xf32>
    %24 = vector.extract_strided_slice %10 {offsets = [64, 0], sizes = [32, 64], strides = [1, 1]} : vector<512x64xf32> to vector<32x64xf32>
    %25 = arith.truncf %24 : vector<32x64xf32> to vector<32x64xbf16>
    %c2 = arith.constant 2 : index
    %c0_17 = arith.constant 0 : index
    %c0_18 = arith.constant 0 : index
    %26 = vector.load %arg4[%c2, %c0_17, %c0_18] : memref<16x64x128xbf16, #tpu.memory_space<vmem>>, vector<1x64x128xbf16>
    %27 = vector.shape_cast %26 : vector<1x64x128xbf16> to vector<64x128xbf16>
    %cst_19 = arith.constant dense<0.000000e+00> : vector<32x128xf32>
    %28 = tpu.matmul %25, %27, %cst_19 {dimension_numbers = #tpu.dot_dimension_numbers<[1], [0], [0], [1], [0, 0, 1, 1], [], []>} : vector<32x64xbf16>, vector<64x128xbf16>, vector<32x128xf32> -> vector<32x128xf32>
    %29 = arith.addf %23, %28 : vector<32x128xf32>
    %30 = vector.extract_strided_slice %10 {offsets = [96, 0], sizes = [32, 64], strides = [1, 1]} : vector<512x64xf32> to vector<32x64xf32>
    %31 = arith.truncf %30 : vector<32x64xf32> to vector<32x64xbf16>
    %c3 = arith.constant 3 : index
    %c0_20 = arith.constant 0 : index
    %c0_21 = arith.constant 0 : index
    %32 = vector.load %arg4[%c3, %c0_20, %c0_21] : memref<16x64x128xbf16, #tpu.memory_space<vmem>>, vector<1x64x128xbf16>
    %33 = vector.shape_cast %32 : vector<1x64x128xbf16> to vector<64x128xbf16>
    %cst_22 = arith.constant dense<0.000000e+00> : vector<32x128xf32>
    %34 = tpu.matmul %31, %33, %cst_22 {dimension_numbers = #tpu.dot_dimension_numbers<[1], [0], [0], [1], [0, 0, 1, 1], [], []>} : vector<32x64xbf16>, vector<64x128xbf16>, vector<32x128xf32> -> vector<32x128xf32>
    %35 = arith.addf %29, %34 : vector<32x128xf32>
    %36 = vector.extract_strided_slice %10 {offsets = [128, 0], sizes = [32, 64], strides = [1, 1]} : vector<512x64xf32> to vector<32x64xf32>
    %37 = arith.truncf %36 : vector<32x64xf32> to vector<32x64xbf16>
    %c4 = arith.constant 4 : index
    %c0_23 = arith.constant 0 : index
    %c0_24 = arith.constant 0 : index
    %38 = vector.load %arg4[%c4, %c0_23, %c0_24] : memref<16x64x128xbf16, #tpu.memory_space<vmem>>, vector<1x64x128xbf16>
    %39 = vector.shape_cast %38 : vector<1x64x128xbf16> to vector<64x128xbf16>
    %cst_25 = arith.constant dense<0.000000e+00> : vector<32x128xf32>
    %40 = tpu.matmul %37, %39, %cst_25 {dimension_numbers = #tpu.dot_dimension_numbers<[1], [0], [0], [1], [0, 0, 1, 1], [], []>} : vector<32x64xbf16>, vector<64x128xbf16>, vector<32x128xf32> -> vector<32x128xf32>
    %41 = arith.addf %35, %40 : vector<32x128xf32>
    %42 = vector.extract_strided_slice %10 {offsets = [160, 0], sizes = [32, 64], strides = [1, 1]} : vector<512x64xf32> to vector<32x64xf32>
    %43 = arith.truncf %42 : vector<32x64xf32> to vector<32x64xbf16>
    %c5 = arith.constant 5 : index
    %c0_26 = arith.constant 0 : index
    %c0_27 = arith.constant 0 : index
    %44 = vector.load %arg4[%c5, %c0_26, %c0_27] : memref<16x64x128xbf16, #tpu.memory_space<vmem>>, vector<1x64x128xbf16>
    %45 = vector.shape_cast %44 : vector<1x64x128xbf16> to vector<64x128xbf16>
    %cst_28 = arith.constant dense<0.000000e+00> : vector<32x128xf32>
    %46 = tpu.matmul %43, %45, %cst_28 {dimension_numbers = #tpu.dot_dimension_numbers<[1], [0], [0], [1], [0, 0, 1, 1], [], []>} : vector<32x64xbf16>, vector<64x128xbf16>, vector<32x128xf32> -> vector<32x128xf32>
    %47 = arith.addf %41, %46 : vector<32x128xf32>
    %48 = vector.extract_strided_slice %10 {offsets = [192, 0], sizes = [32, 64], strides = [1, 1]} : vector<512x64xf32> to vector<32x64xf32>
    %49 = arith.truncf %48 : vector<32x64xf32> to vector<32x64xbf16>
    %c6 = arith.constant 6 : index
    %c0_29 = arith.constant 0 : index
    %c0_30 = arith.constant 0 : index
    %50 = vector.load %arg4[%c6, %c0_29, %c0_30] : memref<16x64x128xbf16, #tpu.memory_space<vmem>>, vector<1x64x128xbf16>
    %51 = vector.shape_cast %50 : vector<1x64x128xbf16> to vector<64x128xbf16>
    %cst_31 = arith.constant dense<0.000000e+00> : vector<32x128xf32>
    %52 = tpu.matmul %49, %51, %cst_31 {dimension_numbers = #tpu.dot_dimension_numbers<[1], [0], [0], [1], [0, 0, 1, 1], [], []>} : vector<32x64xbf16>, vector<64x128xbf16>, vector<32x128xf32> -> vector<32x128xf32>
    %53 = arith.addf %47, %52 : vector<32x128xf32>
    %54 = vector.extract_strided_slice %10 {offsets = [224, 0], sizes = [32, 64], strides = [1, 1]} : vector<512x64xf32> to vector<32x64xf32>
    %55 = arith.truncf %54 : vector<32x64xf32> to vector<32x64xbf16>
    %c7 = arith.constant 7 : index
    %c0_32 = arith.constant 0 : index
    %c0_33 = arith.constant 0 : index
    %56 = vector.load %arg4[%c7, %c0_32, %c0_33] : memref<16x64x128xbf16, #tpu.memory_space<vmem>>, vector<1x64x128xbf16>
    %57 = vector.shape_cast %56 : vector<1x64x128xbf16> to vector<64x128xbf16>
    %cst_34 = arith.constant dense<0.000000e+00> : vector<32x128xf32>
    %58 = tpu.matmul %55, %57, %cst_34 {dimension_numbers = #tpu.dot_dimension_numbers<[1], [0], [0], [1], [0, 0, 1, 1], [], []>} : vector<32x64xbf16>, vector<64x128xbf16>, vector<32x128xf32> -> vector<32x128xf32>
    %59 = arith.addf %53, %58 : vector<32x128xf32>
    %60 = vector.extract_strided_slice %10 {offsets = [256, 0], sizes = [32, 64], strides = [1, 1]} : vector<512x64xf32> to vector<32x64xf32>
    %61 = arith.truncf %60 : vector<32x64xf32> to vector<32x64xbf16>
    %c8 = arith.constant 8 : index
    %c0_35 = arith.constant 0 : index
    %c0_36 = arith.constant 0 : index
    %62 = vector.load %arg4[%c8, %c0_35, %c0_36] : memref<16x64x128xbf16, #tpu.memory_space<vmem>>, vector<1x64x128xbf16>
    %63 = vector.shape_cast %62 : vector<1x64x128xbf16> to vector<64x128xbf16>
    %cst_37 = arith.constant dense<0.000000e+00> : vector<32x128xf32>
    %64 = tpu.matmul %61, %63, %cst_37 {dimension_numbers = #tpu.dot_dimension_numbers<[1], [0], [0], [1], [0, 0, 1, 1], [], []>} : vector<32x64xbf16>, vector<64x128xbf16>, vector<32x128xf32> -> vector<32x128xf32>
    %65 = arith.addf %59, %64 : vector<32x128xf32>
    %66 = vector.extract_strided_slice %10 {offsets = [288, 0], sizes = [32, 64], strides = [1, 1]} : vector<512x64xf32> to vector<32x64xf32>
    %67 = arith.truncf %66 : vector<32x64xf32> to vector<32x64xbf16>
    %c9 = arith.constant 9 : index
    %c0_38 = arith.constant 0 : index
    %c0_39 = arith.constant 0 : index
    %68 = vector.load %arg4[%c9, %c0_38, %c0_39] : memref<16x64x128xbf16, #tpu.memory_space<vmem>>, vector<1x64x128xbf16>
    %69 = vector.shape_cast %68 : vector<1x64x128xbf16> to vector<64x128xbf16>
    %cst_40 = arith.constant dense<0.000000e+00> : vector<32x128xf32>
    %70 = tpu.matmul %67, %69, %cst_40 {dimension_numbers = #tpu.dot_dimension_numbers<[1], [0], [0], [1], [0, 0, 1, 1], [], []>} : vector<32x64xbf16>, vector<64x128xbf16>, vector<32x128xf32> -> vector<32x128xf32>
    %71 = arith.addf %65, %70 : vector<32x128xf32>
    %72 = vector.extract_strided_slice %10 {offsets = [320, 0], sizes = [32, 64], strides = [1, 1]} : vector<512x64xf32> to vector<32x64xf32>
    %73 = arith.truncf %72 : vector<32x64xf32> to vector<32x64xbf16>
    %c10 = arith.constant 10 : index
    %c0_41 = arith.constant 0 : index
    %c0_42 = arith.constant 0 : index
    %74 = vector.load %arg4[%c10, %c0_41, %c0_42] : memref<16x64x128xbf16, #tpu.memory_space<vmem>>, vector<1x64x128xbf16>
    %75 = vector.shape_cast %74 : vector<1x64x128xbf16> to vector<64x128xbf16>
    %cst_43 = arith.constant dense<0.000000e+00> : vector<32x128xf32>
    %76 = tpu.matmul %73, %75, %cst_43 {dimension_numbers = #tpu.dot_dimension_numbers<[1], [0], [0], [1], [0, 0, 1, 1], [], []>} : vector<32x64xbf16>, vector<64x128xbf16>, vector<32x128xf32> -> vector<32x128xf32>
    %77 = arith.addf %71, %76 : vector<32x128xf32>
    %78 = vector.extract_strided_slice %10 {offsets = [352, 0], sizes = [32, 64], strides = [1, 1]} : vector<512x64xf32> to vector<32x64xf32>
    %79 = arith.truncf %78 : vector<32x64xf32> to vector<32x64xbf16>
    %c11 = arith.constant 11 : index
    %c0_44 = arith.constant 0 : index
    %c0_45 = arith.constant 0 : index
    %80 = vector.load %arg4[%c11, %c0_44, %c0_45] : memref<16x64x128xbf16, #tpu.memory_space<vmem>>, vector<1x64x128xbf16>
    %81 = vector.shape_cast %80 : vector<1x64x128xbf16> to vector<64x128xbf16>
    %cst_46 = arith.constant dense<0.000000e+00> : vector<32x128xf32>
    %82 = tpu.matmul %79, %81, %cst_46 {dimension_numbers = #tpu.dot_dimension_numbers<[1], [0], [0], [1], [0, 0, 1, 1], [], []>} : vector<32x64xbf16>, vector<64x128xbf16>, vector<32x128xf32> -> vector<32x128xf32>
    %83 = arith.addf %77, %82 : vector<32x128xf32>
    %84 = vector.extract_strided_slice %10 {offsets = [384, 0], sizes = [32, 64], strides = [1, 1]} : vector<512x64xf32> to vector<32x64xf32>
    %85 = arith.truncf %84 : vector<32x64xf32> to vector<32x64xbf16>
    %c12 = arith.constant 12 : index
    %c0_47 = arith.constant 0 : index
    %c0_48 = arith.constant 0 : index
    %86 = vector.load %arg4[%c12, %c0_47, %c0_48] : memref<16x64x128xbf16, #tpu.memory_space<vmem>>, vector<1x64x128xbf16>
    %87 = vector.shape_cast %86 : vector<1x64x128xbf16> to vector<64x128xbf16>
    %cst_49 = arith.constant dense<0.000000e+00> : vector<32x128xf32>
    %88 = tpu.matmul %85, %87, %cst_49 {dimension_numbers = #tpu.dot_dimension_numbers<[1], [0], [0], [1], [0, 0, 1, 1], [], []>} : vector<32x64xbf16>, vector<64x128xbf16>, vector<32x128xf32> -> vector<32x128xf32>
    %89 = arith.addf %83, %88 : vector<32x128xf32>
    %90 = vector.extract_strided_slice %10 {offsets = [416, 0], sizes = [32, 64], strides = [1, 1]} : vector<512x64xf32> to vector<32x64xf32>
    %91 = arith.truncf %90 : vector<32x64xf32> to vector<32x64xbf16>
    %c13 = arith.constant 13 : index
    %c0_50 = arith.constant 0 : index
    %c0_51 = arith.constant 0 : index
    %92 = vector.load %arg4[%c13, %c0_50, %c0_51] : memref<16x64x128xbf16, #tpu.memory_space<vmem>>, vector<1x64x128xbf16>
    %93 = vector.shape_cast %92 : vector<1x64x128xbf16> to vector<64x128xbf16>
    %cst_52 = arith.constant dense<0.000000e+00> : vector<32x128xf32>
    %94 = tpu.matmul %91, %93, %cst_52 {dimension_numbers = #tpu.dot_dimension_numbers<[1], [0], [0], [1], [0, 0, 1, 1], [], []>} : vector<32x64xbf16>, vector<64x128xbf16>, vector<32x128xf32> -> vector<32x128xf32>
    %95 = arith.addf %89, %94 : vector<32x128xf32>
    %96 = vector.extract_strided_slice %10 {offsets = [448, 0], sizes = [32, 64], strides = [1, 1]} : vector<512x64xf32> to vector<32x64xf32>
    %97 = arith.truncf %96 : vector<32x64xf32> to vector<32x64xbf16>
    %c14 = arith.constant 14 : index
    %c0_53 = arith.constant 0 : index
    %c0_54 = arith.constant 0 : index
    %98 = vector.load %arg4[%c14, %c0_53, %c0_54] : memref<16x64x128xbf16, #tpu.memory_space<vmem>>, vector<1x64x128xbf16>
    %99 = vector.shape_cast %98 : vector<1x64x128xbf16> to vector<64x128xbf16>
    %cst_55 = arith.constant dense<0.000000e+00> : vector<32x128xf32>
    %100 = tpu.matmul %97, %99, %cst_55 {dimension_numbers = #tpu.dot_dimension_numbers<[1], [0], [0], [1], [0, 0, 1, 1], [], []>} : vector<32x64xbf16>, vector<64x128xbf16>, vector<32x128xf32> -> vector<32x128xf32>
    %101 = arith.addf %95, %100 : vector<32x128xf32>
    %102 = vector.extract_strided_slice %10 {offsets = [480, 0], sizes = [32, 64], strides = [1, 1]} : vector<512x64xf32> to vector<32x64xf32>
    %103 = arith.truncf %102 : vector<32x64xf32> to vector<32x64xbf16>
    %c15 = arith.constant 15 : index
    %c0_56 = arith.constant 0 : index
    %c0_57 = arith.constant 0 : index
    %104 = vector.load %arg4[%c15, %c0_56, %c0_57] : memref<16x64x128xbf16, #tpu.memory_space<vmem>>, vector<1x64x128xbf16>
    %105 = vector.shape_cast %104 : vector<1x64x128xbf16> to vector<64x128xbf16>
    %cst_58 = arith.constant dense<0.000000e+00> : vector<32x128xf32>
    %106 = tpu.matmul %103, %105, %cst_58 {dimension_numbers = #tpu.dot_dimension_numbers<[1], [0], [0], [1], [0, 0, 1, 1], [], []>} : vector<32x64xbf16>, vector<64x128xbf16>, vector<32x128xf32> -> vector<32x128xf32>
    %107 = arith.addf %101, %106 : vector<32x128xf32>
    %c0_59 = arith.constant 0 : index
    %c0_60 = arith.constant 0 : index
    %108 = vector.load %arg5[%c0_59, %c0_60] : memref<1x128xf32, #tpu.memory_space<vmem>>, vector<1x128xf32>
    %109 = vector.broadcast %108 : vector<1x128xf32> to vector<32x128xf32>
    %110 = arith.addf %107, %109 : vector<32x128xf32>
    %c0_61 = arith.constant 0 : index
    %c0_62 = arith.constant 0 : index
    %111 = vector.load %arg6[%c0_61, %c0_62] : memref<1x128xf32, #tpu.memory_space<vmem>>, vector<1x128xf32>
    %c0_63 = arith.constant 0 : index
    %c0_64 = arith.constant 0 : index
    %112 = vector.load %arg7[%c0_63, %c0_64] : memref<1x128xf32, #tpu.memory_space<vmem>>, vector<1x128xf32>
    %cst_65 = arith.constant dense<0.000000e+00> : vector<128xf32>
    %113 = vector.multi_reduction <add>, %110, %cst_65 [0] : vector<32x128xf32> to vector<128xf32>
    %114 = vector.shape_cast %113 : vector<128xf32> to vector<1x128xf32>
    %cst_66 = arith.constant 3.200000e+01 : f32
    %115 = vector.broadcast %cst_66 : f32 to vector<1x128xf32>
    %116 = arith.divf %114, %115 : vector<1x128xf32>
    %117 = vector.broadcast %116 : vector<1x128xf32> to vector<32x128xf32>
    %118 = arith.subf %110, %117 : vector<32x128xf32>
    %119 = arith.mulf %118, %118 : vector<32x128xf32>
    %cst_67 = arith.constant dense<0.000000e+00> : vector<128xf32>
    %120 = vector.multi_reduction <add>, %119, %cst_67 [0] : vector<32x128xf32> to vector<128xf32>
    %121 = vector.shape_cast %120 : vector<128xf32> to vector<1x128xf32>
    %cst_68 = arith.constant 3.200000e+01 : f32
    %122 = vector.broadcast %cst_68 : f32 to vector<1x128xf32>
    %123 = arith.divf %121, %122 : vector<1x128xf32>
    %cst_69 = arith.constant 9.99999974E-6 : f32
    %124 = vector.broadcast %cst_69 : f32 to vector<1x128xf32>
    %125 = arith.addf %123, %124 : vector<1x128xf32>
    %126 = math.rsqrt %125 : vector<1x128xf32>
    %127 = arith.mulf %111, %126 : vector<1x128xf32>
    %128 = vector.broadcast %127 : vector<1x128xf32> to vector<32x128xf32>
    %129 = arith.mulf %118, %128 : vector<32x128xf32>
    %130 = vector.broadcast %112 : vector<1x128xf32> to vector<32x128xf32>
    %131 = arith.addf %129, %130 : vector<32x128xf32>
    %cst_70 = arith.constant 0.000000e+00 : f32
    %132 = vector.broadcast %cst_70 : f32 to vector<32x128xf32>
    %133 = arith.maximumf %131, %132 : vector<32x128xf32>
    %134 = arith.truncf %133 : vector<32x128xf32> to vector<32x128xbf16>
    %c0_71 = arith.constant 0 : index
    %c0_72 = arith.constant 0 : index
    %135 = vector.load %arg8[%c0_71, %c0_72] : memref<224x32xbf16, #tpu.memory_space<vmem>>, vector<224x32xbf16>
    %cst_73 = arith.constant dense<0.000000e+00> : vector<224x128xf32>
    %136 = tpu.matmul %135, %134, %cst_73 {dimension_numbers = #tpu.dot_dimension_numbers<[1], [0], [0], [1], [0, 0, 1, 1], [], []>} : vector<224x32xbf16>, vector<32x128xbf16>, vector<224x128xf32> -> vector<224x128xf32>
    %cst_74 = arith.constant 0.000000e+00 : f32
    %137 = vector.broadcast %cst_74 : f32 to vector<56x256xf32>
    %138 = vector.extract_strided_slice %136 {offsets = [0, 0], sizes = [56, 128], strides = [1, 1]} : vector<224x128xf32> to vector<56x128xf32>
    %139 = arith.truncf %138 : vector<56x128xf32> to vector<56x128xbf16>
    %c0_75 = arith.constant 0 : index
    %c0_76 = arith.constant 0 : index
    %c0_77 = arith.constant 0 : index
    %140 = vector.load %arg9[%c0_75, %c0_76, %c0_77] : memref<4x128x256xbf16, #tpu.memory_space<vmem>>, vector<1x128x256xbf16>
    %141 = vector.shape_cast %140 : vector<1x128x256xbf16> to vector<128x256xbf16>
    %cst_78 = arith.constant dense<0.000000e+00> : vector<56x256xf32>
    %142 = tpu.matmul %139, %141, %cst_78 {dimension_numbers = #tpu.dot_dimension_numbers<[1], [0], [0], [1], [0, 0, 1, 1], [], []>} : vector<56x128xbf16>, vector<128x256xbf16>, vector<56x256xf32> -> vector<56x256xf32>
    %143 = arith.addf %137, %142 : vector<56x256xf32>
    %144 = vector.extract_strided_slice %136 {offsets = [56, 0], sizes = [56, 128], strides = [1, 1]} : vector<224x128xf32> to vector<56x128xf32>
    %145 = arith.truncf %144 : vector<56x128xf32> to vector<56x128xbf16>
    %c1_79 = arith.constant 1 : index
    %c0_80 = arith.constant 0 : index
    %c0_81 = arith.constant 0 : index
    %146 = vector.load %arg9[%c1_79, %c0_80, %c0_81] : memref<4x128x256xbf16, #tpu.memory_space<vmem>>, vector<1x128x256xbf16>
    %147 = vector.shape_cast %146 : vector<1x128x256xbf16> to vector<128x256xbf16>
    %cst_82 = arith.constant dense<0.000000e+00> : vector<56x256xf32>
    %148 = tpu.matmul %145, %147, %cst_82 {dimension_numbers = #tpu.dot_dimension_numbers<[1], [0], [0], [1], [0, 0, 1, 1], [], []>} : vector<56x128xbf16>, vector<128x256xbf16>, vector<56x256xf32> -> vector<56x256xf32>
    %149 = arith.addf %143, %148 : vector<56x256xf32>
    %150 = vector.extract_strided_slice %136 {offsets = [112, 0], sizes = [56, 128], strides = [1, 1]} : vector<224x128xf32> to vector<56x128xf32>
    %151 = arith.truncf %150 : vector<56x128xf32> to vector<56x128xbf16>
    %c2_83 = arith.constant 2 : index
    %c0_84 = arith.constant 0 : index
    %c0_85 = arith.constant 0 : index
    %152 = vector.load %arg9[%c2_83, %c0_84, %c0_85] : memref<4x128x256xbf16, #tpu.memory_space<vmem>>, vector<1x128x256xbf16>
    %153 = vector.shape_cast %152 : vector<1x128x256xbf16> to vector<128x256xbf16>
    %cst_86 = arith.constant dense<0.000000e+00> : vector<56x256xf32>
    %154 = tpu.matmul %151, %153, %cst_86 {dimension_numbers = #tpu.dot_dimension_numbers<[1], [0], [0], [1], [0, 0, 1, 1], [], []>} : vector<56x128xbf16>, vector<128x256xbf16>, vector<56x256xf32> -> vector<56x256xf32>
    %155 = arith.addf %149, %154 : vector<56x256xf32>
    %156 = vector.extract_strided_slice %136 {offsets = [168, 0], sizes = [56, 128], strides = [1, 1]} : vector<224x128xf32> to vector<56x128xf32>
    %157 = arith.truncf %156 : vector<56x128xf32> to vector<56x128xbf16>
    %c3_87 = arith.constant 3 : index
    %c0_88 = arith.constant 0 : index
    %c0_89 = arith.constant 0 : index
    %158 = vector.load %arg9[%c3_87, %c0_88, %c0_89] : memref<4x128x256xbf16, #tpu.memory_space<vmem>>, vector<1x128x256xbf16>
    %159 = vector.shape_cast %158 : vector<1x128x256xbf16> to vector<128x256xbf16>
    %cst_90 = arith.constant dense<0.000000e+00> : vector<56x256xf32>
    %160 = tpu.matmul %157, %159, %cst_90 {dimension_numbers = #tpu.dot_dimension_numbers<[1], [0], [0], [1], [0, 0, 1, 1], [], []>} : vector<56x128xbf16>, vector<128x256xbf16>, vector<56x256xf32> -> vector<56x256xf32>
    %161 = arith.addf %155, %160 : vector<56x256xf32>
    %cst_91 = arith.constant 0.000000e+00 : f32
    %162 = vector.broadcast %cst_91 : f32 to vector<128x64xf32>
    %c0_92 = arith.constant 0 : index
    %c0_93 = arith.constant 0 : index
    %c0_94 = arith.constant 0 : index
    %163 = vector.load %arg10[%c0_92, %c0_93, %c0_94] : memref<4x128x56xf32, #tpu.memory_space<vmem>>, vector<1x128x56xf32>
    %164 = vector.shape_cast %163 : vector<1x128x56xf32> to vector<128x56xf32>
    %165 = vector.extract_strided_slice %161 {offsets = [0, 0], sizes = [56, 64], strides = [1, 1]} : vector<56x256xf32> to vector<56x64xf32>
    %cst_95 = arith.constant dense<0.000000e+00> : vector<128x64xf32>
    %166 = tpu.matmul %164, %165, %cst_95 {dimension_numbers = #tpu.dot_dimension_numbers<[1], [0], [0], [1], [0, 0, 1, 1], [], []>} : vector<128x56xf32>, vector<56x64xf32>, vector<128x64xf32> -> vector<128x64xf32>
    %167 = arith.addf %162, %166 : vector<128x64xf32>
    %c1_96 = arith.constant 1 : index
    %c0_97 = arith.constant 0 : index
    %c0_98 = arith.constant 0 : index
    %168 = vector.load %arg10[%c1_96, %c0_97, %c0_98] : memref<4x128x56xf32, #tpu.memory_space<vmem>>, vector<1x128x56xf32>
    %169 = vector.shape_cast %168 : vector<1x128x56xf32> to vector<128x56xf32>
    %170 = vector.extract_strided_slice %161 {offsets = [0, 64], sizes = [56, 64], strides = [1, 1]} : vector<56x256xf32> to vector<56x64xf32>
    %cst_99 = arith.constant dense<0.000000e+00> : vector<128x64xf32>
    %171 = tpu.matmul %169, %170, %cst_99 {dimension_numbers = #tpu.dot_dimension_numbers<[1], [0], [0], [1], [0, 0, 1, 1], [], []>} : vector<128x56xf32>, vector<56x64xf32>, vector<128x64xf32> -> vector<128x64xf32>
    %172 = arith.addf %167, %171 : vector<128x64xf32>
    %c2_100 = arith.constant 2 : index
    %c0_101 = arith.constant 0 : index
    %c0_102 = arith.constant 0 : index
    %173 = vector.load %arg10[%c2_100, %c0_101, %c0_102] : memref<4x128x56xf32, #tpu.memory_space<vmem>>, vector<1x128x56xf32>
    %174 = vector.shape_cast %173 : vector<1x128x56xf32> to vector<128x56xf32>
    %175 = vector.extract_strided_slice %161 {offsets = [0, 128], sizes = [56, 64], strides = [1, 1]} : vector<56x256xf32> to vector<56x64xf32>
    %cst_103 = arith.constant dense<0.000000e+00> : vector<128x64xf32>
    %176 = tpu.matmul %174, %175, %cst_103 {dimension_numbers = #tpu.dot_dimension_numbers<[1], [0], [0], [1], [0, 0, 1, 1], [], []>} : vector<128x56xf32>, vector<56x64xf32>, vector<128x64xf32> -> vector<128x64xf32>
    %177 = arith.addf %172, %176 : vector<128x64xf32>
    %c3_104 = arith.constant 3 : index
    %c0_105 = arith.constant 0 : index
    %c0_106 = arith.constant 0 : index
    %178 = vector.load %arg10[%c3_104, %c0_105, %c0_106] : memref<4x128x56xf32, #tpu.memory_space<vmem>>, vector<1x128x56xf32>
    %179 = vector.shape_cast %178 : vector<1x128x56xf32> to vector<128x56xf32>
    %180 = vector.extract_strided_slice %161 {offsets = [0, 192], sizes = [56, 64], strides = [1, 1]} : vector<56x256xf32> to vector<56x64xf32>
    %cst_107 = arith.constant dense<0.000000e+00> : vector<128x64xf32>
    %181 = tpu.matmul %179, %180, %cst_107 {dimension_numbers = #tpu.dot_dimension_numbers<[1], [0], [0], [1], [0, 0, 1, 1], [], []>} : vector<128x56xf32>, vector<56x64xf32>, vector<128x64xf32> -> vector<128x64xf32>
    %182 = arith.addf %177, %181 : vector<128x64xf32>
    %c0_108 = arith.constant 0 : index
    %c0_109 = arith.constant 0 : index
    %183 = vector.load %arg11[%c0_108, %c0_109] : memref<1x64xf32, #tpu.memory_space<vmem>>, vector<1x64xf32>
    %184 = vector.broadcast %183 : vector<1x64xf32> to vector<128x64xf32>
    %185 = arith.addf %182, %184 : vector<128x64xf32>
    %c0_110 = arith.constant 0 : index
    %c0_111 = arith.constant 0 : index
    %186 = vector.load %arg12[%c0_110, %c0_111] : memref<1x64xf32, #tpu.memory_space<vmem>>, vector<1x64xf32>
    %c0_112 = arith.constant 0 : index
    %c0_113 = arith.constant 0 : index
    %187 = vector.load %arg13[%c0_112, %c0_113] : memref<1x64xf32, #tpu.memory_space<vmem>>, vector<1x64xf32>
    %cst_114 = arith.constant dense<0.000000e+00> : vector<64xf32>
    %188 = vector.multi_reduction <add>, %185, %cst_114 [0] : vector<128x64xf32> to vector<64xf32>
    %189 = vector.shape_cast %188 : vector<64xf32> to vector<1x64xf32>
    %cst_115 = arith.constant 1.280000e+02 : f32
    %190 = vector.broadcast %cst_115 : f32 to vector<1x64xf32>
    %191 = arith.divf %189, %190 : vector<1x64xf32>
    %192 = vector.broadcast %191 : vector<1x64xf32> to vector<128x64xf32>
    %193 = arith.subf %185, %192 : vector<128x64xf32>
    %194 = arith.mulf %193, %193 : vector<128x64xf32>
    %cst_116 = arith.constant dense<0.000000e+00> : vector<64xf32>
    %195 = vector.multi_reduction <add>, %194, %cst_116 [0] : vector<128x64xf32> to vector<64xf32>
    %196 = vector.shape_cast %195 : vector<64xf32> to vector<1x64xf32>
    %cst_117 = arith.constant 1.280000e+02 : f32
    %197 = vector.broadcast %cst_117 : f32 to vector<1x64xf32>
    %198 = arith.divf %196, %197 : vector<1x64xf32>
    %cst_118 = arith.constant 9.99999974E-6 : f32
    %199 = vector.broadcast %cst_118 : f32 to vector<1x64xf32>
    %200 = arith.addf %198, %199 : vector<1x64xf32>
    %201 = math.rsqrt %200 : vector<1x64xf32>
    %202 = arith.mulf %186, %201 : vector<1x64xf32>
    %203 = vector.broadcast %202 : vector<1x64xf32> to vector<128x64xf32>
    %204 = arith.mulf %193, %203 : vector<128x64xf32>
    %205 = vector.broadcast %187 : vector<1x64xf32> to vector<128x64xf32>
    %206 = arith.addf %204, %205 : vector<128x64xf32>
    %cst_119 = arith.constant 0.000000e+00 : f32
    %207 = vector.broadcast %cst_119 : f32 to vector<128x64xf32>
    %208 = arith.maximumf %206, %207 : vector<128x64xf32>
    %209 = arith.truncf %208 : vector<128x64xf32> to vector<128x64xbf16>
    %c0_120 = arith.constant 0 : index
    %c0_121 = arith.constant 0 : index
    %210 = vector.load %arg14[%c0_120, %c0_121] : memref<672x128xbf16, #tpu.memory_space<vmem>>, vector<672x128xbf16>
    %cst_122 = arith.constant dense<0.000000e+00> : vector<672x64xf32>
    %211 = tpu.matmul %210, %209, %cst_122 {dimension_numbers = #tpu.dot_dimension_numbers<[1], [0], [0], [1], [0, 0, 1, 1], [], []>} : vector<672x128xbf16>, vector<128x64xbf16>, vector<672x64xf32> -> vector<672x64xf32>
    %cst_123 = arith.constant 0.000000e+00 : f32
    %212 = vector.broadcast %cst_123 : f32 to vector<168x12xf32>
    %213 = vector.extract_strided_slice %211 {offsets = [0, 0], sizes = [168, 64], strides = [1, 1]} : vector<672x64xf32> to vector<168x64xf32>
    %214 = arith.truncf %213 : vector<168x64xf32> to vector<168x64xbf16>
    %c0_124 = arith.constant 0 : index
    %c0_125 = arith.constant 0 : index
    %c0_126 = arith.constant 0 : index
    %215 = vector.load %arg15[%c0_124, %c0_125, %c0_126] : memref<4x64x12xbf16, #tpu.memory_space<vmem>>, vector<1x64x12xbf16>
    %216 = vector.shape_cast %215 : vector<1x64x12xbf16> to vector<64x12xbf16>
    %cst_127 = arith.constant dense<0.000000e+00> : vector<168x12xf32>
    %217 = tpu.matmul %214, %216, %cst_127 {dimension_numbers = #tpu.dot_dimension_numbers<[1], [0], [0], [1], [0, 0, 1, 1], [], []>} : vector<168x64xbf16>, vector<64x12xbf16>, vector<168x12xf32> -> vector<168x12xf32>
    %218 = arith.addf %212, %217 : vector<168x12xf32>
    %219 = vector.extract_strided_slice %211 {offsets = [168, 0], sizes = [168, 64], strides = [1, 1]} : vector<672x64xf32> to vector<168x64xf32>
    %220 = arith.truncf %219 : vector<168x64xf32> to vector<168x64xbf16>
    %c1_128 = arith.constant 1 : index
    %c0_129 = arith.constant 0 : index
    %c0_130 = arith.constant 0 : index
    %221 = vector.load %arg15[%c1_128, %c0_129, %c0_130] : memref<4x64x12xbf16, #tpu.memory_space<vmem>>, vector<1x64x12xbf16>
    %222 = vector.shape_cast %221 : vector<1x64x12xbf16> to vector<64x12xbf16>
    %cst_131 = arith.constant dense<0.000000e+00> : vector<168x12xf32>
    %223 = tpu.matmul %220, %222, %cst_131 {dimension_numbers = #tpu.dot_dimension_numbers<[1], [0], [0], [1], [0, 0, 1, 1], [], []>} : vector<168x64xbf16>, vector<64x12xbf16>, vector<168x12xf32> -> vector<168x12xf32>
    %224 = arith.addf %218, %223 : vector<168x12xf32>
    %225 = vector.extract_strided_slice %211 {offsets = [336, 0], sizes = [168, 64], strides = [1, 1]} : vector<672x64xf32> to vector<168x64xf32>
    %226 = arith.truncf %225 : vector<168x64xf32> to vector<168x64xbf16>
    %c2_132 = arith.constant 2 : index
    %c0_133 = arith.constant 0 : index
    %c0_134 = arith.constant 0 : index
    %227 = vector.load %arg15[%c2_132, %c0_133, %c0_134] : memref<4x64x12xbf16, #tpu.memory_space<vmem>>, vector<1x64x12xbf16>
    %228 = vector.shape_cast %227 : vector<1x64x12xbf16> to vector<64x12xbf16>
    %cst_135 = arith.constant dense<0.000000e+00> : vector<168x12xf32>
    %229 = tpu.matmul %226, %228, %cst_135 {dimension_numbers = #tpu.dot_dimension_numbers<[1], [0], [0], [1], [0, 0, 1, 1], [], []>} : vector<168x64xbf16>, vector<64x12xbf16>, vector<168x12xf32> -> vector<168x12xf32>
    %230 = arith.addf %224, %229 : vector<168x12xf32>
    %231 = vector.extract_strided_slice %211 {offsets = [504, 0], sizes = [168, 64], strides = [1, 1]} : vector<672x64xf32> to vector<168x64xf32>
    %232 = arith.truncf %231 : vector<168x64xf32> to vector<168x64xbf16>
    %c3_136 = arith.constant 3 : index
    %c0_137 = arith.constant 0 : index
    %c0_138 = arith.constant 0 : index
    %233 = vector.load %arg15[%c3_136, %c0_137, %c0_138] : memref<4x64x12xbf16, #tpu.memory_space<vmem>>, vector<1x64x12xbf16>
    %234 = vector.shape_cast %233 : vector<1x64x12xbf16> to vector<64x12xbf16>
    %cst_139 = arith.constant dense<0.000000e+00> : vector<168x12xf32>
    %235 = tpu.matmul %232, %234, %cst_139 {dimension_numbers = #tpu.dot_dimension_numbers<[1], [0], [0], [1], [0, 0, 1, 1], [], []>} : vector<168x64xbf16>, vector<64x12xbf16>, vector<168x12xf32> -> vector<168x12xf32>
    %236 = arith.addf %230, %235 : vector<168x12xf32>
    %cst_140 = arith.constant 0.000000e+00 : f32
    %237 = vector.broadcast %cst_140 : f32 to vector<512x3xf32>
    %c0_141 = arith.constant 0 : index
    %c0_142 = arith.constant 0 : index
    %c0_143 = arith.constant 0 : index
    %238 = vector.load %arg16[%c0_141, %c0_142, %c0_143] : memref<4x512x168xf32, #tpu.memory_space<vmem>>, vector<1x512x168xf32>
    %239 = vector.shape_cast %238 : vector<1x512x168xf32> to vector<512x168xf32>
    %240 = vector.extract_strided_slice %236 {offsets = [0, 0], sizes = [168, 3], strides = [1, 1]} : vector<168x12xf32> to vector<168x3xf32>
    %cst_144 = arith.constant dense<0.000000e+00> : vector<512x3xf32>
    %241 = tpu.matmul %239, %240, %cst_144 {dimension_numbers = #tpu.dot_dimension_numbers<[1], [0], [0], [1], [0, 0, 1, 1], [], []>} : vector<512x168xf32>, vector<168x3xf32>, vector<512x3xf32> -> vector<512x3xf32>
    %242 = arith.addf %237, %241 : vector<512x3xf32>
    %c1_145 = arith.constant 1 : index
    %c0_146 = arith.constant 0 : index
    %c0_147 = arith.constant 0 : index
    %243 = vector.load %arg16[%c1_145, %c0_146, %c0_147] : memref<4x512x168xf32, #tpu.memory_space<vmem>>, vector<1x512x168xf32>
    %244 = vector.shape_cast %243 : vector<1x512x168xf32> to vector<512x168xf32>
    %245 = vector.extract_strided_slice %236 {offsets = [0, 3], sizes = [168, 3], strides = [1, 1]} : vector<168x12xf32> to vector<168x3xf32>
    %cst_148 = arith.constant dense<0.000000e+00> : vector<512x3xf32>
    %246 = tpu.matmul %244, %245, %cst_148 {dimension_numbers = #tpu.dot_dimension_numbers<[1], [0], [0], [1], [0, 0, 1, 1], [], []>} : vector<512x168xf32>, vector<168x3xf32>, vector<512x3xf32> -> vector<512x3xf32>
    %247 = arith.addf %242, %246 : vector<512x3xf32>
    %c2_149 = arith.constant 2 : index
    %c0_150 = arith.constant 0 : index
    %c0_151 = arith.constant 0 : index
    %248 = vector.load %arg16[%c2_149, %c0_150, %c0_151] : memref<4x512x168xf32, #tpu.memory_space<vmem>>, vector<1x512x168xf32>
    %249 = vector.shape_cast %248 : vector<1x512x168xf32> to vector<512x168xf32>
    %250 = vector.extract_strided_slice %236 {offsets = [0, 6], sizes = [168, 3], strides = [1, 1]} : vector<168x12xf32> to vector<168x3xf32>
    %cst_152 = arith.constant dense<0.000000e+00> : vector<512x3xf32>
    %251 = tpu.matmul %249, %250, %cst_152 {dimension_numbers = #tpu.dot_dimension_numbers<[1], [0], [0], [1], [0, 0, 1, 1], [], []>} : vector<512x168xf32>, vector<168x3xf32>, vector<512x3xf32> -> vector<512x3xf32>
    %252 = arith.addf %247, %251 : vector<512x3xf32>
    %c3_153 = arith.constant 3 : index
    %c0_154 = arith.constant 0 : index
    %c0_155 = arith.constant 0 : index
    %253 = vector.load %arg16[%c3_153, %c0_154, %c0_155] : memref<4x512x168xf32, #tpu.memory_space<vmem>>, vector<1x512x168xf32>
    %254 = vector.shape_cast %253 : vector<1x512x168xf32> to vector<512x168xf32>
    %255 = vector.extract_strided_slice %236 {offsets = [0, 9], sizes = [168, 3], strides = [1, 1]} : vector<168x12xf32> to vector<168x3xf32>
    %cst_156 = arith.constant dense<0.000000e+00> : vector<512x3xf32>
    %256 = tpu.matmul %254, %255, %cst_156 {dimension_numbers = #tpu.dot_dimension_numbers<[1], [0], [0], [1], [0, 0, 1, 1], [], []>} : vector<512x168xf32>, vector<168x3xf32>, vector<512x3xf32> -> vector<512x3xf32>
    %257 = arith.addf %252, %256 : vector<512x3xf32>
    %c0_157 = arith.constant 0 : index
    %c0_158 = arith.constant 0 : index
    %258 = vector.load %arg17[%c0_157, %c0_158] : memref<1x3xf32, #tpu.memory_space<vmem>>, vector<1x3xf32>
    %259 = vector.broadcast %258 : vector<1x3xf32> to vector<512x3xf32>
    %260 = arith.addf %257, %259 : vector<512x3xf32>
    %261 = arith.negf %260 : vector<512x3xf32>
    %262 = math.exp %261 : vector<512x3xf32>
    %cst_159 = arith.constant 1.000000e+00 : f32
    %263 = vector.broadcast %cst_159 : f32 to vector<512x3xf32>
    %264 = arith.addf %263, %262 : vector<512x3xf32>
    %265 = arith.divf %263, %264 : vector<512x3xf32>
    %c0_160 = arith.constant 0 : index
    %c0_161 = arith.constant 0 : index
    %266 = vector.load %arg18[%c0_160, %c0_161] : memref<512x3xf32, #tpu.memory_space<vmem>>, vector<512x3xf32>
    tpu.vector_store %arg18[%c0_160, %c0_161], %265 {strides = array<i32>} : memref<512x3xf32, #tpu.memory_space<vmem>>, vector<512x3xf32>,
    return
  }
}

</mosaic_0001>

<llo_original>
// kernel: generator_forward.1
$region0: #{generator_forward.1}
  #allocation0 [shape = 'u32[]', space=smem, size = 0x4, offset = 0x4, fixed_abs, tag = 'smem constant byte address 0x4 - core index']
  #allocation1 [shape = 'u32[144,128]{1,0:T(1,128)}', space=vmem, size = 0x12000, scoped, tag = 'internal scratch']
  %s0 = inlined_call_operand.vmem [shape: bf16[128,48], index: 0, kind: input, shape index: {}]
  %s1 = inlined_call_operand.vmem [shape: bf16[48,64], index: 1, kind: input, shape index: {}]
  %s2 = inlined_call_operand.vmem [shape: f32[1,64], index: 2, kind: input, shape index: {}]
  %s3 = inlined_call_operand.vmem [shape: bf16[512,128], index: 3, kind: input, shape index: {}]
  %s4 = inlined_call_operand.vmem [shape: bf16[16,64,128], index: 4, kind: input, shape index: {}]
  %s5 = inlined_call_operand.vmem [shape: f32[1,128], index: 5, kind: input, shape index: {}]
  %s6 = inlined_call_operand.vmem [shape: f32[1,128], index: 6, kind: input, shape index: {}]
  %s7 = inlined_call_operand.vmem [shape: f32[1,128], index: 7, kind: input, shape index: {}]
  %s8 = inlined_call_operand.vmem [shape: bf16[224,32], index: 8, kind: input, shape index: {}]
  %s9 = inlined_call_operand.vmem [shape: bf16[4,128,256], index: 9, kind: input, shape index: {}]
  %s10 = inlined_call_operand.vmem [shape: f32[4,128,56], index: 10, kind: input, shape index: {}]
  %s11 = inlined_call_operand.vmem [shape: f32[1,64], index: 11, kind: input, shape index: {}]
  %s12 = inlined_call_operand.vmem [shape: f32[1,64], index: 12, kind: input, shape index: {}]
  %s13 = inlined_call_operand.vmem [shape: f32[1,64], index: 13, kind: input, shape index: {}]
  %s14 = inlined_call_operand.vmem [shape: bf16[672,128], index: 14, kind: input, shape index: {}]
  %s15 = inlined_call_operand.vmem [shape: bf16[4,64,12], index: 15, kind: input, shape index: {}]
  %s16 = inlined_call_operand.vmem [shape: f32[4,512,168], index: 16, kind: input, shape index: {}]
  %s17 = inlined_call_operand.vmem [shape: f32[1,3], index: 17, kind: input, shape index: {}]
  %s18 = inlined_call_operand.vmem [shape: f32[512,3], index: 18, kind: output, shape index: {}]
  %s19 = sld [smem:[#allocation0]]
  $region82: #{generator_forward.1} parent=0
    _
  %s21 = ssub.s32 1, %s19
  %s22 = scalar_select 0, %s21, %s19
  // Predicated region
  $region2: #{generator_forward.1} parent=0 // pred_check
    _
  $region3: #{generator_forward.1} parent=0 // pred_check_branch
    %24 = sbr.rel (0) target = $region5
  $region4: #{generator_forward.1} parent=0 // pred_region
    _
  $region5: #{generator_forward.1} parent=0 // pred_fallthru
    _
  // Predicated region
  $region6: #{generator_forward.1} parent=0 // pred_check
    _
  $region7: #{generator_forward.1} parent=0 // pred_check_branch
    %26 = sbr.rel (0) target = $region9
  $region8: #{generator_forward.1} parent=0 // pred_region
    _
  $region9: #{generator_forward.1} parent=0 // pred_fallthru
    _
  // Predicated region
  $region10: #{generator_forward.1} parent=0 // pred_check
    _
  $region11: #{generator_forward.1} parent=0 // pred_check_branch
    %28 = sbr.rel (0) target = $region13
  $region12: #{generator_forward.1} parent=0 // pred_region
    _
  $region13: #{generator_forward.1} parent=0 // pred_fallthru
    _
  // Predicated region
  $region14: #{generator_forward.1} parent=0 // pred_check
    _
  $region15: #{generator_forward.1} parent=0 // pred_check_branch
    %30 = sbr.rel (0) target = $region17
  $region16: #{generator_forward.1} parent=0 // pred_region
    _
  $region17: #{generator_forward.1} parent=0 // pred_fallthru
    _
  // Predicated region
  $region18: #{generator_forward.1} parent=0 // pred_check
    _
  $region19: #{generator_forward.1} parent=0 // pred_check_branch
    %32 = sbr.rel (0) target = $region21
  $region20: #{generator_forward.1} parent=0 // pred_region
    _
  $region21: #{generator_forward.1} parent=0 // pred_fallthru
    _
  // Predicated region
  $region22: #{generator_forward.1} parent=0 // pred_check
    _
  $region23: #{generator_forward.1} parent=0 // pred_check_branch
    %34 = sbr.rel (0) target = $region25
  $region24: #{generator_forward.1} parent=0 // pred_region
    _
  $region25: #{generator_forward.1} parent=0 // pred_fallthru
    _
  // Predicated region
  $region26: #{generator_forward.1} parent=0 // pred_check
    _
  $region27: #{generator_forward.1} parent=0 // pred_check_branch
    %36 = sbr.rel (0) target = $region29
  $region28: #{generator_forward.1} parent=0 // pred_region
    _
  $region29: #{generator_forward.1} parent=0 // pred_fallthru
    _
  // Predicated region
  $region30: #{generator_forward.1} parent=0 // pred_check
    _
  $region31: #{generator_forward.1} parent=0 // pred_check_branch
    %38 = sbr.rel (0) target = $region33
  $region32: #{generator_forward.1} parent=0 // pred_region
    _
  $region33: #{generator_forward.1} parent=0 // pred_fallthru
    _
  // Predicated region
  $region34: #{generator_forward.1} parent=0 // pred_check
    _
  $region35: #{generator_forward.1} parent=0 // pred_check_branch
    %40 = sbr.rel (0) target = $region37
  $region36: #{generator_forward.1} parent=0 // pred_region
    _
  $region37: #{generator_forward.1} parent=0 // pred_fallthru
    _
  // Predicated region
  $region38: #{generator_forward.1} parent=0 // pred_check
    _
  $region39: #{generator_forward.1} parent=0 // pred_check_branch
    %42 = sbr.rel (0) target = $region41
  $region40: #{generator_forward.1} parent=0 // pred_region
    _
  $region41: #{generator_forward.1} parent=0 // pred_fallthru
    _
  // Predicated region
  $region42: #{generator_forward.1} parent=0 // pred_check
    _
  $region43: #{generator_forward.1} parent=0 // pred_check_branch
    %44 = sbr.rel (0) target = $region45
  $region44: #{generator_forward.1} parent=0 // pred_region
    _
  $region45: #{generator_forward.1} parent=0 // pred_fallthru
    _
  // Predicated region
  $region46: #{generator_forward.1} parent=0 // pred_check
    _
  $region47: #{generator_forward.1} parent=0 // pred_check_branch
    %46 = sbr.rel (0) target = $region49
  $region48: #{generator_forward.1} parent=0 // pred_region
    _
  $region49: #{generator_forward.1} parent=0 // pred_fallthru
    _
  // Predicated region
  $region50: #{generator_forward.1} parent=0 // pred_check
    _
  $region51: #{generator_forward.1} parent=0 // pred_check_branch
    %48 = sbr.rel (0) target = $region53
  $region52: #{generator_forward.1} parent=0 // pred_region
    _
  $region53: #{generator_forward.1} parent=0 // pred_fallthru
    _
  // Predicated region
  $region54: #{generator_forward.1} parent=0 // pred_check
    _
  $region55: #{generator_forward.1} parent=0 // pred_check_branch
    %50 = sbr.rel (0) target = $region57
  $region56: #{generator_forward.1} parent=0 // pred_region
    _
  $region57: #{generator_forward.1} parent=0 // pred_fallthru
    _
  // Predicated region
  $region58: #{generator_forward.1} parent=0 // pred_check
    _
  $region59: #{generator_forward.1} parent=0 // pred_check_branch
    %52 = sbr.rel (0) target = $region61
  $region60: #{generator_forward.1} parent=0 // pred_region
    _
  $region61: #{generator_forward.1} parent=0 // pred_fallthru
    _
  // Predicated region
  $region62: #{generator_forward.1} parent=0 // pred_check
    _
  $region63: #{generator_forward.1} parent=0 // pred_check_branch
    %54 = sbr.rel (0) target = $region65
  $region64: #{generator_forward.1} parent=0 // pred_region
    _
  $region65: #{generator_forward.1} parent=0 // pred_fallthru
    _
  // Predicated region
  $region66: #{generator_forward.1} parent=0 // pred_check
    _
  $region67: #{generator_forward.1} parent=0 // pred_check_branch
    %56 = sbr.rel (0) target = $region69
  $region68: #{generator_forward.1} parent=0 // pred_region
    _
  $region69: #{generator_forward.1} parent=0 // pred_fallthru
    _
  // Predicated region
  $region70: #{generator_forward.1} parent=0 // pred_check
    _
  $region71: #{generator_forward.1} parent=0 // pred_check_branch
    %58 = sbr.rel (0) target = $region73
  $region72: #{generator_forward.1} parent=0 // pred_region
    _
  $region73: #{generator_forward.1} parent=0 // pred_fallthru
    _
  %v60 = vld [vmem:[%s0] sm:$0xf]
  %v61 = vld [vmem:[%s0 + $0x4] sm:$0xf]
  %v62 = vld [vmem:[%s0 + $0x8] sm:$0xf]
  %v63 = vld [vmem:[%s0 + $0xc] sm:$0xf]
  %v64 = vld [vmem:[%s0 + $0x10] sm:$0xf]
  %v65 = vld [vmem:[%s0 + $0x14] sm:$0xf]
  %v66 = vld [vmem:[%s0 + $0x18] sm:$0xf]
  %v67 = vld [vmem:[%s0 + $0x1c] sm:$0xf]
  %v68 = vld [vmem:[%s0 + $0x20] sm:$0xf]
  %v69 = vld [vmem:[%s0 + $0x24] sm:$0xf]
  %v70 = vld [vmem:[%s0 + $0x28] sm:$0xf]
  %v71 = vld [vmem:[%s0 + $0x2c] sm:$0xf]
  %v72 = vld [vmem:[%s0 + $0x30] sm:$0xf]
  %v73 = vld [vmem:[%s0 + $0x34] sm:$0xf]
  %v74 = vld [vmem:[%s0 + $0x38] sm:$0xf]
  %v75 = vld [vmem:[%s0 + $0x3c] sm:$0xf]
  %v76 = vld [vmem:[%s1] sm:$0xf]
  %v77 = vld [vmem:[%s1 + $0x4] sm:$0xf]
  %v78 = vld [vmem:[%s1 + $0x8] sm:$0xf]
  %v79 = vld [vmem:[%s1 + $0xc] sm:$0xf]
  %v80 = vld [vmem:[%s1 + $0x10] sm:$0xf]
  %v81 = vld [vmem:[%s1 + $0x14] sm:$0xf]
  %v82 = vld [vmem:[%s2] sm:$0x1]
  %v84 = vlaneseq
  %v85 = vshrl.u32 %v84, 7
  %v86 = vsub.s32 0, %v85
  %v87 = vrot.slane %v82, %v86
  %v105 = vunpack.c.l.b16 %v60
  %v106 = vunpack.c.l.b16 %v61
  %v107 = vunpack.c.l.b16 %v62
  %v108 = vunpack.c.l.b16 %v63
  %v109 = vunpack.c.l.b16 %v64
  %v110 = vunpack.c.l.b16 %v65
  %v111 = vunpack.c.l.b16 %v66
  %v112 = vunpack.c.l.b16 %v67
  %v113 = vunpack.c.l.b16 %v68
  %v114 = vunpack.c.l.b16 %v69
  %v115 = vunpack.c.l.b16 %v70
  %v116 = vunpack.c.l.b16 %v71
  %v117 = vunpack.c.l.b16 %v72
  %v118 = vunpack.c.l.b16 %v73
  %v119 = vunpack.c.l.b16 %v74
  %v120 = vunpack.c.l.b16 %v75
  %v121 = vpack.c.b16 %v106, %v105
  %v122 = vpack.c.b16 %v108, %v107
  %v123 = vpack.c.b16 %v110, %v109
  %v124 = vpack.c.b16 %v112, %v111
  %v125 = vpack.c.b16 %v114, %v113
  %v126 = vpack.c.b16 %v116, %v115
  %v127 = vpack.c.b16 %v118, %v117
  %v128 = vpack.c.b16 %v120, %v119
  %v135 = vunpack.c.l.b16 %v76
  %v136 = vunpack.c.l.b16 %v77
  %v137 = vunpack.c.l.b16 %v78
  %v138 = vunpack.c.l.b16 %v79
  %v139 = vunpack.c.l.b16 %v80
  %v140 = vunpack.c.l.b16 %v81
  %v141 = vpack.c.b16 %v136, %v135
  %v142 = vpack.c.b16 %v138, %v137
  %v143 = vpack.c.b16 %v140, %v139
  %vm147 = vcmask 392192
  %v149 = vsel %vm147, %v121, 0
  %v152 = vsel %vm147, %v122, 0
  %v155 = vsel %vm147, %v123, 0
  %v158 = vsel %vm147, %v124, 0
  %v161 = vsel %vm147, %v125, 0
  %v164 = vsel %vm147, %v126, 0
  %v167 = vsel %vm147, %v127, 0
  %v170 = vsel %vm147, %v128, 0
  %172 = vmatprep.subr.bf16.mxu0 0
  %173 = vmatpush1.bf16.msra.mxu0 0
  %174 = vmatprep.subr.bf16.mxu0 0
  %175 = vmatpush1.bf16.msra.mxu0 0
  %176 = vmatprep.subr.bf16.mxu0 0
  %177 = vmatpush1.bf16.msra.mxu0 0
  %178 = vmatprep.subr.bf16.mxu0 0
  %179 = vmatpush1.bf16.msra.mxu0 0
  %180 = vmatprep.subr.bf16.mxu0 0
  %181 = vmatpush1.bf16.msra.mxu0 0
  %182 = vmatprep.subr.bf16.mxu0 0
  %183 = vmatpush1.bf16.msra.mxu0 %v143
  %184 = vmatprep.subr.bf16.mxu0 0
  %185 = vmatpush1.bf16.msra.mxu0 %v142
  %186 = vmatprep.subr.bf16.mxu0 0
  %187 = vmatpush1.bf16.msra.mxu0 %v141
  %188 = vmatprep.subr.bf16.mxu0 0
  %189 = vmatpush2.bf16.msra.mxu0 0
  %190 = vmatprep.subr.bf16.mxu0 0
  %191 = vmatpush2.bf16.msra.mxu0 0
  %192 = vmatprep.subr.bf16.mxu0 0
  %193 = vmatpush2.bf16.msra.mxu0 0
  %194 = vmatprep.subr.bf16.mxu0 0
  %195 = vmatpush2.bf16.msra.mxu0 0
  %196 = vmatprep.subr.bf16.mxu0 0
  %197 = vmatpush2.bf16.msra.mxu0 0
  %198 = vmatprep.subr.bf16.mxu0 0
  %199 = vmatpush2.bf16.msra.mxu0 0
  %200 = vmatprep.subr.bf16.mxu0 0
  %201 = vmatpush2.bf16.msra.mxu0 0
  %202 = vmatprep.subr.bf16.mxu0 0
  %203 = vmatpush2.bf16.msra.mxu0 0
  %204 = vmatprep.mubr.bf16.mxu0 0
  %205 = vmatmul.mubr.bf16.gmra.mxu0 %v149
  %v206 = vpop.f32.mrf.mxu0
  %v207 = vadd.f32 %v87, %v206
  %v208 = vpop.f32.mrf.mxu0
  %v209 = vpop.f32.mrf.mxu0
  %v210 = vadd.f32 %v87, %v209
  %v211 = vpop.f32.mrf.mxu0
  %212 = vmatprep.mubr.bf16.mxu0 0
  %213 = vmatmul.mubr.bf16.gmra.mxu0 %v152
  %v214 = vpop.f32.mrf.mxu0
  %v215 = vadd.f32 %v87, %v214
  %v216 = vpop.f32.mrf.mxu0
  %v217 = vpop.f32.mrf.mxu0
  %v218 = vadd.f32 %v87, %v217
  %v219 = vpop.f32.mrf.mxu0
  %220 = vmatprep.mubr.bf16.mxu0 0
  %221 = vmatmul.mubr.bf16.gmra.mxu0 %v155
  %v222 = vpop.f32.mrf.mxu0
  %v223 = vadd.f32 %v87, %v222
  %v224 = vpop.f32.mrf.mxu0
  %v225 = vpop.f32.mrf.mxu0
  %v226 = vadd.f32 %v87, %v225
  %v227 = vpop.f32.mrf.mxu0
  %228 = vmatprep.mubr.bf16.mxu0 0
  %229 = vmatmul.mubr.bf16.gmra.mxu0 %v158
  %v230 = vpop.f32.mrf.mxu0
  %v231 = vadd.f32 %v87, %v230
  %v232 = vpop.f32.mrf.mxu0
  %v233 = vpop.f32.mrf.mxu0
  %v234 = vadd.f32 %v87, %v233
  %v235 = vpop.f32.mrf.mxu0
  %236 = vmatprep.mubr.bf16.mxu0 0
  %237 = vmatmul.mubr.bf16.gmra.mxu0 %v161
  %v238 = vpop.f32.mrf.mxu0
  %v239 = vadd.f32 %v87, %v238
  %v240 = vpop.f32.mrf.mxu0
  %v241 = vpop.f32.mrf.mxu0
  %v242 = vadd.f32 %v87, %v241
  %v243 = vpop.f32.mrf.mxu0
  %244 = vmatprep.mubr.bf16.mxu0 0
  %245 = vmatmul.mubr.bf16.gmra.mxu0 %v164
  %v246 = vpop.f32.mrf.mxu0
  %v247 = vadd.f32 %v87, %v246
  %v248 = vpop.f32.mrf.mxu0
  %v249 = vpop.f32.mrf.mxu0
  %v250 = vadd.f32 %v87, %v249
  %v251 = vpop.f32.mrf.mxu0
  %252 = vmatprep.mubr.bf16.mxu0 0
  %253 = vmatmul.mubr.bf16.gmra.mxu0 %v167
  %v254 = vpop.f32.mrf.mxu0
  %v255 = vadd.f32 %v87, %v254
  %v256 = vpop.f32.mrf.mxu0
  %v257 = vpop.f32.mrf.mxu0
  %v258 = vadd.f32 %v87, %v257
  %v259 = vpop.f32.mrf.mxu0
  %260 = vmatprep.mubr.bf16.mxu0 0
  %261 = vmatmul.mubr.bf16.gmra.mxu0 %v170
  %v262 = vpop.f32.mrf.mxu0
  %v263 = vadd.f32 %v87, %v262
  %v264 = vpop.f32.mrf.mxu0
  %v265 = vpop.f32.mrf.mxu0
  %v266 = vadd.f32 %v87, %v265
  %v267 = vpop.f32.mrf.mxu0
  %268 = vdwg.mxu0
  %v269 = vmax.f32 %v207, 0.0
  %v270 = vmax.f32 %v210, 0.0
  %v271 = vmax.f32 %v215, 0.0
  %v272 = vmax.f32 %v218, 0.0
  %v273 = vmax.f32 %v223, 0.0
  %v274 = vmax.f32 %v226, 0.0
  %v275 = vmax.f32 %v231, 0.0
  %v276 = vmax.f32 %v234, 0.0
  %v277 = vmax.f32 %v239, 0.0
  %v278 = vmax.f32 %v242, 0.0
  %v279 = vmax.f32 %v247, 0.0
  %v280 = vmax.f32 %v250, 0.0
  %v281 = vmax.f32 %v255, 0.0
  %v282 = vmax.f32 %v258, 0.0
  %v283 = vmax.f32 %v263, 0.0
  %v284 = vmax.f32 %v266, 0.0
  %v285 = vpack.c.bf16 %v270, %v269
  %v286 = vpack.c.bf16 %v272, %v271
  %v287 = vpack.c.bf16 %v274, %v273
  %v288 = vpack.c.bf16 %v276, %v275
  %v289 = vpack.c.bf16 %v278, %v277
  %v290 = vpack.c.bf16 %v280, %v279
  %v291 = vpack.c.bf16 %v282, %v281
  %v292 = vpack.c.bf16 %v284, %v283
  %v293 = vld [vmem:[%s3] sm:$0xf]
  %v294 = vld [vmem:[%s3 + $0x4] sm:$0xf]
  %v295 = vld [vmem:[%s3 + $0x8] sm:$0xf]
  %v296 = vld [vmem:[%s3 + $0xc] sm:$0xf]
  %v297 = vld [vmem:[%s3 + $0x10] sm:$0xf]
  %v298 = vld [vmem:[%s3 + $0x14] sm:$0xf]
  %v299 = vld [vmem:[%s3 + $0x18] sm:$0xf]
  %v300 = vld [vmem:[%s3 + $0x1c] sm:$0xf]
  %v301 = vld [vmem:[%s3 + $0x20] sm:$0xf]
  %v302 = vld [vmem:[%s3 + $0x24] sm:$0xf]
  %v303 = vld [vmem:[%s3 + $0x28] sm:$0xf]
  %v304 = vld [vmem:[%s3 + $0x2c] sm:$0xf]
  %v305 = vld [vmem:[%s3 + $0x30] sm:$0xf]
  %v306 = vld [vmem:[%s3 + $0x34] sm:$0xf]
  %v307 = vld [vmem:[%s3 + $0x38] sm:$0xf]
  %v308 = vld [vmem:[%s3 + $0x3c] sm:$0xf]
  %v309 = vld [vmem:[%s3 + $0x40] sm:$0xf]
  %v310 = vld [vmem:[%s3 + $0x44] sm:$0xf]
  %v311 = vld [vmem:[%s3 + $0x48] sm:$0xf]
  %v312 = vld [vmem:[%s3 + $0x4c] sm:$0xf]
  %v313 = vld [vmem:[%s3 + $0x50] sm:$0xf]
  %v314 = vld [vmem:[%s3 + $0x54] sm:$0xf]
  %v315 = vld [vmem:[%s3 + $0x58] sm:$0xf]
  %v316 = vld [vmem:[%s3 + $0x5c] sm:$0xf]
  %v317 = vld [vmem:[%s3 + $0x60] sm:$0xf]
  %v318 = vld [vmem:[%s3 + $0x64] sm:$0xf]
  %v319 = vld [vmem:[%s3 + $0x68] sm:$0xf]
  %v320 = vld [vmem:[%s3 + $0x6c] sm:$0xf]
  %v321 = vld [vmem:[%s3 + $0x70] sm:$0xf]
  %v322 = vld [vmem:[%s3 + $0x74] sm:$0xf]
  %v323 = vld [vmem:[%s3 + $0x78] sm:$0xf]
  %v324 = vld [vmem:[%s3 + $0x7c] sm:$0xf]
  %v325 = vld [vmem:[%s3 + $0x80] sm:$0xf]
  %v326 = vld [vmem:[%s3 + $0x84] sm:$0xf]
  %v327 = vld [vmem:[%s3 + $0x88] sm:$0xf]
  %v328 = vld [vmem:[%s3 + $0x8c] sm:$0xf]
  %v329 = vld [vmem:[%s3 + $0x90] sm:$0xf]
  %v330 = vld [vmem:[%s3 + $0x94] sm:$0xf]
  %v331 = vld [vmem:[%s3 + $0x98] sm:$0xf]
  %v332 = vld [vmem:[%s3 + $0x9c] sm:$0xf]
  %v333 = vld [vmem:[%s3 + $0xa0] sm:$0xf]
  %v334 = vld [vmem:[%s3 + $0xa4] sm:$0xf]
  %v335 = vld [vmem:[%s3 + $0xa8] sm:$0xf]
  %v336 = vld [vmem:[%s3 + $0xac] sm:$0xf]
  %v337 = vld [vmem:[%s3 + $0xb0] sm:$0xf]
  %v338 = vld [vmem:[%s3 + $0xb4] sm:$0xf]
  %v339 = vld [vmem:[%s3 + $0xb8] sm:$0xf]
  %v340 = vld [vmem:[%s3 + $0xbc] sm:$0xf]
  %v341 = vld [vmem:[%s3 + $0xc0] sm:$0xf]
  %v342 = vld [vmem:[%s3 + $0xc4] sm:$0xf]
  %v343 = vld [vmem:[%s3 + $0xc8] sm:$0xf]
  %v344 = vld [vmem:[%s3 + $0xcc] sm:$0xf]
  %v345 = vld [vmem:[%s3 + $0xd0] sm:$0xf]
  %v346 = vld [vmem:[%s3 + $0xd4] sm:$0xf]
  %v347 = vld [vmem:[%s3 + $0xd8] sm:$0xf]
  %v348 = vld [vmem:[%s3 + $0xdc] sm:$0xf]
  %v349 = vld [vmem:[%s3 + $0xe0] sm:$0xf]
  %v350 = vld [vmem:[%s3 + $0xe4] sm:$0xf]
  %v351 = vld [vmem:[%s3 + $0xe8] sm:$0xf]
  %v352 = vld [vmem:[%s3 + $0xec] sm:$0xf]
  %v353 = vld [vmem:[%s3 + $0xf0] sm:$0xf]
  %v354 = vld [vmem:[%s3 + $0xf4] sm:$0xf]
  %v355 = vld [vmem:[%s3 + $0xf8] sm:$0xf]
  %v356 = vld [vmem:[%s3 + $0xfc] sm:$0xf]
  %v421 = vunpack.c.l.b16 %v293
  %v422 = vunpack.c.l.b16 %v294
  %v423 = vunpack.c.l.b16 %v295
  %v424 = vunpack.c.l.b16 %v296
  %v425 = vunpack.c.l.b16 %v297
  %v426 = vunpack.c.l.b16 %v298
  %v427 = vunpack.c.l.b16 %v299
  %v428 = vunpack.c.l.b16 %v300
  %v429 = vunpack.c.l.b16 %v301
  %v430 = vunpack.c.l.b16 %v302
  %v431 = vunpack.c.l.b16 %v303
  %v432 = vunpack.c.l.b16 %v304
  %v433 = vunpack.c.l.b16 %v305
  %v434 = vunpack.c.l.b16 %v306
  %v435 = vunpack.c.l.b16 %v307
  %v436 = vunpack.c.l.b16 %v308
  %v437 = vunpack.c.l.b16 %v309
  %v438 = vunpack.c.l.b16 %v310
  %v439 = vunpack.c.l.b16 %v311
  %v440 = vunpack.c.l.b16 %v312
  %v441 = vunpack.c.l.b16 %v313
  %v442 = vunpack.c.l.b16 %v314
  %v443 = vunpack.c.l.b16 %v315
  %v444 = vunpack.c.l.b16 %v316
  %v445 = vunpack.c.l.b16 %v317
  %v446 = vunpack.c.l.b16 %v318
  %v447 = vunpack.c.l.b16 %v319
  %v448 = vunpack.c.l.b16 %v320
  %v449 = vunpack.c.l.b16 %v321
  %v450 = vunpack.c.l.b16 %v322
  %v451 = vunpack.c.l.b16 %v323
  %v452 = vunpack.c.l.b16 %v324
  %v453 = vunpack.c.l.b16 %v325
  %v454 = vunpack.c.l.b16 %v326
  %v455 = vunpack.c.l.b16 %v327
  %v456 = vunpack.c.l.b16 %v328
  %v457 = vunpack.c.l.b16 %v329
  %v458 = vunpack.c.l.b16 %v330
  %v459 = vunpack.c.l.b16 %v331
  %v460 = vunpack.c.l.b16 %v332
  %v461 = vunpack.c.l.b16 %v333
  %v462 = vunpack.c.l.b16 %v334
  %v463 = vunpack.c.l.b16 %v335
  %v464 = vunpack.c.l.b16 %v336
  %v465 = vunpack.c.l.b16 %v337
  %v466 = vunpack.c.l.b16 %v338
  %v467 = vunpack.c.l.b16 %v339
  %v468 = vunpack.c.l.b16 %v340
  %v469 = vunpack.c.l.b16 %v341
  %v470 = vunpack.c.l.b16 %v342
  %v471 = vunpack.c.l.b16 %v343
  %v472 = vunpack.c.l.b16 %v344
  %v473 = vunpack.c.l.b16 %v345
  %v474 = vunpack.c.l.b16 %v346
  %v475 = vunpack.c.l.b16 %v347
  %v476 = vunpack.c.l.b16 %v348
  %v477 = vunpack.c.l.b16 %v349
  %v478 = vunpack.c.l.b16 %v350
  %v479 = vunpack.c.l.b16 %v351
  %v480 = vunpack.c.l.b16 %v352
  %v481 = vunpack.c.l.b16 %v353
  %v482 = vunpack.c.l.b16 %v354
  %v483 = vunpack.c.l.b16 %v355
  %v484 = vunpack.c.l.b16 %v356
  %v485 = vpack.c.b16 %v422, %v421
  %v486 = vpack.c.b16 %v424, %v423
  %v487 = vpack.c.b16 %v426, %v425
  %v488 = vpack.c.b16 %v428, %v427
  %v489 = vpack.c.b16 %v430, %v429
  %v490 = vpack.c.b16 %v432, %v431
  %v491 = vpack.c.b16 %v434, %v433
  %v492 = vpack.c.b16 %v436, %v435
  %v493 = vpack.c.b16 %v438, %v437
  %v494 = vpack.c.b16 %v440, %v439
  %v495 = vpack.c.b16 %v442, %v441
  %v496 = vpack.c.b16 %v444, %v443
  %v497 = vpack.c.b16 %v446, %v445
  %v498 = vpack.c.b16 %v448, %v447
  %v499 = vpack.c.b16 %v450, %v449
  %v500 = vpack.c.b16 %v452, %v451
  %v501 = vpack.c.b16 %v454, %v453
  %v502 = vpack.c.b16 %v456, %v455
  %v503 = vpack.c.b16 %v458, %v457
  %v504 = vpack.c.b16 %v460, %v459
  %v505 = vpack.c.b16 %v462, %v461
  %v506 = vpack.c.b16 %v464, %v463
  %v507 = vpack.c.b16 %v466, %v465
  %v508 = vpack.c.b16 %v468, %v467
  %v509 = vpack.c.b16 %v470, %v469
  %v510 = vpack.c.b16 %v472, %v471
  %v511 = vpack.c.b16 %v474, %v473
  %v512 = vpack.c.b16 %v476, %v475
  %v513 = vpack.c.b16 %v478, %v477
  %v514 = vpack.c.b16 %v480, %v479
  %v515 = vpack.c.b16 %v482, %v481
  %v516 = vpack.c.b16 %v484, %v483
  %549 = vmatprep.subr.bf16.mxu0 0
  %550 = vmatpush1.bf16.msra.mxu0 %v292
  %551 = vmatprep.subr.bf16.mxu0 0
  %552 = vmatpush1.bf16.msra.mxu0 %v291
  %553 = vmatprep.subr.bf16.mxu0 0
  %554 = vmatpush1.bf16.msra.mxu0 %v290
  %555 = vmatprep.subr.bf16.mxu0 0
  %556 = vmatpush1.bf16.msra.mxu0 %v289
  %557 = vmatprep.subr.bf16.mxu0 0
  %558 = vmatpush1.bf16.msra.mxu0 %v288
  %559 = vmatprep.subr.bf16.mxu0 0
  %560 = vmatpush1.bf16.msra.mxu0 %v287
  %561 = vmatprep.subr.bf16.mxu0 0
  %562 = vmatpush1.bf16.msra.mxu0 %v286
  %563 = vmatprep.subr.bf16.mxu0 0
  %564 = vmatpush1.bf16.msra.mxu0 %v285
  %565 = vmatprep.subr.bf16.mxu0 0
  %566 = vmatpush2.bf16.msra.mxu0 0
  %567 = vmatprep.subr.bf16.mxu0 0
  %568 = vmatpush2.bf16.msra.mxu0 0
  %569 = vmatprep.subr.bf16.mxu0 0
  %570 = vmatpush2.bf16.msra.mxu0 0
  %571 = vmatprep.subr.bf16.mxu0 0
  %572 = vmatpush2.bf16.msra.mxu0 0
  %573 = vmatprep.subr.bf16.mxu0 0
  %574 = vmatpush2.bf16.msra.mxu0 0
  %575 = vmatprep.subr.bf16.mxu0 0
  %576 = vmatpush2.bf16.msra.mxu0 0
  %577 = vmatprep.subr.bf16.mxu0 0
  %578 = vmatpush2.bf16.msra.mxu0 0
  %579 = vmatprep.subr.bf16.mxu0 0
  %580 = vmatpush2.bf16.msra.mxu0 0
  %581 = vmatprep.mubr.bf16.mxu0 0
  %582 = vmatmul.mubr.bf16.gmra.mxu0 %v485
  %v583 = vpop.f32.mrf.mxu0
  %v584 = vadd.f32 0.0, %v583
  %v585 = vpop.f32.mrf.mxu0
  %v586 = vpop.f32.mrf.mxu0
  %v587 = vadd.f32 0.0, %v586
  %v588 = vpop.f32.mrf.mxu0
  %589 = vmatprep.mubr.bf16.mxu0 0
  %590 = vmatmul.mubr.bf16.gmra.mxu0 %v486
  %v591 = vpop.f32.mrf.mxu0
  %v592 = vadd.f32 0.0, %v591
  %v593 = vpop.f32.mrf.mxu0
  %v594 = vpop.f32.mrf.mxu0
  %v595 = vadd.f32 0.0, %v594
  %v596 = vpop.f32.mrf.mxu0
  %597 = vmatprep.mubr.bf16.mxu0 0
  %598 = vmatmul.mubr.bf16.gmra.mxu0 %v487
  %v599 = vpop.f32.mrf.mxu0
  %v600 = vadd.f32 0.0, %v599
  %v601 = vpop.f32.mrf.mxu0
  %v602 = vpop.f32.mrf.mxu0
  %v603 = vadd.f32 0.0, %v602
  %v604 = vpop.f32.mrf.mxu0
  %605 = vmatprep.mubr.bf16.mxu0 0
  %606 = vmatmul.mubr.bf16.gmra.mxu0 %v488
  %v607 = vpop.f32.mrf.mxu0
  %v608 = vadd.f32 0.0, %v607
  %v609 = vpop.f32.mrf.mxu0
  %v610 = vpop.f32.mrf.mxu0
  %v611 = vadd.f32 0.0, %v610
  %v612 = vpop.f32.mrf.mxu0
  %613 = vmatprep.mubr.bf16.mxu0 0
  %614 = vmatmul.mubr.bf16.gmra.mxu0 %v489
  %v615 = vpop.f32.mrf.mxu0
  %v616 = vadd.f32 0.0, %v615
  %v617 = vpop.f32.mrf.mxu0
  %v618 = vpop.f32.mrf.mxu0
  %v619 = vadd.f32 0.0, %v618
  %v620 = vpop.f32.mrf.mxu0
  %621 = vmatprep.mubr.bf16.mxu0 0
  %622 = vmatmul.mubr.bf16.gmra.mxu0 %v490
  %v623 = vpop.f32.mrf.mxu0
  %v624 = vadd.f32 0.0, %v623
  %v625 = vpop.f32.mrf.mxu0
  %v626 = vpop.f32.mrf.mxu0
  %v627 = vadd.f32 0.0, %v626
  %v628 = vpop.f32.mrf.mxu0
  %629 = vmatprep.mubr.bf16.mxu0 0
  %630 = vmatmul.mubr.bf16.gmra.mxu0 %v491
  %v631 = vpop.f32.mrf.mxu0
  %v632 = vadd.f32 0.0, %v631
  %v633 = vpop.f32.mrf.mxu0
  %v634 = vpop.f32.mrf.mxu0
  %v635 = vadd.f32 0.0, %v634
  %v636 = vpop.f32.mrf.mxu0
  %637 = vmatprep.mubr.bf16.mxu0 0
  %638 = vmatmul.mubr.bf16.gmra.mxu0 %v492
  %v639 = vpop.f32.mrf.mxu0
  %v640 = vadd.f32 0.0, %v639
  %v641 = vpop.f32.mrf.mxu0
  %v642 = vpop.f32.mrf.mxu0
  %v643 = vadd.f32 0.0, %v642
  %v644 = vpop.f32.mrf.mxu0
  %645 = vmatprep.mubr.bf16.mxu0 0
  %646 = vmatmul.mubr.bf16.gmra.mxu0 %v493
  %v647 = vpop.f32.mrf.mxu0
  %v648 = vadd.f32 0.0, %v647
  %v649 = vpop.f32.mrf.mxu0
  %v650 = vpop.f32.mrf.mxu0
  %v651 = vadd.f32 0.0, %v650
  %v652 = vpop.f32.mrf.mxu0
  %653 = vmatprep.mubr.bf16.mxu0 0
  %654 = vmatmul.mubr.bf16.gmra.mxu0 %v494
  %v655 = vpop.f32.mrf.mxu0
  %v656 = vadd.f32 0.0, %v655
  %v657 = vpop.f32.mrf.mxu0
  %v658 = vpop.f32.mrf.mxu0
  %v659 = vadd.f32 0.0, %v658
  %v660 = vpop.f32.mrf.mxu0
  %661 = vmatprep.mubr.bf16.mxu0 0
  %662 = vmatmul.mubr.bf16.gmra.mxu0 %v495
  %v663 = vpop.f32.mrf.mxu0
  %v664 = vadd.f32 0.0, %v663
  %v665 = vpop.f32.mrf.mxu0
  %v666 = vpop.f32.mrf.mxu0
  %v667 = vadd.f32 0.0, %v666
  %v668 = vpop.f32.mrf.mxu0
  %669 = vmatprep.mubr.bf16.mxu0 0
  %670 = vmatmul.mubr.bf16.gmra.mxu0 %v496
  %v671 = vpop.f32.mrf.mxu0
  %v672 = vadd.f32 0.0, %v671
  %v673 = vpop.f32.mrf.mxu0
  %v674 = vpop.f32.mrf.mxu0
  %v675 = vadd.f32 0.0, %v674
  %v676 = vpop.f32.mrf.mxu0
  %677 = vmatprep.mubr.bf16.mxu0 0
  %678 = vmatmul.mubr.bf16.gmra.mxu0 %v497
  %v679 = vpop.f32.mrf.mxu0
  %v680 = vadd.f32 0.0, %v679
  %v681 = vpop.f32.mrf.mxu0
  %v682 = vpop.f32.mrf.mxu0
  %v683 = vadd.f32 0.0, %v682
  %v684 = vpop.f32.mrf.mxu0
  %685 = vmatprep.mubr.bf16.mxu0 0
  %686 = vmatmul.mubr.bf16.gmra.mxu0 %v498
  %v687 = vpop.f32.mrf.mxu0
  %v688 = vadd.f32 0.0, %v687
  %v689 = vpop.f32.mrf.mxu0
  %v690 = vpop.f32.mrf.mxu0
  %v691 = vadd.f32 0.0, %v690
  %v692 = vpop.f32.mrf.mxu0
  %693 = vmatprep.mubr.bf16.mxu0 0
  %694 = vmatmul.mubr.bf16.gmra.mxu0 %v499
  %v695 = vpop.f32.mrf.mxu0
  %v696 = vadd.f32 0.0, %v695
  %v697 = vpop.f32.mrf.mxu0
  %v698 = vpop.f32.mrf.mxu0
  %v699 = vadd.f32 0.0, %v698
  %v700 = vpop.f32.mrf.mxu0
  %701 = vmatprep.mubr.bf16.mxu0 0
  %702 = vmatmul.mubr.bf16.gmra.mxu0 %v500
  %v703 = vpop.f32.mrf.mxu0
  %v704 = vadd.f32 0.0, %v703
  %v705 = vpop.f32.mrf.mxu0
  %v706 = vpop.f32.mrf.mxu0
  %v707 = vadd.f32 0.0, %v706
  %v708 = vpop.f32.mrf.mxu0
  %709 = vmatprep.mubr.bf16.mxu0 0
  %710 = vmatmul.mubr.bf16.gmra.mxu0 %v501
  %v711 = vpop.f32.mrf.mxu0
  %v712 = vadd.f32 0.0, %v711
  %v713 = vpop.f32.mrf.mxu0
  %v714 = vpop.f32.mrf.mxu0
  %v715 = vadd.f32 0.0, %v714
  %v716 = vpop.f32.mrf.mxu0
  %717 = vmatprep.mubr.bf16.mxu0 0
  %718 = vmatmul.mubr.bf16.gmra.mxu0 %v502
  %v719 = vpop.f32.mrf.mxu0
  %v720 = vadd.f32 0.0, %v719
  %v721 = vpop.f32.mrf.mxu0
  %v722 = vpop.f32.mrf.mxu0
  %v723 = vadd.f32 0.0, %v722
  %v724 = vpop.f32.mrf.mxu0
  %725 = vmatprep.mubr.bf16.mxu0 0
  %726 = vmatmul.mubr.bf16.gmra.mxu0 %v503
  %v727 = vpop.f32.mrf.mxu0
  %v728 = vadd.f32 0.0, %v727
  %v729 = vpop.f32.mrf.mxu0
  %v730 = vpop.f32.mrf.mxu0
  %v731 = vadd.f32 0.0, %v730
  %v732 = vpop.f32.mrf.mxu0
  %733 = vmatprep.mubr.bf16.mxu0 0
  %734 = vmatmul.mubr.bf16.gmra.mxu0 %v504
  %v735 = vpop.f32.mrf.mxu0
  %v736 = vadd.f32 0.0, %v735
  %v737 = vpop.f32.mrf.mxu0
  %v738 = vpop.f32.mrf.mxu0
  %v739 = vadd.f32 0.0, %v738
  %v740 = vpop.f32.mrf.mxu0
  %741 = vmatprep.mubr.bf16.mxu0 0
  %742 = vmatmul.mubr.bf16.gmra.mxu0 %v505
  %v743 = vpop.f32.mrf.mxu0
  %v744 = vadd.f32 0.0, %v743
  %v745 = vpop.f32.mrf.mxu0
  %v746 = vpop.f32.mrf.mxu0
  %v747 = vadd.f32 0.0, %v746
  %v748 = vpop.f32.mrf.mxu0
  %749 = vmatprep.mubr.bf16.mxu0 0
  %750 = vmatmul.mubr.bf16.gmra.mxu0 %v506
  %v751 = vpop.f32.mrf.mxu0
  %v752 = vadd.f32 0.0, %v751
  %v753 = vpop.f32.mrf.mxu0
  %v754 = vpop.f32.mrf.mxu0
  %v755 = vadd.f32 0.0, %v754
  %v756 = vpop.f32.mrf.mxu0
  %757 = vmatprep.mubr.bf16.mxu0 0
  %758 = vmatmul.mubr.bf16.gmra.mxu0 %v507
  %v759 = vpop.f32.mrf.mxu0
  %v760 = vadd.f32 0.0, %v759
  %v761 = vpop.f32.mrf.mxu0
  %v762 = vpop.f32.mrf.mxu0
  %v763 = vadd.f32 0.0, %v762
  %v764 = vpop.f32.mrf.mxu0
  %765 = vmatprep.mubr.bf16.mxu0 0
  %766 = vmatmul.mubr.bf16.gmra.mxu0 %v508
  %v767 = vpop.f32.mrf.mxu0
  %v768 = vadd.f32 0.0, %v767
  %v769 = vpop.f32.mrf.mxu0
  %v770 = vpop.f32.mrf.mxu0
  %v771 = vadd.f32 0.0, %v770
  %v772 = vpop.f32.mrf.mxu0
  %773 = vmatprep.mubr.bf16.mxu0 0
  %774 = vmatmul.mubr.bf16.gmra.mxu0 %v509
  %v775 = vpop.f32.mrf.mxu0
  %v776 = vadd.f32 0.0, %v775
  %v777 = vpop.f32.mrf.mxu0
  %v778 = vpop.f32.mrf.mxu0
  %v779 = vadd.f32 0.0, %v778
  %v780 = vpop.f32.mrf.mxu0
  %781 = vmatprep.mubr.bf16.mxu0 0
  %782 = vmatmul.mubr.bf16.gmra.mxu0 %v510
  %v783 = vpop.f32.mrf.mxu0
  %v784 = vadd.f32 0.0, %v783
  %v785 = vpop.f32.mrf.mxu0
  %v786 = vpop.f32.mrf.mxu0
  %v787 = vadd.f32 0.0, %v786
  %v788 = vpop.f32.mrf.mxu0
  %789 = vmatprep.mubr.bf16.mxu0 0
  %790 = vmatmul.mubr.bf16.gmra.mxu0 %v511
  %v791 = vpop.f32.mrf.mxu0
  %v792 = vadd.f32 0.0, %v791
  %v793 = vpop.f32.mrf.mxu0
  %v794 = vpop.f32.mrf.mxu0
  %v795 = vadd.f32 0.0, %v794
  %v796 = vpop.f32.mrf.mxu0
  %797 = vmatprep.mubr.bf16.mxu0 0
  %798 = vmatmul.mubr.bf16.gmra.mxu0 %v512
  %v799 = vpop.f32.mrf.mxu0
  %v800 = vadd.f32 0.0, %v799
  %v801 = vpop.f32.mrf.mxu0
  %v802 = vpop.f32.mrf.mxu0
  %v803 = vadd.f32 0.0, %v802
  %v804 = vpop.f32.mrf.mxu0
  %805 = vmatprep.mubr.bf16.mxu0 0
  %806 = vmatmul.mubr.bf16.gmra.mxu0 %v513
  %v807 = vpop.f32.mrf.mxu0
  %v808 = vadd.f32 0.0, %v807
  %v809 = vpop.f32.mrf.mxu0
  %v810 = vpop.f32.mrf.mxu0
  %v811 = vadd.f32 0.0, %v810
  %v812 = vpop.f32.mrf.mxu0
  %813 = vmatprep.mubr.bf16.mxu0 0
  %814 = vmatmul.mubr.bf16.gmra.mxu0 %v514
  %v815 = vpop.f32.mrf.mxu0
  %v816 = vadd.f32 0.0, %v815
  %v817 = vpop.f32.mrf.mxu0
  %v818 = vpop.f32.mrf.mxu0
  %v819 = vadd.f32 0.0, %v818
  %v820 = vpop.f32.mrf.mxu0
  %821 = vmatprep.mubr.bf16.mxu0 0
  %822 = vmatmul.mubr.bf16.gmra.mxu0 %v515
  %v823 = vpop.f32.mrf.mxu0
  %v824 = vadd.f32 0.0, %v823
  %v825 = vpop.f32.mrf.mxu0
  %v826 = vpop.f32.mrf.mxu0
  %v827 = vadd.f32 0.0, %v826
  %v828 = vpop.f32.mrf.mxu0
  %829 = vmatprep.mubr.bf16.mxu0 0
  %830 = vmatmul.mubr.bf16.gmra.mxu0 %v516
  %v831 = vpop.f32.mrf.mxu0
  %v832 = vadd.f32 0.0, %v831
  %v833 = vpop.f32.mrf.mxu0
  %v834 = vpop.f32.mrf.mxu0
  %v835 = vadd.f32 0.0, %v834
  %v836 = vpop.f32.mrf.mxu0
  %837 = vdwg.mxu0
  %v838 = vpack.c.bf16 %v587, %v584
  %v839 = vpack.c.bf16 %v595, %v592
  %v840 = vld [vmem:[%s4] sm:$0xf]
  %v841 = vld [vmem:[%s4 + $0x4] sm:$0xf]
  %v842 = vld [vmem:[%s4 + $0x8] sm:$0xf]
  %v843 = vld [vmem:[%s4 + $0xc] sm:$0xf]
  %v844 = vld [vmem:[%s4 + $0x10] sm:$0xf]
  %v845 = vld [vmem:[%s4 + $0x14] sm:$0xf]
  %v846 = vld [vmem:[%s4 + $0x18] sm:$0xf]
  %v847 = vld [vmem:[%s4 + $0x1c] sm:$0xf]
  %v848 = vpack.c.bf16 %v603, %v600
  %v849 = vpack.c.bf16 %v611, %v608
  %s850 = scalar_lea.vmem %s4, 32
  %v851 = vld [vmem:[%s850] sm:$0xf]
  %v852 = vld [vmem:[%s850 + $0x4] sm:$0xf]
  %v853 = vld [vmem:[%s850 + $0x8] sm:$0xf]
  %v854 = vld [vmem:[%s850 + $0xc] sm:$0xf]
  %v855 = vld [vmem:[%s850 + $0x10] sm:$0xf]
  %v856 = vld [vmem:[%s850 + $0x14] sm:$0xf]
  %v857 = vld [vmem:[%s850 + $0x18] sm:$0xf]
  %v858 = vld [vmem:[%s850 + $0x1c] sm:$0xf]
  %v867 = vunpack.c.l.b16 %v851
  %v868 = vunpack.c.l.b16 %v852
  %v869 = vunpack.c.l.b16 %v853
  %v870 = vunpack.c.l.b16 %v854
  %v871 = vunpack.c.l.b16 %v855
  %v872 = vunpack.c.l.b16 %v856
  %v873 = vunpack.c.l.b16 %v857
  %v874 = vunpack.c.l.b16 %v858
  %v875 = vpack.c.b16 %v868, %v867
  %v876 = vpack.c.b16 %v870, %v869
  %v877 = vpack.c.b16 %v872, %v871
  %v878 = vpack.c.b16 %v874, %v873
  %vm883 = vcmask 523264
  %v885 = vsel %vm883, %v848, 0
  %v888 = vsel %vm883, %v849, 0
  %890 = vmatprep.subr.bf16.mxu0 0
  %891 = vmatpush1.bf16.msra.mxu0 0
  %892 = vmatprep.subr.bf16.mxu0 0
  %893 = vmatpush1.bf16.msra.mxu0 0
  %894 = vmatprep.subr.bf16.mxu0 0
  %895 = vmatpush1.bf16.msra.mxu0 0
  %896 = vmatprep.subr.bf16.mxu0 0
  %897 = vmatpush1.bf16.msra.mxu0 0
  %898 = vmatprep.subr.bf16.mxu0 0
  %899 = vmatpush1.bf16.msra.mxu0 %v878
  %900 = vmatprep.subr.bf16.mxu0 0
  %901 = vmatpush1.bf16.msra.mxu0 %v877
  %902 = vmatprep.subr.bf16.mxu0 0
  %903 = vmatpush1.bf16.msra.mxu0 %v876
  %904 = vmatprep.subr.bf16.mxu0 0
  %905 = vmatpush1.bf16.msra.mxu0 %v875
  %906 = vmatprep.subr.bf16.mxu0 0
  %907 = vmatpush2.bf16.msra.mxu0 0
  %908 = vmatprep.subr.bf16.mxu0 0
  %909 = vmatpush2.bf16.msra.mxu0 0
  %910 = vmatprep.subr.bf16.mxu0 0
  %911 = vmatpush2.bf16.msra.mxu0 0
  %912 = vmatprep.subr.bf16.mxu0 0
  %913 = vmatpush2.bf16.msra.mxu0 0
  %914 = vmatprep.subr.bf16.mxu0 0
  %915 = vmatpush2.bf16.msra.mxu0 0
  %916 = vmatprep.subr.bf16.mxu0 0
  %917 = vmatpush2.bf16.msra.mxu0 0
  %918 = vmatprep.subr.bf16.mxu0 0
  %919 = vmatpush2.bf16.msra.mxu0 0
  %920 = vmatprep.subr.bf16.mxu0 0
  %921 = vmatpush2.bf16.msra.mxu0 0
  %922 = vmatprep.mubr.bf16.mxu0 0
  %923 = vmatmul.mubr.bf16.gmra.mxu0 %v885
  %v924 = vpop.f32.mrf.mxu0
  %v925 = vadd.f32 0.0, %v924
  %v926 = vpop.f32.mrf.mxu0
  %v927 = vpop.f32.mrf.mxu0
  %v928 = vadd.f32 0.0, %v927
  %v929 = vpop.f32.mrf.mxu0
  %930 = vmatprep.mubr.bf16.mxu0 0
  %931 = vmatmul.mubr.bf16.gmra.mxu0 %v888
  %v932 = vpop.f32.mrf.mxu0
  %v933 = vadd.f32 0.0, %v932
  %v934 = vpop.f32.mrf.mxu0
  %v935 = vpop.f32.mrf.mxu0
  %v936 = vadd.f32 0.0, %v935
  %v937 = vpop.f32.mrf.mxu0
  %938 = vdwg.mxu0
  %v947 = vunpack.c.l.b16 %v840
  %v948 = vunpack.c.l.b16 %v841
  %v949 = vunpack.c.l.b16 %v842
  %v950 = vunpack.c.l.b16 %v843
  %v951 = vunpack.c.l.b16 %v844
  %v952 = vunpack.c.l.b16 %v845
  %v953 = vunpack.c.l.b16 %v846
  %v954 = vunpack.c.l.b16 %v847
  %v955 = vpack.c.b16 %v948, %v947
  %v956 = vpack.c.b16 %v950, %v949
  %v957 = vpack.c.b16 %v952, %v951
  %v958 = vpack.c.b16 %v954, %v953
  %v964 = vsel %vm883, %v838, 0
  %v967 = vsel %vm883, %v839, 0
  %969 = vmatprep.subr.bf16.mxu0 0
  %970 = vmatpush1.bf16.msra.mxu0 0
  %971 = vmatprep.subr.bf16.mxu0 0
  %972 = vmatpush1.bf16.msra.mxu0 0
  %973 = vmatprep.subr.bf16.mxu0 0
  %974 = vmatpush1.bf16.msra.mxu0 0
  %975 = vmatprep.subr.bf16.mxu0 0
  %976 = vmatpush1.bf16.msra.mxu0 0
  %977 = vmatprep.subr.bf16.mxu0 0
  %978 = vmatpush1.bf16.msra.mxu0 %v958
  %979 = vmatprep.subr.bf16.mxu0 0
  %980 = vmatpush1.bf16.msra.mxu0 %v957
  %981 = vmatprep.subr.bf16.mxu0 0
  %982 = vmatpush1.bf16.msra.mxu0 %v956
  %983 = vmatprep.subr.bf16.mxu0 0
  %984 = vmatpush1.bf16.msra.mxu0 %v955
  %985 = vmatprep.subr.bf16.mxu0 0
  %986 = vmatpush2.bf16.msra.mxu0 0
  %987 = vmatprep.subr.bf16.mxu0 0
  %988 = vmatpush2.bf16.msra.mxu0 0
  %989 = vmatprep.subr.bf16.mxu0 0
  %990 = vmatpush2.bf16.msra.mxu0 0
  %991 = vmatprep.subr.bf16.mxu0 0
  %992 = vmatpush2.bf16.msra.mxu0 0
  %993 = vmatprep.subr.bf16.mxu0 0
  %994 = vmatpush2.bf16.msra.mxu0 0
  %995 = vmatprep.subr.bf16.mxu0 0
  %996 = vmatpush2.bf16.msra.mxu0 0
  %997 = vmatprep.subr.bf16.mxu0 0
  %998 = vmatpush2.bf16.msra.mxu0 0
  %999 = vmatprep.subr.bf16.mxu0 0
  %1000 = vmatpush2.bf16.msra.mxu0 0
  %1001 = vmatprep.mubr.bf16.mxu0 0
  %1002 = vmatmul.mubr.bf16.gmra.mxu0 %v964
  %v1003 = vpop.f32.mrf.mxu0
  %v1004 = vadd.f32 %v925, %v1003
  %v1005 = vpop.f32.mrf.mxu0
  %v1006 = vpop.f32.mrf.mxu0
  %v1007 = vadd.f32 %v928, %v1006
  %v1008 = vpop.f32.mrf.mxu0
  %1009 = vmatprep.mubr.bf16.mxu0 0
  %1010 = vmatmul.mubr.bf16.gmra.mxu0 %v967
  %v1011 = vpop.f32.mrf.mxu0
  %v1012 = vadd.f32 %v933, %v1011
  %v1013 = vpop.f32.mrf.mxu0
  %v1014 = vpop.f32.mrf.mxu0
  %v1015 = vadd.f32 %v936, %v1014
  %v1016 = vpop.f32.mrf.mxu0
  %1017 = vdwg.mxu0
  %v1018 = vpack.c.bf16 %v619, %v616
  %v1019 = vpack.c.bf16 %v627, %v624
  %s1020 = scalar_lea.vmem %s4, 64
  %v1021 = vld [vmem:[%s1020] sm:$0xf]
  %v1022 = vld [vmem:[%s1020 + $0x4] sm:$0xf]
  %v1023 = vld [vmem:[%s1020 + $0x8] sm:$0xf]
  %v1024 = vld [vmem:[%s1020 + $0xc] sm:$0xf]
  %v1025 = vld [vmem:[%s1020 + $0x10] sm:$0xf]
  %v1026 = vld [vmem:[%s1020 + $0x14] sm:$0xf]
  %v1027 = vld [vmem:[%s1020 + $0x18] sm:$0xf]
  %v1028 = vld [vmem:[%s1020 + $0x1c] sm:$0xf]
  %v1037 = vunpack.c.l.b16 %v1021
  %v1038 = vunpack.c.l.b16 %v1022
  %v1039 = vunpack.c.l.b16 %v1023
  %v1040 = vunpack.c.l.b16 %v1024
  %v1041 = vunpack.c.l.b16 %v1025
  %v1042 = vunpack.c.l.b16 %v1026
  %v1043 = vunpack.c.l.b16 %v1027
  %v1044 = vunpack.c.l.b16 %v1028
  %v1045 = vpack.c.b16 %v1038, %v1037
  %v1046 = vpack.c.b16 %v1040, %v1039
  %v1047 = vpack.c.b16 %v1042, %v1041
  %v1048 = vpack.c.b16 %v1044, %v1043
  %v1054 = vsel %vm883, %v1018, 0
  %v1057 = vsel %vm883, %v1019, 0
  %1059 = vmatprep.subr.bf16.mxu0 0
  %1060 = vmatpush1.bf16.msra.mxu0 0
  %1061 = vmatprep.subr.bf16.mxu0 0
  %1062 = vmatpush1.bf16.msra.mxu0 0
  %1063 = vmatprep.subr.bf16.mxu0 0
  %1064 = vmatpush1.bf16.msra.mxu0 0
  %1065 = vmatprep.subr.bf16.mxu0 0
  %1066 = vmatpush1.bf16.msra.mxu0 0
  %1067 = vmatprep.subr.bf16.mxu0 0
  %1068 = vmatpush1.bf16.msra.mxu0 %v1048
  %1069 = vmatprep.subr.bf16.mxu0 0
  %1070 = vmatpush1.bf16.msra.mxu0 %v1047
  %1071 = vmatprep.subr.bf16.mxu0 0
  %1072 = vmatpush1.bf16.msra.mxu0 %v1046
  %1073 = vmatprep.subr.bf16.mxu0 0
  %1074 = vmatpush1.bf16.msra.mxu0 %v1045
  %1075 = vmatprep.subr.bf16.mxu0 0
  %1076 = vmatpush2.bf16.msra.mxu0 0
  %1077 = vmatprep.subr.bf16.mxu0 0
  %1078 = vmatpush2.bf16.msra.mxu0 0
  %1079 = vmatprep.subr.bf16.mxu0 0
  %1080 = vmatpush2.bf16.msra.mxu0 0
  %1081 = vmatprep.subr.bf16.mxu0 0
  %1082 = vmatpush2.bf16.msra.mxu0 0
  %1083 = vmatprep.subr.bf16.mxu0 0
  %1084 = vmatpush2.bf16.msra.mxu0 0
  %1085 = vmatprep.subr.bf16.mxu0 0
  %1086 = vmatpush2.bf16.msra.mxu0 0
  %1087 = vmatprep.subr.bf16.mxu0 0
  %1088 = vmatpush2.bf16.msra.mxu0 0
  %1089 = vmatprep.subr.bf16.mxu0 0
  %1090 = vmatpush2.bf16.msra.mxu0 0
  %1091 = vmatprep.mubr.bf16.mxu0 0
  %1092 = vmatmul.mubr.bf16.gmra.mxu0 %v1054
  %v1093 = vpop.f32.mrf.mxu0
  %v1094 = vadd.f32 0.0, %v1093
  %v1095 = vpop.f32.mrf.mxu0
  %v1096 = vpop.f32.mrf.mxu0
  %v1097 = vadd.f32 0.0, %v1096
  %v1098 = vpop.f32.mrf.mxu0
  %1099 = vmatprep.mubr.bf16.mxu0 0
  %1100 = vmatmul.mubr.bf16.gmra.mxu0 %v1057
  %v1101 = vpop.f32.mrf.mxu0
  %v1102 = vadd.f32 0.0, %v1101
  %v1103 = vpop.f32.mrf.mxu0
  %v1104 = vpop.f32.mrf.mxu0
  %v1105 = vadd.f32 0.0, %v1104
  %v1106 = vpop.f32.mrf.mxu0
  %1107 = vdwg.mxu0
  %v1108 = vadd.f32 %v1004, %v1094
  %v1109 = vadd.f32 %v1007, %v1097
  %v1110 = vadd.f32 %v1012, %v1102
  %v1111 = vadd.f32 %v1015, %v1105
  %v1112 = vpack.c.bf16 %v635, %v632
  %v1113 = vpack.c.bf16 %v643, %v640
  %s1114 = scalar_lea.vmem %s4, 96
  %v1115 = vld [vmem:[%s1114] sm:$0xf]
  %v1116 = vld [vmem:[%s1114 + $0x4] sm:$0xf]
  %v1117 = vld [vmem:[%s1114 + $0x8] sm:$0xf]
  %v1118 = vld [vmem:[%s1114 + $0xc] sm:$0xf]
  %v1119 = vld [vmem:[%s1114 + $0x10] sm:$0xf]
  %v1120 = vld [vmem:[%s1114 + $0x14] sm:$0xf]
  %v1121 = vld [vmem:[%s1114 + $0x18] sm:$0xf]
  %v1122 = vld [vmem:[%s1114 + $0x1c] sm:$0xf]
  %v1131 = vunpack.c.l.b16 %v1115
  %v1132 = vunpack.c.l.b16 %v1116
  %v1133 = vunpack.c.l.b16 %v1117
  %v1134 = vunpack.c.l.b16 %v1118
  %v1135 = vunpack.c.l.b16 %v1119
  %v1136 = vunpack.c.l.b16 %v1120
  %v1137 = vunpack.c.l.b16 %v1121
  %v1138 = vunpack.c.l.b16 %v1122
  %v1139 = vpack.c.b16 %v1132, %v1131
  %v1140 = vpack.c.b16 %v1134, %v1133
  %v1141 = vpack.c.b16 %v1136, %v1135
  %v1142 = vpack.c.b16 %v1138, %v1137
  %v1148 = vsel %vm883, %v1112, 0
  %v1151 = vsel %vm883, %v1113, 0
  %1153 = vmatprep.subr.bf16.mxu0 0
  %1154 = vmatpush1.bf16.msra.mxu0 0
  %1155 = vmatprep.subr.bf16.mxu0 0
  %1156 = vmatpush1.bf16.msra.mxu0 0
  %1157 = vmatprep.subr.bf16.mxu0 0
  %1158 = vmatpush1.bf16.msra.mxu0 0
  %1159 = vmatprep.subr.bf16.mxu0 0
  %1160 = vmatpush1.bf16.msra.mxu0 0
  %1161 = vmatprep.subr.bf16.mxu0 0
  %1162 = vmatpush1.bf16.msra.mxu0 %v1142
  %1163 = vmatprep.subr.bf16.mxu0 0
  %1164 = vmatpush1.bf16.msra.mxu0 %v1141
  %1165 = vmatprep.subr.bf16.mxu0 0
  %1166 = vmatpush1.bf16.msra.mxu0 %v1140
  %1167 = vmatprep.subr.bf16.mxu0 0
  %1168 = vmatpush1.bf16.msra.mxu0 %v1139
  %1169 = vmatprep.subr.bf16.mxu0 0
  %1170 = vmatpush2.bf16.msra.mxu0 0
  %1171 = vmatprep.subr.bf16.mxu0 0
  %1172 = vmatpush2.bf16.msra.mxu0 0
  %1173 = vmatprep.subr.bf16.mxu0 0
  %1174 = vmatpush2.bf16.msra.mxu0 0
  %1175 = vmatprep.subr.bf16.mxu0 0
  %1176 = vmatpush2.bf16.msra.mxu0 0
  %1177 = vmatprep.subr.bf16.mxu0 0
  %1178 = vmatpush2.bf16.msra.mxu0 0
  %1179 = vmatprep.subr.bf16.mxu0 0
  %1180 = vmatpush2.bf16.msra.mxu0 0
  %1181 = vmatprep.subr.bf16.mxu0 0
  %1182 = vmatpush2.bf16.msra.mxu0 0
  %1183 = vmatprep.subr.bf16.mxu0 0
  %1184 = vmatpush2.bf16.msra.mxu0 0
  %1185 = vmatprep.mubr.bf16.mxu0 0
  %1186 = vmatmul.mubr.bf16.gmra.mxu0 %v1148
  %v1187 = vpop.f32.mrf.mxu0
  %v1188 = vadd.f32 0.0, %v1187
  %v1189 = vpop.f32.mrf.mxu0
  %v1190 = vpop.f32.mrf.mxu0
  %v1191 = vadd.f32 0.0, %v1190
  %v1192 = vpop.f32.mrf.mxu0
  %1193 = vmatprep.mubr.bf16.mxu0 0
  %1194 = vmatmul.mubr.bf16.gmra.mxu0 %v1151
  %v1195 = vpop.f32.mrf.mxu0
  %v1196 = vadd.f32 0.0, %v1195
  %v1197 = vpop.f32.mrf.mxu0
  %v1198 = vpop.f32.mrf.mxu0
  %v1199 = vadd.f32 0.0, %v1198
  %v1200 = vpop.f32.mrf.mxu0
  %1201 = vdwg.mxu0
  %v1202 = vadd.f32 %v1108, %v1188
  %v1203 = vadd.f32 %v1109, %v1191
  %v1204 = vadd.f32 %v1110, %v1196
  %v1205 = vadd.f32 %v1111, %v1199
  %v1206 = vpack.c.bf16 %v651, %v648
  %v1207 = vpack.c.bf16 %v659, %v656
  %s1208 = scalar_lea.vmem %s4, 128
  %v1209 = vld [vmem:[%s1208] sm:$0xf]
  %v1210 = vld [vmem:[%s1208 + $0x4] sm:$0xf]
  %v1211 = vld [vmem:[%s1208 + $0x8] sm:$0xf]
  %v1212 = vld [vmem:[%s1208 + $0xc] sm:$0xf]
  %v1213 = vld [vmem:[%s1208 + $0x10] sm:$0xf]
  %v1214 = vld [vmem:[%s1208 + $0x14] sm:$0xf]
  %v1215 = vld [vmem:[%s1208 + $0x18] sm:$0xf]
  %v1216 = vld [vmem:[%s1208 + $0x1c] sm:$0xf]
  %v1225 = vunpack.c.l.b16 %v1209
  %v1226 = vunpack.c.l.b16 %v1210
  %v1227 = vunpack.c.l.b16 %v1211
  %v1228 = vunpack.c.l.b16 %v1212
  %v1229 = vunpack.c.l.b16 %v1213
  %v1230 = vunpack.c.l.b16 %v1214
  %v1231 = vunpack.c.l.b16 %v1215
  %v1232 = vunpack.c.l.b16 %v1216
  %v1233 = vpack.c.b16 %v1226, %v1225
  %v1234 = vpack.c.b16 %v1228, %v1227
  %v1235 = vpack.c.b16 %v1230, %v1229
  %v1236 = vpack.c.b16 %v1232, %v1231
  %v1242 = vsel %vm883, %v1206, 0
  %v1245 = vsel %vm883, %v1207, 0
  %1247 = vmatprep.subr.bf16.mxu0 0
  %1248 = vmatpush1.bf16.msra.mxu0 0
  %1249 = vmatprep.subr.bf16.mxu0 0
  %1250 = vmatpush1.bf16.msra.mxu0 0
  %1251 = vmatprep.subr.bf16.mxu0 0
  %1252 = vmatpush1.bf16.msra.mxu0 0
  %1253 = vmatprep.subr.bf16.mxu0 0
  %1254 = vmatpush1.bf16.msra.mxu0 0
  %1255 = vmatprep.subr.bf16.mxu0 0
  %1256 = vmatpush1.bf16.msra.mxu0 %v1236
  %1257 = vmatprep.subr.bf16.mxu0 0
  %1258 = vmatpush1.bf16.msra.mxu0 %v1235
  %1259 = vmatprep.subr.bf16.mxu0 0
  %1260 = vmatpush1.bf16.msra.mxu0 %v1234
  %1261 = vmatprep.subr.bf16.mxu0 0
  %1262 = vmatpush1.bf16.msra.mxu0 %v1233
  %1263 = vmatprep.subr.bf16.mxu0 0
  %1264 = vmatpush2.bf16.msra.mxu0 0
  %1265 = vmatprep.subr.bf16.mxu0 0
  %1266 = vmatpush2.bf16.msra.mxu0 0
  %1267 = vmatprep.subr.bf16.mxu0 0
  %1268 = vmatpush2.bf16.msra.mxu0 0
  %1269 = vmatprep.subr.bf16.mxu0 0
  %1270 = vmatpush2.bf16.msra.mxu0 0
  %1271 = vmatprep.subr.bf16.mxu0 0
  %1272 = vmatpush2.bf16.msra.mxu0 0
  %1273 = vmatprep.subr.bf16.mxu0 0
  %1274 = vmatpush2.bf16.msra.mxu0 0
  %1275 = vmatprep.subr.bf16.mxu0 0
  %1276 = vmatpush2.bf16.msra.mxu0 0
  %1277 = vmatprep.subr.bf16.mxu0 0
  %1278 = vmatpush2.bf16.msra.mxu0 0
  %1279 = vmatprep.mubr.bf16.mxu0 0
  %1280 = vmatmul.mubr.bf16.gmra.mxu0 %v1242
  %v1281 = vpop.f32.mrf.mxu0
  %v1282 = vadd.f32 0.0, %v1281
  %v1283 = vpop.f32.mrf.mxu0
  %v1284 = vpop.f32.mrf.mxu0
  %v1285 = vadd.f32 0.0, %v1284
  %v1286 = vpop.f32.mrf.mxu0
  %1287 = vmatprep.mubr.bf16.mxu0 0
  %1288 = vmatmul.mubr.bf16.gmra.mxu0 %v1245
  %v1289 = vpop.f32.mrf.mxu0
  %v1290 = vadd.f32 0.0, %v1289
  %v1291 = vpop.f32.mrf.mxu0
  %v1292 = vpop.f32.mrf.mxu0
  %v1293 = vadd.f32 0.0, %v1292
  %v1294 = vpop.f32.mrf.mxu0
  %1295 = vdwg.mxu0
  %v1296 = vadd.f32 %v1202, %v1282
  %v1297 = vadd.f32 %v1203, %v1285
  %v1298 = vadd.f32 %v1204, %v1290
  %v1299 = vadd.f32 %v1205, %v1293
  %v1300 = vpack.c.bf16 %v667, %v664
  %v1301 = vpack.c.bf16 %v675, %v672
  %s1302 = scalar_lea.vmem %s4, 160
  %v1303 = vld [vmem:[%s1302] sm:$0xf]
  %v1304 = vld [vmem:[%s1302 + $0x4] sm:$0xf]
  %v1305 = vld [vmem:[%s1302 + $0x8] sm:$0xf]
  %v1306 = vld [vmem:[%s1302 + $0xc] sm:$0xf]
  %v1307 = vld [vmem:[%s1302 + $0x10] sm:$0xf]
  %v1308 = vld [vmem:[%s1302 + $0x14] sm:$0xf]
  %v1309 = vld [vmem:[%s1302 + $0x18] sm:$0xf]
  %v1310 = vld [vmem:[%s1302 + $0x1c] sm:$0xf]
  %v1319 = vunpack.c.l.b16 %v1303
  %v1320 = vunpack.c.l.b16 %v1304
  %v1321 = vunpack.c.l.b16 %v1305
  %v1322 = vunpack.c.l.b16 %v1306
  %v1323 = vunpack.c.l.b16 %v1307
  %v1324 = vunpack.c.l.b16 %v1308
  %v1325 = vunpack.c.l.b16 %v1309
  %v1326 = vunpack.c.l.b16 %v1310
  %v1327 = vpack.c.b16 %v1320, %v1319
  %v1328 = vpack.c.b16 %v1322, %v1321
  %v1329 = vpack.c.b16 %v1324, %v1323
  %v1330 = vpack.c.b16 %v1326, %v1325
  %v1336 = vsel %vm883, %v1300, 0
  %v1339 = vsel %vm883, %v1301, 0
  %1341 = vmatprep.subr.bf16.mxu0 0
  %1342 = vmatpush1.bf16.msra.mxu0 0
  %1343 = vmatprep.subr.bf16.mxu0 0
  %1344 = vmatpush1.bf16.msra.mxu0 0
  %1345 = vmatprep.subr.bf16.mxu0 0
  %1346 = vmatpush1.bf16.msra.mxu0 0
  %1347 = vmatprep.subr.bf16.mxu0 0
  %1348 = vmatpush1.bf16.msra.mxu0 0
  %1349 = vmatprep.subr.bf16.mxu0 0
  %1350 = vmatpush1.bf16.msra.mxu0 %v1330
  %1351 = vmatprep.subr.bf16.mxu0 0
  %1352 = vmatpush1.bf16.msra.mxu0 %v1329
  %1353 = vmatprep.subr.bf16.mxu0 0
  %1354 = vmatpush1.bf16.msra.mxu0 %v1328
  %1355 = vmatprep.subr.bf16.mxu0 0
  %1356 = vmatpush1.bf16.msra.mxu0 %v1327
  %1357 = vmatprep.subr.bf16.mxu0 0
  %1358 = vmatpush2.bf16.msra.mxu0 0
  %1359 = vmatprep.subr.bf16.mxu0 0
  %1360 = vmatpush2.bf16.msra.mxu0 0
  %1361 = vmatprep.subr.bf16.mxu0 0
  %1362 = vmatpush2.bf16.msra.mxu0 0
  %1363 = vmatprep.subr.bf16.mxu0 0
  %1364 = vmatpush2.bf16.msra.mxu0 0
  %1365 = vmatprep.subr.bf16.mxu0 0
  %1366 = vmatpush2.bf16.msra.mxu0 0
  %1367 = vmatprep.subr.bf16.mxu0 0
  %1368 = vmatpush2.bf16.msra.mxu0 0
  %1369 = vmatprep.subr.bf16.mxu0 0
  %1370 = vmatpush2.bf16.msra.mxu0 0
  %1371 = vmatprep.subr.bf16.mxu0 0
  %1372 = vmatpush2.bf16.msra.mxu0 0
  %1373 = vmatprep.mubr.bf16.mxu0 0
  %1374 = vmatmul.mubr.bf16.gmra.mxu0 %v1336
  %v1375 = vpop.f32.mrf.mxu0
  %v1376 = vadd.f32 0.0, %v1375
  %v1377 = vpop.f32.mrf.mxu0
  %v1378 = vpop.f32.mrf.mxu0
  %v1379 = vadd.f32 0.0, %v1378
  %v1380 = vpop.f32.mrf.mxu0
  %1381 = vmatprep.mubr.bf16.mxu0 0
  %1382 = vmatmul.mubr.bf16.gmra.mxu0 %v1339
  %v1383 = vpop.f32.mrf.mxu0
  %v1384 = vadd.f32 0.0, %v1383
  %v1385 = vpop.f32.mrf.mxu0
  %v1386 = vpop.f32.mrf.mxu0
  %v1387 = vadd.f32 0.0, %v1386
  %v1388 = vpop.f32.mrf.mxu0
  %1389 = vdwg.mxu0
  %v1390 = vadd.f32 %v1296, %v1376
  %v1391 = vadd.f32 %v1297, %v1379
  %v1392 = vadd.f32 %v1298, %v1384
  %v1393 = vadd.f32 %v1299, %v1387
  %v1394 = vpack.c.bf16 %v683, %v680
  %v1395 = vpack.c.bf16 %v691, %v688
  %s1396 = scalar_lea.vmem %s4, 192
  %v1397 = vld [vmem:[%s1396] sm:$0xf]
  %v1398 = vld [vmem:[%s1396 + $0x4] sm:$0xf]
  %v1399 = vld [vmem:[%s1396 + $0x8] sm:$0xf]
  %v1400 = vld [vmem:[%s1396 + $0xc] sm:$0xf]
  %v1401 = vld [vmem:[%s1396 + $0x10] sm:$0xf]
  %v1402 = vld [vmem:[%s1396 + $0x14] sm:$0xf]
  %v1403 = vld [vmem:[%s1396 + $0x18] sm:$0xf]
  %v1404 = vld [vmem:[%s1396 + $0x1c] sm:$0xf]
  %v1413 = vunpack.c.l.b16 %v1397
  %v1414 = vunpack.c.l.b16 %v1398
  %v1415 = vunpack.c.l.b16 %v1399
  %v1416 = vunpack.c.l.b16 %v1400
  %v1417 = vunpack.c.l.b16 %v1401
  %v1418 = vunpack.c.l.b16 %v1402
  %v1419 = vunpack.c.l.b16 %v1403
  %v1420 = vunpack.c.l.b16 %v1404
  %v1421 = vpack.c.b16 %v1414, %v1413
  %v1422 = vpack.c.b16 %v1416, %v1415
  %v1423 = vpack.c.b16 %v1418, %v1417
  %v1424 = vpack.c.b16 %v1420, %v1419
  %v1430 = vsel %vm883, %v1394, 0
  %v1433 = vsel %vm883, %v1395, 0
  %1435 = vmatprep.subr.bf16.mxu0 0
  %1436 = vmatpush1.bf16.msra.mxu0 0
  %1437 = vmatprep.subr.bf16.mxu0 0
  %1438 = vmatpush1.bf16.msra.mxu0 0
  %1439 = vmatprep.subr.bf16.mxu0 0
  %1440 = vmatpush1.bf16.msra.mxu0 0
  %1441 = vmatprep.subr.bf16.mxu0 0
  %1442 = vmatpush1.bf16.msra.mxu0 0
  %1443 = vmatprep.subr.bf16.mxu0 0
  %1444 = vmatpush1.bf16.msra.mxu0 %v1424
  %1445 = vmatprep.subr.bf16.mxu0 0
  %1446 = vmatpush1.bf16.msra.mxu0 %v1423
  %1447 = vmatprep.subr.bf16.mxu0 0
  %1448 = vmatpush1.bf16.msra.mxu0 %v1422
  %1449 = vmatprep.subr.bf16.mxu0 0
  %1450 = vmatpush1.bf16.msra.mxu0 %v1421
  %1451 = vmatprep.subr.bf16.mxu0 0
  %1452 = vmatpush2.bf16.msra.mxu0 0
  %1453 = vmatprep.subr.bf16.mxu0 0
  %1454 = vmatpush2.bf16.msra.mxu0 0
  %1455 = vmatprep.subr.bf16.mxu0 0
  %1456 = vmatpush2.bf16.msra.mxu0 0
  %1457 = vmatprep.subr.bf16.mxu0 0
  %1458 = vmatpush2.bf16.msra.mxu0 0
  %1459 = vmatprep.subr.bf16.mxu0 0
  %1460 = vmatpush2.bf16.msra.mxu0 0
  %1461 = vmatprep.subr.bf16.mxu0 0
  %1462 = vmatpush2.bf16.msra.mxu0 0
  %1463 = vmatprep.subr.bf16.mxu0 0
  %1464 = vmatpush2.bf16.msra.mxu0 0
  %1465 = vmatprep.subr.bf16.mxu0 0
  %1466 = vmatpush2.bf16.msra.mxu0 0
  %1467 = vmatprep.mubr.bf16.mxu0 0
  %1468 = vmatmul.mubr.bf16.gmra.mxu0 %v1430
  %v1469 = vpop.f32.mrf.mxu0
  %v1470 = vadd.f32 0.0, %v1469
  %v1471 = vpop.f32.mrf.mxu0
  %v1472 = vpop.f32.mrf.mxu0
  %v1473 = vadd.f32 0.0, %v1472
  %v1474 = vpop.f32.mrf.mxu0
  %1475 = vmatprep.mubr.bf16.mxu0 0
  %1476 = vmatmul.mubr.bf16.gmra.mxu0 %v1433
  %v1477 = vpop.f32.mrf.mxu0
  %v1478 = vadd.f32 0.0, %v1477
  %v1479 = vpop.f32.mrf.mxu0
  %v1480 = vpop.f32.mrf.mxu0
  %v1481 = vadd.f32 0.0, %v1480
  %v1482 = vpop.f32.mrf.mxu0
  %1483 = vdwg.mxu0
  %v1484 = vadd.f32 %v1390, %v1470
  %v1485 = vadd.f32 %v1391, %v1473
  %v1486 = vadd.f32 %v1392, %v1478
  %v1487 = vadd.f32 %v1393, %v1481
  %v1488 = vpack.c.bf16 %v699, %v696
  %v1489 = vpack.c.bf16 %v707, %v704
  %s1490 = scalar_lea.vmem %s4, 224
  %v1491 = vld [vmem:[%s1490] sm:$0xf]
  %v1492 = vld [vmem:[%s1490 + $0x4] sm:$0xf]
  %v1493 = vld [vmem:[%s1490 + $0x8] sm:$0xf]
  %v1494 = vld [vmem:[%s1490 + $0xc] sm:$0xf]
  %v1495 = vld [vmem:[%s1490 + $0x10] sm:$0xf]
  %v1496 = vld [vmem:[%s1490 + $0x14] sm:$0xf]
  %v1497 = vld [vmem:[%s1490 + $0x18] sm:$0xf]
  %v1498 = vld [vmem:[%s1490 + $0x1c] sm:$0xf]
  %v1507 = vunpack.c.l.b16 %v1491
  %v1508 = vunpack.c.l.b16 %v1492
  %v1509 = vunpack.c.l.b16 %v1493
  %v1510 = vunpack.c.l.b16 %v1494
  %v1511 = vunpack.c.l.b16 %v1495
  %v1512 = vunpack.c.l.b16 %v1496
  %v1513 = vunpack.c.l.b16 %v1497
  %v1514 = vunpack.c.l.b16 %v1498
  %v1515 = vpack.c.b16 %v1508, %v1507
  %v1516 = vpack.c.b16 %v1510, %v1509
  %v1517 = vpack.c.b16 %v1512, %v1511
  %v1518 = vpack.c.b16 %v1514, %v1513
  %v1524 = vsel %vm883, %v1488, 0
  %v1527 = vsel %vm883, %v1489, 0
  %1529 = vmatprep.subr.bf16.mxu0 0
  %1530 = vmatpush1.bf16.msra.mxu0 0
  %1531 = vmatprep.subr.bf16.mxu0 0
  %1532 = vmatpush1.bf16.msra.mxu0 0
  %1533 = vmatprep.subr.bf16.mxu0 0
  %1534 = vmatpush1.bf16.msra.mxu0 0
  %1535 = vmatprep.subr.bf16.mxu0 0
  %1536 = vmatpush1.bf16.msra.mxu0 0
  %1537 = vmatprep.subr.bf16.mxu0 0
  %1538 = vmatpush1.bf16.msra.mxu0 %v1518
  %1539 = vmatprep.subr.bf16.mxu0 0
  %1540 = vmatpush1.bf16.msra.mxu0 %v1517
  %1541 = vmatprep.subr.bf16.mxu0 0
  %1542 = vmatpush1.bf16.msra.mxu0 %v1516
  %1543 = vmatprep.subr.bf16.mxu0 0
  %1544 = vmatpush1.bf16.msra.mxu0 %v1515
  %1545 = vmatprep.subr.bf16.mxu0 0
  %1546 = vmatpush2.bf16.msra.mxu0 0
  %1547 = vmatprep.subr.bf16.mxu0 0
  %1548 = vmatpush2.bf16.msra.mxu0 0
  %1549 = vmatprep.subr.bf16.mxu0 0
  %1550 = vmatpush2.bf16.msra.mxu0 0
  %1551 = vmatprep.subr.bf16.mxu0 0
  %1552 = vmatpush2.bf16.msra.mxu0 0
  %1553 = vmatprep.subr.bf16.mxu0 0
  %1554 = vmatpush2.bf16.msra.mxu0 0
  %1555 = vmatprep.subr.bf16.mxu0 0
  %1556 = vmatpush2.bf16.msra.mxu0 0
  %1557 = vmatprep.subr.bf16.mxu0 0
  %1558 = vmatpush2.bf16.msra.mxu0 0
  %1559 = vmatprep.subr.bf16.mxu0 0
  %1560 = vmatpush2.bf16.msra.mxu0 0
  %1561 = vmatprep.mubr.bf16.mxu0 0
  %1562 = vmatmul.mubr.bf16.gmra.mxu0 %v1524
  %v1563 = vpop.f32.mrf.mxu0
  %v1564 = vadd.f32 0.0, %v1563
  %v1565 = vpop.f32.mrf.mxu0
  %v1566 = vpop.f32.mrf.mxu0
  %v1567 = vadd.f32 0.0, %v1566
  %v1568 = vpop.f32.mrf.mxu0
  %1569 = vmatprep.mubr.bf16.mxu0 0
  %1570 = vmatmul.mubr.bf16.gmra.mxu0 %v1527
  %v1571 = vpop.f32.mrf.mxu0
  %v1572 = vadd.f32 0.0, %v1571
  %v1573 = vpop.f32.mrf.mxu0
  %v1574 = vpop.f32.mrf.mxu0
  %v1575 = vadd.f32 0.0, %v1574
  %v1576 = vpop.f32.mrf.mxu0
  %1577 = vdwg.mxu0
  %v1578 = vadd.f32 %v1484, %v1564
  %v1579 = vadd.f32 %v1485, %v1567
  %v1580 = vadd.f32 %v1486, %v1572
  %v1581 = vadd.f32 %v1487, %v1575
  %v1582 = vpack.c.bf16 %v715, %v712
  %v1583 = vpack.c.bf16 %v723, %v720
  %s1584 = scalar_lea.vmem %s4, 256
  %v1585 = vld [vmem:[%s1584] sm:$0xf]
  %v1586 = vld [vmem:[%s1584 + $0x4] sm:$0xf]
  %v1587 = vld [vmem:[%s1584 + $0x8] sm:$0xf]
  %v1588 = vld [vmem:[%s1584 + $0xc] sm:$0xf]
  %v1589 = vld [vmem:[%s1584 + $0x10] sm:$0xf]
  %v1590 = vld [vmem:[%s1584 + $0x14] sm:$0xf]
  %v1591 = vld [vmem:[%s1584 + $0x18] sm:$0xf]
  %v1592 = vld [vmem:[%s1584 + $0x1c] sm:$0xf]
  %v1601 = vunpack.c.l.b16 %v1585
  %v1602 = vunpack.c.l.b16 %v1586
  %v1603 = vunpack.c.l.b16 %v1587
  %v1604 = vunpack.c.l.b16 %v1588
  %v1605 = vunpack.c.l.b16 %v1589
  %v1606 = vunpack.c.l.b16 %v1590
  %v1607 = vunpack.c.l.b16 %v1591
  %v1608 = vunpack.c.l.b16 %v1592
  %v1609 = vpack.c.b16 %v1602, %v1601
  %v1610 = vpack.c.b16 %v1604, %v1603
  %v1611 = vpack.c.b16 %v1606, %v1605
  %v1612 = vpack.c.b16 %v1608, %v1607
  %v1618 = vsel %vm883, %v1582, 0
  %v1621 = vsel %vm883, %v1583, 0
  %1623 = vmatprep.subr.bf16.mxu0 0
  %1624 = vmatpush1.bf16.msra.mxu0 0
  %1625 = vmatprep.subr.bf16.mxu0 0
  %1626 = vmatpush1.bf16.msra.mxu0 0
  %1627 = vmatprep.subr.bf16.mxu0 0
  %1628 = vmatpush1.bf16.msra.mxu0 0
  %1629 = vmatprep.subr.bf16.mxu0 0
  %1630 = vmatpush1.bf16.msra.mxu0 0
  %1631 = vmatprep.subr.bf16.mxu0 0
  %1632 = vmatpush1.bf16.msra.mxu0 %v1612
  %1633 = vmatprep.subr.bf16.mxu0 0
  %1634 = vmatpush1.bf16.msra.mxu0 %v1611
  %1635 = vmatprep.subr.bf16.mxu0 0
  %1636 = vmatpush1.bf16.msra.mxu0 %v1610
  %1637 = vmatprep.subr.bf16.mxu0 0
  %1638 = vmatpush1.bf16.msra.mxu0 %v1609
  %1639 = vmatprep.subr.bf16.mxu0 0
  %1640 = vmatpush2.bf16.msra.mxu0 0
  %1641 = vmatprep.subr.bf16.mxu0 0
  %1642 = vmatpush2.bf16.msra.mxu0 0
  %1643 = vmatprep.subr.bf16.mxu0 0
  %1644 = vmatpush2.bf16.msra.mxu0 0
  %1645 = vmatprep.subr.bf16.mxu0 0
  %1646 = vmatpush2.bf16.msra.mxu0 0
  %1647 = vmatprep.subr.bf16.mxu0 0
  %1648 = vmatpush2.bf16.msra.mxu0 0
  %1649 = vmatprep.subr.bf16.mxu0 0
  %1650 = vmatpush2.bf16.msra.mxu0 0
  %1651 = vmatprep.subr.bf16.mxu0 0
  %1652 = vmatpush2.bf16.msra.mxu0 0
  %1653 = vmatprep.subr.bf16.mxu0 0
  %1654 = vmatpush2.bf16.msra.mxu0 0
  %1655 = vmatprep.mubr.bf16.mxu0 0
  %1656 = vmatmul.mubr.bf16.gmra.mxu0 %v1618
  %v1657 = vpop.f32.mrf.mxu0
  %v1658 = vadd.f32 0.0, %v1657
  %v1659 = vpop.f32.mrf.mxu0
  %v1660 = vpop.f32.mrf.mxu0
  %v1661 = vadd.f32 0.0, %v1660
  %v1662 = vpop.f32.mrf.mxu0
  %1663 = vmatprep.mubr.bf16.mxu0 0
  %1664 = vmatmul.mubr.bf16.gmra.mxu0 %v1621
  %v1665 = vpop.f32.mrf.mxu0
  %v1666 = vadd.f32 0.0, %v1665
  %v1667 = vpop.f32.mrf.mxu0
  %v1668 = vpop.f32.mrf.mxu0
  %v1669 = vadd.f32 0.0, %v1668
  %v1670 = vpop.f32.mrf.mxu0
  %1671 = vdwg.mxu0
  %v1672 = vadd.f32 %v1578, %v1658
  %v1673 = vadd.f32 %v1579, %v1661
  %v1674 = vadd.f32 %v1580, %v1666
  %v1675 = vadd.f32 %v1581, %v1669
  %v1676 = vpack.c.bf16 %v731, %v728
  %v1677 = vpack.c.bf16 %v739, %v736
  %s1678 = scalar_lea.vmem %s4, 288
  %v1679 = vld [vmem:[%s1678] sm:$0xf]
  %v1680 = vld [vmem:[%s1678 + $0x4] sm:$0xf]
  %v1681 = vld [vmem:[%s1678 + $0x8] sm:$0xf]
  %v1682 = vld [vmem:[%s1678 + $0xc] sm:$0xf]
  %v1683 = vld [vmem:[%s1678 + $0x10] sm:$0xf]
  %v1684 = vld [vmem:[%s1678 + $0x14] sm:$0xf]
  %v1685 = vld [vmem:[%s1678 + $0x18] sm:$0xf]
  %v1686 = vld [vmem:[%s1678 + $0x1c] sm:$0xf]
  %v1695 = vunpack.c.l.b16 %v1679
  %v1696 = vunpack.c.l.b16 %v1680
  %v1697 = vunpack.c.l.b16 %v1681
  %v1698 = vunpack.c.l.b16 %v1682
  %v1699 = vunpack.c.l.b16 %v1683
  %v1700 = vunpack.c.l.b16 %v1684
  %v1701 = vunpack.c.l.b16 %v1685
  %v1702 = vunpack.c.l.b16 %v1686
  %v1703 = vpack.c.b16 %v1696, %v1695
  %v1704 = vpack.c.b16 %v1698, %v1697
  %v1705 = vpack.c.b16 %v1700, %v1699
  %v1706 = vpack.c.b16 %v1702, %v1701
  %v1712 = vsel %vm883, %v1676, 0
  %v1715 = vsel %vm883, %v1677, 0
  %1717 = vmatprep.subr.bf16.mxu0 0
  %1718 = vmatpush1.bf16.msra.mxu0 0
  %1719 = vmatprep.subr.bf16.mxu0 0
  %1720 = vmatpush1.bf16.msra.mxu0 0
  %1721 = vmatprep.subr.bf16.mxu0 0
  %1722 = vmatpush1.bf16.msra.mxu0 0
  %1723 = vmatprep.subr.bf16.mxu0 0
  %1724 = vmatpush1.bf16.msra.mxu0 0
  %1725 = vmatprep.subr.bf16.mxu0 0
  %1726 = vmatpush1.bf16.msra.mxu0 %v1706
  %1727 = vmatprep.subr.bf16.mxu0 0
  %1728 = vmatpush1.bf16.msra.mxu0 %v1705
  %1729 = vmatprep.subr.bf16.mxu0 0
  %1730 = vmatpush1.bf16.msra.mxu0 %v1704
  %1731 = vmatprep.subr.bf16.mxu0 0
  %1732 = vmatpush1.bf16.msra.mxu0 %v1703
  %1733 = vmatprep.subr.bf16.mxu0 0
  %1734 = vmatpush2.bf16.msra.mxu0 0
  %1735 = vmatprep.subr.bf16.mxu0 0
  %1736 = vmatpush2.bf16.msra.mxu0 0
  %1737 = vmatprep.subr.bf16.mxu0 0
  %1738 = vmatpush2.bf16.msra.mxu0 0
  %1739 = vmatprep.subr.bf16.mxu0 0
  %1740 = vmatpush2.bf16.msra.mxu0 0
  %1741 = vmatprep.subr.bf16.mxu0 0
  %1742 = vmatpush2.bf16.msra.mxu0 0
  %1743 = vmatprep.subr.bf16.mxu0 0
  %1744 = vmatpush2.bf16.msra.mxu0 0
  %1745 = vmatprep.subr.bf16.mxu0 0
  %1746 = vmatpush2.bf16.msra.mxu0 0
  %1747 = vmatprep.subr.bf16.mxu0 0
  %1748 = vmatpush2.bf16.msra.mxu0 0
  %1749 = vmatprep.mubr.bf16.mxu0 0
  %1750 = vmatmul.mubr.bf16.gmra.mxu0 %v1712
  %v1751 = vpop.f32.mrf.mxu0
  %v1752 = vadd.f32 0.0, %v1751
  %v1753 = vpop.f32.mrf.mxu0
  %v1754 = vpop.f32.mrf.mxu0
  %v1755 = vadd.f32 0.0, %v1754
  %v1756 = vpop.f32.mrf.mxu0
  %1757 = vmatprep.mubr.bf16.mxu0 0
  %1758 = vmatmul.mubr.bf16.gmra.mxu0 %v1715
  %v1759 = vpop.f32.mrf.mxu0
  %v1760 = vadd.f32 0.0, %v1759
  %v1761 = vpop.f32.mrf.mxu0
  %v1762 = vpop.f32.mrf.mxu0
  %v1763 = vadd.f32 0.0, %v1762
  %v1764 = vpop.f32.mrf.mxu0
  %1765 = vdwg.mxu0
  %v1766 = vadd.f32 %v1672, %v1752
  %v1767 = vadd.f32 %v1673, %v1755
  %v1768 = vadd.f32 %v1674, %v1760
  %v1769 = vadd.f32 %v1675, %v1763
  %v1770 = vpack.c.bf16 %v747, %v744
  %v1771 = vpack.c.bf16 %v755, %v752
  %s1772 = scalar_lea.vmem %s4, 320
  %v1773 = vld [vmem:[%s1772] sm:$0xf]
  %v1774 = vld [vmem:[%s1772 + $0x4] sm:$0xf]
  %v1775 = vld [vmem:[%s1772 + $0x8] sm:$0xf]
  %v1776 = vld [vmem:[%s1772 + $0xc] sm:$0xf]
  %v1777 = vld [vmem:[%s1772 + $0x10] sm:$0xf]
  %v1778 = vld [vmem:[%s1772 + $0x14] sm:$0xf]
  %v1779 = vld [vmem:[%s1772 + $0x18] sm:$0xf]
  %v1780 = vld [vmem:[%s1772 + $0x1c] sm:$0xf]
  %v1789 = vunpack.c.l.b16 %v1773
  %v1790 = vunpack.c.l.b16 %v1774
  %v1791 = vunpack.c.l.b16 %v1775
  %v1792 = vunpack.c.l.b16 %v1776
  %v1793 = vunpack.c.l.b16 %v1777
  %v1794 = vunpack.c.l.b16 %v1778
  %v1795 = vunpack.c.l.b16 %v1779
  %v1796 = vunpack.c.l.b16 %v1780
  %v1797 = vpack.c.b16 %v1790, %v1789
  %v1798 = vpack.c.b16 %v1792, %v1791
  %v1799 = vpack.c.b16 %v1794, %v1793
  %v1800 = vpack.c.b16 %v1796, %v1795
  %v1806 = vsel %vm883, %v1770, 0
  %v1809 = vsel %vm883, %v1771, 0
  %1811 = vmatprep.subr.bf16.mxu0 0
  %1812 = vmatpush1.bf16.msra.mxu0 0
  %1813 = vmatprep.subr.bf16.mxu0 0
  %1814 = vmatpush1.bf16.msra.mxu0 0
  %1815 = vmatprep.subr.bf16.mxu0 0
  %1816 = vmatpush1.bf16.msra.mxu0 0
  %1817 = vmatprep.subr.bf16.mxu0 0
  %1818 = vmatpush1.bf16.msra.mxu0 0
  %1819 = vmatprep.subr.bf16.mxu0 0
  %1820 = vmatpush1.bf16.msra.mxu0 %v1800
  %1821 = vmatprep.subr.bf16.mxu0 0
  %1822 = vmatpush1.bf16.msra.mxu0 %v1799
  %1823 = vmatprep.subr.bf16.mxu0 0
  %1824 = vmatpush1.bf16.msra.mxu0 %v1798
  %1825 = vmatprep.subr.bf16.mxu0 0
  %1826 = vmatpush1.bf16.msra.mxu0 %v1797
  %1827 = vmatprep.subr.bf16.mxu0 0
  %1828 = vmatpush2.bf16.msra.mxu0 0
  %1829 = vmatprep.subr.bf16.mxu0 0
  %1830 = vmatpush2.bf16.msra.mxu0 0
  %1831 = vmatprep.subr.bf16.mxu0 0
  %1832 = vmatpush2.bf16.msra.mxu0 0
  %1833 = vmatprep.subr.bf16.mxu0 0
  %1834 = vmatpush2.bf16.msra.mxu0 0
  %1835 = vmatprep.subr.bf16.mxu0 0
  %1836 = vmatpush2.bf16.msra.mxu0 0
  %1837 = vmatprep.subr.bf16.mxu0 0
  %1838 = vmatpush2.bf16.msra.mxu0 0
  %1839 = vmatprep.subr.bf16.mxu0 0
  %1840 = vmatpush2.bf16.msra.mxu0 0
  %1841 = vmatprep.subr.bf16.mxu0 0
  %1842 = vmatpush2.bf16.msra.mxu0 0
  %1843 = vmatprep.mubr.bf16.mxu0 0
  %1844 = vmatmul.mubr.bf16.gmra.mxu0 %v1806
  %v1845 = vpop.f32.mrf.mxu0
  %v1846 = vadd.f32 0.0, %v1845
  %v1847 = vpop.f32.mrf.mxu0
  %v1848 = vpop.f32.mrf.mxu0
  %v1849 = vadd.f32 0.0, %v1848
  %v1850 = vpop.f32.mrf.mxu0
  %1851 = vmatprep.mubr.bf16.mxu0 0
  %1852 = vmatmul.mubr.bf16.gmra.mxu0 %v1809
  %v1853 = vpop.f32.mrf.mxu0
  %v1854 = vadd.f32 0.0, %v1853
  %v1855 = vpop.f32.mrf.mxu0
  %v1856 = vpop.f32.mrf.mxu0
  %v1857 = vadd.f32 0.0, %v1856
  %v1858 = vpop.f32.mrf.mxu0
  %1859 = vdwg.mxu0
  %v1860 = vadd.f32 %v1766, %v1846
  %v1861 = vadd.f32 %v1767, %v1849
  %v1862 = vadd.f32 %v1768, %v1854
  %v1863 = vadd.f32 %v1769, %v1857
  %v1864 = vpack.c.bf16 %v763, %v760
  %v1865 = vpack.c.bf16 %v771, %v768
  %s1866 = scalar_lea.vmem %s4, 352
  %v1867 = vld [vmem:[%s1866] sm:$0xf]
  %v1868 = vld [vmem:[%s1866 + $0x4] sm:$0xf]
  %v1869 = vld [vmem:[%s1866 + $0x8] sm:$0xf]
  %v1870 = vld [vmem:[%s1866 + $0xc] sm:$0xf]
  %v1871 = vld [vmem:[%s1866 + $0x10] sm:$0xf]
  %v1872 = vld [vmem:[%s1866 + $0x14] sm:$0xf]
  %v1873 = vld [vmem:[%s1866 + $0x18] sm:$0xf]
  %v1874 = vld [vmem:[%s1866 + $0x1c] sm:$0xf]
  %v1883 = vunpack.c.l.b16 %v1867
  %v1884 = vunpack.c.l.b16 %v1868
  %v1885 = vunpack.c.l.b16 %v1869
  %v1886 = vunpack.c.l.b16 %v1870
  %v1887 = vunpack.c.l.b16 %v1871
  %v1888 = vunpack.c.l.b16 %v1872
  %v1889 = vunpack.c.l.b16 %v1873
  %v1890 = vunpack.c.l.b16 %v1874
  %v1891 = vpack.c.b16 %v1884, %v1883
  %v1892 = vpack.c.b16 %v1886, %v1885
  %v1893 = vpack.c.b16 %v1888, %v1887
  %v1894 = vpack.c.b16 %v1890, %v1889
  %v1900 = vsel %vm883, %v1864, 0
  %v1903 = vsel %vm883, %v1865, 0
  %1905 = vmatprep.subr.bf16.mxu0 0
  %1906 = vmatpush1.bf16.msra.mxu0 0
  %1907 = vmatprep.subr.bf16.mxu0 0
  %1908 = vmatpush1.bf16.msra.mxu0 0
  %1909 = vmatprep.subr.bf16.mxu0 0
  %1910 = vmatpush1.bf16.msra.mxu0 0
  %1911 = vmatprep.subr.bf16.mxu0 0
  %1912 = vmatpush1.bf16.msra.mxu0 0
  %1913 = vmatprep.subr.bf16.mxu0 0
  %1914 = vmatpush1.bf16.msra.mxu0 %v1894
  %1915 = vmatprep.subr.bf16.mxu0 0
  %1916 = vmatpush1.bf16.msra.mxu0 %v1893
  %1917 = vmatprep.subr.bf16.mxu0 0
  %1918 = vmatpush1.bf16.msra.mxu0 %v1892
  %1919 = vmatprep.subr.bf16.mxu0 0
  %1920 = vmatpush1.bf16.msra.mxu0 %v1891
  %1921 = vmatprep.subr.bf16.mxu0 0
  %1922 = vmatpush2.bf16.msra.mxu0 0
  %1923 = vmatprep.subr.bf16.mxu0 0
  %1924 = vmatpush2.bf16.msra.mxu0 0
  %1925 = vmatprep.subr.bf16.mxu0 0
  %1926 = vmatpush2.bf16.msra.mxu0 0
  %1927 = vmatprep.subr.bf16.mxu0 0
  %1928 = vmatpush2.bf16.msra.mxu0 0
  %1929 = vmatprep.subr.bf16.mxu0 0
  %1930 = vmatpush2.bf16.msra.mxu0 0
  %1931 = vmatprep.subr.bf16.mxu0 0
  %1932 = vmatpush2.bf16.msra.mxu0 0
  %1933 = vmatprep.subr.bf16.mxu0 0
  %1934 = vmatpush2.bf16.msra.mxu0 0
  %1935 = vmatprep.subr.bf16.mxu0 0
  %1936 = vmatpush2.bf16.msra.mxu0 0
  %1937 = vmatprep.mubr.bf16.mxu0 0
  %1938 = vmatmul.mubr.bf16.gmra.mxu0 %v1900
  %v1939 = vpop.f32.mrf.mxu0
  %v1940 = vadd.f32 0.0, %v1939
  %v1941 = vpop.f32.mrf.mxu0
  %v1942 = vpop.f32.mrf.mxu0
  %v1943 = vadd.f32 0.0, %v1942
  %v1944 = vpop.f32.mrf.mxu0
  %1945 = vmatprep.mubr.bf16.mxu0 0
  %1946 = vmatmul.mubr.bf16.gmra.mxu0 %v1903
  %v1947 = vpop.f32.mrf.mxu0
  %v1948 = vadd.f32 0.0, %v1947
  %v1949 = vpop.f32.mrf.mxu0
  %v1950 = vpop.f32.mrf.mxu0
  %v1951 = vadd.f32 0.0, %v1950
  %v1952 = vpop.f32.mrf.mxu0
  %1953 = vdwg.mxu0
  %v1954 = vadd.f32 %v1860, %v1940
  %v1955 = vadd.f32 %v1861, %v1943
  %v1956 = vadd.f32 %v1862, %v1948
  %v1957 = vadd.f32 %v1863, %v1951
  %v1958 = vpack.c.bf16 %v779, %v776
  %v1959 = vpack.c.bf16 %v787, %v784
  %s1960 = scalar_lea.vmem %s4, 384
  %v1961 = vld [vmem:[%s1960] sm:$0xf]
  %v1962 = vld [vmem:[%s1960 + $0x4] sm:$0xf]
  %v1963 = vld [vmem:[%s1960 + $0x8] sm:$0xf]
  %v1964 = vld [vmem:[%s1960 + $0xc] sm:$0xf]
  %v1965 = vld [vmem:[%s1960 + $0x10] sm:$0xf]
  %v1966 = vld [vmem:[%s1960 + $0x14] sm:$0xf]
  %v1967 = vld [vmem:[%s1960 + $0x18] sm:$0xf]
  %v1968 = vld [vmem:[%s1960 + $0x1c] sm:$0xf]
  %v1977 = vunpack.c.l.b16 %v1961
  %v1978 = vunpack.c.l.b16 %v1962
  %v1979 = vunpack.c.l.b16 %v1963
  %v1980 = vunpack.c.l.b16 %v1964
  %v1981 = vunpack.c.l.b16 %v1965
  %v1982 = vunpack.c.l.b16 %v1966
  %v1983 = vunpack.c.l.b16 %v1967
  %v1984 = vunpack.c.l.b16 %v1968
  %v1985 = vpack.c.b16 %v1978, %v1977
  %v1986 = vpack.c.b16 %v1980, %v1979
  %v1987 = vpack.c.b16 %v1982, %v1981
  %v1988 = vpack.c.b16 %v1984, %v1983
  %v1994 = vsel %vm883, %v1958, 0
  %v1997 = vsel %vm883, %v1959, 0
  %1999 = vmatprep.subr.bf16.mxu0 0
  %2000 = vmatpush1.bf16.msra.mxu0 0
  %2001 = vmatprep.subr.bf16.mxu0 0
  %2002 = vmatpush1.bf16.msra.mxu0 0
  %2003 = vmatprep.subr.bf16.mxu0 0
  %2004 = vmatpush1.bf16.msra.mxu0 0
  %2005 = vmatprep.subr.bf16.mxu0 0
  %2006 = vmatpush1.bf16.msra.mxu0 0
  %2007 = vmatprep.subr.bf16.mxu0 0
  %2008 = vmatpush1.bf16.msra.mxu0 %v1988
  %2009 = vmatprep.subr.bf16.mxu0 0
  %2010 = vmatpush1.bf16.msra.mxu0 %v1987
  %2011 = vmatprep.subr.bf16.mxu0 0
  %2012 = vmatpush1.bf16.msra.mxu0 %v1986
  %2013 = vmatprep.subr.bf16.mxu0 0
  %2014 = vmatpush1.bf16.msra.mxu0 %v1985
  %2015 = vmatprep.subr.bf16.mxu0 0
  %2016 = vmatpush2.bf16.msra.mxu0 0
  %2017 = vmatprep.subr.bf16.mxu0 0
  %2018 = vmatpush2.bf16.msra.mxu0 0
  %2019 = vmatprep.subr.bf16.mxu0 0
  %2020 = vmatpush2.bf16.msra.mxu0 0
  %2021 = vmatprep.subr.bf16.mxu0 0
  %2022 = vmatpush2.bf16.msra.mxu0 0
  %2023 = vmatprep.subr.bf16.mxu0 0
  %2024 = vmatpush2.bf16.msra.mxu0 0
  %2025 = vmatprep.subr.bf16.mxu0 0
  %2026 = vmatpush2.bf16.msra.mxu0 0
  %2027 = vmatprep.subr.bf16.mxu0 0
  %2028 = vmatpush2.bf16.msra.mxu0 0
  %2029 = vmatprep.subr.bf16.mxu0 0
  %2030 = vmatpush2.bf16.msra.mxu0 0
  %2031 = vmatprep.mubr.bf16.mxu0 0
  %2032 = vmatmul.mubr.bf16.gmra.mxu0 %v1994
  %v2033 = vpop.f32.mrf.mxu0
  %v2034 = vadd.f32 0.0, %v2033
  %v2035 = vpop.f32.mrf.mxu0
  %v2036 = vpop.f32.mrf.mxu0
  %v2037 = vadd.f32 0.0, %v2036
  %v2038 = vpop.f32.mrf.mxu0
  %2039 = vmatprep.mubr.bf16.mxu0 0
  %2040 = vmatmul.mubr.bf16.gmra.mxu0 %v1997
  %v2041 = vpop.f32.mrf.mxu0
  %v2042 = vadd.f32 0.0, %v2041
  %v2043 = vpop.f32.mrf.mxu0
  %v2044 = vpop.f32.mrf.mxu0
  %v2045 = vadd.f32 0.0, %v2044
  %v2046 = vpop.f32.mrf.mxu0
  %2047 = vdwg.mxu0
  %v2048 = vadd.f32 %v1954, %v2034
  %v2049 = vadd.f32 %v1955, %v2037
  %v2050 = vadd.f32 %v1956, %v2042
  %v2051 = vadd.f32 %v1957, %v2045
  %v2052 = vpack.c.bf16 %v795, %v792
  %v2053 = vpack.c.bf16 %v803, %v800
  %s2054 = scalar_lea.vmem %s4, 416
  %v2055 = vld [vmem:[%s2054] sm:$0xf]
  %v2056 = vld [vmem:[%s2054 + $0x4] sm:$0xf]
  %v2057 = vld [vmem:[%s2054 + $0x8] sm:$0xf]
  %v2058 = vld [vmem:[%s2054 + $0xc] sm:$0xf]
  %v2059 = vld [vmem:[%s2054 + $0x10] sm:$0xf]
  %v2060 = vld [vmem:[%s2054 + $0x14] sm:$0xf]
  %v2061 = vld [vmem:[%s2054 + $0x18] sm:$0xf]
  %v2062 = vld [vmem:[%s2054 + $0x1c] sm:$0xf]
  %v2071 = vunpack.c.l.b16 %v2055
  %v2072 = vunpack.c.l.b16 %v2056
  %v2073 = vunpack.c.l.b16 %v2057
  %v2074 = vunpack.c.l.b16 %v2058
  %v2075 = vunpack.c.l.b16 %v2059
  %v2076 = vunpack.c.l.b16 %v2060
  %v2077 = vunpack.c.l.b16 %v2061
  %v2078 = vunpack.c.l.b16 %v2062
  %v2079 = vpack.c.b16 %v2072, %v2071
  %v2080 = vpack.c.b16 %v2074, %v2073
  %v2081 = vpack.c.b16 %v2076, %v2075
  %v2082 = vpack.c.b16 %v2078, %v2077
  %v2088 = vsel %vm883, %v2052, 0
  %v2091 = vsel %vm883, %v2053, 0
  %2093 = vmatprep.subr.bf16.mxu0 0
  %2094 = vmatpush1.bf16.msra.mxu0 0
  %2095 = vmatprep.subr.bf16.mxu0 0
  %2096 = vmatpush1.bf16.msra.mxu0 0
  %2097 = vmatprep.subr.bf16.mxu0 0
  %2098 = vmatpush1.bf16.msra.mxu0 0
  %2099 = vmatprep.subr.bf16.mxu0 0
  %2100 = vmatpush1.bf16.msra.mxu0 0
  %2101 = vmatprep.subr.bf16.mxu0 0
  %2102 = vmatpush1.bf16.msra.mxu0 %v2082
  %2103 = vmatprep.subr.bf16.mxu0 0
  %2104 = vmatpush1.bf16.msra.mxu0 %v2081
  %2105 = vmatprep.subr.bf16.mxu0 0
  %2106 = vmatpush1.bf16.msra.mxu0 %v2080
  %2107 = vmatprep.subr.bf16.mxu0 0
  %2108 = vmatpush1.bf16.msra.mxu0 %v2079
  %2109 = vmatprep.subr.bf16.mxu0 0
  %2110 = vmatpush2.bf16.msra.mxu0 0
  %2111 = vmatprep.subr.bf16.mxu0 0
  %2112 = vmatpush2.bf16.msra.mxu0 0
  %2113 = vmatprep.subr.bf16.mxu0 0
  %2114 = vmatpush2.bf16.msra.mxu0 0
  %2115 = vmatprep.subr.bf16.mxu0 0
  %2116 = vmatpush2.bf16.msra.mxu0 0
  %2117 = vmatprep.subr.bf16.mxu0 0
  %2118 = vmatpush2.bf16.msra.mxu0 0
  %2119 = vmatprep.subr.bf16.mxu0 0
  %2120 = vmatpush2.bf16.msra.mxu0 0
  %2121 = vmatprep.subr.bf16.mxu0 0
  %2122 = vmatpush2.bf16.msra.mxu0 0
  %2123 = vmatprep.subr.bf16.mxu0 0
  %2124 = vmatpush2.bf16.msra.mxu0 0
  %2125 = vmatprep.mubr.bf16.mxu0 0
  %2126 = vmatmul.mubr.bf16.gmra.mxu0 %v2088
  %v2127 = vpop.f32.mrf.mxu0
  %v2128 = vadd.f32 0.0, %v2127
  %v2129 = vpop.f32.mrf.mxu0
  %v2130 = vpop.f32.mrf.mxu0
  %v2131 = vadd.f32 0.0, %v2130
  %v2132 = vpop.f32.mrf.mxu0
  %2133 = vmatprep.mubr.bf16.mxu0 0
  %2134 = vmatmul.mubr.bf16.gmra.mxu0 %v2091
  %v2135 = vpop.f32.mrf.mxu0
  %v2136 = vadd.f32 0.0, %v2135
  %v2137 = vpop.f32.mrf.mxu0
  %v2138 = vpop.f32.mrf.mxu0
  %v2139 = vadd.f32 0.0, %v2138
  %v2140 = vpop.f32.mrf.mxu0
  %2141 = vdwg.mxu0
  %v2142 = vadd.f32 %v2048, %v2128
  %v2143 = vadd.f32 %v2049, %v2131
  %v2144 = vadd.f32 %v2050, %v2136
  %v2145 = vadd.f32 %v2051, %v2139
  %v2146 = vpack.c.bf16 %v811, %v808
  %v2147 = vpack.c.bf16 %v819, %v816
  %s2148 = scalar_lea.vmem %s4, 448
  %v2149 = vld [vmem:[%s2148] sm:$0xf]
  %v2150 = vld [vmem:[%s2148 + $0x4] sm:$0xf]
  %v2151 = vld [vmem:[%s2148 + $0x8] sm:$0xf]
  %v2152 = vld [vmem:[%s2148 + $0xc] sm:$0xf]
  %v2153 = vld [vmem:[%s2148 + $0x10] sm:$0xf]
  %v2154 = vld [vmem:[%s2148 + $0x14] sm:$0xf]
  %v2155 = vld [vmem:[%s2148 + $0x18] sm:$0xf]
  %v2156 = vld [vmem:[%s2148 + $0x1c] sm:$0xf]
  %v2165 = vunpack.c.l.b16 %v2149
  %v2166 = vunpack.c.l.b16 %v2150
  %v2167 = vunpack.c.l.b16 %v2151
  %v2168 = vunpack.c.l.b16 %v2152
  %v2169 = vunpack.c.l.b16 %v2153
  %v2170 = vunpack.c.l.b16 %v2154
  %v2171 = vunpack.c.l.b16 %v2155
  %v2172 = vunpack.c.l.b16 %v2156
  %v2173 = vpack.c.b16 %v2166, %v2165
  %v2174 = vpack.c.b16 %v2168, %v2167
  %v2175 = vpack.c.b16 %v2170, %v2169
  %v2176 = vpack.c.b16 %v2172, %v2171
  %v2182 = vsel %vm883, %v2146, 0
  %v2185 = vsel %vm883, %v2147, 0
  %2187 = vmatprep.subr.bf16.mxu0 0
  %2188 = vmatpush1.bf16.msra.mxu0 0
  %2189 = vmatprep.subr.bf16.mxu0 0
  %2190 = vmatpush1.bf16.msra.mxu0 0
  %2191 = vmatprep.subr.bf16.mxu0 0
  %2192 = vmatpush1.bf16.msra.mxu0 0
  %2193 = vmatprep.subr.bf16.mxu0 0
  %2194 = vmatpush1.bf16.msra.mxu0 0
  %2195 = vmatprep.subr.bf16.mxu0 0
  %2196 = vmatpush1.bf16.msra.mxu0 %v2176
  %2197 = vmatprep.subr.bf16.mxu0 0
  %2198 = vmatpush1.bf16.msra.mxu0 %v2175
  %2199 = vmatprep.subr.bf16.mxu0 0
  %2200 = vmatpush1.bf16.msra.mxu0 %v2174
  %2201 = vmatprep.subr.bf16.mxu0 0
  %2202 = vmatpush1.bf16.msra.mxu0 %v2173
  %2203 = vmatprep.subr.bf16.mxu0 0
  %2204 = vmatpush2.bf16.msra.mxu0 0
  %2205 = vmatprep.subr.bf16.mxu0 0
  %2206 = vmatpush2.bf16.msra.mxu0 0
  %2207 = vmatprep.subr.bf16.mxu0 0
  %2208 = vmatpush2.bf16.msra.mxu0 0
  %2209 = vmatprep.subr.bf16.mxu0 0
  %2210 = vmatpush2.bf16.msra.mxu0 0
  %2211 = vmatprep.subr.bf16.mxu0 0
  %2212 = vmatpush2.bf16.msra.mxu0 0
  %2213 = vmatprep.subr.bf16.mxu0 0
  %2214 = vmatpush2.bf16.msra.mxu0 0
  %2215 = vmatprep.subr.bf16.mxu0 0
  %2216 = vmatpush2.bf16.msra.mxu0 0
  %2217 = vmatprep.subr.bf16.mxu0 0
  %2218 = vmatpush2.bf16.msra.mxu0 0
  %2219 = vmatprep.mubr.bf16.mxu0 0
  %2220 = vmatmul.mubr.bf16.gmra.mxu0 %v2182
  %v2221 = vpop.f32.mrf.mxu0
  %v2222 = vadd.f32 0.0, %v2221
  %v2223 = vpop.f32.mrf.mxu0
  %v2224 = vpop.f32.mrf.mxu0
  %v2225 = vadd.f32 0.0, %v2224
  %v2226 = vpop.f32.mrf.mxu0
  %2227 = vmatprep.mubr.bf16.mxu0 0
  %2228 = vmatmul.mubr.bf16.gmra.mxu0 %v2185
  %v2229 = vpop.f32.mrf.mxu0
  %v2230 = vadd.f32 0.0, %v2229
  %v2231 = vpop.f32.mrf.mxu0
  %v2232 = vpop.f32.mrf.mxu0
  %v2233 = vadd.f32 0.0, %v2232
  %v2234 = vpop.f32.mrf.mxu0
  %2235 = vdwg.mxu0
  %v2236 = vadd.f32 %v2142, %v2222
  %v2237 = vadd.f32 %v2143, %v2225
  %v2238 = vadd.f32 %v2144, %v2230
  %v2239 = vadd.f32 %v2145, %v2233
  %v2240 = vpack.c.bf16 %v827, %v824
  %v2241 = vpack.c.bf16 %v835, %v832
  %s2242 = scalar_lea.vmem %s4, 480
  %v2243 = vld [vmem:[%s2242] sm:$0xf]
  %v2244 = vld [vmem:[%s2242 + $0x4] sm:$0xf]
  %v2245 = vld [vmem:[%s2242 + $0x8] sm:$0xf]
  %v2246 = vld [vmem:[%s2242 + $0xc] sm:$0xf]
  %v2247 = vld [vmem:[%s2242 + $0x10] sm:$0xf]
  %v2248 = vld [vmem:[%s2242 + $0x14] sm:$0xf]
  %v2249 = vld [vmem:[%s2242 + $0x18] sm:$0xf]
  %v2250 = vld [vmem:[%s2242 + $0x1c] sm:$0xf]
  %v2259 = vunpack.c.l.b16 %v2243
  %v2260 = vunpack.c.l.b16 %v2244
  %v2261 = vunpack.c.l.b16 %v2245
  %v2262 = vunpack.c.l.b16 %v2246
  %v2263 = vunpack.c.l.b16 %v2247
  %v2264 = vunpack.c.l.b16 %v2248
  %v2265 = vunpack.c.l.b16 %v2249
  %v2266 = vunpack.c.l.b16 %v2250
  %v2267 = vpack.c.b16 %v2260, %v2259
  %v2268 = vpack.c.b16 %v2262, %v2261
  %v2269 = vpack.c.b16 %v2264, %v2263
  %v2270 = vpack.c.b16 %v2266, %v2265
  %v2276 = vsel %vm883, %v2240, 0
  %v2279 = vsel %vm883, %v2241, 0
  %2281 = vmatprep.subr.bf16.mxu0 0
  %2282 = vmatpush1.bf16.msra.mxu0 0
  %2283 = vmatprep.subr.bf16.mxu0 0
  %2284 = vmatpush1.bf16.msra.mxu0 0
  %2285 = vmatprep.subr.bf16.mxu0 0
  %2286 = vmatpush1.bf16.msra.mxu0 0
  %2287 = vmatprep.subr.bf16.mxu0 0
  %2288 = vmatpush1.bf16.msra.mxu0 0
  %2289 = vmatprep.subr.bf16.mxu0 0
  %2290 = vmatpush1.bf16.msra.mxu0 %v2270
  %2291 = vmatprep.subr.bf16.mxu0 0
  %2292 = vmatpush1.bf16.msra.mxu0 %v2269
  %2293 = vmatprep.subr.bf16.mxu0 0
  %2294 = vmatpush1.bf16.msra.mxu0 %v2268
  %2295 = vmatprep.subr.bf16.mxu0 0
  %2296 = vmatpush1.bf16.msra.mxu0 %v2267
  %2297 = vmatprep.subr.bf16.mxu0 0
  %2298 = vmatpush2.bf16.msra.mxu0 0
  %2299 = vmatprep.subr.bf16.mxu0 0
  %2300 = vmatpush2.bf16.msra.mxu0 0
  %2301 = vmatprep.subr.bf16.mxu0 0
  %2302 = vmatpush2.bf16.msra.mxu0 0
  %2303 = vmatprep.subr.bf16.mxu0 0
  %2304 = vmatpush2.bf16.msra.mxu0 0
  %2305 = vmatprep.subr.bf16.mxu0 0
  %2306 = vmatpush2.bf16.msra.mxu0 0
  %2307 = vmatprep.subr.bf16.mxu0 0
  %2308 = vmatpush2.bf16.msra.mxu0 0
  %2309 = vmatprep.subr.bf16.mxu0 0
  %2310 = vmatpush2.bf16.msra.mxu0 0
  %2311 = vmatprep.subr.bf16.mxu0 0
  %2312 = vmatpush2.bf16.msra.mxu0 0
  %2313 = vmatprep.mubr.bf16.mxu0 0
  %2314 = vmatmul.mubr.bf16.gmra.mxu0 %v2276
  %v2315 = vpop.f32.mrf.mxu0
  %v2316 = vadd.f32 0.0, %v2315
  %v2317 = vpop.f32.mrf.mxu0
  %v2318 = vpop.f32.mrf.mxu0
  %v2319 = vadd.f32 0.0, %v2318
  %v2320 = vpop.f32.mrf.mxu0
  %2321 = vmatprep.mubr.bf16.mxu0 0
  %2322 = vmatmul.mubr.bf16.gmra.mxu0 %v2279
  %v2323 = vpop.f32.mrf.mxu0
  %v2324 = vadd.f32 0.0, %v2323
  %v2325 = vpop.f32.mrf.mxu0
  %v2326 = vpop.f32.mrf.mxu0
  %v2327 = vadd.f32 0.0, %v2326
  %v2328 = vpop.f32.mrf.mxu0
  %2329 = vdwg.mxu0
  %v2330 = vadd.f32 %v2236, %v2316
  %v2331 = vadd.f32 %v2237, %v2319
  %v2332 = vadd.f32 %v2238, %v2324
  %v2333 = vadd.f32 %v2239, %v2327
  %v2334 = vld [vmem:[%s5] sm:$0x1]
  %v2336 = vlaneseq
  %v2337 = vshrl.u32 %v2336, 7
  %v2338 = vsub.s32 0, %v2337
  %v2339 = vrot.slane %v2334, %v2338
  %v2341 = vadd.f32 %v2330, %v2339
  %v2342 = vadd.f32 %v2331, %v2339
  %v2343 = vadd.f32 %v2332, %v2339
  %v2344 = vadd.f32 %v2333, %v2339
  %v2345 = vld [vmem:[%s6] sm:$0x1]
  %v2346 = vld [vmem:[%s7] sm:$0x1]
  %v2347 = vadd.f32 %v2341, %v2342
  %v2348 = vadd.f32 %v2347, %v2343
  %v2349 = vadd.f32 %v2348, %v2344
  %v2350 = vrot.slane %v2349, 4
  %v2351 = vadd.f32 %v2349, %v2350
  %v2352 = vrot.slane %v2351, 2
  %v2353 = vadd.f32 %v2351, %v2352
  %v2354 = vrot.slane %v2353, 1
  %v2355 = vadd.f32 %v2353, %v2354
  %v2356 = vrcp.pop 32.0
  %v2357 = vmul.f32 %v2355, %v2356
  %v2358 = vsub.f32 %v2341, %v2357
  %v2359 = vsub.f32 %v2342, %v2357
  %v2360 = vsub.f32 %v2343, %v2357
  %v2361 = vsub.f32 %v2344, %v2357
  %v2362 = vmul.f32 %v2358, %v2358
  %v2363 = vmul.f32 %v2359, %v2359
  %v2364 = vmul.f32 %v2360, %v2360
  %v2365 = vmul.f32 %v2361, %v2361
  %v2366 = vadd.f32 %v2362, %v2363
  %v2367 = vadd.f32 %v2366, %v2364
  %v2368 = vadd.f32 %v2367, %v2365
  %v2369 = vrot.slane %v2368, 4
  %v2370 = vadd.f32 %v2368, %v2369
  %v2371 = vrot.slane %v2370, 2
  %v2372 = vadd.f32 %v2370, %v2371
  %v2373 = vrot.slane %v2372, 1
  %v2374 = vadd.f32 %v2372, %v2373
  %v2375 = vmul.f32 %v2374, %v2356
  %v2376 = vadd.f32 %v2375, 1e-05
  %v2377 = vrsqrt.pop %v2376
  %v2378 = vmul.f32 %v2345, %v2377
  %v2380 = vlaneseq
  %v2381 = vshrl.u32 %v2380, 7
  %v2382 = vsub.s32 0, %v2381
  %v2383 = vrot.slane %v2378, %v2382
  %v2385 = vmul.f32 %v2358, %v2383
  %v2386 = vmul.f32 %v2359, %v2383
  %v2387 = vmul.f32 %v2360, %v2383
  %v2388 = vmul.f32 %v2361, %v2383
  %v2390 = vlaneseq
  %v2391 = vshrl.u32 %v2390, 7
  %v2392 = vsub.s32 0, %v2391
  %v2393 = vrot.slane %v2346, %v2392
  %v2395 = vadd.f32 %v2385, %v2393
  %v2396 = vadd.f32 %v2386, %v2393
  %v2397 = vadd.f32 %v2387, %v2393
  %v2398 = vadd.f32 %v2388, %v2393
  %v2399 = vmax.f32 %v2395, 0.0
  %v2400 = vmax.f32 %v2396, 0.0
  %v2401 = vmax.f32 %v2397, 0.0
  %v2402 = vmax.f32 %v2398, 0.0
  %v2403 = vpack.c.bf16 %v2400, %v2399
  %v2404 = vpack.c.bf16 %v2402, %v2401
  %v2405 = vld [vmem:[%s8] sm:$0xf]
  %v2406 = vld [vmem:[%s8 + $0x4] sm:$0xf]
  %v2407 = vld [vmem:[%s8 + $0x8] sm:$0xf]
  %v2408 = vld [vmem:[%s8 + $0xc] sm:$0xf]
  %v2409 = vld [vmem:[%s8 + $0x10] sm:$0xf]
  %v2410 = vld [vmem:[%s8 + $0x14] sm:$0xf]
  %v2411 = vld [vmem:[%s8 + $0x18] sm:$0xf]
  %v2412 = vld [vmem:[%s8 + $0x1c] sm:$0xf]
  %v2413 = vld [vmem:[%s8 + $0x20] sm:$0xf]
  %v2414 = vld [vmem:[%s8 + $0x24] sm:$0xf]
  %v2415 = vld [vmem:[%s8 + $0x28] sm:$0xf]
  %v2416 = vld [vmem:[%s8 + $0x2c] sm:$0xf]
  %v2417 = vld [vmem:[%s8 + $0x30] sm:$0xf]
  %v2418 = vld [vmem:[%s8 + $0x34] sm:$0xf]
  %v2419 = vld [vmem:[%s8 + $0x38] sm:$0xf]
  %v2420 = vld [vmem:[%s8 + $0x3c] sm:$0xf]
  %v2421 = vld [vmem:[%s8 + $0x40] sm:$0xf]
  %v2422 = vld [vmem:[%s8 + $0x44] sm:$0xf]
  %v2423 = vld [vmem:[%s8 + $0x48] sm:$0xf]
  %v2424 = vld [vmem:[%s8 + $0x4c] sm:$0xf]
  %v2425 = vld [vmem:[%s8 + $0x50] sm:$0xf]
  %v2426 = vld [vmem:[%s8 + $0x54] sm:$0xf]
  %v2427 = vld [vmem:[%s8 + $0x58] sm:$0xf]
  %v2428 = vld [vmem:[%s8 + $0x5c] sm:$0xf]
  %v2429 = vld [vmem:[%s8 + $0x60] sm:$0xf]
  %v2430 = vld [vmem:[%s8 + $0x64] sm:$0xf]
  %v2431 = vld [vmem:[%s8 + $0x68] sm:$0xf]
  %v2432 = vld [vmem:[%s8 + $0x6c] sm:$0xf]
  %v2461 = vunpack.c.l.b16 %v2405
  %v2462 = vunpack.c.l.b16 %v2406
  %v2463 = vunpack.c.l.b16 %v2407
  %v2464 = vunpack.c.l.b16 %v2408
  %v2465 = vunpack.c.l.b16 %v2409
  %v2466 = vunpack.c.l.b16 %v2410
  %v2467 = vunpack.c.l.b16 %v2411
  %v2468 = vunpack.c.l.b16 %v2412
  %v2469 = vunpack.c.l.b16 %v2413
  %v2470 = vunpack.c.l.b16 %v2414
  %v2471 = vunpack.c.l.b16 %v2415
  %v2472 = vunpack.c.l.b16 %v2416
  %v2473 = vunpack.c.l.b16 %v2417
  %v2474 = vunpack.c.l.b16 %v2418
  %v2475 = vunpack.c.l.b16 %v2419
  %v2476 = vunpack.c.l.b16 %v2420
  %v2477 = vunpack.c.l.b16 %v2421
  %v2478 = vunpack.c.l.b16 %v2422
  %v2479 = vunpack.c.l.b16 %v2423
  %v2480 = vunpack.c.l.b16 %v2424
  %v2481 = vunpack.c.l.b16 %v2425
  %v2482 = vunpack.c.l.b16 %v2426
  %v2483 = vunpack.c.l.b16 %v2427
  %v2484 = vunpack.c.l.b16 %v2428
  %v2485 = vunpack.c.l.b16 %v2429
  %v2486 = vunpack.c.l.b16 %v2430
  %v2487 = vunpack.c.l.b16 %v2431
  %v2488 = vunpack.c.l.b16 %v2432
  %v2489 = vpack.c.b16 %v2462, %v2461
  %v2490 = vpack.c.b16 %v2464, %v2463
  %v2491 = vpack.c.b16 %v2466, %v2465
  %v2492 = vpack.c.b16 %v2468, %v2467
  %v2493 = vpack.c.b16 %v2470, %v2469
  %v2494 = vpack.c.b16 %v2472, %v2471
  %v2495 = vpack.c.b16 %v2474, %v2473
  %v2496 = vpack.c.b16 %v2476, %v2475
  %v2497 = vpack.c.b16 %v2478, %v2477
  %v2498 = vpack.c.b16 %v2480, %v2479
  %v2499 = vpack.c.b16 %v2482, %v2481
  %v2500 = vpack.c.b16 %v2484, %v2483
  %v2501 = vpack.c.b16 %v2486, %v2485
  %v2502 = vpack.c.b16 %v2488, %v2487
  %vm2503 = vcmask 261120
  %v2505 = vsel %vm2503, %v2489, 0
  %v2508 = vsel %vm2503, %v2490, 0
  %v2511 = vsel %vm2503, %v2491, 0
  %v2514 = vsel %vm2503, %v2492, 0
  %v2517 = vsel %vm2503, %v2493, 0
  %v2520 = vsel %vm2503, %v2494, 0
  %v2523 = vsel %vm2503, %v2495, 0
  %v2526 = vsel %vm2503, %v2496, 0
  %v2529 = vsel %vm2503, %v2497, 0
  %v2532 = vsel %vm2503, %v2498, 0
  %v2535 = vsel %vm2503, %v2499, 0
  %v2538 = vsel %vm2503, %v2500, 0
  %v2541 = vsel %vm2503, %v2501, 0
  %v2544 = vsel %vm2503, %v2502, 0
  %2546 = vmatprep.subr.bf16.mxu0 0
  %2547 = vmatpush1.bf16.msra.mxu0 0
  %2548 = vmatprep.subr.bf16.mxu0 0
  %2549 = vmatpush1.bf16.msra.mxu0 0
  %2550 = vmatprep.subr.bf16.mxu0 0
  %2551 = vmatpush1.bf16.msra.mxu0 0
  %2552 = vmatprep.subr.bf16.mxu0 0
  %2553 = vmatpush1.bf16.msra.mxu0 0
  %2554 = vmatprep.subr.bf16.mxu0 0
  %2555 = vmatpush1.bf16.msra.mxu0 0
  %2556 = vmatprep.subr.bf16.mxu0 0
  %2557 = vmatpush1.bf16.msra.mxu0 0
  %2558 = vmatprep.subr.bf16.mxu0 0
  %2559 = vmatpush1.bf16.msra.mxu0 %v2404
  %2560 = vmatprep.subr.bf16.mxu0 0
  %2561 = vmatpush1.bf16.msra.mxu0 %v2403
  %2562 = vmatprep.subr.bf16.mxu0 0
  %2563 = vmatpush2.bf16.msra.mxu0 0
  %2564 = vmatprep.subr.bf16.mxu0 0
  %2565 = vmatpush2.bf16.msra.mxu0 0
  %2566 = vmatprep.subr.bf16.mxu0 0
  %2567 = vmatpush2.bf16.msra.mxu0 0
  %2568 = vmatprep.subr.bf16.mxu0 0
  %2569 = vmatpush2.bf16.msra.mxu0 0
  %2570 = vmatprep.subr.bf16.mxu0 0
  %2571 = vmatpush2.bf16.msra.mxu0 0
  %2572 = vmatprep.subr.bf16.mxu0 0
  %2573 = vmatpush2.bf16.msra.mxu0 0
  %2574 = vmatprep.subr.bf16.mxu0 0
  %2575 = vmatpush2.bf16.msra.mxu0 0
  %2576 = vmatprep.subr.bf16.mxu0 0
  %2577 = vmatpush2.bf16.msra.mxu0 0
  %2578 = vmatprep.mubr.bf16.mxu0 0
  %2579 = vmatmul.mubr.bf16.gmra.mxu0 %v2505
  %v2580 = vpop.f32.mrf.mxu0
  %v2581 = vadd.f32 0.0, %v2580
  %v2582 = vpop.f32.mrf.mxu0
  %v2583 = vpop.f32.mrf.mxu0
  %v2584 = vadd.f32 0.0, %v2583
  %v2585 = vpop.f32.mrf.mxu0
  %2586 = vmatprep.mubr.bf16.mxu0 0
  %2587 = vmatmul.mubr.bf16.gmra.mxu0 %v2508
  %v2588 = vpop.f32.mrf.mxu0
  %v2589 = vadd.f32 0.0, %v2588
  %v2590 = vpop.f32.mrf.mxu0
  %v2591 = vpop.f32.mrf.mxu0
  %v2592 = vadd.f32 0.0, %v2591
  %v2593 = vpop.f32.mrf.mxu0
  %2594 = vmatprep.mubr.bf16.mxu0 0
  %2595 = vmatmul.mubr.bf16.gmra.mxu0 %v2511
  %v2596 = vpop.f32.mrf.mxu0
  %v2597 = vadd.f32 0.0, %v2596
  %v2598 = vpop.f32.mrf.mxu0
  %v2599 = vpop.f32.mrf.mxu0
  %v2600 = vadd.f32 0.0, %v2599
  %v2601 = vpop.f32.mrf.mxu0
  %2602 = vmatprep.mubr.bf16.mxu0 0
  %2603 = vmatmul.mubr.bf16.gmra.mxu0 %v2514
  %v2604 = vpop.f32.mrf.mxu0
  %v2605 = vadd.f32 0.0, %v2604
  %v2606 = vpop.f32.mrf.mxu0
  %v2607 = vpop.f32.mrf.mxu0
  %v2608 = vadd.f32 0.0, %v2607
  %v2609 = vpop.f32.mrf.mxu0
  %2610 = vmatprep.mubr.bf16.mxu0 0
  %2611 = vmatmul.mubr.bf16.gmra.mxu0 %v2517
  %v2612 = vpop.f32.mrf.mxu0
  %v2613 = vadd.f32 0.0, %v2612
  %v2614 = vpop.f32.mrf.mxu0
  %v2615 = vpop.f32.mrf.mxu0
  %v2616 = vadd.f32 0.0, %v2615
  %v2617 = vpop.f32.mrf.mxu0
  %2618 = vmatprep.mubr.bf16.mxu0 0
  %2619 = vmatmul.mubr.bf16.gmra.mxu0 %v2520
  %v2620 = vpop.f32.mrf.mxu0
  %v2621 = vadd.f32 0.0, %v2620
  %v2622 = vpop.f32.mrf.mxu0
  %v2623 = vpop.f32.mrf.mxu0
  %v2624 = vadd.f32 0.0, %v2623
  %v2625 = vpop.f32.mrf.mxu0
  %2626 = vmatprep.mubr.bf16.mxu0 0
  %2627 = vmatmul.mubr.bf16.gmra.mxu0 %v2523
  %v2628 = vpop.f32.mrf.mxu0
  %v2629 = vadd.f32 0.0, %v2628
  %v2630 = vpop.f32.mrf.mxu0
  %v2631 = vpop.f32.mrf.mxu0
  %v2632 = vadd.f32 0.0, %v2631
  %v2633 = vpop.f32.mrf.mxu0
  %2634 = vmatprep.mubr.bf16.mxu0 0
  %2635 = vmatmul.mubr.bf16.gmra.mxu0 %v2526
  %v2636 = vpop.f32.mrf.mxu0
  %v2637 = vadd.f32 0.0, %v2636
  %v2638 = vpop.f32.mrf.mxu0
  %v2639 = vpop.f32.mrf.mxu0
  %v2640 = vadd.f32 0.0, %v2639
  %v2641 = vpop.f32.mrf.mxu0
  %2642 = vmatprep.mubr.bf16.mxu0 0
  %2643 = vmatmul.mubr.bf16.gmra.mxu0 %v2529
  %v2644 = vpop.f32.mrf.mxu0
  %v2645 = vadd.f32 0.0, %v2644
  %v2646 = vpop.f32.mrf.mxu0
  %v2647 = vpop.f32.mrf.mxu0
  %v2648 = vadd.f32 0.0, %v2647
  %v2649 = vpop.f32.mrf.mxu0
  %2650 = vmatprep.mubr.bf16.mxu0 0
  %2651 = vmatmul.mubr.bf16.gmra.mxu0 %v2532
  %v2652 = vpop.f32.mrf.mxu0
  %v2653 = vadd.f32 0.0, %v2652
  %v2654 = vpop.f32.mrf.mxu0
  %v2655 = vpop.f32.mrf.mxu0
  %v2656 = vadd.f32 0.0, %v2655
  %v2657 = vpop.f32.mrf.mxu0
  %2658 = vmatprep.mubr.bf16.mxu0 0
  %2659 = vmatmul.mubr.bf16.gmra.mxu0 %v2535
  %v2660 = vpop.f32.mrf.mxu0
  %v2661 = vadd.f32 0.0, %v2660
  %v2662 = vpop.f32.mrf.mxu0
  %v2663 = vpop.f32.mrf.mxu0
  %v2664 = vadd.f32 0.0, %v2663
  %v2665 = vpop.f32.mrf.mxu0
  %2666 = vmatprep.mubr.bf16.mxu0 0
  %2667 = vmatmul.mubr.bf16.gmra.mxu0 %v2538
  %v2668 = vpop.f32.mrf.mxu0
  %v2669 = vadd.f32 0.0, %v2668
  %v2670 = vpop.f32.mrf.mxu0
  %v2671 = vpop.f32.mrf.mxu0
  %v2672 = vadd.f32 0.0, %v2671
  %v2673 = vpop.f32.mrf.mxu0
  %2674 = vmatprep.mubr.bf16.mxu0 0
  %2675 = vmatmul.mubr.bf16.gmra.mxu0 %v2541
  %v2676 = vpop.f32.mrf.mxu0
  %v2677 = vadd.f32 0.0, %v2676
  %v2678 = vpop.f32.mrf.mxu0
  %v2679 = vpop.f32.mrf.mxu0
  %v2680 = vadd.f32 0.0, %v2679
  %v2681 = vpop.f32.mrf.mxu0
  %2682 = vmatprep.mubr.bf16.mxu0 0
  %2683 = vmatmul.mubr.bf16.gmra.mxu0 %v2544
  %v2684 = vpop.f32.mrf.mxu0
  %v2685 = vadd.f32 0.0, %v2684
  %v2686 = vpop.f32.mrf.mxu0
  %v2687 = vpop.f32.mrf.mxu0
  %v2688 = vadd.f32 0.0, %v2687
  %v2689 = vpop.f32.mrf.mxu0
  %2690 = vdwg.mxu0
  %v2691 = vpack.c.bf16 %v2584, %v2581
  %v2692 = vpack.c.bf16 %v2592, %v2589
  %v2693 = vpack.c.bf16 %v2600, %v2597
  %v2694 = vpack.c.bf16 %v2605, %v2605
  %v2695 = vld [vmem:[%s9] sm:$0xff]
  %v2696 = vld [vmem:[%s9 + $0x8] sm:$0xff]
  %v2697 = vld [vmem:[%s9 + $0x10] sm:$0xff]
  %v2698 = vld [vmem:[%s9 + $0x18] sm:$0xff]
  %v2699 = vld [vmem:[%s9 + $0x20] sm:$0xff]
  %v2700 = vld [vmem:[%s9 + $0x28] sm:$0xff]
  %v2701 = vld [vmem:[%s9 + $0x30] sm:$0xff]
  %v2702 = vld [vmem:[%s9 + $0x38] sm:$0xff]
  %v2703 = vld [vmem:[%s9 + $0x40] sm:$0xff]
  %v2704 = vld [vmem:[%s9 + $0x48] sm:$0xff]
  %v2705 = vld [vmem:[%s9 + $0x50] sm:$0xff]
  %v2706 = vld [vmem:[%s9 + $0x58] sm:$0xff]
  %v2707 = vld [vmem:[%s9 + $0x60] sm:$0xff]
  %v2708 = vld [vmem:[%s9 + $0x68] sm:$0xff]
  %v2709 = vld [vmem:[%s9 + $0x70] sm:$0xff]
  %v2710 = vld [vmem:[%s9 + $0x78] sm:$0xff]
  %v2711 = vpack.c.bf16 %v2613, %v2608
  %v2712 = vpack.c.bf16 %v2621, %v2616
  %v2713 = vpack.c.bf16 %v2629, %v2624
  %v2714 = vpack.c.bf16 %v2632, %v2632
  %s2715 = scalar_lea.vmem %s9, 128
  %v2716 = vld [vmem:[%s2715] sm:$0xff]
  %v2717 = vld [vmem:[%s2715 + $0x8] sm:$0xff]
  %v2718 = vld [vmem:[%s2715 + $0x10] sm:$0xff]
  %v2719 = vld [vmem:[%s2715 + $0x18] sm:$0xff]
  %v2720 = vld [vmem:[%s2715 + $0x20] sm:$0xff]
  %v2721 = vld [vmem:[%s2715 + $0x28] sm:$0xff]
  %v2722 = vld [vmem:[%s2715 + $0x30] sm:$0xff]
  %v2723 = vld [vmem:[%s2715 + $0x38] sm:$0xff]
  %v2724 = vld [vmem:[%s2715 + $0x40] sm:$0xff]
  %v2725 = vld [vmem:[%s2715 + $0x48] sm:$0xff]
  %v2726 = vld [vmem:[%s2715 + $0x50] sm:$0xff]
  %v2727 = vld [vmem:[%s2715 + $0x58] sm:$0xff]
  %v2728 = vld [vmem:[%s2715 + $0x60] sm:$0xff]
  %v2729 = vld [vmem:[%s2715 + $0x68] sm:$0xff]
  %v2730 = vld [vmem:[%s2715 + $0x70] sm:$0xff]
  %v2731 = vld [vmem:[%s2715 + $0x78] sm:$0xff]
  %v2748 = vunpack.c.l.b16 %v2716
  %v2749 = vunpack.c.h.b16 %v2716
  %v2750 = vunpack.c.l.b16 %v2717
  %v2751 = vunpack.c.h.b16 %v2717
  %v2752 = vunpack.c.l.b16 %v2718
  %v2753 = vunpack.c.h.b16 %v2718
  %v2754 = vunpack.c.l.b16 %v2719
  %v2755 = vunpack.c.h.b16 %v2719
  %v2756 = vunpack.c.l.b16 %v2720
  %v2757 = vunpack.c.h.b16 %v2720
  %v2758 = vunpack.c.l.b16 %v2721
  %v2759 = vunpack.c.h.b16 %v2721
  %v2760 = vunpack.c.l.b16 %v2722
  %v2761 = vunpack.c.h.b16 %v2722
  %v2762 = vunpack.c.l.b16 %v2723
  %v2763 = vunpack.c.h.b16 %v2723
  %v2764 = vunpack.c.l.b16 %v2724
  %v2765 = vunpack.c.h.b16 %v2724
  %v2766 = vunpack.c.l.b16 %v2725
  %v2767 = vunpack.c.h.b16 %v2725
  %v2768 = vunpack.c.l.b16 %v2726
  %v2769 = vunpack.c.h.b16 %v2726
  %v2770 = vunpack.c.l.b16 %v2727
  %v2771 = vunpack.c.h.b16 %v2727
  %v2772 = vunpack.c.l.b16 %v2728
  %v2773 = vunpack.c.h.b16 %v2728
  %v2774 = vunpack.c.l.b16 %v2729
  %v2775 = vunpack.c.h.b16 %v2729
  %v2776 = vunpack.c.l.b16 %v2730
  %v2777 = vunpack.c.h.b16 %v2730
  %v2778 = vunpack.c.l.b16 %v2731
  %v2779 = vunpack.c.h.b16 %v2731
  %v2780 = vpack.c.b16 %v2750, %v2748
  %v2781 = vpack.c.b16 %v2751, %v2749
  %v2782 = vpack.c.b16 %v2754, %v2752
  %v2783 = vpack.c.b16 %v2755, %v2753
  %v2784 = vpack.c.b16 %v2758, %v2756
  %v2785 = vpack.c.b16 %v2759, %v2757
  %v2786 = vpack.c.b16 %v2762, %v2760
  %v2787 = vpack.c.b16 %v2763, %v2761
  %v2788 = vpack.c.b16 %v2766, %v2764
  %v2789 = vpack.c.b16 %v2767, %v2765
  %v2790 = vpack.c.b16 %v2770, %v2768
  %v2791 = vpack.c.b16 %v2771, %v2769
  %v2792 = vpack.c.b16 %v2774, %v2772
  %v2793 = vpack.c.b16 %v2775, %v2773
  %v2794 = vpack.c.b16 %v2778, %v2776
  %v2795 = vpack.c.b16 %v2779, %v2777
  %2812 = vmatprep.subr.bf16.mxu0 %v2795
  %2813 = vmatpush1.bf16.msra.mxu0 %v2794
  %2814 = vmatprep.subr.bf16.mxu0 %v2793
  %2815 = vmatpush1.bf16.msra.mxu0 %v2792
  %2816 = vmatprep.subr.bf16.mxu0 %v2791
  %2817 = vmatpush1.bf16.msra.mxu0 %v2790
  %2818 = vmatprep.subr.bf16.mxu0 %v2789
  %2819 = vmatpush1.bf16.msra.mxu0 %v2788
  %2820 = vmatprep.subr.bf16.mxu0 %v2787
  %2821 = vmatpush1.bf16.msra.mxu0 %v2786
  %2822 = vmatprep.subr.bf16.mxu0 %v2785
  %2823 = vmatpush1.bf16.msra.mxu0 %v2784
  %2824 = vmatprep.subr.bf16.mxu0 %v2783
  %2825 = vmatpush1.bf16.msra.mxu0 %v2782
  %2826 = vmatprep.subr.bf16.mxu0 %v2781
  %2827 = vmatpush1.bf16.msra.mxu0 %v2780
  %2828 = vmatprep.subr.bf16.mxu0 0
  %2829 = vmatpush2.bf16.msra.mxu0 0
  %2830 = vmatprep.subr.bf16.mxu0 0
  %2831 = vmatpush2.bf16.msra.mxu0 0
  %2832 = vmatprep.subr.bf16.mxu0 0
  %2833 = vmatpush2.bf16.msra.mxu0 0
  %2834 = vmatprep.subr.bf16.mxu0 0
  %2835 = vmatpush2.bf16.msra.mxu0 0
  %2836 = vmatprep.subr.bf16.mxu0 0
  %2837 = vmatpush2.bf16.msra.mxu0 0
  %2838 = vmatprep.subr.bf16.mxu0 0
  %2839 = vmatpush2.bf16.msra.mxu0 0
  %2840 = vmatprep.subr.bf16.mxu0 0
  %2841 = vmatpush2.bf16.msra.mxu0 0
  %2842 = vmatprep.subr.bf16.mxu0 0
  %2843 = vmatpush2.bf16.msra.mxu0 0
  %2844 = vmatprep.mubr.bf16.mxu0 0
  %2845 = vmatmul.mubr.bf16.gmra.mxu0 %v2711
  %v2846 = vpop.f32.mrf.mxu0
  %v2847 = vadd.f32 0.0, %v2846
  %v2848 = vpop.f32.mrf.mxu0
  %v2849 = vadd.f32 0.0, %v2848
  %v2850 = vpop.f32.mrf.mxu0
  %v2851 = vadd.f32 0.0, %v2850
  %v2852 = vpop.f32.mrf.mxu0
  %v2853 = vadd.f32 0.0, %v2852
  %2854 = vmatprep.mubr.bf16.mxu0 0
  %2855 = vmatmul.mubr.bf16.gmra.mxu0 %v2712
  %v2856 = vpop.f32.mrf.mxu0
  %v2857 = vadd.f32 0.0, %v2856
  %v2858 = vpop.f32.mrf.mxu0
  %v2859 = vadd.f32 0.0, %v2858
  %v2860 = vpop.f32.mrf.mxu0
  %v2861 = vadd.f32 0.0, %v2860
  %v2862 = vpop.f32.mrf.mxu0
  %v2863 = vadd.f32 0.0, %v2862
  %2864 = vmatprep.mubr.bf16.mxu0 0
  %2865 = vmatmul.mubr.bf16.gmra.mxu0 %v2713
  %v2866 = vpop.f32.mrf.mxu0
  %v2867 = vadd.f32 0.0, %v2866
  %v2868 = vpop.f32.mrf.mxu0
  %v2869 = vadd.f32 0.0, %v2868
  %v2870 = vpop.f32.mrf.mxu0
  %v2871 = vadd.f32 0.0, %v2870
  %v2872 = vpop.f32.mrf.mxu0
  %v2873 = vadd.f32 0.0, %v2872
  %2874 = vmatprep.mubr.bf16.mxu0 0
  %2875 = vmatmul.mubr.bf16.gmra.mxu0 %v2714
  %v2876 = vpop.f32.mrf.mxu0
  %v2877 = vadd.f32 0.0, %v2876
  %v2878 = vpop.f32.mrf.mxu0
  %v2879 = vadd.f32 0.0, %v2878
  %v2880 = vpop.f32.mrf.mxu0
  %v2881 = vpop.f32.mrf.mxu0
  %2882 = vdwg.mxu0
  %v2899 = vunpack.c.l.b16 %v2695
  %v2900 = vunpack.c.h.b16 %v2695
  %v2901 = vunpack.c.l.b16 %v2696
  %v2902 = vunpack.c.h.b16 %v2696
  %v2903 = vunpack.c.l.b16 %v2697
  %v2904 = vunpack.c.h.b16 %v2697
  %v2905 = vunpack.c.l.b16 %v2698
  %v2906 = vunpack.c.h.b16 %v2698
  %v2907 = vunpack.c.l.b16 %v2699
  %v2908 = vunpack.c.h.b16 %v2699
  %v2909 = vunpack.c.l.b16 %v2700
  %v2910 = vunpack.c.h.b16 %v2700
  %v2911 = vunpack.c.l.b16 %v2701
  %v2912 = vunpack.c.h.b16 %v2701
  %v2913 = vunpack.c.l.b16 %v2702
  %v2914 = vunpack.c.h.b16 %v2702
  %v2915 = vunpack.c.l.b16 %v2703
  %v2916 = vunpack.c.h.b16 %v2703
  %v2917 = vunpack.c.l.b16 %v2704
  %v2918 = vunpack.c.h.b16 %v2704
  %v2919 = vunpack.c.l.b16 %v2705
  %v2920 = vunpack.c.h.b16 %v2705
  %v2921 = vunpack.c.l.b16 %v2706
  %v2922 = vunpack.c.h.b16 %v2706
  %v2923 = vunpack.c.l.b16 %v2707
  %v2924 = vunpack.c.h.b16 %v2707
  %v2925 = vunpack.c.l.b16 %v2708
  %v2926 = vunpack.c.h.b16 %v2708
  %v2927 = vunpack.c.l.b16 %v2709
  %v2928 = vunpack.c.h.b16 %v2709
  %v2929 = vunpack.c.l.b16 %v2710
  %v2930 = vunpack.c.h.b16 %v2710
  %v2931 = vpack.c.b16 %v2901, %v2899
  %v2932 = vpack.c.b16 %v2902, %v2900
  %v2933 = vpack.c.b16 %v2905, %v2903
  %v2934 = vpack.c.b16 %v2906, %v2904
  %v2935 = vpack.c.b16 %v2909, %v2907
  %v2936 = vpack.c.b16 %v2910, %v2908
  %v2937 = vpack.c.b16 %v2913, %v2911
  %v2938 = vpack.c.b16 %v2914, %v2912
  %v2939 = vpack.c.b16 %v2917, %v2915
  %v2940 = vpack.c.b16 %v2918, %v2916
  %v2941 = vpack.c.b16 %v2921, %v2919
  %v2942 = vpack.c.b16 %v2922, %v2920
  %v2943 = vpack.c.b16 %v2925, %v2923
  %v2944 = vpack.c.b16 %v2926, %v2924
  %v2945 = vpack.c.b16 %v2929, %v2927
  %v2946 = vpack.c.b16 %v2930, %v2928
  %2963 = vmatprep.subr.bf16.mxu0 %v2946
  %2964 = vmatpush1.bf16.msra.mxu0 %v2945
  %2965 = vmatprep.subr.bf16.mxu0 %v2944
  %2966 = vmatpush1.bf16.msra.mxu0 %v2943
  %2967 = vmatprep.subr.bf16.mxu0 %v2942
  %2968 = vmatpush1.bf16.msra.mxu0 %v2941
  %2969 = vmatprep.subr.bf16.mxu0 %v2940
  %2970 = vmatpush1.bf16.msra.mxu0 %v2939
  %2971 = vmatprep.subr.bf16.mxu0 %v2938
  %2972 = vmatpush1.bf16.msra.mxu0 %v2937
  %2973 = vmatprep.subr.bf16.mxu0 %v2936
  %2974 = vmatpush1.bf16.msra.mxu0 %v2935
  %2975 = vmatprep.subr.bf16.mxu0 %v2934
  %2976 = vmatpush1.bf16.msra.mxu0 %v2933
  %2977 = vmatprep.subr.bf16.mxu0 %v2932
  %2978 = vmatpush1.bf16.msra.mxu0 %v2931
  %2979 = vmatprep.subr.bf16.mxu0 0
  %2980 = vmatpush2.bf16.msra.mxu0 0
  %2981 = vmatprep.subr.bf16.mxu0 0
  %2982 = vmatpush2.bf16.msra.mxu0 0
  %2983 = vmatprep.subr.bf16.mxu0 0
  %2984 = vmatpush2.bf16.msra.mxu0 0
  %2985 = vmatprep.subr.bf16.mxu0 0
  %2986 = vmatpush2.bf16.msra.mxu0 0
  %2987 = vmatprep.subr.bf16.mxu0 0
  %2988 = vmatpush2.bf16.msra.mxu0 0
  %2989 = vmatprep.subr.bf16.mxu0 0
  %2990 = vmatpush2.bf16.msra.mxu0 0
  %2991 = vmatprep.subr.bf16.mxu0 0
  %2992 = vmatpush2.bf16.msra.mxu0 0
  %2993 = vmatprep.subr.bf16.mxu0 0
  %2994 = vmatpush2.bf16.msra.mxu0 0
  %2995 = vmatprep.mubr.bf16.mxu0 0
  %2996 = vmatmul.mubr.bf16.gmra.mxu0 %v2691
  %v2997 = vpop.f32.mrf.mxu0
  %v2998 = vadd.f32 %v2847, %v2997
  %v2999 = vpop.f32.mrf.mxu0
  %v3000 = vadd.f32 %v2849, %v2999
  %v3001 = vpop.f32.mrf.mxu0
  %v3002 = vadd.f32 %v2851, %v3001
  %v3003 = vpop.f32.mrf.mxu0
  %v3004 = vadd.f32 %v2853, %v3003
  %3005 = vmatprep.mubr.bf16.mxu0 0
  %3006 = vmatmul.mubr.bf16.gmra.mxu0 %v2692
  %v3007 = vpop.f32.mrf.mxu0
  %v3008 = vadd.f32 %v2857, %v3007
  %v3009 = vpop.f32.mrf.mxu0
  %v3010 = vadd.f32 %v2859, %v3009
  %v3011 = vpop.f32.mrf.mxu0
  %v3012 = vadd.f32 %v2861, %v3011
  %v3013 = vpop.f32.mrf.mxu0
  %v3014 = vadd.f32 %v2863, %v3013
  %3015 = vmatprep.mubr.bf16.mxu0 0
  %3016 = vmatmul.mubr.bf16.gmra.mxu0 %v2693
  %v3017 = vpop.f32.mrf.mxu0
  %v3018 = vadd.f32 %v2867, %v3017
  %v3019 = vpop.f32.mrf.mxu0
  %v3020 = vadd.f32 %v2869, %v3019
  %v3021 = vpop.f32.mrf.mxu0
  %v3022 = vadd.f32 %v2871, %v3021
  %v3023 = vpop.f32.mrf.mxu0
  %v3024 = vadd.f32 %v2873, %v3023
  %3025 = vmatprep.mubr.bf16.mxu0 0
  %3026 = vmatmul.mubr.bf16.gmra.mxu0 %v2694
  %v3027 = vpop.f32.mrf.mxu0
  %v3028 = vadd.f32 %v2877, %v3027
  %v3029 = vpop.f32.mrf.mxu0
  %v3030 = vadd.f32 %v2879, %v3029
  %v3031 = vpop.f32.mrf.mxu0
  %v3032 = vpop.f32.mrf.mxu0
  %3033 = vdwg.mxu0
  %v3034 = vpack.c.bf16 %v2640, %v2637
  %v3035 = vpack.c.bf16 %v2648, %v2645
  %v3036 = vpack.c.bf16 %v2656, %v2653
  %v3037 = vpack.c.bf16 %v2661, %v2661
  %s3038 = scalar_lea.vmem %s9, 256
  %v3039 = vld [vmem:[%s3038] sm:$0xff]
  %v3040 = vld [vmem:[%s3038 + $0x8] sm:$0xff]
  %v3041 = vld [vmem:[%s3038 + $0x10] sm:$0xff]
  %v3042 = vld [vmem:[%s3038 + $0x18] sm:$0xff]
  %v3043 = vld [vmem:[%s3038 + $0x20] sm:$0xff]
  %v3044 = vld [vmem:[%s3038 + $0x28] sm:$0xff]
  %v3045 = vld [vmem:[%s3038 + $0x30] sm:$0xff]
  %v3046 = vld [vmem:[%s3038 + $0x38] sm:$0xff]
  %v3047 = vld [vmem:[%s3038 + $0x40] sm:$0xff]
  %v3048 = vld [vmem:[%s3038 + $0x48] sm:$0xff]
  %v3049 = vld [vmem:[%s3038 + $0x50] sm:$0xff]
  %v3050 = vld [vmem:[%s3038 + $0x58] sm:$0xff]
  %v3051 = vld [vmem:[%s3038 + $0x60] sm:$0xff]
  %v3052 = vld [vmem:[%s3038 + $0x68] sm:$0xff]
  %v3053 = vld [vmem:[%s3038 + $0x70] sm:$0xff]
  %v3054 = vld [vmem:[%s3038 + $0x78] sm:$0xff]
  %v3071 = vunpack.c.l.b16 %v3039
  %v3072 = vunpack.c.h.b16 %v3039
  %v3073 = vunpack.c.l.b16 %v3040
  %v3074 = vunpack.c.h.b16 %v3040
  %v3075 = vunpack.c.l.b16 %v3041
  %v3076 = vunpack.c.h.b16 %v3041
  %v3077 = vunpack.c.l.b16 %v3042
  %v3078 = vunpack.c.h.b16 %v3042
  %v3079 = vunpack.c.l.b16 %v3043
  %v3080 = vunpack.c.h.b16 %v3043
  %v3081 = vunpack.c.l.b16 %v3044
  %v3082 = vunpack.c.h.b16 %v3044
  %v3083 = vunpack.c.l.b16 %v3045
  %v3084 = vunpack.c.h.b16 %v3045
  %v3085 = vunpack.c.l.b16 %v3046
  %v3086 = vunpack.c.h.b16 %v3046
  %v3087 = vunpack.c.l.b16 %v3047
  %v3088 = vunpack.c.h.b16 %v3047
  %v3089 = vunpack.c.l.b16 %v3048
  %v3090 = vunpack.c.h.b16 %v3048
  %v3091 = vunpack.c.l.b16 %v3049
  %v3092 = vunpack.c.h.b16 %v3049
  %v3093 = vunpack.c.l.b16 %v3050
  %v3094 = vunpack.c.h.b16 %v3050
  %v3095 = vunpack.c.l.b16 %v3051
  %v3096 = vunpack.c.h.b16 %v3051
  %v3097 = vunpack.c.l.b16 %v3052
  %v3098 = vunpack.c.h.b16 %v3052
  %v3099 = vunpack.c.l.b16 %v3053
  %v3100 = vunpack.c.h.b16 %v3053
  %v3101 = vunpack.c.l.b16 %v3054
  %v3102 = vunpack.c.h.b16 %v3054
  %v3103 = vpack.c.b16 %v3073, %v3071
  %v3104 = vpack.c.b16 %v3074, %v3072
  %v3105 = vpack.c.b16 %v3077, %v3075
  %v3106 = vpack.c.b16 %v3078, %v3076
  %v3107 = vpack.c.b16 %v3081, %v3079
  %v3108 = vpack.c.b16 %v3082, %v3080
  %v3109 = vpack.c.b16 %v3085, %v3083
  %v3110 = vpack.c.b16 %v3086, %v3084
  %v3111 = vpack.c.b16 %v3089, %v3087
  %v3112 = vpack.c.b16 %v3090, %v3088
  %v3113 = vpack.c.b16 %v3093, %v3091
  %v3114 = vpack.c.b16 %v3094, %v3092
  %v3115 = vpack.c.b16 %v3097, %v3095
  %v3116 = vpack.c.b16 %v3098, %v3096
  %v3117 = vpack.c.b16 %v3101, %v3099
  %v3118 = vpack.c.b16 %v3102, %v3100
  %3135 = vmatprep.subr.bf16.mxu0 %v3118
  %3136 = vmatpush1.bf16.msra.mxu0 %v3117
  %3137 = vmatprep.subr.bf16.mxu0 %v3116
  %3138 = vmatpush1.bf16.msra.mxu0 %v3115
  %3139 = vmatprep.subr.bf16.mxu0 %v3114
  %3140 = vmatpush1.bf16.msra.mxu0 %v3113
  %3141 = vmatprep.subr.bf16.mxu0 %v3112
  %3142 = vmatpush1.bf16.msra.mxu0 %v3111
  %3143 = vmatprep.subr.bf16.mxu0 %v3110
  %3144 = vmatpush1.bf16.msra.mxu0 %v3109
  %3145 = vmatprep.subr.bf16.mxu0 %v3108
  %3146 = vmatpush1.bf16.msra.mxu0 %v3107
  %3147 = vmatprep.subr.bf16.mxu0 %v3106
  %3148 = vmatpush1.bf16.msra.mxu0 %v3105
  %3149 = vmatprep.subr.bf16.mxu0 %v3104
  %3150 = vmatpush1.bf16.msra.mxu0 %v3103
  %3151 = vmatprep.subr.bf16.mxu0 0
  %3152 = vmatpush2.bf16.msra.mxu0 0
  %3153 = vmatprep.subr.bf16.mxu0 0
  %3154 = vmatpush2.bf16.msra.mxu0 0
  %3155 = vmatprep.subr.bf16.mxu0 0
  %3156 = vmatpush2.bf16.msra.mxu0 0
  %3157 = vmatprep.subr.bf16.mxu0 0
  %3158 = vmatpush2.bf16.msra.mxu0 0
  %3159 = vmatprep.subr.bf16.mxu0 0
  %3160 = vmatpush2.bf16.msra.mxu0 0
  %3161 = vmatprep.subr.bf16.mxu0 0
  %3162 = vmatpush2.bf16.msra.mxu0 0
  %3163 = vmatprep.subr.bf16.mxu0 0
  %3164 = vmatpush2.bf16.msra.mxu0 0
  %3165 = vmatprep.subr.bf16.mxu0 0
  %3166 = vmatpush2.bf16.msra.mxu0 0
  %3167 = vmatprep.mubr.bf16.mxu0 0
  %3168 = vmatmul.mubr.bf16.gmra.mxu0 %v3034
  %v3169 = vpop.f32.mrf.mxu0
  %v3170 = vadd.f32 0.0, %v3169
  %v3171 = vpop.f32.mrf.mxu0
  %v3172 = vadd.f32 0.0, %v3171
  %v3173 = vpop.f32.mrf.mxu0
  %v3174 = vadd.f32 0.0, %v3173
  %v3175 = vpop.f32.mrf.mxu0
  %v3176 = vadd.f32 0.0, %v3175
  %3177 = vmatprep.mubr.bf16.mxu0 0
  %3178 = vmatmul.mubr.bf16.gmra.mxu0 %v3035
  %v3179 = vpop.f32.mrf.mxu0
  %v3180 = vadd.f32 0.0, %v3179
  %v3181 = vpop.f32.mrf.mxu0
  %v3182 = vadd.f32 0.0, %v3181
  %v3183 = vpop.f32.mrf.mxu0
  %v3184 = vadd.f32 0.0, %v3183
  %v3185 = vpop.f32.mrf.mxu0
  %v3186 = vadd.f32 0.0, %v3185
  %3187 = vmatprep.mubr.bf16.mxu0 0
  %3188 = vmatmul.mubr.bf16.gmra.mxu0 %v3036
  %v3189 = vpop.f32.mrf.mxu0
  %v3190 = vadd.f32 0.0, %v3189
  %v3191 = vpop.f32.mrf.mxu0
  %v3192 = vadd.f32 0.0, %v3191
  %v3193 = vpop.f32.mrf.mxu0
  %v3194 = vadd.f32 0.0, %v3193
  %v3195 = vpop.f32.mrf.mxu0
  %v3196 = vadd.f32 0.0, %v3195
  %3197 = vmatprep.mubr.bf16.mxu0 0
  %3198 = vmatmul.mubr.bf16.gmra.mxu0 %v3037
  %v3199 = vpop.f32.mrf.mxu0
  %v3200 = vadd.f32 0.0, %v3199
  %v3201 = vpop.f32.mrf.mxu0
  %v3202 = vadd.f32 0.0, %v3201
  %v3203 = vpop.f32.mrf.mxu0
  %v3204 = vpop.f32.mrf.mxu0
  %3205 = vdwg.mxu0
  %v3206 = vadd.f32 %v2998, %v3170
  %v3207 = vadd.f32 %v3000, %v3172
  %v3208 = vadd.f32 %v3002, %v3174
  %v3209 = vadd.f32 %v3004, %v3176
  %v3210 = vadd.f32 %v3008, %v3180
  %v3211 = vadd.f32 %v3010, %v3182
  %v3212 = vadd.f32 %v3012, %v3184
  %v3213 = vadd.f32 %v3014, %v3186
  %v3214 = vadd.f32 %v3018, %v3190
  %v3215 = vadd.f32 %v3020, %v3192
  %v3216 = vadd.f32 %v3022, %v3194
  %v3217 = vadd.f32 %v3024, %v3196
  %v3218 = vadd.f32 %v3028, %v3200
  %v3219 = vadd.f32 %v3030, %v3202
  %v3220 = vpack.c.bf16 %v2669, %v2664
  %v3221 = vpack.c.bf16 %v2677, %v2672
  %v3222 = vpack.c.bf16 %v2685, %v2680
  %v3223 = vpack.c.bf16 %v2688, %v2688
  %s3224 = scalar_lea.vmem %s9, 384
  %v3225 = vld [vmem:[%s3224] sm:$0xff]
  %v3226 = vld [vmem:[%s3224 + $0x8] sm:$0xff]
  %v3227 = vld [vmem:[%s3224 + $0x10] sm:$0xff]
  %v3228 = vld [vmem:[%s3224 + $0x18] sm:$0xff]
  %v3229 = vld [vmem:[%s3224 + $0x20] sm:$0xff]
  %v3230 = vld [vmem:[%s3224 + $0x28] sm:$0xff]
  %v3231 = vld [vmem:[%s3224 + $0x30] sm:$0xff]
  %v3232 = vld [vmem:[%s3224 + $0x38] sm:$0xff]
  %v3233 = vld [vmem:[%s3224 + $0x40] sm:$0xff]
  %v3234 = vld [vmem:[%s3224 + $0x48] sm:$0xff]
  %v3235 = vld [vmem:[%s3224 + $0x50] sm:$0xff]
  %v3236 = vld [vmem:[%s3224 + $0x58] sm:$0xff]
  %v3237 = vld [vmem:[%s3224 + $0x60] sm:$0xff]
  %v3238 = vld [vmem:[%s3224 + $0x68] sm:$0xff]
  %v3239 = vld [vmem:[%s3224 + $0x70] sm:$0xff]
  %v3240 = vld [vmem:[%s3224 + $0x78] sm:$0xff]
  %v3257 = vunpack.c.l.b16 %v3225
  %v3258 = vunpack.c.h.b16 %v3225
  %v3259 = vunpack.c.l.b16 %v3226
  %v3260 = vunpack.c.h.b16 %v3226
  %v3261 = vunpack.c.l.b16 %v3227
  %v3262 = vunpack.c.h.b16 %v3227
  %v3263 = vunpack.c.l.b16 %v3228
  %v3264 = vunpack.c.h.b16 %v3228
  %v3265 = vunpack.c.l.b16 %v3229
  %v3266 = vunpack.c.h.b16 %v3229
  %v3267 = vunpack.c.l.b16 %v3230
  %v3268 = vunpack.c.h.b16 %v3230
  %v3269 = vunpack.c.l.b16 %v3231
  %v3270 = vunpack.c.h.b16 %v3231
  %v3271 = vunpack.c.l.b16 %v3232
  %v3272 = vunpack.c.h.b16 %v3232
  %v3273 = vunpack.c.l.b16 %v3233
  %v3274 = vunpack.c.h.b16 %v3233
  %v3275 = vunpack.c.l.b16 %v3234
  %v3276 = vunpack.c.h.b16 %v3234
  %v3277 = vunpack.c.l.b16 %v3235
  %v3278 = vunpack.c.h.b16 %v3235
  %v3279 = vunpack.c.l.b16 %v3236
  %v3280 = vunpack.c.h.b16 %v3236
  %v3281 = vunpack.c.l.b16 %v3237
  %v3282 = vunpack.c.h.b16 %v3237
  %v3283 = vunpack.c.l.b16 %v3238
  %v3284 = vunpack.c.h.b16 %v3238
  %v3285 = vunpack.c.l.b16 %v3239
  %v3286 = vunpack.c.h.b16 %v3239
  %v3287 = vunpack.c.l.b16 %v3240
  %v3288 = vunpack.c.h.b16 %v3240
  %v3289 = vpack.c.b16 %v3259, %v3257
  %v3290 = vpack.c.b16 %v3260, %v3258
  %v3291 = vpack.c.b16 %v3263, %v3261
  %v3292 = vpack.c.b16 %v3264, %v3262
  %v3293 = vpack.c.b16 %v3267, %v3265
  %v3294 = vpack.c.b16 %v3268, %v3266
  %v3295 = vpack.c.b16 %v3271, %v3269
  %v3296 = vpack.c.b16 %v3272, %v3270
  %v3297 = vpack.c.b16 %v3275, %v3273
  %v3298 = vpack.c.b16 %v3276, %v3274
  %v3299 = vpack.c.b16 %v3279, %v3277
  %v3300 = vpack.c.b16 %v3280, %v3278
  %v3301 = vpack.c.b16 %v3283, %v3281
  %v3302 = vpack.c.b16 %v3284, %v3282
  %v3303 = vpack.c.b16 %v3287, %v3285
  %v3304 = vpack.c.b16 %v3288, %v3286
  %3321 = vmatprep.subr.bf16.mxu0 %v3304
  %3322 = vmatpush1.bf16.msra.mxu0 %v3303
  %3323 = vmatprep.subr.bf16.mxu0 %v3302
  %3324 = vmatpush1.bf16.msra.mxu0 %v3301
  %3325 = vmatprep.subr.bf16.mxu0 %v3300
  %3326 = vmatpush1.bf16.msra.mxu0 %v3299
  %3327 = vmatprep.subr.bf16.mxu0 %v3298
  %3328 = vmatpush1.bf16.msra.mxu0 %v3297
  %3329 = vmatprep.subr.bf16.mxu0 %v3296
  %3330 = vmatpush1.bf16.msra.mxu0 %v3295
  %3331 = vmatprep.subr.bf16.mxu0 %v3294
  %3332 = vmatpush1.bf16.msra.mxu0 %v3293
  %3333 = vmatprep.subr.bf16.mxu0 %v3292
  %3334 = vmatpush1.bf16.msra.mxu0 %v3291
  %3335 = vmatprep.subr.bf16.mxu0 %v3290
  %3336 = vmatpush1.bf16.msra.mxu0 %v3289
  %3337 = vmatprep.subr.bf16.mxu0 0
  %3338 = vmatpush2.bf16.msra.mxu0 0
  %3339 = vmatprep.subr.bf16.mxu0 0
  %3340 = vmatpush2.bf16.msra.mxu0 0
  %3341 = vmatprep.subr.bf16.mxu0 0
  %3342 = vmatpush2.bf16.msra.mxu0 0
  %3343 = vmatprep.subr.bf16.mxu0 0
  %3344 = vmatpush2.bf16.msra.mxu0 0
  %3345 = vmatprep.subr.bf16.mxu0 0
  %3346 = vmatpush2.bf16.msra.mxu0 0
  %3347 = vmatprep.subr.bf16.mxu0 0
  %3348 = vmatpush2.bf16.msra.mxu0 0
  %3349 = vmatprep.subr.bf16.mxu0 0
  %3350 = vmatpush2.bf16.msra.mxu0 0
  %3351 = vmatprep.subr.bf16.mxu0 0
  %3352 = vmatpush2.bf16.msra.mxu0 0
  %3353 = vmatprep.mubr.bf16.mxu0 0
  %3354 = vmatmul.mubr.bf16.gmra.mxu0 %v3220
  %v3355 = vpop.f32.mrf.mxu0
  %v3356 = vadd.f32 0.0, %v3355
  %v3357 = vpop.f32.mrf.mxu0
  %v3358 = vadd.f32 0.0, %v3357
  %v3359 = vpop.f32.mrf.mxu0
  %v3360 = vadd.f32 0.0, %v3359
  %v3361 = vpop.f32.mrf.mxu0
  %v3362 = vadd.f32 0.0, %v3361
  %3363 = vmatprep.mubr.bf16.mxu0 0
  %3364 = vmatmul.mubr.bf16.gmra.mxu0 %v3221
  %v3365 = vpop.f32.mrf.mxu0
  %v3366 = vadd.f32 0.0, %v3365
  %v3367 = vpop.f32.mrf.mxu0
  %v3368 = vadd.f32 0.0, %v3367
  %v3369 = vpop.f32.mrf.mxu0
  %v3370 = vadd.f32 0.0, %v3369
  %v3371 = vpop.f32.mrf.mxu0
  %v3372 = vadd.f32 0.0, %v3371
  %3373 = vmatprep.mubr.bf16.mxu0 0
  %3374 = vmatmul.mubr.bf16.gmra.mxu0 %v3222
  %v3375 = vpop.f32.mrf.mxu0
  %v3376 = vadd.f32 0.0, %v3375
  %v3377 = vpop.f32.mrf.mxu0
  %v3378 = vadd.f32 0.0, %v3377
  %v3379 = vpop.f32.mrf.mxu0
  %v3380 = vadd.f32 0.0, %v3379
  %v3381 = vpop.f32.mrf.mxu0
  %v3382 = vadd.f32 0.0, %v3381
  %3383 = vmatprep.mubr.bf16.mxu0 0
  %3384 = vmatmul.mubr.bf16.gmra.mxu0 %v3223
  %v3385 = vpop.f32.mrf.mxu0
  %v3386 = vadd.f32 0.0, %v3385
  %v3387 = vpop.f32.mrf.mxu0
  %v3388 = vadd.f32 0.0, %v3387
  %v3389 = vpop.f32.mrf.mxu0
  %v3390 = vpop.f32.mrf.mxu0
  %3391 = vdwg.mxu0
  %v3392 = vadd.f32 %v3206, %v3356
  %v3393 = vadd.f32 %v3207, %v3358
  %v3394 = vadd.f32 %v3208, %v3360
  %v3395 = vadd.f32 %v3209, %v3362
  %v3396 = vadd.f32 %v3210, %v3366
  %v3397 = vadd.f32 %v3211, %v3368
  %v3398 = vadd.f32 %v3212, %v3370
  %v3399 = vadd.f32 %v3213, %v3372
  %v3400 = vadd.f32 %v3214, %v3376
  %v3401 = vadd.f32 %v3215, %v3378
  %v3402 = vadd.f32 %v3216, %v3380
  %v3403 = vadd.f32 %v3217, %v3382
  %v3404 = vadd.f32 %v3218, %v3386
  %v3405 = vadd.f32 %v3219, %v3388
  %v3406 = vld [vmem:[%s10] sm:$0xff]
  %v3407 = vld [vmem:[%s10 + $0x8] sm:$0xff]
  %v3408 = vld [vmem:[%s10 + $0x10] sm:$0xff]
  %v3409 = vld [vmem:[%s10 + $0x18] sm:$0xff]
  %v3410 = vld [vmem:[%s10 + $0x20] sm:$0xff]
  %v3411 = vld [vmem:[%s10 + $0x28] sm:$0xff]
  %v3412 = vld [vmem:[%s10 + $0x30] sm:$0xff]
  %v3413 = vld [vmem:[%s10 + $0x38] sm:$0xff]
  %v3414 = vld [vmem:[%s10 + $0x40] sm:$0xff]
  %v3415 = vld [vmem:[%s10 + $0x48] sm:$0xff]
  %v3416 = vld [vmem:[%s10 + $0x50] sm:$0xff]
  %v3417 = vld [vmem:[%s10 + $0x58] sm:$0xff]
  %v3418 = vld [vmem:[%s10 + $0x60] sm:$0xff]
  %v3419 = vld [vmem:[%s10 + $0x68] sm:$0xff]
  %v3420 = vld [vmem:[%s10 + $0x70] sm:$0xff]
  %v3421 = vld [vmem:[%s10 + $0x78] sm:$0xff]
  %s3422 = scalar_lea.vmem %s10, 128
  %v3423 = vld [vmem:[%s3422] sm:$0xff]
  %v3424 = vld [vmem:[%s3422 + $0x8] sm:$0xff]
  %v3425 = vld [vmem:[%s3422 + $0x10] sm:$0xff]
  %v3426 = vld [vmem:[%s3422 + $0x18] sm:$0xff]
  %v3427 = vld [vmem:[%s3422 + $0x20] sm:$0xff]
  %v3428 = vld [vmem:[%s3422 + $0x28] sm:$0xff]
  %v3429 = vld [vmem:[%s3422 + $0x30] sm:$0xff]
  %v3430 = vld [vmem:[%s3422 + $0x38] sm:$0xff]
  %v3431 = vld [vmem:[%s3422 + $0x40] sm:$0xff]
  %v3432 = vld [vmem:[%s3422 + $0x48] sm:$0xff]
  %v3433 = vld [vmem:[%s3422 + $0x50] sm:$0xff]
  %v3434 = vld [vmem:[%s3422 + $0x58] sm:$0xff]
  %v3435 = vld [vmem:[%s3422 + $0x60] sm:$0xff]
  %v3436 = vld [vmem:[%s3422 + $0x68] sm:$0xff]
  %v3437 = vld [vmem:[%s3422 + $0x70] sm:$0xff]
  %v3438 = vld [vmem:[%s3422 + $0x78] sm:$0xff]
  %3446 = vrot.lane.b32.xlu0 %v3392, 64
  %v3447 = vpop.permute.xlu0 %3446
  %3448 = vrot.lane.b32.xlu0 %v3394, 64
  %v3449 = vpop.permute.xlu0 %3448
  %3450 = vrot.lane.b32.xlu0 %v3396, 64
  %v3451 = vpop.permute.xlu0 %3450
  %3452 = vrot.lane.b32.xlu0 %v3398, 64
  %v3453 = vpop.permute.xlu0 %3452
  %3454 = vrot.lane.b32.xlu0 %v3400, 64
  %v3455 = vpop.permute.xlu0 %3454
  %3456 = vrot.lane.b32.xlu0 %v3402, 64
  %v3457 = vpop.permute.xlu0 %3456
  %3458 = vrot.lane.b32.xlu0 %v3404, 64
  %v3459 = vpop.permute.xlu0 %3458
  %vm3467 = vcmask 457728
  %v3469 = vsel %vm3467, %v3423, 0
  %v3472 = vsel %vm3467, %v3424, 0
  %v3475 = vsel %vm3467, %v3425, 0
  %v3478 = vsel %vm3467, %v3426, 0
  %v3481 = vsel %vm3467, %v3427, 0
  %v3484 = vsel %vm3467, %v3428, 0
  %v3487 = vsel %vm3467, %v3429, 0
  %v3490 = vsel %vm3467, %v3430, 0
  %v3493 = vsel %vm3467, %v3431, 0
  %v3496 = vsel %vm3467, %v3432, 0
  %v3499 = vsel %vm3467, %v3433, 0
  %v3502 = vsel %vm3467, %v3434, 0
  %v3505 = vsel %vm3467, %v3435, 0
  %v3508 = vsel %vm3467, %v3436, 0
  %v3511 = vsel %vm3467, %v3437, 0
  %v3514 = vsel %vm3467, %v3438, 0
  %3516 = vmatprep.subr.mxu0 0.0
  %3517 = vmatpush1.msra.mxu0 0.0
  %3518 = vmatprep.subr.mxu0 0.0
  %3519 = vmatpush1.msra.mxu0 0.0
  %3520 = vmatprep.subr.mxu0 0.0
  %3521 = vmatpush1.msra.mxu0 0.0
  %3522 = vmatprep.subr.mxu0 0.0
  %3523 = vmatpush1.msra.mxu0 0.0
  %3524 = vmatprep.subr.mxu0 0.0
  %3525 = vmatpush1.msra.mxu0 0.0
  %3526 = vmatprep.subr.mxu0 0.0
  %3527 = vmatpush1.msra.mxu0 0.0
  %3528 = vmatprep.subr.mxu0 0.0
  %3529 = vmatpush1.msra.mxu0 0.0
  %3530 = vmatprep.subr.mxu0 0.0
  %3531 = vmatpush1.msra.mxu0 0.0
  %3532 = vmatprep.subr.mxu0 0.0
  %3533 = vmatpush1.msra.mxu0 0.0
  %3534 = vmatprep.subr.mxu0 0.0
  %3535 = vmatpush1.msra.mxu0 %v3459
  %3536 = vmatprep.subr.mxu0 0.0
  %3537 = vmatpush1.msra.mxu0 %v3457
  %3538 = vmatprep.subr.mxu0 0.0
  %3539 = vmatpush1.msra.mxu0 %v3455
  %3540 = vmatprep.subr.mxu0 0.0
  %3541 = vmatpush1.msra.mxu0 %v3453
  %3542 = vmatprep.subr.mxu0 0.0
  %3543 = vmatpush1.msra.mxu0 %v3451
  %3544 = vmatprep.subr.mxu0 0.0
  %3545 = vmatpush1.msra.mxu0 %v3449
  %3546 = vmatprep.subr.mxu0 0.0
  %3547 = vmatpush1.msra.mxu0 %v3447
  %3548 = vmatprep.subr.mxu0 0.0
  %3549 = vmatpush2.msra.mxu0 0.0
  %3550 = vmatprep.subr.mxu0 0.0
  %3551 = vmatpush2.msra.mxu0 0.0
  %3552 = vmatprep.subr.mxu0 0.0
  %3553 = vmatpush2.msra.mxu0 0.0
  %3554 = vmatprep.subr.mxu0 0.0
  %3555 = vmatpush2.msra.mxu0 0.0
  %3556 = vmatprep.subr.mxu0 0.0
  %3557 = vmatpush2.msra.mxu0 0.0
  %3558 = vmatprep.subr.mxu0 0.0
  %3559 = vmatpush2.msra.mxu0 0.0
  %3560 = vmatprep.subr.mxu0 0.0
  %3561 = vmatpush2.msra.mxu0 0.0
  %3562 = vmatprep.subr.mxu0 0.0
  %3563 = vmatpush2.msra.mxu0 0.0
  %3564 = vmatprep.subr.mxu0 0.0
  %3565 = vmatpush2.msra.mxu0 0.0
  %3566 = vmatprep.subr.mxu0 0.0
  %3567 = vmatpush2.msra.mxu0 0.0
  %3568 = vmatprep.subr.mxu0 0.0
  %3569 = vmatpush2.msra.mxu0 0.0
  %3570 = vmatprep.subr.mxu0 0.0
  %3571 = vmatpush2.msra.mxu0 0.0
  %3572 = vmatprep.subr.mxu0 0.0
  %3573 = vmatpush2.msra.mxu0 0.0
  %3574 = vmatprep.subr.mxu0 0.0
  %3575 = vmatpush2.msra.mxu0 0.0
  %3576 = vmatprep.subr.mxu0 0.0
  %3577 = vmatpush2.msra.mxu0 0.0
  %3578 = vmatprep.subr.mxu0 0.0
  %3579 = vmatpush2.msra.mxu0 0.0
  %3580 = vmatprep.mubr.f32.mxu0 0.0
  %3581 = vmatmul.mubr.f32.gmra.mxu0 %v3469
  %v3582 = vpop.f32.mrf.mxu0
  %v3583 = vadd.f32 0.0, %v3582
  %v3584 = vpop.f32.mrf.mxu0
  %3585 = vmatprep.mubr.f32.mxu0 0.0
  %3586 = vmatmul.mubr.f32.gmra.mxu0 %v3472
  %v3587 = vpop.f32.mrf.mxu0
  %v3588 = vadd.f32 0.0, %v3587
  %v3589 = vpop.f32.mrf.mxu0
  %3590 = vmatprep.mubr.f32.mxu0 0.0
  %3591 = vmatmul.mubr.f32.gmra.mxu0 %v3475
  %v3592 = vpop.f32.mrf.mxu0
  %v3593 = vadd.f32 0.0, %v3592
  %v3594 = vpop.f32.mrf.mxu0
  %3595 = vmatprep.mubr.f32.mxu0 0.0
  %3596 = vmatmul.mubr.f32.gmra.mxu0 %v3478
  %v3597 = vpop.f32.mrf.mxu0
  %v3598 = vadd.f32 0.0, %v3597
  %v3599 = vpop.f32.mrf.mxu0
  %3600 = vmatprep.mubr.f32.mxu0 0.0
  %3601 = vmatmul.mubr.f32.gmra.mxu0 %v3481
  %v3602 = vpop.f32.mrf.mxu0
  %v3603 = vadd.f32 0.0, %v3602
  %v3604 = vpop.f32.mrf.mxu0
  %3605 = vmatprep.mubr.f32.mxu0 0.0
  %3606 = vmatmul.mubr.f32.gmra.mxu0 %v3484
  %v3607 = vpop.f32.mrf.mxu0
  %v3608 = vadd.f32 0.0, %v3607
  %v3609 = vpop.f32.mrf.mxu0
  %3610 = vmatprep.mubr.f32.mxu0 0.0
  %3611 = vmatmul.mubr.f32.gmra.mxu0 %v3487
  %v3612 = vpop.f32.mrf.mxu0
  %v3613 = vadd.f32 0.0, %v3612
  %v3614 = vpop.f32.mrf.mxu0
  %3615 = vmatprep.mubr.f32.mxu0 0.0
  %3616 = vmatmul.mubr.f32.gmra.mxu0 %v3490
  %v3617 = vpop.f32.mrf.mxu0
  %v3618 = vadd.f32 0.0, %v3617
  %v3619 = vpop.f32.mrf.mxu0
  %3620 = vmatprep.mubr.f32.mxu0 0.0
  %3621 = vmatmul.mubr.f32.gmra.mxu0 %v3493
  %v3622 = vpop.f32.mrf.mxu0
  %v3623 = vadd.f32 0.0, %v3622
  %v3624 = vpop.f32.mrf.mxu0
  %3625 = vmatprep.mubr.f32.mxu0 0.0
  %3626 = vmatmul.mubr.f32.gmra.mxu0 %v3496
  %v3627 = vpop.f32.mrf.mxu0
  %v3628 = vadd.f32 0.0, %v3627
  %v3629 = vpop.f32.mrf.mxu0
  %3630 = vmatprep.mubr.f32.mxu0 0.0
  %3631 = vmatmul.mubr.f32.gmra.mxu0 %v3499
  %v3632 = vpop.f32.mrf.mxu0
  %v3633 = vadd.f32 0.0, %v3632
  %v3634 = vpop.f32.mrf.mxu0
  %3635 = vmatprep.mubr.f32.mxu0 0.0
  %3636 = vmatmul.mubr.f32.gmra.mxu0 %v3502
  %v3637 = vpop.f32.mrf.mxu0
  %v3638 = vadd.f32 0.0, %v3637
  %v3639 = vpop.f32.mrf.mxu0
  %3640 = vmatprep.mubr.f32.mxu0 0.0
  %3641 = vmatmul.mubr.f32.gmra.mxu0 %v3505
  %v3642 = vpop.f32.mrf.mxu0
  %v3643 = vadd.f32 0.0, %v3642
  %v3644 = vpop.f32.mrf.mxu0
  %3645 = vmatprep.mubr.f32.mxu0 0.0
  %3646 = vmatmul.mubr.f32.gmra.mxu0 %v3508
  %v3647 = vpop.f32.mrf.mxu0
  %v3648 = vadd.f32 0.0, %v3647
  %v3649 = vpop.f32.mrf.mxu0
  %3650 = vmatprep.mubr.f32.mxu0 0.0
  %3651 = vmatmul.mubr.f32.gmra.mxu0 %v3511
  %v3652 = vpop.f32.mrf.mxu0
  %v3653 = vadd.f32 0.0, %v3652
  %v3654 = vpop.f32.mrf.mxu0
  %3655 = vmatprep.mubr.f32.mxu0 0.0
  %3656 = vmatmul.mubr.f32.gmra.mxu0 %v3514
  %v3657 = vpop.f32.mrf.mxu0
  %v3658 = vadd.f32 0.0, %v3657
  %v3659 = vpop.f32.mrf.mxu0
  %3660 = vdwg.mxu0
  %v3662 = vsel %vm3467, %v3406, 0
  %v3665 = vsel %vm3467, %v3407, 0
  %v3668 = vsel %vm3467, %v3408, 0
  %v3671 = vsel %vm3467, %v3409, 0
  %v3674 = vsel %vm3467, %v3410, 0
  %v3677 = vsel %vm3467, %v3411, 0
  %v3680 = vsel %vm3467, %v3412, 0
  %v3683 = vsel %vm3467, %v3413, 0
  %v3686 = vsel %vm3467, %v3414, 0
  %v3689 = vsel %vm3467, %v3415, 0
  %v3692 = vsel %vm3467, %v3416, 0
  %v3695 = vsel %vm3467, %v3417, 0
  %v3698 = vsel %vm3467, %v3418, 0
  %v3701 = vsel %vm3467, %v3419, 0
  %v3704 = vsel %vm3467, %v3420, 0
  %v3707 = vsel %vm3467, %v3421, 0
  %3709 = vmatprep.subr.mxu0 0.0
  %3710 = vmatpush1.msra.mxu0 0.0
  %3711 = vmatprep.subr.mxu0 0.0
  %3712 = vmatpush1.msra.mxu0 0.0
  %3713 = vmatprep.subr.mxu0 0.0
  %3714 = vmatpush1.msra.mxu0 0.0
  %3715 = vmatprep.subr.mxu0 0.0
  %3716 = vmatpush1.msra.mxu0 0.0
  %3717 = vmatprep.subr.mxu0 0.0
  %3718 = vmatpush1.msra.mxu0 0.0
  %3719 = vmatprep.subr.mxu0 0.0
  %3720 = vmatpush1.msra.mxu0 0.0
  %3721 = vmatprep.subr.mxu0 0.0
  %3722 = vmatpush1.msra.mxu0 0.0
  %3723 = vmatprep.subr.mxu0 0.0
  %3724 = vmatpush1.msra.mxu0 0.0
  %3725 = vmatprep.subr.mxu0 0.0
  %3726 = vmatpush1.msra.mxu0 0.0
  %3727 = vmatprep.subr.mxu0 0.0
  %3728 = vmatpush1.msra.mxu0 %v3404
  %3729 = vmatprep.subr.mxu0 0.0
  %3730 = vmatpush1.msra.mxu0 %v3402
  %3731 = vmatprep.subr.mxu0 0.0
  %3732 = vmatpush1.msra.mxu0 %v3400
  %3733 = vmatprep.subr.mxu0 0.0
  %3734 = vmatpush1.msra.mxu0 %v3398
  %3735 = vmatprep.subr.mxu0 0.0
  %3736 = vmatpush1.msra.mxu0 %v3396
  %3737 = vmatprep.subr.mxu0 0.0
  %3738 = vmatpush1.msra.mxu0 %v3394
  %3739 = vmatprep.subr.mxu0 0.0
  %3740 = vmatpush1.msra.mxu0 %v3392
  %3741 = vmatprep.subr.mxu0 0.0
  %3742 = vmatpush2.msra.mxu0 0.0
  %3743 = vmatprep.subr.mxu0 0.0
  %3744 = vmatpush2.msra.mxu0 0.0
  %3745 = vmatprep.subr.mxu0 0.0
  %3746 = vmatpush2.msra.mxu0 0.0
  %3747 = vmatprep.subr.mxu0 0.0
  %3748 = vmatpush2.msra.mxu0 0.0
  %3749 = vmatprep.subr.mxu0 0.0
  %3750 = vmatpush2.msra.mxu0 0.0
  %3751 = vmatprep.subr.mxu0 0.0
  %3752 = vmatpush2.msra.mxu0 0.0
  %3753 = vmatprep.subr.mxu0 0.0
  %3754 = vmatpush2.msra.mxu0 0.0
  %3755 = vmatprep.subr.mxu0 0.0
  %3756 = vmatpush2.msra.mxu0 0.0
  %3757 = vmatprep.subr.mxu0 0.0
  %3758 = vmatpush2.msra.mxu0 0.0
  %3759 = vmatprep.subr.mxu0 0.0
  %3760 = vmatpush2.msra.mxu0 0.0
  %3761 = vmatprep.subr.mxu0 0.0
  %3762 = vmatpush2.msra.mxu0 0.0
  %3763 = vmatprep.subr.mxu0 0.0
  %3764 = vmatpush2.msra.mxu0 0.0
  %3765 = vmatprep.subr.mxu0 0.0
  %3766 = vmatpush2.msra.mxu0 0.0
  %3767 = vmatprep.subr.mxu0 0.0
  %3768 = vmatpush2.msra.mxu0 0.0
  %3769 = vmatprep.subr.mxu0 0.0
  %3770 = vmatpush2.msra.mxu0 0.0
  %3771 = vmatprep.subr.mxu0 0.0
  %3772 = vmatpush2.msra.mxu0 0.0
  %3773 = vmatprep.mubr.f32.mxu0 0.0
  %3774 = vmatmul.mubr.f32.gmra.mxu0 %v3662
  %v3775 = vpop.f32.mrf.mxu0
  %v3776 = vadd.f32 %v3583, %v3775
  %v3777 = vpop.f32.mrf.mxu0
  %3778 = vmatprep.mubr.f32.mxu0 0.0
  %3779 = vmatmul.mubr.f32.gmra.mxu0 %v3665
  %v3780 = vpop.f32.mrf.mxu0
  %v3781 = vadd.f32 %v3588, %v3780
  %v3782 = vpop.f32.mrf.mxu0
  %3783 = vmatprep.mubr.f32.mxu0 0.0
  %3784 = vmatmul.mubr.f32.gmra.mxu0 %v3668
  %v3785 = vpop.f32.mrf.mxu0
  %v3786 = vadd.f32 %v3593, %v3785
  %v3787 = vpop.f32.mrf.mxu0
  %3788 = vmatprep.mubr.f32.mxu0 0.0
  %3789 = vmatmul.mubr.f32.gmra.mxu0 %v3671
  %v3790 = vpop.f32.mrf.mxu0
  %v3791 = vadd.f32 %v3598, %v3790
  %v3792 = vpop.f32.mrf.mxu0
  %3793 = vmatprep.mubr.f32.mxu0 0.0
  %3794 = vmatmul.mubr.f32.gmra.mxu0 %v3674
  %v3795 = vpop.f32.mrf.mxu0
  %v3796 = vadd.f32 %v3603, %v3795
  %v3797 = vpop.f32.mrf.mxu0
  %3798 = vmatprep.mubr.f32.mxu0 0.0
  %3799 = vmatmul.mubr.f32.gmra.mxu0 %v3677
  %v3800 = vpop.f32.mrf.mxu0
  %v3801 = vadd.f32 %v3608, %v3800
  %v3802 = vpop.f32.mrf.mxu0
  %3803 = vmatprep.mubr.f32.mxu0 0.0
  %3804 = vmatmul.mubr.f32.gmra.mxu0 %v3680
  %v3805 = vpop.f32.mrf.mxu0
  %v3806 = vadd.f32 %v3613, %v3805
  %v3807 = vpop.f32.mrf.mxu0
  %3808 = vmatprep.mubr.f32.mxu0 0.0
  %3809 = vmatmul.mubr.f32.gmra.mxu0 %v3683
  %v3810 = vpop.f32.mrf.mxu0
  %v3811 = vadd.f32 %v3618, %v3810
  %v3812 = vpop.f32.mrf.mxu0
  %3813 = vmatprep.mubr.f32.mxu0 0.0
  %3814 = vmatmul.mubr.f32.gmra.mxu0 %v3686
  %v3815 = vpop.f32.mrf.mxu0
  %v3816 = vadd.f32 %v3623, %v3815
  %v3817 = vpop.f32.mrf.mxu0
  %3818 = vmatprep.mubr.f32.mxu0 0.0
  %3819 = vmatmul.mubr.f32.gmra.mxu0 %v3689
  %v3820 = vpop.f32.mrf.mxu0
  %v3821 = vadd.f32 %v3628, %v3820
  %v3822 = vpop.f32.mrf.mxu0
  %3823 = vmatprep.mubr.f32.mxu0 0.0
  %3824 = vmatmul.mubr.f32.gmra.mxu0 %v3692
  %v3825 = vpop.f32.mrf.mxu0
  %v3826 = vadd.f32 %v3633, %v3825
  %v3827 = vpop.f32.mrf.mxu0
  %3828 = vmatprep.mubr.f32.mxu0 0.0
  %3829 = vmatmul.mubr.f32.gmra.mxu0 %v3695
  %v3830 = vpop.f32.mrf.mxu0
  %v3831 = vadd.f32 %v3638, %v3830
  %v3832 = vpop.f32.mrf.mxu0
  %3833 = vmatprep.mubr.f32.mxu0 0.0
  %3834 = vmatmul.mubr.f32.gmra.mxu0 %v3698
  %v3835 = vpop.f32.mrf.mxu0
  %v3836 = vadd.f32 %v3643, %v3835
  %v3837 = vpop.f32.mrf.mxu0
  %3838 = vmatprep.mubr.f32.mxu0 0.0
  %3839 = vmatmul.mubr.f32.gmra.mxu0 %v3701
  %v3840 = vpop.f32.mrf.mxu0
  %v3841 = vadd.f32 %v3648, %v3840
  %v3842 = vpop.f32.mrf.mxu0
  %3843 = vmatprep.mubr.f32.mxu0 0.0
  %3844 = vmatmul.mubr.f32.gmra.mxu0 %v3704
  %v3845 = vpop.f32.mrf.mxu0
  %v3846 = vadd.f32 %v3653, %v3845
  %v3847 = vpop.f32.mrf.mxu0
  %3848 = vmatprep.mubr.f32.mxu0 0.0
  %3849 = vmatmul.mubr.f32.gmra.mxu0 %v3707
  %v3850 = vpop.f32.mrf.mxu0
  %v3851 = vadd.f32 %v3658, %v3850
  %v3852 = vpop.f32.mrf.mxu0
  %3853 = vdwg.mxu0
  %s3854 = scalar_lea.vmem %s10, 256
  %v3855 = vld [vmem:[%s3854] sm:$0xff]
  %v3856 = vld [vmem:[%s3854 + $0x8] sm:$0xff]
  %v3857 = vld [vmem:[%s3854 + $0x10] sm:$0xff]
  %v3858 = vld [vmem:[%s3854 + $0x18] sm:$0xff]
  %v3859 = vld [vmem:[%s3854 + $0x20] sm:$0xff]
  %v3860 = vld [vmem:[%s3854 + $0x28] sm:$0xff]
  %v3861 = vld [vmem:[%s3854 + $0x30] sm:$0xff]
  %v3862 = vld [vmem:[%s3854 + $0x38] sm:$0xff]
  %v3863 = vld [vmem:[%s3854 + $0x40] sm:$0xff]
  %v3864 = vld [vmem:[%s3854 + $0x48] sm:$0xff]
  %v3865 = vld [vmem:[%s3854 + $0x50] sm:$0xff]
  %v3866 = vld [vmem:[%s3854 + $0x58] sm:$0xff]
  %v3867 = vld [vmem:[%s3854 + $0x60] sm:$0xff]
  %v3868 = vld [vmem:[%s3854 + $0x68] sm:$0xff]
  %v3869 = vld [vmem:[%s3854 + $0x70] sm:$0xff]
  %v3870 = vld [vmem:[%s3854 + $0x78] sm:$0xff]
  %v3872 = vsel %vm3467, %v3855, 0
  %v3875 = vsel %vm3467, %v3856, 0
  %v3878 = vsel %vm3467, %v3857, 0
  %v3881 = vsel %vm3467, %v3858, 0
  %v3884 = vsel %vm3467, %v3859, 0
  %v3887 = vsel %vm3467, %v3860, 0
  %v3890 = vsel %vm3467, %v3861, 0
  %v3893 = vsel %vm3467, %v3862, 0
  %v3896 = vsel %vm3467, %v3863, 0
  %v3899 = vsel %vm3467, %v3864, 0
  %v3902 = vsel %vm3467, %v3865, 0
  %v3905 = vsel %vm3467, %v3866, 0
  %v3908 = vsel %vm3467, %v3867, 0
  %v3911 = vsel %vm3467, %v3868, 0
  %v3914 = vsel %vm3467, %v3869, 0
  %v3917 = vsel %vm3467, %v3870, 0
  %3919 = vmatprep.subr.mxu0 0.0
  %3920 = vmatpush1.msra.mxu0 0.0
  %3921 = vmatprep.subr.mxu0 0.0
  %3922 = vmatpush1.msra.mxu0 0.0
  %3923 = vmatprep.subr.mxu0 0.0
  %3924 = vmatpush1.msra.mxu0 0.0
  %3925 = vmatprep.subr.mxu0 0.0
  %3926 = vmatpush1.msra.mxu0 0.0
  %3927 = vmatprep.subr.mxu0 0.0
  %3928 = vmatpush1.msra.mxu0 0.0
  %3929 = vmatprep.subr.mxu0 0.0
  %3930 = vmatpush1.msra.mxu0 0.0
  %3931 = vmatprep.subr.mxu0 0.0
  %3932 = vmatpush1.msra.mxu0 0.0
  %3933 = vmatprep.subr.mxu0 0.0
  %3934 = vmatpush1.msra.mxu0 0.0
  %3935 = vmatprep.subr.mxu0 0.0
  %3936 = vmatpush1.msra.mxu0 0.0
  %3937 = vmatprep.subr.mxu0 0.0
  %3938 = vmatpush1.msra.mxu0 %v3405
  %3939 = vmatprep.subr.mxu0 0.0
  %3940 = vmatpush1.msra.mxu0 %v3403
  %3941 = vmatprep.subr.mxu0 0.0
  %3942 = vmatpush1.msra.mxu0 %v3401
  %3943 = vmatprep.subr.mxu0 0.0
  %3944 = vmatpush1.msra.mxu0 %v3399
  %3945 = vmatprep.subr.mxu0 0.0
  %3946 = vmatpush1.msra.mxu0 %v3397
  %3947 = vmatprep.subr.mxu0 0.0
  %3948 = vmatpush1.msra.mxu0 %v3395
  %3949 = vmatprep.subr.mxu0 0.0
  %3950 = vmatpush1.msra.mxu0 %v3393
  %3951 = vmatprep.subr.mxu0 0.0
  %3952 = vmatpush2.msra.mxu0 0.0
  %3953 = vmatprep.subr.mxu0 0.0
  %3954 = vmatpush2.msra.mxu0 0.0
  %3955 = vmatprep.subr.mxu0 0.0
  %3956 = vmatpush2.msra.mxu0 0.0
  %3957 = vmatprep.subr.mxu0 0.0
  %3958 = vmatpush2.msra.mxu0 0.0
  %3959 = vmatprep.subr.mxu0 0.0
  %3960 = vmatpush2.msra.mxu0 0.0
  %3961 = vmatprep.subr.mxu0 0.0
  %3962 = vmatpush2.msra.mxu0 0.0
  %3963 = vmatprep.subr.mxu0 0.0
  %3964 = vmatpush2.msra.mxu0 0.0
  %3965 = vmatprep.subr.mxu0 0.0
  %3966 = vmatpush2.msra.mxu0 0.0
  %3967 = vmatprep.subr.mxu0 0.0
  %3968 = vmatpush2.msra.mxu0 0.0
  %3969 = vmatprep.subr.mxu0 0.0
  %3970 = vmatpush2.msra.mxu0 0.0
  %3971 = vmatprep.subr.mxu0 0.0
  %3972 = vmatpush2.msra.mxu0 0.0
  %3973 = vmatprep.subr.mxu0 0.0
  %3974 = vmatpush2.msra.mxu0 0.0
  %3975 = vmatprep.subr.mxu0 0.0
  %3976 = vmatpush2.msra.mxu0 0.0
  %3977 = vmatprep.subr.mxu0 0.0
  %3978 = vmatpush2.msra.mxu0 0.0
  %3979 = vmatprep.subr.mxu0 0.0
  %3980 = vmatpush2.msra.mxu0 0.0
  %3981 = vmatprep.subr.mxu0 0.0
  %3982 = vmatpush2.msra.mxu0 0.0
  %3983 = vmatprep.mubr.f32.mxu0 0.0
  %3984 = vmatmul.mubr.f32.gmra.mxu0 %v3872
  %v3985 = vpop.f32.mrf.mxu0
  %v3986 = vadd.f32 0.0, %v3985
  %v3987 = vpop.f32.mrf.mxu0
  %3988 = vmatprep.mubr.f32.mxu0 0.0
  %3989 = vmatmul.mubr.f32.gmra.mxu0 %v3875
  %v3990 = vpop.f32.mrf.mxu0
  %v3991 = vadd.f32 0.0, %v3990
  %v3992 = vpop.f32.mrf.mxu0
  %3993 = vmatprep.mubr.f32.mxu0 0.0
  %3994 = vmatmul.mubr.f32.gmra.mxu0 %v3878
  %v3995 = vpop.f32.mrf.mxu0
  %v3996 = vadd.f32 0.0, %v3995
  %v3997 = vpop.f32.mrf.mxu0
  %3998 = vmatprep.mubr.f32.mxu0 0.0
  %3999 = vmatmul.mubr.f32.gmra.mxu0 %v3881
  %v4000 = vpop.f32.mrf.mxu0
  %v4001 = vadd.f32 0.0, %v4000
  %v4002 = vpop.f32.mrf.mxu0
  %4003 = vmatprep.mubr.f32.mxu0 0.0
  %4004 = vmatmul.mubr.f32.gmra.mxu0 %v3884
  %v4005 = vpop.f32.mrf.mxu0
  %v4006 = vadd.f32 0.0, %v4005
  %v4007 = vpop.f32.mrf.mxu0
  %4008 = vmatprep.mubr.f32.mxu0 0.0
  %4009 = vmatmul.mubr.f32.gmra.mxu0 %v3887
  %v4010 = vpop.f32.mrf.mxu0
  %v4011 = vadd.f32 0.0, %v4010
  %v4012 = vpop.f32.mrf.mxu0
  %4013 = vmatprep.mubr.f32.mxu0 0.0
  %4014 = vmatmul.mubr.f32.gmra.mxu0 %v3890
  %v4015 = vpop.f32.mrf.mxu0
  %v4016 = vadd.f32 0.0, %v4015
  %v4017 = vpop.f32.mrf.mxu0
  %4018 = vmatprep.mubr.f32.mxu0 0.0
  %4019 = vmatmul.mubr.f32.gmra.mxu0 %v3893
  %v4020 = vpop.f32.mrf.mxu0
  %v4021 = vadd.f32 0.0, %v4020
  %v4022 = vpop.f32.mrf.mxu0
  %4023 = vmatprep.mubr.f32.mxu0 0.0
  %4024 = vmatmul.mubr.f32.gmra.mxu0 %v3896
  %v4025 = vpop.f32.mrf.mxu0
  %v4026 = vadd.f32 0.0, %v4025
  %v4027 = vpop.f32.mrf.mxu0
  %4028 = vmatprep.mubr.f32.mxu0 0.0
  %4029 = vmatmul.mubr.f32.gmra.mxu0 %v3899
  %v4030 = vpop.f32.mrf.mxu0
  %v4031 = vadd.f32 0.0, %v4030
  %v4032 = vpop.f32.mrf.mxu0
  %4033 = vmatprep.mubr.f32.mxu0 0.0
  %4034 = vmatmul.mubr.f32.gmra.mxu0 %v3902
  %v4035 = vpop.f32.mrf.mxu0
  %v4036 = vadd.f32 0.0, %v4035
  %v4037 = vpop.f32.mrf.mxu0
  %4038 = vmatprep.mubr.f32.mxu0 0.0
  %4039 = vmatmul.mubr.f32.gmra.mxu0 %v3905
  %v4040 = vpop.f32.mrf.mxu0
  %v4041 = vadd.f32 0.0, %v4040
  %v4042 = vpop.f32.mrf.mxu0
  %4043 = vmatprep.mubr.f32.mxu0 0.0
  %4044 = vmatmul.mubr.f32.gmra.mxu0 %v3908
  %v4045 = vpop.f32.mrf.mxu0
  %v4046 = vadd.f32 0.0, %v4045
  %v4047 = vpop.f32.mrf.mxu0
  %4048 = vmatprep.mubr.f32.mxu0 0.0
  %4049 = vmatmul.mubr.f32.gmra.mxu0 %v3911
  %v4050 = vpop.f32.mrf.mxu0
  %v4051 = vadd.f32 0.0, %v4050
  %v4052 = vpop.f32.mrf.mxu0
  %4053 = vmatprep.mubr.f32.mxu0 0.0
  %4054 = vmatmul.mubr.f32.gmra.mxu0 %v3914
  %v4055 = vpop.f32.mrf.mxu0
  %v4056 = vadd.f32 0.0, %v4055
  %v4057 = vpop.f32.mrf.mxu0
  %4058 = vmatprep.mubr.f32.mxu0 0.0
  %4059 = vmatmul.mubr.f32.gmra.mxu0 %v3917
  %v4060 = vpop.f32.mrf.mxu0
  %v4061 = vadd.f32 0.0, %v4060
  %v4062 = vpop.f32.mrf.mxu0
  %4063 = vdwg.mxu0
  %v4064 = vadd.f32 %v3776, %v3986
  %v4065 = vadd.f32 %v3781, %v3991
  %v4066 = vadd.f32 %v3786, %v3996
  %v4067 = vadd.f32 %v3791, %v4001
  %v4068 = vadd.f32 %v3796, %v4006
  %v4069 = vadd.f32 %v3801, %v4011
  %v4070 = vadd.f32 %v3806, %v4016
  %v4071 = vadd.f32 %v3811, %v4021
  %v4072 = vadd.f32 %v3816, %v4026
  %v4073 = vadd.f32 %v3821, %v4031
  %v4074 = vadd.f32 %v3826, %v4036
  %v4075 = vadd.f32 %v3831, %v4041
  %v4076 = vadd.f32 %v3836, %v4046
  %v4077 = vadd.f32 %v3841, %v4051
  %v4078 = vadd.f32 %v3846, %v4056
  %v4079 = vadd.f32 %v3851, %v4061
  %s4080 = scalar_lea.vmem %s10, 384
  %v4081 = vld [vmem:[%s4080] sm:$0xff]
  %v4082 = vld [vmem:[%s4080 + $0x8] sm:$0xff]
  %v4083 = vld [vmem:[%s4080 + $0x10] sm:$0xff]
  %v4084 = vld [vmem:[%s4080 + $0x18] sm:$0xff]
  %v4085 = vld [vmem:[%s4080 + $0x20] sm:$0xff]
  %v4086 = vld [vmem:[%s4080 + $0x28] sm:$0xff]
  %v4087 = vld [vmem:[%s4080 + $0x30] sm:$0xff]
  %v4088 = vld [vmem:[%s4080 + $0x38] sm:$0xff]
  %v4089 = vld [vmem:[%s4080 + $0x40] sm:$0xff]
  %v4090 = vld [vmem:[%s4080 + $0x48] sm:$0xff]
  %v4091 = vld [vmem:[%s4080 + $0x50] sm:$0xff]
  %v4092 = vld [vmem:[%s4080 + $0x58] sm:$0xff]
  %v4093 = vld [vmem:[%s4080 + $0x60] sm:$0xff]
  %v4094 = vld [vmem:[%s4080 + $0x68] sm:$0xff]
  %v4095 = vld [vmem:[%s4080 + $0x70] sm:$0xff]
  %v4096 = vld [vmem:[%s4080 + $0x78] sm:$0xff]
  %4104 = vrot.lane.b32.xlu0 %v3393, 64
  %v4105 = vpop.permute.xlu0 %4104
  %4106 = vrot.lane.b32.xlu0 %v3395, 64
  %v4107 = vpop.permute.xlu0 %4106
  %4108 = vrot.lane.b32.xlu0 %v3397, 64
  %v4109 = vpop.permute.xlu0 %4108
  %4110 = vrot.lane.b32.xlu0 %v3399, 64
  %v4111 = vpop.permute.xlu0 %4110
  %4112 = vrot.lane.b32.xlu0 %v3401, 64
  %v4113 = vpop.permute.xlu0 %4112
  %4114 = vrot.lane.b32.xlu0 %v3403, 64
  %v4115 = vpop.permute.xlu0 %4114
  %4116 = vrot.lane.b32.xlu0 %v3405, 64
  %v4117 = vpop.permute.xlu0 %4116
  %v4126 = vsel %vm3467, %v4081, 0
  %v4129 = vsel %vm3467, %v4082, 0
  %v4132 = vsel %vm3467, %v4083, 0
  %v4135 = vsel %vm3467, %v4084, 0
  %v4138 = vsel %vm3467, %v4085, 0
  %v4141 = vsel %vm3467, %v4086, 0
  %v4144 = vsel %vm3467, %v4087, 0
  %v4147 = vsel %vm3467, %v4088, 0
  %v4150 = vsel %vm3467, %v4089, 0
  %v4153 = vsel %vm3467, %v4090, 0
  %v4156 = vsel %vm3467, %v4091, 0
  %v4159 = vsel %vm3467, %v4092, 0
  %v4162 = vsel %vm3467, %v4093, 0
  %v4165 = vsel %vm3467, %v4094, 0
  %v4168 = vsel %vm3467, %v4095, 0
  %v4171 = vsel %vm3467, %v4096, 0
  %4173 = vmatprep.subr.mxu0 0.0
  %4174 = vmatpush1.msra.mxu0 0.0
  %4175 = vmatprep.subr.mxu0 0.0
  %4176 = vmatpush1.msra.mxu0 0.0
  %4177 = vmatprep.subr.mxu0 0.0
  %4178 = vmatpush1.msra.mxu0 0.0
  %4179 = vmatprep.subr.mxu0 0.0
  %4180 = vmatpush1.msra.mxu0 0.0
  %4181 = vmatprep.subr.mxu0 0.0
  %4182 = vmatpush1.msra.mxu0 0.0
  %4183 = vmatprep.subr.mxu0 0.0
  %4184 = vmatpush1.msra.mxu0 0.0
  %4185 = vmatprep.subr.mxu0 0.0
  %4186 = vmatpush1.msra.mxu0 0.0
  %4187 = vmatprep.subr.mxu0 0.0
  %4188 = vmatpush1.msra.mxu0 0.0
  %4189 = vmatprep.subr.mxu0 0.0
  %4190 = vmatpush1.msra.mxu0 0.0
  %4191 = vmatprep.subr.mxu0 0.0
  %4192 = vmatpush1.msra.mxu0 %v4117
  %4193 = vmatprep.subr.mxu0 0.0
  %4194 = vmatpush1.msra.mxu0 %v4115
  %4195 = vmatprep.subr.mxu0 0.0
  %4196 = vmatpush1.msra.mxu0 %v4113
  %4197 = vmatprep.subr.mxu0 0.0
  %4198 = vmatpush1.msra.mxu0 %v4111
  %4199 = vmatprep.subr.mxu0 0.0
  %4200 = vmatpush1.msra.mxu0 %v4109
  %4201 = vmatprep.subr.mxu0 0.0
  %4202 = vmatpush1.msra.mxu0 %v4107
  %4203 = vmatprep.subr.mxu0 0.0
  %4204 = vmatpush1.msra.mxu0 %v4105
  %4205 = vmatprep.subr.mxu0 0.0
  %4206 = vmatpush2.msra.mxu0 0.0
  %4207 = vmatprep.subr.mxu0 0.0
  %4208 = vmatpush2.msra.mxu0 0.0
  %4209 = vmatprep.subr.mxu0 0.0
  %4210 = vmatpush2.msra.mxu0 0.0
  %4211 = vmatprep.subr.mxu0 0.0
  %4212 = vmatpush2.msra.mxu0 0.0
  %4213 = vmatprep.subr.mxu0 0.0
  %4214 = vmatpush2.msra.mxu0 0.0
  %4215 = vmatprep.subr.mxu0 0.0
  %4216 = vmatpush2.msra.mxu0 0.0
  %4217 = vmatprep.subr.mxu0 0.0
  %4218 = vmatpush2.msra.mxu0 0.0
  %4219 = vmatprep.subr.mxu0 0.0
  %4220 = vmatpush2.msra.mxu0 0.0
  %4221 = vmatprep.subr.mxu0 0.0
  %4222 = vmatpush2.msra.mxu0 0.0
  %4223 = vmatprep.subr.mxu0 0.0
  %4224 = vmatpush2.msra.mxu0 0.0
  %4225 = vmatprep.subr.mxu0 0.0
  %4226 = vmatpush2.msra.mxu0 0.0
  %4227 = vmatprep.subr.mxu0 0.0
  %4228 = vmatpush2.msra.mxu0 0.0
  %4229 = vmatprep.subr.mxu0 0.0
  %4230 = vmatpush2.msra.mxu0 0.0
  %4231 = vmatprep.subr.mxu0 0.0
  %4232 = vmatpush2.msra.mxu0 0.0
  %4233 = vmatprep.subr.mxu0 0.0
  %4234 = vmatpush2.msra.mxu0 0.0
  %4235 = vmatprep.subr.mxu0 0.0
  %4236 = vmatpush2.msra.mxu0 0.0
  %4237 = vmatprep.mubr.f32.mxu0 0.0
  %4238 = vmatmul.mubr.f32.gmra.mxu0 %v4126
  %v4239 = vpop.f32.mrf.mxu0
  %v4240 = vadd.f32 0.0, %v4239
  %v4241 = vpop.f32.mrf.mxu0
  %4242 = vmatprep.mubr.f32.mxu0 0.0
  %4243 = vmatmul.mubr.f32.gmra.mxu0 %v4129
  %v4244 = vpop.f32.mrf.mxu0
  %v4245 = vadd.f32 0.0, %v4244
  %v4246 = vpop.f32.mrf.mxu0
  %4247 = vmatprep.mubr.f32.mxu0 0.0
  %4248 = vmatmul.mubr.f32.gmra.mxu0 %v4132
  %v4249 = vpop.f32.mrf.mxu0
  %v4250 = vadd.f32 0.0, %v4249
  %v4251 = vpop.f32.mrf.mxu0
  %4252 = vmatprep.mubr.f32.mxu0 0.0
  %4253 = vmatmul.mubr.f32.gmra.mxu0 %v4135
  %v4254 = vpop.f32.mrf.mxu0
  %v4255 = vadd.f32 0.0, %v4254
  %v4256 = vpop.f32.mrf.mxu0
  %4257 = vmatprep.mubr.f32.mxu0 0.0
  %4258 = vmatmul.mubr.f32.gmra.mxu0 %v4138
  %v4259 = vpop.f32.mrf.mxu0
  %v4260 = vadd.f32 0.0, %v4259
  %v4261 = vpop.f32.mrf.mxu0
  %4262 = vmatprep.mubr.f32.mxu0 0.0
  %4263 = vmatmul.mubr.f32.gmra.mxu0 %v4141
  %v4264 = vpop.f32.mrf.mxu0
  %v4265 = vadd.f32 0.0, %v4264
  %v4266 = vpop.f32.mrf.mxu0
  %4267 = vmatprep.mubr.f32.mxu0 0.0
  %4268 = vmatmul.mubr.f32.gmra.mxu0 %v4144
  %v4269 = vpop.f32.mrf.mxu0
  %v4270 = vadd.f32 0.0, %v4269
  %v4271 = vpop.f32.mrf.mxu0
  %4272 = vmatprep.mubr.f32.mxu0 0.0
  %4273 = vmatmul.mubr.f32.gmra.mxu0 %v4147
  %v4274 = vpop.f32.mrf.mxu0
  %v4275 = vadd.f32 0.0, %v4274
  %v4276 = vpop.f32.mrf.mxu0
  %4277 = vmatprep.mubr.f32.mxu0 0.0
  %4278 = vmatmul.mubr.f32.gmra.mxu0 %v4150
  %v4279 = vpop.f32.mrf.mxu0
  %v4280 = vadd.f32 0.0, %v4279
  %v4281 = vpop.f32.mrf.mxu0
  %4282 = vmatprep.mubr.f32.mxu0 0.0
  %4283 = vmatmul.mubr.f32.gmra.mxu0 %v4153
  %v4284 = vpop.f32.mrf.mxu0
  %v4285 = vadd.f32 0.0, %v4284
  %v4286 = vpop.f32.mrf.mxu0
  %4287 = vmatprep.mubr.f32.mxu0 0.0
  %4288 = vmatmul.mubr.f32.gmra.mxu0 %v4156
  %v4289 = vpop.f32.mrf.mxu0
  %v4290 = vadd.f32 0.0, %v4289
  %v4291 = vpop.f32.mrf.mxu0
  %4292 = vmatprep.mubr.f32.mxu0 0.0
  %4293 = vmatmul.mubr.f32.gmra.mxu0 %v4159
  %v4294 = vpop.f32.mrf.mxu0
  %v4295 = vadd.f32 0.0, %v4294
  %v4296 = vpop.f32.mrf.mxu0
  %4297 = vmatprep.mubr.f32.mxu0 0.0
  %4298 = vmatmul.mubr.f32.gmra.mxu0 %v4162
  %v4299 = vpop.f32.mrf.mxu0
  %v4300 = vadd.f32 0.0, %v4299
  %v4301 = vpop.f32.mrf.mxu0
  %4302 = vmatprep.mubr.f32.mxu0 0.0
  %4303 = vmatmul.mubr.f32.gmra.mxu0 %v4165
  %v4304 = vpop.f32.mrf.mxu0
  %v4305 = vadd.f32 0.0, %v4304
  %v4306 = vpop.f32.mrf.mxu0
  %4307 = vmatprep.mubr.f32.mxu0 0.0
  %4308 = vmatmul.mubr.f32.gmra.mxu0 %v4168
  %v4309 = vpop.f32.mrf.mxu0
  %v4310 = vadd.f32 0.0, %v4309
  %v4311 = vpop.f32.mrf.mxu0
  %4312 = vmatprep.mubr.f32.mxu0 0.0
  %4313 = vmatmul.mubr.f32.gmra.mxu0 %v4171
  %v4314 = vpop.f32.mrf.mxu0
  %v4315 = vadd.f32 0.0, %v4314
  %v4316 = vpop.f32.mrf.mxu0
  %4317 = vdwg.mxu0
  %v4318 = vadd.f32 %v4064, %v4240
  %v4319 = vadd.f32 %v4065, %v4245
  %v4320 = vadd.f32 %v4066, %v4250
  %v4321 = vadd.f32 %v4067, %v4255
  %v4322 = vadd.f32 %v4068, %v4260
  %v4323 = vadd.f32 %v4069, %v4265
  %v4324 = vadd.f32 %v4070, %v4270
  %v4325 = vadd.f32 %v4071, %v4275
  %v4326 = vadd.f32 %v4072, %v4280
  %v4327 = vadd.f32 %v4073, %v4285
  %v4328 = vadd.f32 %v4074, %v4290
  %v4329 = vadd.f32 %v4075, %v4295
  %v4330 = vadd.f32 %v4076, %v4300
  %v4331 = vadd.f32 %v4077, %v4305
  %v4332 = vadd.f32 %v4078, %v4310
  %v4333 = vadd.f32 %v4079, %v4315
  %v4334 = vld [vmem:[%s11] sm:$0x1]
  %v4336 = vlaneseq
  %v4337 = vshrl.u32 %v4336, 7
  %v4338 = vsub.s32 0, %v4337
  %v4339 = vrot.slane %v4334, %v4338
  %v4341 = vadd.f32 %v4318, %v4339
  %v4342 = vadd.f32 %v4319, %v4339
  %v4343 = vadd.f32 %v4320, %v4339
  %v4344 = vadd.f32 %v4321, %v4339
  %v4345 = vadd.f32 %v4322, %v4339
  %v4346 = vadd.f32 %v4323, %v4339
  %v4347 = vadd.f32 %v4324, %v4339
  %v4348 = vadd.f32 %v4325, %v4339
  %v4349 = vadd.f32 %v4326, %v4339
  %v4350 = vadd.f32 %v4327, %v4339
  %v4351 = vadd.f32 %v4328, %v4339
  %v4352 = vadd.f32 %v4329, %v4339
  %v4353 = vadd.f32 %v4330, %v4339
  %v4354 = vadd.f32 %v4331, %v4339
  %v4355 = vadd.f32 %v4332, %v4339
  %v4356 = vadd.f32 %v4333, %v4339
  %v4357 = vld [vmem:[%s12] sm:$0x1]
  %v4358 = vld [vmem:[%s13] sm:$0x1]
  %v4359 = vsel %vm883, %v4341, 0.0
  %v4360 = vsel %vm883, %v4342, 0.0
  %v4361 = vadd.f32 %v4359, %v4360
  %v4362 = vsel %vm883, %v4343, 0.0
  %v4363 = vadd.f32 %v4361, %v4362
  %v4364 = vsel %vm883, %v4344, 0.0
  %v4365 = vadd.f32 %v4363, %v4364
  %v4366 = vsel %vm883, %v4345, 0.0
  %v4367 = vadd.f32 %v4365, %v4366
  %v4368 = vsel %vm883, %v4346, 0.0
  %v4369 = vadd.f32 %v4367, %v4368
  %v4370 = vsel %vm883, %v4347, 0.0
  %v4371 = vadd.f32 %v4369, %v4370
  %v4372 = vsel %vm883, %v4348, 0.0
  %v4373 = vadd.f32 %v4371, %v4372
  %v4374 = vsel %vm883, %v4349, 0.0
  %v4375 = vadd.f32 %v4373, %v4374
  %v4376 = vsel %vm883, %v4350, 0.0
  %v4377 = vadd.f32 %v4375, %v4376
  %v4378 = vsel %vm883, %v4351, 0.0
  %v4379 = vadd.f32 %v4377, %v4378
  %v4380 = vsel %vm883, %v4352, 0.0
  %v4381 = vadd.f32 %v4379, %v4380
  %v4382 = vsel %vm883, %v4353, 0.0
  %v4383 = vadd.f32 %v4381, %v4382
  %v4384 = vsel %vm883, %v4354, 0.0
  %v4385 = vadd.f32 %v4383, %v4384
  %v4386 = vsel %vm883, %v4355, 0.0
  %v4387 = vadd.f32 %v4385, %v4386
  %v4388 = vsel %vm883, %v4356, 0.0
  %v4389 = vadd.f32 %v4387, %v4388
  %v4390 = vrot.slane %v4389, 4
  %v4391 = vadd.f32 %v4389, %v4390
  %v4392 = vrot.slane %v4391, 2
  %v4393 = vadd.f32 %v4391, %v4392
  %v4394 = vrot.slane %v4393, 1
  %v4395 = vadd.f32 %v4393, %v4394
  %v4396 = vrcp.pop 128.0
  %v4397 = vmul.f32 %v4395, %v4396
  %v4398 = vsub.f32 %v4341, %v4397
  %v4399 = vsub.f32 %v4342, %v4397
  %v4400 = vsub.f32 %v4343, %v4397
  %v4401 = vsub.f32 %v4344, %v4397
  %v4402 = vsub.f32 %v4345, %v4397
  %v4403 = vsub.f32 %v4346, %v4397
  %v4404 = vsub.f32 %v4347, %v4397
  %v4405 = vsub.f32 %v4348, %v4397
  %v4406 = vsub.f32 %v4349, %v4397
  %v4407 = vsub.f32 %v4350, %v4397
  %v4408 = vsub.f32 %v4351, %v4397
  %v4409 = vsub.f32 %v4352, %v4397
  %v4410 = vsub.f32 %v4353, %v4397
  %v4411 = vsub.f32 %v4354, %v4397
  %v4412 = vsub.f32 %v4355, %v4397
  %v4413 = vsub.f32 %v4356, %v4397
  %v4414 = vmul.f32 %v4398, %v4398
  %v4415 = vmul.f32 %v4399, %v4399
  %v4416 = vmul.f32 %v4400, %v4400
  %v4417 = vmul.f32 %v4401, %v4401
  %v4418 = vmul.f32 %v4402, %v4402
  %v4419 = vmul.f32 %v4403, %v4403
  %v4420 = vmul.f32 %v4404, %v4404
  %v4421 = vmul.f32 %v4405, %v4405
  %v4422 = vmul.f32 %v4406, %v4406
  %v4423 = vmul.f32 %v4407, %v4407
  %v4424 = vmul.f32 %v4408, %v4408
  %v4425 = vmul.f32 %v4409, %v4409
  %v4426 = vmul.f32 %v4410, %v4410
  %v4427 = vmul.f32 %v4411, %v4411
  %v4428 = vmul.f32 %v4412, %v4412
  %v4429 = vmul.f32 %v4413, %v4413
  %v4430 = vsel %vm883, %v4414, 0.0
  %v4431 = vsel %vm883, %v4415, 0.0
  %v4432 = vadd.f32 %v4430, %v4431
  %v4433 = vsel %vm883, %v4416, 0.0
  %v4434 = vadd.f32 %v4432, %v4433
  %v4435 = vsel %vm883, %v4417, 0.0
  %v4436 = vadd.f32 %v4434, %v4435
  %v4437 = vsel %vm883, %v4418, 0.0
  %v4438 = vadd.f32 %v4436, %v4437
  %v4439 = vsel %vm883, %v4419, 0.0
  %v4440 = vadd.f32 %v4438, %v4439
  %v4441 = vsel %vm883, %v4420, 0.0
  %v4442 = vadd.f32 %v4440, %v4441
  %v4443 = vsel %vm883, %v4421, 0.0
  %v4444 = vadd.f32 %v4442, %v4443
  %v4445 = vsel %vm883, %v4422, 0.0
  %v4446 = vadd.f32 %v4444, %v4445
  %v4447 = vsel %vm883, %v4423, 0.0
  %v4448 = vadd.f32 %v4446, %v4447
  %v4449 = vsel %vm883, %v4424, 0.0
  %v4450 = vadd.f32 %v4448, %v4449
  %v4451 = vsel %vm883, %v4425, 0.0
  %v4452 = vadd.f32 %v4450, %v4451
  %v4453 = vsel %vm883, %v4426, 0.0
  %v4454 = vadd.f32 %v4452, %v4453
  %v4455 = vsel %vm883, %v4427, 0.0
  %v4456 = vadd.f32 %v4454, %v4455
  %v4457 = vsel %vm883, %v4428, 0.0
  %v4458 = vadd.f32 %v4456, %v4457
  %v4459 = vsel %vm883, %v4429, 0.0
  %v4460 = vadd.f32 %v4458, %v4459
  %v4461 = vrot.slane %v4460, 4
  %v4462 = vadd.f32 %v4460, %v4461
  %v4463 = vrot.slane %v4462, 2
  %v4464 = vadd.f32 %v4462, %v4463
  %v4465 = vrot.slane %v4464, 1
  %v4466 = vadd.f32 %v4464, %v4465
  %v4467 = vmul.f32 %v4466, %v4396
  %v4468 = vadd.f32 %v4467, 1e-05
  %v4469 = vrsqrt.pop %v4468
  %v4470 = vmul.f32 %v4357, %v4469
  %v4472 = vlaneseq
  %v4473 = vshrl.u32 %v4472, 7
  %v4474 = vsub.s32 0, %v4473
  %v4475 = vrot.slane %v4470, %v4474
  %v4477 = vmul.f32 %v4398, %v4475
  %v4478 = vmul.f32 %v4399, %v4475
  %v4479 = vmul.f32 %v4400, %v4475
  %v4480 = vmul.f32 %v4401, %v4475
  %v4481 = vmul.f32 %v4402, %v4475
  %v4482 = vmul.f32 %v4403, %v4475
  %v4483 = vmul.f32 %v4404, %v4475
  %v4484 = vmul.f32 %v4405, %v4475
  %v4485 = vmul.f32 %v4406, %v4475
  %v4486 = vmul.f32 %v4407, %v4475
  %v4487 = vmul.f32 %v4408, %v4475
  %v4488 = vmul.f32 %v4409, %v4475
  %v4489 = vmul.f32 %v4410, %v4475
  %v4490 = vmul.f32 %v4411, %v4475
  %v4491 = vmul.f32 %v4412, %v4475
  %v4492 = vmul.f32 %v4413, %v4475
  %v4494 = vlaneseq
  %v4495 = vshrl.u32 %v4494, 7
  %v4496 = vsub.s32 0, %v4495
  %v4497 = vrot.slane %v4358, %v4496
  %v4499 = vadd.f32 %v4477, %v4497
  %v4500 = vadd.f32 %v4478, %v4497
  %v4501 = vadd.f32 %v4479, %v4497
  %v4502 = vadd.f32 %v4480, %v4497
  %v4503 = vadd.f32 %v4481, %v4497
  %v4504 = vadd.f32 %v4482, %v4497
  %v4505 = vadd.f32 %v4483, %v4497
  %v4506 = vadd.f32 %v4484, %v4497
  %v4507 = vadd.f32 %v4485, %v4497
  %v4508 = vadd.f32 %v4486, %v4497
  %v4509 = vadd.f32 %v4487, %v4497
  %v4510 = vadd.f32 %v4488, %v4497
  %v4511 = vadd.f32 %v4489, %v4497
  %v4512 = vadd.f32 %v4490, %v4497
  %v4513 = vadd.f32 %v4491, %v4497
  %v4514 = vadd.f32 %v4492, %v4497
  %v4515 = vmax.f32 %v4499, 0.0
  %v4516 = vmax.f32 %v4500, 0.0
  %v4517 = vmax.f32 %v4501, 0.0
  %v4518 = vmax.f32 %v4502, 0.0
  %v4519 = vmax.f32 %v4503, 0.0
  %v4520 = vmax.f32 %v4504, 0.0
  %v4521 = vmax.f32 %v4505, 0.0
  %v4522 = vmax.f32 %v4506, 0.0
  %v4523 = vmax.f32 %v4507, 0.0
  %v4524 = vmax.f32 %v4508, 0.0
  %v4525 = vmax.f32 %v4509, 0.0
  %v4526 = vmax.f32 %v4510, 0.0
  %v4527 = vmax.f32 %v4511, 0.0
  %v4528 = vmax.f32 %v4512, 0.0
  %v4529 = vmax.f32 %v4513, 0.0
  %v4530 = vmax.f32 %v4514, 0.0
  %v4531 = vpack.c.bf16 %v4516, %v4515
  %v4532 = vpack.c.bf16 %v4518, %v4517
  %v4533 = vpack.c.bf16 %v4520, %v4519
  %v4534 = vpack.c.bf16 %v4522, %v4521
  %v4535 = vpack.c.bf16 %v4524, %v4523
  %v4536 = vpack.c.bf16 %v4526, %v4525
  %v4537 = vpack.c.bf16 %v4528, %v4527
  %v4538 = vpack.c.bf16 %v4530, %v4529
  %v4539 = vld [vmem:[%s14] sm:$0xf]
  %v4540 = vld [vmem:[%s14 + $0x4] sm:$0xf]
  %v4541 = vld [vmem:[%s14 + $0x8] sm:$0xf]
  %v4542 = vld [vmem:[%s14 + $0xc] sm:$0xf]
  %v4543 = vld [vmem:[%s14 + $0x10] sm:$0xf]
  %v4544 = vld [vmem:[%s14 + $0x14] sm:$0xf]
  %v4545 = vld [vmem:[%s14 + $0x18] sm:$0xf]
  %v4546 = vld [vmem:[%s14 + $0x1c] sm:$0xf]
  %v4547 = vld [vmem:[%s14 + $0x20] sm:$0xf]
  %v4548 = vld [vmem:[%s14 + $0x24] sm:$0xf]
  %v4549 = vld [vmem:[%s14 + $0x28] sm:$0xf]
  %v4550 = vld [vmem:[%s14 + $0x2c] sm:$0xf]
  %v4551 = vld [vmem:[%s14 + $0x30] sm:$0xf]
  %v4552 = vld [vmem:[%s14 + $0x34] sm:$0xf]
  %v4553 = vld [vmem:[%s14 + $0x38] sm:$0xf]
  %v4554 = vld [vmem:[%s14 + $0x3c] sm:$0xf]
  %v4555 = vld [vmem:[%s14 + $0x40] sm:$0xf]
  %v4556 = vld [vmem:[%s14 + $0x44] sm:$0xf]
  %v4557 = vld [vmem:[%s14 + $0x48] sm:$0xf]
  %v4558 = vld [vmem:[%s14 + $0x4c] sm:$0xf]
  %v4559 = vld [vmem:[%s14 + $0x50] sm:$0xf]
  %v4560 = vld [vmem:[%s14 + $0x54] sm:$0xf]
  %v4561 = vld [vmem:[%s14 + $0x58] sm:$0xf]
  %v4562 = vld [vmem:[%s14 + $0x5c] sm:$0xf]
  %v4563 = vld [vmem:[%s14 + $0x60] sm:$0xf]
  %v4564 = vld [vmem:[%s14 + $0x64] sm:$0xf]
  %v4565 = vld [vmem:[%s14 + $0x68] sm:$0xf]
  %v4566 = vld [vmem:[%s14 + $0x6c] sm:$0xf]
  %v4567 = vld [vmem:[%s14 + $0x70] sm:$0xf]
  %v4568 = vld [vmem:[%s14 + $0x74] sm:$0xf]
  %v4569 = vld [vmem:[%s14 + $0x78] sm:$0xf]
  %v4570 = vld [vmem:[%s14 + $0x7c] sm:$0xf]
  %v4571 = vld [vmem:[%s14 + $0x80] sm:$0xf]
  %v4572 = vld [vmem:[%s14 + $0x84] sm:$0xf]
  %v4573 = vld [vmem:[%s14 + $0x88] sm:$0xf]
  %v4574 = vld [vmem:[%s14 + $0x8c] sm:$0xf]
  %v4575 = vld [vmem:[%s14 + $0x90] sm:$0xf]
  %v4576 = vld [vmem:[%s14 + $0x94] sm:$0xf]
  %v4577 = vld [vmem:[%s14 + $0x98] sm:$0xf]
  %v4578 = vld [vmem:[%s14 + $0x9c] sm:$0xf]
  %v4579 = vld [vmem:[%s14 + $0xa0] sm:$0xf]
  %v4580 = vld [vmem:[%s14 + $0xa4] sm:$0xf]
  %v4581 = vld [vmem:[%s14 + $0xa8] sm:$0xf]
  %v4582 = vld [vmem:[%s14 + $0xac] sm:$0xf]
  %v4583 = vld [vmem:[%s14 + $0xb0] sm:$0xf]
  %v4584 = vld [vmem:[%s14 + $0xb4] sm:$0xf]
  %v4585 = vld [vmem:[%s14 + $0xb8] sm:$0xf]
  %v4586 = vld [vmem:[%s14 + $0xbc] sm:$0xf]
  %v4587 = vld [vmem:[%s14 + $0xc0] sm:$0xf]
  %v4588 = vld [vmem:[%s14 + $0xc4] sm:$0xf]
  %v4589 = vld [vmem:[%s14 + $0xc8] sm:$0xf]
  %v4590 = vld [vmem:[%s14 + $0xcc] sm:$0xf]
  %v4591 = vld [vmem:[%s14 + $0xd0] sm:$0xf]
  %v4592 = vld [vmem:[%s14 + $0xd4] sm:$0xf]
  %v4593 = vld [vmem:[%s14 + $0xd8] sm:$0xf]
  %v4594 = vld [vmem:[%s14 + $0xdc] sm:$0xf]
  %v4595 = vld [vmem:[%s14 + $0xe0] sm:$0xf]
  %v4596 = vld [vmem:[%s14 + $0xe4] sm:$0xf]
  %v4597 = vld [vmem:[%s14 + $0xe8] sm:$0xf]
  %v4598 = vld [vmem:[%s14 + $0xec] sm:$0xf]
  %v4599 = vld [vmem:[%s14 + $0xf0] sm:$0xf]
  %v4600 = vld [vmem:[%s14 + $0xf4] sm:$0xf]
  %v4601 = vld [vmem:[%s14 + $0xf8] sm:$0xf]
  %v4602 = vld [vmem:[%s14 + $0xfc] sm:$0xf]
  %v4603 = vld [vmem:[%s14 + $0x100] sm:$0xf]
  %v4604 = vld [vmem:[%s14 + $0x104] sm:$0xf]
  %v4605 = vld [vmem:[%s14 + $0x108] sm:$0xf]
  %v4606 = vld [vmem:[%s14 + $0x10c] sm:$0xf]
  %v4607 = vld [vmem:[%s14 + $0x110] sm:$0xf]
  %v4608 = vld [vmem:[%s14 + $0x114] sm:$0xf]
  %v4609 = vld [vmem:[%s14 + $0x118] sm:$0xf]
  %v4610 = vld [vmem:[%s14 + $0x11c] sm:$0xf]
  %v4611 = vld [vmem:[%s14 + $0x120] sm:$0xf]
  %v4612 = vld [vmem:[%s14 + $0x124] sm:$0xf]
  %v4613 = vld [vmem:[%s14 + $0x128] sm:$0xf]
  %v4614 = vld [vmem:[%s14 + $0x12c] sm:$0xf]
  %v4615 = vld [vmem:[%s14 + $0x130] sm:$0xf]
  %v4616 = vld [vmem:[%s14 + $0x134] sm:$0xf]
  %v4617 = vld [vmem:[%s14 + $0x138] sm:$0xf]
  %v4618 = vld [vmem:[%s14 + $0x13c] sm:$0xf]
  %v4619 = vld [vmem:[%s14 + $0x140] sm:$0xf]
  %v4620 = vld [vmem:[%s14 + $0x144] sm:$0xf]
  %v4621 = vld [vmem:[%s14 + $0x148] sm:$0xf]
  %v4622 = vld [vmem:[%s14 + $0x14c] sm:$0xf]
  %v4707 = vunpack.c.l.b16 %v4539
  %v4708 = vunpack.c.l.b16 %v4540
  %v4709 = vunpack.c.l.b16 %v4541
  %v4710 = vunpack.c.l.b16 %v4542
  %v4711 = vunpack.c.l.b16 %v4543
  %v4712 = vunpack.c.l.b16 %v4544
  %v4713 = vunpack.c.l.b16 %v4545
  %v4714 = vunpack.c.l.b16 %v4546
  %v4715 = vunpack.c.l.b16 %v4547
  %v4716 = vunpack.c.l.b16 %v4548
  %v4717 = vunpack.c.l.b16 %v4549
  %v4718 = vunpack.c.l.b16 %v4550
  %v4719 = vunpack.c.l.b16 %v4551
  %v4720 = vunpack.c.l.b16 %v4552
  %v4721 = vunpack.c.l.b16 %v4553
  %v4722 = vunpack.c.l.b16 %v4554
  %v4723 = vunpack.c.l.b16 %v4555
  %v4724 = vunpack.c.l.b16 %v4556
  %v4725 = vunpack.c.l.b16 %v4557
  %v4726 = vunpack.c.l.b16 %v4558
  %v4727 = vunpack.c.l.b16 %v4559
  %v4728 = vunpack.c.l.b16 %v4560
  %v4729 = vunpack.c.l.b16 %v4561
  %v4730 = vunpack.c.l.b16 %v4562
  %v4731 = vunpack.c.l.b16 %v4563
  %v4732 = vunpack.c.l.b16 %v4564
  %v4733 = vunpack.c.l.b16 %v4565
  %v4734 = vunpack.c.l.b16 %v4566
  %v4735 = vunpack.c.l.b16 %v4567
  %v4736 = vunpack.c.l.b16 %v4568
  %v4737 = vunpack.c.l.b16 %v4569
  %v4738 = vunpack.c.l.b16 %v4570
  %v4739 = vunpack.c.l.b16 %v4571
  %v4740 = vunpack.c.l.b16 %v4572
  %v4741 = vunpack.c.l.b16 %v4573
  %v4742 = vunpack.c.l.b16 %v4574
  %v4743 = vunpack.c.l.b16 %v4575
  %v4744 = vunpack.c.l.b16 %v4576
  %v4745 = vunpack.c.l.b16 %v4577
  %v4746 = vunpack.c.l.b16 %v4578
  %v4747 = vunpack.c.l.b16 %v4579
  %v4748 = vunpack.c.l.b16 %v4580
  %v4749 = vunpack.c.l.b16 %v4581
  %v4750 = vunpack.c.l.b16 %v4582
  %v4751 = vunpack.c.l.b16 %v4583
  %v4752 = vunpack.c.l.b16 %v4584
  %v4753 = vunpack.c.l.b16 %v4585
  %v4754 = vunpack.c.l.b16 %v4586
  %v4755 = vunpack.c.l.b16 %v4587
  %v4756 = vunpack.c.l.b16 %v4588
  %v4757 = vunpack.c.l.b16 %v4589
  %v4758 = vunpack.c.l.b16 %v4590
  %v4759 = vunpack.c.l.b16 %v4591
  %v4760 = vunpack.c.l.b16 %v4592
  %v4761 = vunpack.c.l.b16 %v4593
  %v4762 = vunpack.c.l.b16 %v4594
  %v4763 = vunpack.c.l.b16 %v4595
  %v4764 = vunpack.c.l.b16 %v4596
  %v4765 = vunpack.c.l.b16 %v4597
  %v4766 = vunpack.c.l.b16 %v4598
  %v4767 = vunpack.c.l.b16 %v4599
  %v4768 = vunpack.c.l.b16 %v4600
  %v4769 = vunpack.c.l.b16 %v4601
  %v4770 = vunpack.c.l.b16 %v4602
  %v4771 = vunpack.c.l.b16 %v4603
  %v4772 = vunpack.c.l.b16 %v4604
  %v4773 = vunpack.c.l.b16 %v4605
  %v4774 = vunpack.c.l.b16 %v4606
  %v4775 = vunpack.c.l.b16 %v4607
  %v4776 = vunpack.c.l.b16 %v4608
  %v4777 = vunpack.c.l.b16 %v4609
  %v4778 = vunpack.c.l.b16 %v4610
  %v4779 = vunpack.c.l.b16 %v4611
  %v4780 = vunpack.c.l.b16 %v4612
  %v4781 = vunpack.c.l.b16 %v4613
  %v4782 = vunpack.c.l.b16 %v4614
  %v4783 = vunpack.c.l.b16 %v4615
  %v4784 = vunpack.c.l.b16 %v4616
  %v4785 = vunpack.c.l.b16 %v4617
  %v4786 = vunpack.c.l.b16 %v4618
  %v4787 = vunpack.c.l.b16 %v4619
  %v4788 = vunpack.c.l.b16 %v4620
  %v4789 = vunpack.c.l.b16 %v4621
  %v4790 = vunpack.c.l.b16 %v4622
  %v4791 = vpack.c.b16 %v4708, %v4707
  %v4792 = vpack.c.b16 %v4710, %v4709
  %v4793 = vpack.c.b16 %v4712, %v4711
  %v4794 = vpack.c.b16 %v4714, %v4713
  %v4795 = vpack.c.b16 %v4716, %v4715
  %v4796 = vpack.c.b16 %v4718, %v4717
  %v4797 = vpack.c.b16 %v4720, %v4719
  %v4798 = vpack.c.b16 %v4722, %v4721
  %v4799 = vpack.c.b16 %v4724, %v4723
  %v4800 = vpack.c.b16 %v4726, %v4725
  %v4801 = vpack.c.b16 %v4728, %v4727
  %v4802 = vpack.c.b16 %v4730, %v4729
  %v4803 = vpack.c.b16 %v4732, %v4731
  %v4804 = vpack.c.b16 %v4734, %v4733
  %v4805 = vpack.c.b16 %v4736, %v4735
  %v4806 = vpack.c.b16 %v4738, %v4737
  %v4807 = vpack.c.b16 %v4740, %v4739
  %v4808 = vpack.c.b16 %v4742, %v4741
  %v4809 = vpack.c.b16 %v4744, %v4743
  %v4810 = vpack.c.b16 %v4746, %v4745
  %v4811 = vpack.c.b16 %v4748, %v4747
  %v4812 = vpack.c.b16 %v4750, %v4749
  %v4813 = vpack.c.b16 %v4752, %v4751
  %v4814 = vpack.c.b16 %v4754, %v4753
  %v4815 = vpack.c.b16 %v4756, %v4755
  %v4816 = vpack.c.b16 %v4758, %v4757
  %v4817 = vpack.c.b16 %v4760, %v4759
  %v4818 = vpack.c.b16 %v4762, %v4761
  %v4819 = vpack.c.b16 %v4764, %v4763
  %v4820 = vpack.c.b16 %v4766, %v4765
  %v4821 = vpack.c.b16 %v4768, %v4767
  %v4822 = vpack.c.b16 %v4770, %v4769
  %v4823 = vpack.c.b16 %v4772, %v4771
  %v4824 = vpack.c.b16 %v4774, %v4773
  %v4825 = vpack.c.b16 %v4776, %v4775
  %v4826 = vpack.c.b16 %v4778, %v4777
  %v4827 = vpack.c.b16 %v4780, %v4779
  %v4828 = vpack.c.b16 %v4782, %v4781
  %v4829 = vpack.c.b16 %v4784, %v4783
  %v4830 = vpack.c.b16 %v4786, %v4785
  %v4831 = vpack.c.b16 %v4788, %v4787
  %v4832 = vpack.c.b16 %v4790, %v4789
  %4875 = vmatprep.subr.bf16.mxu0 0
  %4876 = vmatpush1.bf16.msra.mxu0 %v4538
  %4877 = vmatprep.subr.bf16.mxu0 0
  %4878 = vmatpush1.bf16.msra.mxu0 %v4537
  %4879 = vmatprep.subr.bf16.mxu0 0
  %4880 = vmatpush1.bf16.msra.mxu0 %v4536
  %4881 = vmatprep.subr.bf16.mxu0 0
  %4882 = vmatpush1.bf16.msra.mxu0 %v4535
  %4883 = vmatprep.subr.bf16.mxu0 0
  %4884 = vmatpush1.bf16.msra.mxu0 %v4534
  %4885 = vmatprep.subr.bf16.mxu0 0
  %4886 = vmatpush1.bf16.msra.mxu0 %v4533
  %4887 = vmatprep.subr.bf16.mxu0 0
  %4888 = vmatpush1.bf16.msra.mxu0 %v4532
  %4889 = vmatprep.subr.bf16.mxu0 0
  %4890 = vmatpush1.bf16.msra.mxu0 %v4531
  %4891 = vmatprep.subr.bf16.mxu0 0
  %4892 = vmatpush2.bf16.msra.mxu0 0
  %4893 = vmatprep.subr.bf16.mxu0 0
  %4894 = vmatpush2.bf16.msra.mxu0 0
  %4895 = vmatprep.subr.bf16.mxu0 0
  %4896 = vmatpush2.bf16.msra.mxu0 0
  %4897 = vmatprep.subr.bf16.mxu0 0
  %4898 = vmatpush2.bf16.msra.mxu0 0
  %4899 = vmatprep.subr.bf16.mxu0 0
  %4900 = vmatpush2.bf16.msra.mxu0 0
  %4901 = vmatprep.subr.bf16.mxu0 0
  %4902 = vmatpush2.bf16.msra.mxu0 0
  %4903 = vmatprep.subr.bf16.mxu0 0
  %4904 = vmatpush2.bf16.msra.mxu0 0
  %4905 = vmatprep.subr.bf16.mxu0 0
  %4906 = vmatpush2.bf16.msra.mxu0 0
  %4907 = vmatprep.mubr.bf16.mxu0 0
  %4908 = vmatmul.mubr.bf16.gmra.mxu0 %v4791
  %v4909 = vpop.f32.mrf.mxu0
  %v4910 = vadd.f32 0.0, %v4909
  %v4911 = vpop.f32.mrf.mxu0
  %v4912 = vpop.f32.mrf.mxu0
  %v4913 = vadd.f32 0.0, %v4912
  %v4914 = vpop.f32.mrf.mxu0
  %4915 = vmatprep.mubr.bf16.mxu0 0
  %4916 = vmatmul.mubr.bf16.gmra.mxu0 %v4792
  %v4917 = vpop.f32.mrf.mxu0
  %v4918 = vadd.f32 0.0, %v4917
  %v4919 = vpop.f32.mrf.mxu0
  %v4920 = vpop.f32.mrf.mxu0
  %v4921 = vadd.f32 0.0, %v4920
  %v4922 = vpop.f32.mrf.mxu0
  %4923 = vmatprep.mubr.bf16.mxu0 0
  %4924 = vmatmul.mubr.bf16.gmra.mxu0 %v4793
  %v4925 = vpop.f32.mrf.mxu0
  %v4926 = vadd.f32 0.0, %v4925
  %v4927 = vpop.f32.mrf.mxu0
  %v4928 = vpop.f32.mrf.mxu0
  %v4929 = vadd.f32 0.0, %v4928
  %v4930 = vpop.f32.mrf.mxu0
  %4931 = vmatprep.mubr.bf16.mxu0 0
  %4932 = vmatmul.mubr.bf16.gmra.mxu0 %v4794
  %v4933 = vpop.f32.mrf.mxu0
  %v4934 = vadd.f32 0.0, %v4933
  %v4935 = vpop.f32.mrf.mxu0
  %v4936 = vpop.f32.mrf.mxu0
  %v4937 = vadd.f32 0.0, %v4936
  %v4938 = vpop.f32.mrf.mxu0
  %4939 = vmatprep.mubr.bf16.mxu0 0
  %4940 = vmatmul.mubr.bf16.gmra.mxu0 %v4795
  %v4941 = vpop.f32.mrf.mxu0
  %v4942 = vadd.f32 0.0, %v4941
  %v4943 = vpop.f32.mrf.mxu0
  %v4944 = vpop.f32.mrf.mxu0
  %v4945 = vadd.f32 0.0, %v4944
  %v4946 = vpop.f32.mrf.mxu0
  %4947 = vmatprep.mubr.bf16.mxu0 0
  %4948 = vmatmul.mubr.bf16.gmra.mxu0 %v4796
  %v4949 = vpop.f32.mrf.mxu0
  %v4950 = vadd.f32 0.0, %v4949
  %v4951 = vpop.f32.mrf.mxu0
  %v4952 = vpop.f32.mrf.mxu0
  %v4953 = vadd.f32 0.0, %v4952
  %v4954 = vpop.f32.mrf.mxu0
  %4955 = vmatprep.mubr.bf16.mxu0 0
  %4956 = vmatmul.mubr.bf16.gmra.mxu0 %v4797
  %v4957 = vpop.f32.mrf.mxu0
  %v4958 = vadd.f32 0.0, %v4957
  %v4959 = vpop.f32.mrf.mxu0
  %v4960 = vpop.f32.mrf.mxu0
  %v4961 = vadd.f32 0.0, %v4960
  %v4962 = vpop.f32.mrf.mxu0
  %4963 = vmatprep.mubr.bf16.mxu0 0
  %4964 = vmatmul.mubr.bf16.gmra.mxu0 %v4798
  %v4965 = vpop.f32.mrf.mxu0
  %v4966 = vadd.f32 0.0, %v4965
  %v4967 = vpop.f32.mrf.mxu0
  %v4968 = vpop.f32.mrf.mxu0
  %v4969 = vadd.f32 0.0, %v4968
  %v4970 = vpop.f32.mrf.mxu0
  %4971 = vmatprep.mubr.bf16.mxu0 0
  %4972 = vmatmul.mubr.bf16.gmra.mxu0 %v4799
  %v4973 = vpop.f32.mrf.mxu0
  %v4974 = vadd.f32 0.0, %v4973
  %v4975 = vpop.f32.mrf.mxu0
  %v4976 = vpop.f32.mrf.mxu0
  %v4977 = vadd.f32 0.0, %v4976
  %v4978 = vpop.f32.mrf.mxu0
  %4979 = vmatprep.mubr.bf16.mxu0 0
  %4980 = vmatmul.mubr.bf16.gmra.mxu0 %v4800
  %v4981 = vpop.f32.mrf.mxu0
  %v4982 = vadd.f32 0.0, %v4981
  %v4983 = vpop.f32.mrf.mxu0
  %v4984 = vpop.f32.mrf.mxu0
  %v4985 = vadd.f32 0.0, %v4984
  %v4986 = vpop.f32.mrf.mxu0
  %4987 = vmatprep.mubr.bf16.mxu0 0
  %4988 = vmatmul.mubr.bf16.gmra.mxu0 %v4801
  %v4989 = vpop.f32.mrf.mxu0
  %v4990 = vadd.f32 0.0, %v4989
  %v4991 = vpop.f32.mrf.mxu0
  %v4992 = vpop.f32.mrf.mxu0
  %v4993 = vadd.f32 0.0, %v4992
  %v4994 = vpop.f32.mrf.mxu0
  %4995 = vmatprep.mubr.bf16.mxu0 0
  %4996 = vmatmul.mubr.bf16.gmra.mxu0 %v4802
  %v4997 = vpop.f32.mrf.mxu0
  %v4998 = vadd.f32 0.0, %v4997
  %v4999 = vpop.f32.mrf.mxu0
  %v5000 = vpop.f32.mrf.mxu0
  %v5001 = vadd.f32 0.0, %v5000
  %v5002 = vpop.f32.mrf.mxu0
  %5003 = vmatprep.mubr.bf16.mxu0 0
  %5004 = vmatmul.mubr.bf16.gmra.mxu0 %v4803
  %v5005 = vpop.f32.mrf.mxu0
  %v5006 = vadd.f32 0.0, %v5005
  %v5007 = vpop.f32.mrf.mxu0
  %v5008 = vpop.f32.mrf.mxu0
  %v5009 = vadd.f32 0.0, %v5008
  %v5010 = vpop.f32.mrf.mxu0
  %5011 = vmatprep.mubr.bf16.mxu0 0
  %5012 = vmatmul.mubr.bf16.gmra.mxu0 %v4804
  %v5013 = vpop.f32.mrf.mxu0
  %v5014 = vadd.f32 0.0, %v5013
  %v5015 = vpop.f32.mrf.mxu0
  %v5016 = vpop.f32.mrf.mxu0
  %v5017 = vadd.f32 0.0, %v5016
  %v5018 = vpop.f32.mrf.mxu0
  %5019 = vmatprep.mubr.bf16.mxu0 0
  %5020 = vmatmul.mubr.bf16.gmra.mxu0 %v4805
  %v5021 = vpop.f32.mrf.mxu0
  %v5022 = vadd.f32 0.0, %v5021
  %v5023 = vpop.f32.mrf.mxu0
  %v5024 = vpop.f32.mrf.mxu0
  %v5025 = vadd.f32 0.0, %v5024
  %v5026 = vpop.f32.mrf.mxu0
  %5027 = vmatprep.mubr.bf16.mxu0 0
  %5028 = vmatmul.mubr.bf16.gmra.mxu0 %v4806
  %v5029 = vpop.f32.mrf.mxu0
  %v5030 = vadd.f32 0.0, %v5029
  %v5031 = vpop.f32.mrf.mxu0
  %v5032 = vpop.f32.mrf.mxu0
  %v5033 = vadd.f32 0.0, %v5032
  %v5034 = vpop.f32.mrf.mxu0
  %5035 = vmatprep.mubr.bf16.mxu0 0
  %5036 = vmatmul.mubr.bf16.gmra.mxu0 %v4807
  %v5037 = vpop.f32.mrf.mxu0
  %v5038 = vadd.f32 0.0, %v5037
  %v5039 = vpop.f32.mrf.mxu0
  %v5040 = vpop.f32.mrf.mxu0
  %v5041 = vadd.f32 0.0, %v5040
  %v5042 = vpop.f32.mrf.mxu0
  %5043 = vmatprep.mubr.bf16.mxu0 0
  %5044 = vmatmul.mubr.bf16.gmra.mxu0 %v4808
  %v5045 = vpop.f32.mrf.mxu0
  %v5046 = vadd.f32 0.0, %v5045
  %v5047 = vpop.f32.mrf.mxu0
  %v5048 = vpop.f32.mrf.mxu0
  %v5049 = vadd.f32 0.0, %v5048
  %v5050 = vpop.f32.mrf.mxu0
  %5051 = vmatprep.mubr.bf16.mxu0 0
  %5052 = vmatmul.mubr.bf16.gmra.mxu0 %v4809
  %v5053 = vpop.f32.mrf.mxu0
  %v5054 = vadd.f32 0.0, %v5053
  %v5055 = vpop.f32.mrf.mxu0
  %v5056 = vpop.f32.mrf.mxu0
  %v5057 = vadd.f32 0.0, %v5056
  %v5058 = vpop.f32.mrf.mxu0
  %5059 = vmatprep.mubr.bf16.mxu0 0
  %5060 = vmatmul.mubr.bf16.gmra.mxu0 %v4810
  %v5061 = vpop.f32.mrf.mxu0
  %v5062 = vadd.f32 0.0, %v5061
  %v5063 = vpop.f32.mrf.mxu0
  %v5064 = vpop.f32.mrf.mxu0
  %v5065 = vadd.f32 0.0, %v5064
  %v5066 = vpop.f32.mrf.mxu0
  %5067 = vmatprep.mubr.bf16.mxu0 0
  %5068 = vmatmul.mubr.bf16.gmra.mxu0 %v4811
  %v5069 = vpop.f32.mrf.mxu0
  %v5070 = vadd.f32 0.0, %v5069
  %v5071 = vpop.f32.mrf.mxu0
  %v5072 = vpop.f32.mrf.mxu0
  %v5073 = vadd.f32 0.0, %v5072
  %v5074 = vpop.f32.mrf.mxu0
  %5075 = vmatprep.mubr.bf16.mxu0 0
  %5076 = vmatmul.mubr.bf16.gmra.mxu0 %v4812
  %v5077 = vpop.f32.mrf.mxu0
  %v5078 = vadd.f32 0.0, %v5077
  %v5079 = vpop.f32.mrf.mxu0
  %v5080 = vpop.f32.mrf.mxu0
  %v5081 = vadd.f32 0.0, %v5080
  %v5082 = vpop.f32.mrf.mxu0
  %5083 = vmatprep.mubr.bf16.mxu0 0
  %5084 = vmatmul.mubr.bf16.gmra.mxu0 %v4813
  %v5085 = vpop.f32.mrf.mxu0
  %v5086 = vadd.f32 0.0, %v5085
  %v5087 = vpop.f32.mrf.mxu0
  %v5088 = vpop.f32.mrf.mxu0
  %v5089 = vadd.f32 0.0, %v5088
  %v5090 = vpop.f32.mrf.mxu0
  %5091 = vmatprep.mubr.bf16.mxu0 0
  %5092 = vmatmul.mubr.bf16.gmra.mxu0 %v4814
  %v5093 = vpop.f32.mrf.mxu0
  %v5094 = vadd.f32 0.0, %v5093
  %v5095 = vpop.f32.mrf.mxu0
  %v5096 = vpop.f32.mrf.mxu0
  %v5097 = vadd.f32 0.0, %v5096
  %v5098 = vpop.f32.mrf.mxu0
  %5099 = vmatprep.mubr.bf16.mxu0 0
  %5100 = vmatmul.mubr.bf16.gmra.mxu0 %v4815
  %v5101 = vpop.f32.mrf.mxu0
  %v5102 = vadd.f32 0.0, %v5101
  %v5103 = vpop.f32.mrf.mxu0
  %v5104 = vpop.f32.mrf.mxu0
  %v5105 = vadd.f32 0.0, %v5104
  %v5106 = vpop.f32.mrf.mxu0
  %5107 = vmatprep.mubr.bf16.mxu0 0
  %5108 = vmatmul.mubr.bf16.gmra.mxu0 %v4816
  %v5109 = vpop.f32.mrf.mxu0
  %v5110 = vadd.f32 0.0, %v5109
  %v5111 = vpop.f32.mrf.mxu0
  %v5112 = vpop.f32.mrf.mxu0
  %v5113 = vadd.f32 0.0, %v5112
  %v5114 = vpop.f32.mrf.mxu0
  %5115 = vmatprep.mubr.bf16.mxu0 0
  %5116 = vmatmul.mubr.bf16.gmra.mxu0 %v4817
  %v5117 = vpop.f32.mrf.mxu0
  %v5118 = vadd.f32 0.0, %v5117
  %v5119 = vpop.f32.mrf.mxu0
  %v5120 = vpop.f32.mrf.mxu0
  %v5121 = vadd.f32 0.0, %v5120
  %v5122 = vpop.f32.mrf.mxu0
  %5123 = vmatprep.mubr.bf16.mxu0 0
  %5124 = vmatmul.mubr.bf16.gmra.mxu0 %v4818
  %v5125 = vpop.f32.mrf.mxu0
  %v5126 = vadd.f32 0.0, %v5125
  %v5127 = vpop.f32.mrf.mxu0
  %v5128 = vpop.f32.mrf.mxu0
  %v5129 = vadd.f32 0.0, %v5128
  %v5130 = vpop.f32.mrf.mxu0
  %5131 = vmatprep.mubr.bf16.mxu0 0
  %5132 = vmatmul.mubr.bf16.gmra.mxu0 %v4819
  %v5133 = vpop.f32.mrf.mxu0
  %v5134 = vadd.f32 0.0, %v5133
  %v5135 = vpop.f32.mrf.mxu0
  %v5136 = vpop.f32.mrf.mxu0
  %v5137 = vadd.f32 0.0, %v5136
  %v5138 = vpop.f32.mrf.mxu0
  %5139 = vmatprep.mubr.bf16.mxu0 0
  %5140 = vmatmul.mubr.bf16.gmra.mxu0 %v4820
  %v5141 = vpop.f32.mrf.mxu0
  %v5142 = vadd.f32 0.0, %v5141
  %v5143 = vpop.f32.mrf.mxu0
  %v5144 = vpop.f32.mrf.mxu0
  %v5145 = vadd.f32 0.0, %v5144
  %v5146 = vpop.f32.mrf.mxu0
  %5147 = vmatprep.mubr.bf16.mxu0 0
  %5148 = vmatmul.mubr.bf16.gmra.mxu0 %v4821
  %v5149 = vpop.f32.mrf.mxu0
  %v5150 = vadd.f32 0.0, %v5149
  %v5151 = vpop.f32.mrf.mxu0
  %v5152 = vpop.f32.mrf.mxu0
  %v5153 = vadd.f32 0.0, %v5152
  %v5154 = vpop.f32.mrf.mxu0
  %5155 = vmatprep.mubr.bf16.mxu0 0
  %5156 = vmatmul.mubr.bf16.gmra.mxu0 %v4822
  %v5157 = vpop.f32.mrf.mxu0
  %v5158 = vadd.f32 0.0, %v5157
  %v5159 = vpop.f32.mrf.mxu0
  %v5160 = vpop.f32.mrf.mxu0
  %v5161 = vadd.f32 0.0, %v5160
  %v5162 = vpop.f32.mrf.mxu0
  %5163 = vmatprep.mubr.bf16.mxu0 0
  %5164 = vmatmul.mubr.bf16.gmra.mxu0 %v4823
  %v5165 = vpop.f32.mrf.mxu0
  %v5166 = vadd.f32 0.0, %v5165
  %v5167 = vpop.f32.mrf.mxu0
  %v5168 = vpop.f32.mrf.mxu0
  %v5169 = vadd.f32 0.0, %v5168
  %v5170 = vpop.f32.mrf.mxu0
  %5171 = vmatprep.mubr.bf16.mxu0 0
  %5172 = vmatmul.mubr.bf16.gmra.mxu0 %v4824
  %v5173 = vpop.f32.mrf.mxu0
  %v5174 = vadd.f32 0.0, %v5173
  %v5175 = vpop.f32.mrf.mxu0
  %v5176 = vpop.f32.mrf.mxu0
  %v5177 = vadd.f32 0.0, %v5176
  %v5178 = vpop.f32.mrf.mxu0
  %5179 = vmatprep.mubr.bf16.mxu0 0
  %5180 = vmatmul.mubr.bf16.gmra.mxu0 %v4825
  %v5181 = vpop.f32.mrf.mxu0
  %v5182 = vadd.f32 0.0, %v5181
  %v5183 = vpop.f32.mrf.mxu0
  %v5184 = vpop.f32.mrf.mxu0
  %v5185 = vadd.f32 0.0, %v5184
  %v5186 = vpop.f32.mrf.mxu0
  %5187 = vmatprep.mubr.bf16.mxu0 0
  %5188 = vmatmul.mubr.bf16.gmra.mxu0 %v4826
  %v5189 = vpop.f32.mrf.mxu0
  %v5190 = vadd.f32 0.0, %v5189
  %v5191 = vpop.f32.mrf.mxu0
  %v5192 = vpop.f32.mrf.mxu0
  %v5193 = vadd.f32 0.0, %v5192
  %v5194 = vpop.f32.mrf.mxu0
  %5195 = vmatprep.mubr.bf16.mxu0 0
  %5196 = vmatmul.mubr.bf16.gmra.mxu0 %v4827
  %v5197 = vpop.f32.mrf.mxu0
  %v5198 = vadd.f32 0.0, %v5197
  %v5199 = vpop.f32.mrf.mxu0
  %v5200 = vpop.f32.mrf.mxu0
  %v5201 = vadd.f32 0.0, %v5200
  %v5202 = vpop.f32.mrf.mxu0
  %5203 = vmatprep.mubr.bf16.mxu0 0
  %5204 = vmatmul.mubr.bf16.gmra.mxu0 %v4828
  %v5205 = vpop.f32.mrf.mxu0
  %v5206 = vadd.f32 0.0, %v5205
  %v5207 = vpop.f32.mrf.mxu0
  %v5208 = vpop.f32.mrf.mxu0
  %v5209 = vadd.f32 0.0, %v5208
  %v5210 = vpop.f32.mrf.mxu0
  %5211 = vmatprep.mubr.bf16.mxu0 0
  %5212 = vmatmul.mubr.bf16.gmra.mxu0 %v4829
  %v5213 = vpop.f32.mrf.mxu0
  %v5214 = vadd.f32 0.0, %v5213
  %v5215 = vpop.f32.mrf.mxu0
  %v5216 = vpop.f32.mrf.mxu0
  %v5217 = vadd.f32 0.0, %v5216
  %v5218 = vpop.f32.mrf.mxu0
  %5219 = vmatprep.mubr.bf16.mxu0 0
  %5220 = vmatmul.mubr.bf16.gmra.mxu0 %v4830
  %v5221 = vpop.f32.mrf.mxu0
  %v5222 = vadd.f32 0.0, %v5221
  %v5223 = vpop.f32.mrf.mxu0
  %v5224 = vpop.f32.mrf.mxu0
  %v5225 = vadd.f32 0.0, %v5224
  %v5226 = vpop.f32.mrf.mxu0
  %5227 = vmatprep.mubr.bf16.mxu0 0
  %5228 = vmatmul.mubr.bf16.gmra.mxu0 %v4831
  %v5229 = vpop.f32.mrf.mxu0
  %v5230 = vadd.f32 0.0, %v5229
  %v5231 = vpop.f32.mrf.mxu0
  %v5232 = vpop.f32.mrf.mxu0
  %v5233 = vadd.f32 0.0, %v5232
  %v5234 = vpop.f32.mrf.mxu0
  %5235 = vmatprep.mubr.bf16.mxu0 0
  %5236 = vmatmul.mubr.bf16.gmra.mxu0 %v4832
  %v5237 = vpop.f32.mrf.mxu0
  %v5238 = vadd.f32 0.0, %v5237
  %v5239 = vpop.f32.mrf.mxu0
  %v5240 = vpop.f32.mrf.mxu0
  %v5241 = vadd.f32 0.0, %v5240
  %v5242 = vpop.f32.mrf.mxu0
  %5243 = vdwg.mxu0
  %v5244 = vpack.c.bf16 %v4913, %v4910
  %v5245 = vpack.c.bf16 %v4921, %v4918
  %v5246 = vpack.c.bf16 %v4929, %v4926
  %v5247 = vpack.c.bf16 %v4937, %v4934
  %v5248 = vpack.c.bf16 %v4945, %v4942
  %v5249 = vpack.c.bf16 %v4953, %v4950
  %v5250 = vpack.c.bf16 %v4961, %v4958
  %v5251 = vpack.c.bf16 %v4969, %v4966
  %v5252 = vpack.c.bf16 %v4977, %v4974
  %v5253 = vpack.c.bf16 %v4985, %v4982
  %v5254 = vpack.c.bf16 %v4990, %v4990
  %v5255 = vld [vmem:[%s15] sm:$0xf]
  %v5256 = vld [vmem:[%s15 + $0x4] sm:$0xf]
  %v5257 = vld [vmem:[%s15 + $0x8] sm:$0xf]
  %v5258 = vld [vmem:[%s15 + $0xc] sm:$0xf]
  %v5259 = vld [vmem:[%s15 + $0x10] sm:$0xf]
  %v5260 = vld [vmem:[%s15 + $0x14] sm:$0xf]
  %v5261 = vld [vmem:[%s15 + $0x18] sm:$0xf]
  %v5262 = vld [vmem:[%s15 + $0x1c] sm:$0xf]
  %v5263 = vpack.c.bf16 %v4998, %v4993
  %v5264 = vpack.c.bf16 %v5006, %v5001
  %v5265 = vpack.c.bf16 %v5014, %v5009
  %v5266 = vpack.c.bf16 %v5022, %v5017
  %v5267 = vpack.c.bf16 %v5030, %v5025
  %v5268 = vpack.c.bf16 %v5038, %v5033
  %v5269 = vpack.c.bf16 %v5046, %v5041
  %v5270 = vpack.c.bf16 %v5054, %v5049
  %v5271 = vpack.c.bf16 %v5062, %v5057
  %v5272 = vpack.c.bf16 %v5070, %v5065
  %v5273 = vpack.c.bf16 %v5073, %v5073
  %s5274 = scalar_lea.vmem %s15, 32
  %v5275 = vld [vmem:[%s5274] sm:$0xf]
  %v5276 = vld [vmem:[%s5274 + $0x4] sm:$0xf]
  %v5277 = vld [vmem:[%s5274 + $0x8] sm:$0xf]
  %v5278 = vld [vmem:[%s5274 + $0xc] sm:$0xf]
  %v5279 = vld [vmem:[%s5274 + $0x10] sm:$0xf]
  %v5280 = vld [vmem:[%s5274 + $0x14] sm:$0xf]
  %v5281 = vld [vmem:[%s5274 + $0x18] sm:$0xf]
  %v5282 = vld [vmem:[%s5274 + $0x1c] sm:$0xf]
  %v5291 = vunpack.c.l.b16 %v5275
  %v5292 = vunpack.c.l.b16 %v5276
  %v5293 = vunpack.c.l.b16 %v5277
  %v5294 = vunpack.c.l.b16 %v5278
  %v5295 = vunpack.c.l.b16 %v5279
  %v5296 = vunpack.c.l.b16 %v5280
  %v5297 = vunpack.c.l.b16 %v5281
  %v5298 = vunpack.c.l.b16 %v5282
  %v5299 = vpack.c.b16 %v5292, %v5291
  %v5300 = vpack.c.b16 %v5294, %v5293
  %v5301 = vpack.c.b16 %v5296, %v5295
  %v5302 = vpack.c.b16 %v5298, %v5297
  %v5308 = vsel %vm883, %v5263, 0
  %v5311 = vsel %vm883, %v5264, 0
  %v5314 = vsel %vm883, %v5265, 0
  %v5317 = vsel %vm883, %v5266, 0
  %v5320 = vsel %vm883, %v5267, 0
  %v5323 = vsel %vm883, %v5268, 0
  %v5326 = vsel %vm883, %v5269, 0
  %v5329 = vsel %vm883, %v5270, 0
  %v5332 = vsel %vm883, %v5271, 0
  %v5335 = vsel %vm883, %v5272, 0
  %v5338 = vsel %vm883, %v5273, 0
  %5340 = vmatprep.subr.bf16.mxu0 0
  %5341 = vmatpush1.bf16.msra.mxu0 0
  %5342 = vmatprep.subr.bf16.mxu0 0
  %5343 = vmatpush1.bf16.msra.mxu0 0
  %5344 = vmatprep.subr.bf16.mxu0 0
  %5345 = vmatpush1.bf16.msra.mxu0 0
  %5346 = vmatprep.subr.bf16.mxu0 0
  %5347 = vmatpush1.bf16.msra.mxu0 0
  %5348 = vmatprep.subr.bf16.mxu0 0
  %5349 = vmatpush1.bf16.msra.mxu0 %v5302
  %5350 = vmatprep.subr.bf16.mxu0 0
  %5351 = vmatpush1.bf16.msra.mxu0 %v5301
  %5352 = vmatprep.subr.bf16.mxu0 0
  %5353 = vmatpush1.bf16.msra.mxu0 %v5300
  %5354 = vmatprep.subr.bf16.mxu0 0
  %5355 = vmatpush1.bf16.msra.mxu0 %v5299
  %5356 = vmatprep.subr.bf16.mxu0 0
  %5357 = vmatpush2.bf16.msra.mxu0 0
  %5358 = vmatprep.subr.bf16.mxu0 0
  %5359 = vmatpush2.bf16.msra.mxu0 0
  %5360 = vmatprep.subr.bf16.mxu0 0
  %5361 = vmatpush2.bf16.msra.mxu0 0
  %5362 = vmatprep.subr.bf16.mxu0 0
  %5363 = vmatpush2.bf16.msra.mxu0 0
  %5364 = vmatprep.subr.bf16.mxu0 0
  %5365 = vmatpush2.bf16.msra.mxu0 0
  %5366 = vmatprep.subr.bf16.mxu0 0
  %5367 = vmatpush2.bf16.msra.mxu0 0
  %5368 = vmatprep.subr.bf16.mxu0 0
  %5369 = vmatpush2.bf16.msra.mxu0 0
  %5370 = vmatprep.subr.bf16.mxu0 0
  %5371 = vmatpush2.bf16.msra.mxu0 0
  %5372 = vmatprep.mubr.bf16.mxu0 0
  %5373 = vmatmul.mubr.bf16.gmra.mxu0 %v5308
  %v5374 = vpop.f32.mrf.mxu0
  %v5375 = vadd.f32 0.0, %v5374
  %v5376 = vpop.f32.mrf.mxu0
  %v5377 = vpop.f32.mrf.mxu0
  %v5378 = vadd.f32 0.0, %v5377
  %v5379 = vpop.f32.mrf.mxu0
  %5380 = vmatprep.mubr.bf16.mxu0 0
  %5381 = vmatmul.mubr.bf16.gmra.mxu0 %v5311
  %v5382 = vpop.f32.mrf.mxu0
  %v5383 = vadd.f32 0.0, %v5382
  %v5384 = vpop.f32.mrf.mxu0
  %v5385 = vpop.f32.mrf.mxu0
  %v5386 = vadd.f32 0.0, %v5385
  %v5387 = vpop.f32.mrf.mxu0
  %5388 = vmatprep.mubr.bf16.mxu0 0
  %5389 = vmatmul.mubr.bf16.gmra.mxu0 %v5314
  %v5390 = vpop.f32.mrf.mxu0
  %v5391 = vadd.f32 0.0, %v5390
  %v5392 = vpop.f32.mrf.mxu0
  %v5393 = vpop.f32.mrf.mxu0
  %v5394 = vadd.f32 0.0, %v5393
  %v5395 = vpop.f32.mrf.mxu0
  %5396 = vmatprep.mubr.bf16.mxu0 0
  %5397 = vmatmul.mubr.bf16.gmra.mxu0 %v5317
  %v5398 = vpop.f32.mrf.mxu0
  %v5399 = vadd.f32 0.0, %v5398
  %v5400 = vpop.f32.mrf.mxu0
  %v5401 = vpop.f32.mrf.mxu0
  %v5402 = vadd.f32 0.0, %v5401
  %v5403 = vpop.f32.mrf.mxu0
  %5404 = vmatprep.mubr.bf16.mxu0 0
  %5405 = vmatmul.mubr.bf16.gmra.mxu0 %v5320
  %v5406 = vpop.f32.mrf.mxu0
  %v5407 = vadd.f32 0.0, %v5406
  %v5408 = vpop.f32.mrf.mxu0
  %v5409 = vpop.f32.mrf.mxu0
  %v5410 = vadd.f32 0.0, %v5409
  %v5411 = vpop.f32.mrf.mxu0
  %5412 = vmatprep.mubr.bf16.mxu0 0
  %5413 = vmatmul.mubr.bf16.gmra.mxu0 %v5323
  %v5414 = vpop.f32.mrf.mxu0
  %v5415 = vadd.f32 0.0, %v5414
  %v5416 = vpop.f32.mrf.mxu0
  %v5417 = vpop.f32.mrf.mxu0
  %v5418 = vadd.f32 0.0, %v5417
  %v5419 = vpop.f32.mrf.mxu0
  %5420 = vmatprep.mubr.bf16.mxu0 0
  %5421 = vmatmul.mubr.bf16.gmra.mxu0 %v5326
  %v5422 = vpop.f32.mrf.mxu0
  %v5423 = vadd.f32 0.0, %v5422
  %v5424 = vpop.f32.mrf.mxu0
  %v5425 = vpop.f32.mrf.mxu0
  %v5426 = vadd.f32 0.0, %v5425
  %v5427 = vpop.f32.mrf.mxu0
  %5428 = vmatprep.mubr.bf16.mxu0 0
  %5429 = vmatmul.mubr.bf16.gmra.mxu0 %v5329
  %v5430 = vpop.f32.mrf.mxu0
  %v5431 = vadd.f32 0.0, %v5430
  %v5432 = vpop.f32.mrf.mxu0
  %v5433 = vpop.f32.mrf.mxu0
  %v5434 = vadd.f32 0.0, %v5433
  %v5435 = vpop.f32.mrf.mxu0
  %5436 = vmatprep.mubr.bf16.mxu0 0
  %5437 = vmatmul.mubr.bf16.gmra.mxu0 %v5332
  %v5438 = vpop.f32.mrf.mxu0
  %v5439 = vadd.f32 0.0, %v5438
  %v5440 = vpop.f32.mrf.mxu0
  %v5441 = vpop.f32.mrf.mxu0
  %v5442 = vadd.f32 0.0, %v5441
  %v5443 = vpop.f32.mrf.mxu0
  %5444 = vmatprep.mubr.bf16.mxu0 0
  %5445 = vmatmul.mubr.bf16.gmra.mxu0 %v5335
  %v5446 = vpop.f32.mrf.mxu0
  %v5447 = vadd.f32 0.0, %v5446
  %v5448 = vpop.f32.mrf.mxu0
  %v5449 = vpop.f32.mrf.mxu0
  %v5450 = vadd.f32 0.0, %v5449
  %v5451 = vpop.f32.mrf.mxu0
  %5452 = vmatprep.mubr.bf16.mxu0 0
  %5453 = vmatmul.mubr.bf16.gmra.mxu0 %v5338
  %v5454 = vpop.f32.mrf.mxu0
  %v5455 = vadd.f32 0.0, %v5454
  %v5456 = vpop.f32.mrf.mxu0
  %v5457 = vpop.f32.mrf.mxu0
  %v5458 = vpop.f32.mrf.mxu0
  %5459 = vdwg.mxu0
  %v5468 = vunpack.c.l.b16 %v5255
  %v5469 = vunpack.c.l.b16 %v5256
  %v5470 = vunpack.c.l.b16 %v5257
  %v5471 = vunpack.c.l.b16 %v5258
  %v5472 = vunpack.c.l.b16 %v5259
  %v5473 = vunpack.c.l.b16 %v5260
  %v5474 = vunpack.c.l.b16 %v5261
  %v5475 = vunpack.c.l.b16 %v5262
  %v5476 = vpack.c.b16 %v5469, %v5468
  %v5477 = vpack.c.b16 %v5471, %v5470
  %v5478 = vpack.c.b16 %v5473, %v5472
  %v5479 = vpack.c.b16 %v5475, %v5474
  %v5485 = vsel %vm883, %v5244, 0
  %v5488 = vsel %vm883, %v5245, 0
  %v5491 = vsel %vm883, %v5246, 0
  %v5494 = vsel %vm883, %v5247, 0
  %v5497 = vsel %vm883, %v5248, 0
  %v5500 = vsel %vm883, %v5249, 0
  %v5503 = vsel %vm883, %v5250, 0
  %v5506 = vsel %vm883, %v5251, 0
  %v5509 = vsel %vm883, %v5252, 0
  %v5512 = vsel %vm883, %v5253, 0
  %v5515 = vsel %vm883, %v5254, 0
  %5517 = vmatprep.subr.bf16.mxu0 0
  %5518 = vmatpush1.bf16.msra.mxu0 0
  %5519 = vmatprep.subr.bf16.mxu0 0
  %5520 = vmatpush1.bf16.msra.mxu0 0
  %5521 = vmatprep.subr.bf16.mxu0 0
  %5522 = vmatpush1.bf16.msra.mxu0 0
  %5523 = vmatprep.subr.bf16.mxu0 0
  %5524 = vmatpush1.bf16.msra.mxu0 0
  %5525 = vmatprep.subr.bf16.mxu0 0
  %5526 = vmatpush1.bf16.msra.mxu0 %v5479
  %5527 = vmatprep.subr.bf16.mxu0 0
  %5528 = vmatpush1.bf16.msra.mxu0 %v5478
  %5529 = vmatprep.subr.bf16.mxu0 0
  %5530 = vmatpush1.bf16.msra.mxu0 %v5477
  %5531 = vmatprep.subr.bf16.mxu0 0
  %5532 = vmatpush1.bf16.msra.mxu0 %v5476
  %5533 = vmatprep.subr.bf16.mxu0 0
  %5534 = vmatpush2.bf16.msra.mxu0 0
  %5535 = vmatprep.subr.bf16.mxu0 0
  %5536 = vmatpush2.bf16.msra.mxu0 0
  %5537 = vmatprep.subr.bf16.mxu0 0
  %5538 = vmatpush2.bf16.msra.mxu0 0
  %5539 = vmatprep.subr.bf16.mxu0 0
  %5540 = vmatpush2.bf16.msra.mxu0 0
  %5541 = vmatprep.subr.bf16.mxu0 0
  %5542 = vmatpush2.bf16.msra.mxu0 0
  %5543 = vmatprep.subr.bf16.mxu0 0
  %5544 = vmatpush2.bf16.msra.mxu0 0
  %5545 = vmatprep.subr.bf16.mxu0 0
  %5546 = vmatpush2.bf16.msra.mxu0 0
  %5547 = vmatprep.subr.bf16.mxu0 0
  %5548 = vmatpush2.bf16.msra.mxu0 0
  %5549 = vmatprep.mubr.bf16.mxu0 0
  %5550 = vmatmul.mubr.bf16.gmra.mxu0 %v5485
  %v5551 = vpop.f32.mrf.mxu0
  %v5552 = vadd.f32 %v5375, %v5551
  %v5553 = vpop.f32.mrf.mxu0
  %v5554 = vpop.f32.mrf.mxu0
  %v5555 = vadd.f32 %v5378, %v5554
  %v5556 = vpop.f32.mrf.mxu0
  %5557 = vmatprep.mubr.bf16.mxu0 0
  %5558 = vmatmul.mubr.bf16.gmra.mxu0 %v5488
  %v5559 = vpop.f32.mrf.mxu0
  %v5560 = vadd.f32 %v5383, %v5559
  %v5561 = vpop.f32.mrf.mxu0
  %v5562 = vpop.f32.mrf.mxu0
  %v5563 = vadd.f32 %v5386, %v5562
  %v5564 = vpop.f32.mrf.mxu0
  %5565 = vmatprep.mubr.bf16.mxu0 0
  %5566 = vmatmul.mubr.bf16.gmra.mxu0 %v5491
  %v5567 = vpop.f32.mrf.mxu0
  %v5568 = vadd.f32 %v5391, %v5567
  %v5569 = vpop.f32.mrf.mxu0
  %v5570 = vpop.f32.mrf.mxu0
  %v5571 = vadd.f32 %v5394, %v5570
  %v5572 = vpop.f32.mrf.mxu0
  %5573 = vmatprep.mubr.bf16.mxu0 0
  %5574 = vmatmul.mubr.bf16.gmra.mxu0 %v5494
  %v5575 = vpop.f32.mrf.mxu0
  %v5576 = vadd.f32 %v5399, %v5575
  %v5577 = vpop.f32.mrf.mxu0
  %v5578 = vpop.f32.mrf.mxu0
  %v5579 = vadd.f32 %v5402, %v5578
  %v5580 = vpop.f32.mrf.mxu0
  %5581 = vmatprep.mubr.bf16.mxu0 0
  %5582 = vmatmul.mubr.bf16.gmra.mxu0 %v5497
  %v5583 = vpop.f32.mrf.mxu0
  %v5584 = vadd.f32 %v5407, %v5583
  %v5585 = vpop.f32.mrf.mxu0
  %v5586 = vpop.f32.mrf.mxu0
  %v5587 = vadd.f32 %v5410, %v5586
  %v5588 = vpop.f32.mrf.mxu0
  %5589 = vmatprep.mubr.bf16.mxu0 0
  %5590 = vmatmul.mubr.bf16.gmra.mxu0 %v5500
  %v5591 = vpop.f32.mrf.mxu0
  %v5592 = vadd.f32 %v5415, %v5591
  %v5593 = vpop.f32.mrf.mxu0
  %v5594 = vpop.f32.mrf.mxu0
  %v5595 = vadd.f32 %v5418, %v5594
  %v5596 = vpop.f32.mrf.mxu0
  %5597 = vmatprep.mubr.bf16.mxu0 0
  %5598 = vmatmul.mubr.bf16.gmra.mxu0 %v5503
  %v5599 = vpop.f32.mrf.mxu0
  %v5600 = vadd.f32 %v5423, %v5599
  %v5601 = vpop.f32.mrf.mxu0
  %v5602 = vpop.f32.mrf.mxu0
  %v5603 = vadd.f32 %v5426, %v5602
  %v5604 = vpop.f32.mrf.mxu0
  %5605 = vmatprep.mubr.bf16.mxu0 0
  %5606 = vmatmul.mubr.bf16.gmra.mxu0 %v5506
  %v5607 = vpop.f32.mrf.mxu0
  %v5608 = vadd.f32 %v5431, %v5607
  %v5609 = vpop.f32.mrf.mxu0
  %v5610 = vpop.f32.mrf.mxu0
  %v5611 = vadd.f32 %v5434, %v5610
  %v5612 = vpop.f32.mrf.mxu0
  %5613 = vmatprep.mubr.bf16.mxu0 0
  %5614 = vmatmul.mubr.bf16.gmra.mxu0 %v5509
  %v5615 = vpop.f32.mrf.mxu0
  %v5616 = vadd.f32 %v5439, %v5615
  %v5617 = vpop.f32.mrf.mxu0
  %v5618 = vpop.f32.mrf.mxu0
  %v5619 = vadd.f32 %v5442, %v5618
  %v5620 = vpop.f32.mrf.mxu0
  %5621 = vmatprep.mubr.bf16.mxu0 0
  %5622 = vmatmul.mubr.bf16.gmra.mxu0 %v5512
  %v5623 = vpop.f32.mrf.mxu0
  %v5624 = vadd.f32 %v5447, %v5623
  %v5625 = vpop.f32.mrf.mxu0
  %v5626 = vpop.f32.mrf.mxu0
  %v5627 = vadd.f32 %v5450, %v5626
  %v5628 = vpop.f32.mrf.mxu0
  %5629 = vmatprep.mubr.bf16.mxu0 0
  %5630 = vmatmul.mubr.bf16.gmra.mxu0 %v5515
  %v5631 = vpop.f32.mrf.mxu0
  %v5632 = vadd.f32 %v5455, %v5631
  %v5633 = vpop.f32.mrf.mxu0
  %v5634 = vpop.f32.mrf.mxu0
  %v5635 = vpop.f32.mrf.mxu0
  %5636 = vdwg.mxu0
  %v5637 = vpack.c.bf16 %v5081, %v5078
  %v5638 = vpack.c.bf16 %v5089, %v5086
  %v5639 = vpack.c.bf16 %v5097, %v5094
  %v5640 = vpack.c.bf16 %v5105, %v5102
  %v5641 = vpack.c.bf16 %v5113, %v5110
  %v5642 = vpack.c.bf16 %v5121, %v5118
  %v5643 = vpack.c.bf16 %v5129, %v5126
  %v5644 = vpack.c.bf16 %v5137, %v5134
  %v5645 = vpack.c.bf16 %v5145, %v5142
  %v5646 = vpack.c.bf16 %v5153, %v5150
  %v5647 = vpack.c.bf16 %v5158, %v5158
  %s5648 = scalar_lea.vmem %s15, 64
  %v5649 = vld [vmem:[%s5648] sm:$0xf]
  %v5650 = vld [vmem:[%s5648 + $0x4] sm:$0xf]
  %v5651 = vld [vmem:[%s5648 + $0x8] sm:$0xf]
  %v5652 = vld [vmem:[%s5648 + $0xc] sm:$0xf]
  %v5653 = vld [vmem:[%s5648 + $0x10] sm:$0xf]
  %v5654 = vld [vmem:[%s5648 + $0x14] sm:$0xf]
  %v5655 = vld [vmem:[%s5648 + $0x18] sm:$0xf]
  %v5656 = vld [vmem:[%s5648 + $0x1c] sm:$0xf]
  %v5665 = vunpack.c.l.b16 %v5649
  %v5666 = vunpack.c.l.b16 %v5650
  %v5667 = vunpack.c.l.b16 %v5651
  %v5668 = vunpack.c.l.b16 %v5652
  %v5669 = vunpack.c.l.b16 %v5653
  %v5670 = vunpack.c.l.b16 %v5654
  %v5671 = vunpack.c.l.b16 %v5655
  %v5672 = vunpack.c.l.b16 %v5656
  %v5673 = vpack.c.b16 %v5666, %v5665
  %v5674 = vpack.c.b16 %v5668, %v5667
  %v5675 = vpack.c.b16 %v5670, %v5669
  %v5676 = vpack.c.b16 %v5672, %v5671
  %v5682 = vsel %vm883, %v5637, 0
  %v5685 = vsel %vm883, %v5638, 0
  %v5688 = vsel %vm883, %v5639, 0
  %v5691 = vsel %vm883, %v5640, 0
  %v5694 = vsel %vm883, %v5641, 0
  %v5697 = vsel %vm883, %v5642, 0
  %v5700 = vsel %vm883, %v5643, 0
  %v5703 = vsel %vm883, %v5644, 0
  %v5706 = vsel %vm883, %v5645, 0
  %v5709 = vsel %vm883, %v5646, 0
  %v5712 = vsel %vm883, %v5647, 0
  %5714 = vmatprep.subr.bf16.mxu0 0
  %5715 = vmatpush1.bf16.msra.mxu0 0
  %5716 = vmatprep.subr.bf16.mxu0 0
  %5717 = vmatpush1.bf16.msra.mxu0 0
  %5718 = vmatprep.subr.bf16.mxu0 0
  %5719 = vmatpush1.bf16.msra.mxu0 0
  %5720 = vmatprep.subr.bf16.mxu0 0
  %5721 = vmatpush1.bf16.msra.mxu0 0
  %5722 = vmatprep.subr.bf16.mxu0 0
  %5723 = vmatpush1.bf16.msra.mxu0 %v5676
  %5724 = vmatprep.subr.bf16.mxu0 0
  %5725 = vmatpush1.bf16.msra.mxu0 %v5675
  %5726 = vmatprep.subr.bf16.mxu0 0
  %5727 = vmatpush1.bf16.msra.mxu0 %v5674
  %5728 = vmatprep.subr.bf16.mxu0 0
  %5729 = vmatpush1.bf16.msra.mxu0 %v5673
  %5730 = vmatprep.subr.bf16.mxu0 0
  %5731 = vmatpush2.bf16.msra.mxu0 0
  %5732 = vmatprep.subr.bf16.mxu0 0
  %5733 = vmatpush2.bf16.msra.mxu0 0
  %5734 = vmatprep.subr.bf16.mxu0 0
  %5735 = vmatpush2.bf16.msra.mxu0 0
  %5736 = vmatprep.subr.bf16.mxu0 0
  %5737 = vmatpush2.bf16.msra.mxu0 0
  %5738 = vmatprep.subr.bf16.mxu0 0
  %5739 = vmatpush2.bf16.msra.mxu0 0
  %5740 = vmatprep.subr.bf16.mxu0 0
  %5741 = vmatpush2.bf16.msra.mxu0 0
  %5742 = vmatprep.subr.bf16.mxu0 0
  %5743 = vmatpush2.bf16.msra.mxu0 0
  %5744 = vmatprep.subr.bf16.mxu0 0
  %5745 = vmatpush2.bf16.msra.mxu0 0
  %5746 = vmatprep.mubr.bf16.mxu0 0
  %5747 = vmatmul.mubr.bf16.gmra.mxu0 %v5682
  %v5748 = vpop.f32.mrf.mxu0
  %v5749 = vadd.f32 0.0, %v5748
  %v5750 = vpop.f32.mrf.mxu0
  %v5751 = vpop.f32.mrf.mxu0
  %v5752 = vadd.f32 0.0, %v5751
  %v5753 = vpop.f32.mrf.mxu0
  %5754 = vmatprep.mubr.bf16.mxu0 0
  %5755 = vmatmul.mubr.bf16.gmra.mxu0 %v5685
  %v5756 = vpop.f32.mrf.mxu0
  %v5757 = vadd.f32 0.0, %v5756
  %v5758 = vpop.f32.mrf.mxu0
  %v5759 = vpop.f32.mrf.mxu0
  %v5760 = vadd.f32 0.0, %v5759
  %v5761 = vpop.f32.mrf.mxu0
  %5762 = vmatprep.mubr.bf16.mxu0 0
  %5763 = vmatmul.mubr.bf16.gmra.mxu0 %v5688
  %v5764 = vpop.f32.mrf.mxu0
  %v5765 = vadd.f32 0.0, %v5764
  %v5766 = vpop.f32.mrf.mxu0
  %v5767 = vpop.f32.mrf.mxu0
  %v5768 = vadd.f32 0.0, %v5767
  %v5769 = vpop.f32.mrf.mxu0
  %5770 = vmatprep.mubr.bf16.mxu0 0
  %5771 = vmatmul.mubr.bf16.gmra.mxu0 %v5691
  %v5772 = vpop.f32.mrf.mxu0
  %v5773 = vadd.f32 0.0, %v5772
  %v5774 = vpop.f32.mrf.mxu0
  %v5775 = vpop.f32.mrf.mxu0
  %v5776 = vadd.f32 0.0, %v5775
  %v5777 = vpop.f32.mrf.mxu0
  %5778 = vmatprep.mubr.bf16.mxu0 0
  %5779 = vmatmul.mubr.bf16.gmra.mxu0 %v5694
  %v5780 = vpop.f32.mrf.mxu0
  %v5781 = vadd.f32 0.0, %v5780
  %v5782 = vpop.f32.mrf.mxu0
  %v5783 = vpop.f32.mrf.mxu0
  %v5784 = vadd.f32 0.0, %v5783
  %v5785 = vpop.f32.mrf.mxu0
  %5786 = vmatprep.mubr.bf16.mxu0 0
  %5787 = vmatmul.mubr.bf16.gmra.mxu0 %v5697
  %v5788 = vpop.f32.mrf.mxu0
  %v5789 = vadd.f32 0.0, %v5788
  %v5790 = vpop.f32.mrf.mxu0
  %v5791 = vpop.f32.mrf.mxu0
  %v5792 = vadd.f32 0.0, %v5791
  %v5793 = vpop.f32.mrf.mxu0
  %5794 = vmatprep.mubr.bf16.mxu0 0
  %5795 = vmatmul.mubr.bf16.gmra.mxu0 %v5700
  %v5796 = vpop.f32.mrf.mxu0
  %v5797 = vadd.f32 0.0, %v5796
  %v5798 = vpop.f32.mrf.mxu0
  %v5799 = vpop.f32.mrf.mxu0
  %v5800 = vadd.f32 0.0, %v5799
  %v5801 = vpop.f32.mrf.mxu0
  %5802 = vmatprep.mubr.bf16.mxu0 0
  %5803 = vmatmul.mubr.bf16.gmra.mxu0 %v5703
  %v5804 = vpop.f32.mrf.mxu0
  %v5805 = vadd.f32 0.0, %v5804
  %v5806 = vpop.f32.mrf.mxu0
  %v5807 = vpop.f32.mrf.mxu0
  %v5808 = vadd.f32 0.0, %v5807
  %v5809 = vpop.f32.mrf.mxu0
  %5810 = vmatprep.mubr.bf16.mxu0 0
  %5811 = vmatmul.mubr.bf16.gmra.mxu0 %v5706
  %v5812 = vpop.f32.mrf.mxu0
  %v5813 = vadd.f32 0.0, %v5812
  %v5814 = vpop.f32.mrf.mxu0
  %v5815 = vpop.f32.mrf.mxu0
  %v5816 = vadd.f32 0.0, %v5815
  %v5817 = vpop.f32.mrf.mxu0
  %5818 = vmatprep.mubr.bf16.mxu0 0
  %5819 = vmatmul.mubr.bf16.gmra.mxu0 %v5709
  %v5820 = vpop.f32.mrf.mxu0
  %v5821 = vadd.f32 0.0, %v5820
  %v5822 = vpop.f32.mrf.mxu0
  %v5823 = vpop.f32.mrf.mxu0
  %v5824 = vadd.f32 0.0, %v5823
  %v5825 = vpop.f32.mrf.mxu0
  %5826 = vmatprep.mubr.bf16.mxu0 0
  %5827 = vmatmul.mubr.bf16.gmra.mxu0 %v5712
  %v5828 = vpop.f32.mrf.mxu0
  %v5829 = vadd.f32 0.0, %v5828
  %v5830 = vpop.f32.mrf.mxu0
  %v5831 = vpop.f32.mrf.mxu0
  %v5832 = vpop.f32.mrf.mxu0
  %5833 = vdwg.mxu0
  %v5834 = vadd.f32 %v5552, %v5749
  %v5835 = vadd.f32 %v5555, %v5752
  %v5836 = vadd.f32 %v5560, %v5757
  %v5837 = vadd.f32 %v5563, %v5760
  %v5838 = vadd.f32 %v5568, %v5765
  %v5839 = vadd.f32 %v5571, %v5768
  %v5840 = vadd.f32 %v5576, %v5773
  %v5841 = vadd.f32 %v5579, %v5776
  %v5842 = vadd.f32 %v5584, %v5781
  %v5843 = vadd.f32 %v5587, %v5784
  %v5844 = vadd.f32 %v5592, %v5789
  %v5845 = vadd.f32 %v5595, %v5792
  %v5846 = vadd.f32 %v5600, %v5797
  %v5847 = vadd.f32 %v5603, %v5800
  %v5848 = vadd.f32 %v5608, %v5805
  %v5849 = vadd.f32 %v5611, %v5808
  %v5850 = vadd.f32 %v5616, %v5813
  %v5851 = vadd.f32 %v5619, %v5816
  %v5852 = vadd.f32 %v5624, %v5821
  %v5853 = vadd.f32 %v5627, %v5824
  %v5854 = vadd.f32 %v5632, %v5829
  %v5855 = vpack.c.bf16 %v5166, %v5161
  %v5856 = vpack.c.bf16 %v5174, %v5169
  %v5857 = vpack.c.bf16 %v5182, %v5177
  %v5858 = vpack.c.bf16 %v5190, %v5185
  %v5859 = vpack.c.bf16 %v5198, %v5193
  %v5860 = vpack.c.bf16 %v5206, %v5201
  %v5861 = vpack.c.bf16 %v5214, %v5209
  %v5862 = vpack.c.bf16 %v5222, %v5217
  %v5863 = vpack.c.bf16 %v5230, %v5225
  %v5864 = vpack.c.bf16 %v5238, %v5233
  %v5865 = vpack.c.bf16 %v5241, %v5241
  %s5866 = scalar_lea.vmem %s15, 96
  %v5867 = vld [vmem:[%s5866] sm:$0xf]
  %v5868 = vld [vmem:[%s5866 + $0x4] sm:$0xf]
  %v5869 = vld [vmem:[%s5866 + $0x8] sm:$0xf]
  %v5870 = vld [vmem:[%s5866 + $0xc] sm:$0xf]
  %v5871 = vld [vmem:[%s5866 + $0x10] sm:$0xf]
  %v5872 = vld [vmem:[%s5866 + $0x14] sm:$0xf]
  %v5873 = vld [vmem:[%s5866 + $0x18] sm:$0xf]
  %v5874 = vld [vmem:[%s5866 + $0x1c] sm:$0xf]
  %v5883 = vunpack.c.l.b16 %v5867
  %v5884 = vunpack.c.l.b16 %v5868
  %v5885 = vunpack.c.l.b16 %v5869
  %v5886 = vunpack.c.l.b16 %v5870
  %v5887 = vunpack.c.l.b16 %v5871
  %v5888 = vunpack.c.l.b16 %v5872
  %v5889 = vunpack.c.l.b16 %v5873
  %v5890 = vunpack.c.l.b16 %v5874
  %v5891 = vpack.c.b16 %v5884, %v5883
  %v5892 = vpack.c.b16 %v5886, %v5885
  %v5893 = vpack.c.b16 %v5888, %v5887
  %v5894 = vpack.c.b16 %v5890, %v5889
  %v5900 = vsel %vm883, %v5855, 0
  %v5903 = vsel %vm883, %v5856, 0
  %v5906 = vsel %vm883, %v5857, 0
  %v5909 = vsel %vm883, %v5858, 0
  %v5912 = vsel %vm883, %v5859, 0
  %v5915 = vsel %vm883, %v5860, 0
  %v5918 = vsel %vm883, %v5861, 0
  %v5921 = vsel %vm883, %v5862, 0
  %v5924 = vsel %vm883, %v5863, 0
  %v5927 = vsel %vm883, %v5864, 0
  %v5930 = vsel %vm883, %v5865, 0
  %5932 = vmatprep.subr.bf16.mxu0 0
  %5933 = vmatpush1.bf16.msra.mxu0 0
  %5934 = vmatprep.subr.bf16.mxu0 0
  %5935 = vmatpush1.bf16.msra.mxu0 0
  %5936 = vmatprep.subr.bf16.mxu0 0
  %5937 = vmatpush1.bf16.msra.mxu0 0
  %5938 = vmatprep.subr.bf16.mxu0 0
  %5939 = vmatpush1.bf16.msra.mxu0 0
  %5940 = vmatprep.subr.bf16.mxu0 0
  %5941 = vmatpush1.bf16.msra.mxu0 %v5894
  %5942 = vmatprep.subr.bf16.mxu0 0
  %5943 = vmatpush1.bf16.msra.mxu0 %v5893
  %5944 = vmatprep.subr.bf16.mxu0 0
  %5945 = vmatpush1.bf16.msra.mxu0 %v5892
  %5946 = vmatprep.subr.bf16.mxu0 0
  %5947 = vmatpush1.bf16.msra.mxu0 %v5891
  %5948 = vmatprep.subr.bf16.mxu0 0
  %5949 = vmatpush2.bf16.msra.mxu0 0
  %5950 = vmatprep.subr.bf16.mxu0 0
  %5951 = vmatpush2.bf16.msra.mxu0 0
  %5952 = vmatprep.subr.bf16.mxu0 0
  %5953 = vmatpush2.bf16.msra.mxu0 0
  %5954 = vmatprep.subr.bf16.mxu0 0
  %5955 = vmatpush2.bf16.msra.mxu0 0
  %5956 = vmatprep.subr.bf16.mxu0 0
  %5957 = vmatpush2.bf16.msra.mxu0 0
  %5958 = vmatprep.subr.bf16.mxu0 0
  %5959 = vmatpush2.bf16.msra.mxu0 0
  %5960 = vmatprep.subr.bf16.mxu0 0
  %5961 = vmatpush2.bf16.msra.mxu0 0
  %5962 = vmatprep.subr.bf16.mxu0 0
  %5963 = vmatpush2.bf16.msra.mxu0 0
  %5964 = vmatprep.mubr.bf16.mxu0 0
  %5965 = vmatmul.mubr.bf16.gmra.mxu0 %v5900
  %v5966 = vpop.f32.mrf.mxu0
  %v5967 = vadd.f32 0.0, %v5966
  %v5968 = vpop.f32.mrf.mxu0
  %v5969 = vpop.f32.mrf.mxu0
  %v5970 = vadd.f32 0.0, %v5969
  %v5971 = vpop.f32.mrf.mxu0
  %5972 = vmatprep.mubr.bf16.mxu0 0
  %5973 = vmatmul.mubr.bf16.gmra.mxu0 %v5903
  %v5974 = vpop.f32.mrf.mxu0
  %v5975 = vadd.f32 0.0, %v5974
  %v5976 = vpop.f32.mrf.mxu0
  %v5977 = vpop.f32.mrf.mxu0
  %v5978 = vadd.f32 0.0, %v5977
  %v5979 = vpop.f32.mrf.mxu0
  %5980 = vmatprep.mubr.bf16.mxu0 0
  %5981 = vmatmul.mubr.bf16.gmra.mxu0 %v5906
  %v5982 = vpop.f32.mrf.mxu0
  %v5983 = vadd.f32 0.0, %v5982
  %v5984 = vpop.f32.mrf.mxu0
  %v5985 = vpop.f32.mrf.mxu0
  %v5986 = vadd.f32 0.0, %v5985
  %v5987 = vpop.f32.mrf.mxu0
  %5988 = vmatprep.mubr.bf16.mxu0 0
  %5989 = vmatmul.mubr.bf16.gmra.mxu0 %v5909
  %v5990 = vpop.f32.mrf.mxu0
  %v5991 = vadd.f32 0.0, %v5990
  %v5992 = vpop.f32.mrf.mxu0
  %v5993 = vpop.f32.mrf.mxu0
  %v5994 = vadd.f32 0.0, %v5993
  %v5995 = vpop.f32.mrf.mxu0
  %5996 = vmatprep.mubr.bf16.mxu0 0
  %5997 = vmatmul.mubr.bf16.gmra.mxu0 %v5912
  %v5998 = vpop.f32.mrf.mxu0
  %v5999 = vadd.f32 0.0, %v5998
  %v6000 = vpop.f32.mrf.mxu0
  %v6001 = vpop.f32.mrf.mxu0
  %v6002 = vadd.f32 0.0, %v6001
  %v6003 = vpop.f32.mrf.mxu0
  %6004 = vmatprep.mubr.bf16.mxu0 0
  %6005 = vmatmul.mubr.bf16.gmra.mxu0 %v5915
  %v6006 = vpop.f32.mrf.mxu0
  %v6007 = vadd.f32 0.0, %v6006
  %v6008 = vpop.f32.mrf.mxu0
  %v6009 = vpop.f32.mrf.mxu0
  %v6010 = vadd.f32 0.0, %v6009
  %v6011 = vpop.f32.mrf.mxu0
  %6012 = vmatprep.mubr.bf16.mxu0 0
  %6013 = vmatmul.mubr.bf16.gmra.mxu0 %v5918
  %v6014 = vpop.f32.mrf.mxu0
  %v6015 = vadd.f32 0.0, %v6014
  %v6016 = vpop.f32.mrf.mxu0
  %v6017 = vpop.f32.mrf.mxu0
  %v6018 = vadd.f32 0.0, %v6017
  %v6019 = vpop.f32.mrf.mxu0
  %6020 = vmatprep.mubr.bf16.mxu0 0
  %6021 = vmatmul.mubr.bf16.gmra.mxu0 %v5921
  %v6022 = vpop.f32.mrf.mxu0
  %v6023 = vadd.f32 0.0, %v6022
  %v6024 = vpop.f32.mrf.mxu0
  %v6025 = vpop.f32.mrf.mxu0
  %v6026 = vadd.f32 0.0, %v6025
  %v6027 = vpop.f32.mrf.mxu0
  %6028 = vmatprep.mubr.bf16.mxu0 0
  %6029 = vmatmul.mubr.bf16.gmra.mxu0 %v5924
  %v6030 = vpop.f32.mrf.mxu0
  %v6031 = vadd.f32 0.0, %v6030
  %v6032 = vpop.f32.mrf.mxu0
  %v6033 = vpop.f32.mrf.mxu0
  %v6034 = vadd.f32 0.0, %v6033
  %v6035 = vpop.f32.mrf.mxu0
  %6036 = vmatprep.mubr.bf16.mxu0 0
  %6037 = vmatmul.mubr.bf16.gmra.mxu0 %v5927
  %v6038 = vpop.f32.mrf.mxu0
  %v6039 = vadd.f32 0.0, %v6038
  %v6040 = vpop.f32.mrf.mxu0
  %v6041 = vpop.f32.mrf.mxu0
  %v6042 = vadd.f32 0.0, %v6041
  %v6043 = vpop.f32.mrf.mxu0
  %6044 = vmatprep.mubr.bf16.mxu0 0
  %6045 = vmatmul.mubr.bf16.gmra.mxu0 %v5930
  %v6046 = vpop.f32.mrf.mxu0
  %v6047 = vadd.f32 0.0, %v6046
  %v6048 = vpop.f32.mrf.mxu0
  %v6049 = vpop.f32.mrf.mxu0
  %v6050 = vpop.f32.mrf.mxu0
  %6051 = vdwg.mxu0
  %v6052 = vadd.f32 %v5834, %v5967
  %v6053 = vadd.f32 %v5835, %v5970
  %v6054 = vadd.f32 %v5836, %v5975
  %v6055 = vadd.f32 %v5837, %v5978
  %v6056 = vadd.f32 %v5838, %v5983
  %v6057 = vadd.f32 %v5839, %v5986
  %v6058 = vadd.f32 %v5840, %v5991
  %v6059 = vadd.f32 %v5841, %v5994
  %v6060 = vadd.f32 %v5842, %v5999
  %v6061 = vadd.f32 %v5843, %v6002
  %v6062 = vadd.f32 %v5844, %v6007
  %v6063 = vadd.f32 %v5845, %v6010
  %v6064 = vadd.f32 %v5846, %v6015
  %v6065 = vadd.f32 %v5847, %v6018
  %v6066 = vadd.f32 %v5848, %v6023
  %v6067 = vadd.f32 %v5849, %v6026
  %v6068 = vadd.f32 %v5850, %v6031
  %v6069 = vadd.f32 %v5851, %v6034
  %v6070 = vadd.f32 %v5852, %v6039
  %v6071 = vadd.f32 %v5853, %v6042
  %v6072 = vadd.f32 %v5854, %v6047
  %v6073 = vld [vmem:[%s16] sm:$0xff]
  %v6074 = vld [vmem:[%s16 + $0x8] sm:$0xff]
  %v6075 = vld [vmem:[%s16 + $0x10] sm:$0xff]
  %v6076 = vld [vmem:[%s16 + $0x18] sm:$0xff]
  %v6077 = vld [vmem:[%s16 + $0x20] sm:$0xff]
  %v6078 = vld [vmem:[%s16 + $0x28] sm:$0xff]
  %v6079 = vld [vmem:[%s16 + $0x30] sm:$0xff]
  %v6080 = vld [vmem:[%s16 + $0x38] sm:$0xff]
  %v6081 = vld [vmem:[%s16 + $0x40] sm:$0xff]
  %v6082 = vld [vmem:[%s16 + $0x48] sm:$0xff]
  %v6083 = vld [vmem:[%s16 + $0x50] sm:$0xff]
  %v6084 = vld [vmem:[%s16 + $0x58] sm:$0xff]
  %v6085 = vld [vmem:[%s16 + $0x60] sm:$0xff]
  %v6086 = vld [vmem:[%s16 + $0x68] sm:$0xff]
  %v6087 = vld [vmem:[%s16 + $0x70] sm:$0xff]
  %v6088 = vld [vmem:[%s16 + $0x78] sm:$0xff]
  %v6089 = vld [vmem:[%s16 + $0x80] sm:$0xff]
  %v6090 = vld [vmem:[%s16 + $0x88] sm:$0xff]
  %v6091 = vld [vmem:[%s16 + $0x90] sm:$0xff]
  %v6092 = vld [vmem:[%s16 + $0x98] sm:$0xff]
  %v6093 = vld [vmem:[%s16 + $0xa0] sm:$0xff]
  %v6094 = vld [vmem:[%s16 + $0xa8] sm:$0xff]
  %v6095 = vld [vmem:[%s16 + $0xb0] sm:$0xff]
  %v6096 = vld [vmem:[%s16 + $0xb8] sm:$0xff]
  %v6097 = vld [vmem:[%s16 + $0xc0] sm:$0xff]
  %v6098 = vld [vmem:[%s16 + $0xc8] sm:$0xff]
  %v6099 = vld [vmem:[%s16 + $0xd0] sm:$0xff]
  %v6100 = vld [vmem:[%s16 + $0xd8] sm:$0xff]
  %v6101 = vld [vmem:[%s16 + $0xe0] sm:$0xff]
  %v6102 = vld [vmem:[%s16 + $0xe8] sm:$0xff]
  %v6103 = vld [vmem:[%s16 + $0xf0] sm:$0xff]
  %v6104 = vld [vmem:[%s16 + $0xf8] sm:$0xff]
  %v6105 = vld [vmem:[%s16 + $0x100] sm:$0xff]
  %v6106 = vld [vmem:[%s16 + $0x108] sm:$0xff]
  %v6107 = vld [vmem:[%s16 + $0x110] sm:$0xff]
  %v6108 = vld [vmem:[%s16 + $0x118] sm:$0xff]
  %v6109 = vld [vmem:[%s16 + $0x120] sm:$0xff]
  %v6110 = vld [vmem:[%s16 + $0x128] sm:$0xff]
  %v6111 = vld [vmem:[%s16 + $0x130] sm:$0xff]
  %v6112 = vld [vmem:[%s16 + $0x138] sm:$0xff]
  %v6113 = vld [vmem:[%s16 + $0x140] sm:$0xff]
  %v6114 = vld [vmem:[%s16 + $0x148] sm:$0xff]
  %v6115 = vld [vmem:[%s16 + $0x150] sm:$0xff]
  %v6116 = vld [vmem:[%s16 + $0x158] sm:$0xff]
  %v6117 = vld [vmem:[%s16 + $0x160] sm:$0xff]
  %v6118 = vld [vmem:[%s16 + $0x168] sm:$0xff]
  %v6119 = vld [vmem:[%s16 + $0x170] sm:$0xff]
  %v6120 = vld [vmem:[%s16 + $0x178] sm:$0xff]
  %v6121 = vld [vmem:[%s16 + $0x180] sm:$0xff]
  %v6122 = vld [vmem:[%s16 + $0x188] sm:$0xff]
  %v6123 = vld [vmem:[%s16 + $0x190] sm:$0xff]
  %v6124 = vld [vmem:[%s16 + $0x198] sm:$0xff]
  %v6125 = vld [vmem:[%s16 + $0x1a0] sm:$0xff]
  %v6126 = vld [vmem:[%s16 + $0x1a8] sm:$0xff]
  %v6127 = vld [vmem:[%s16 + $0x1b0] sm:$0xff]
  %v6128 = vld [vmem:[%s16 + $0x1b8] sm:$0xff]
  %v6129 = vld [vmem:[%s16 + $0x1c0] sm:$0xff]
  %v6130 = vld [vmem:[%s16 + $0x1c8] sm:$0xff]
  %v6131 = vld [vmem:[%s16 + $0x1d0] sm:$0xff]
  %v6132 = vld [vmem:[%s16 + $0x1d8] sm:$0xff]
  %v6133 = vld [vmem:[%s16 + $0x1e0] sm:$0xff]
  %v6134 = vld [vmem:[%s16 + $0x1e8] sm:$0xff]
  %v6135 = vld [vmem:[%s16 + $0x1f0] sm:$0xff]
  %v6136 = vld [vmem:[%s16 + $0x1f8] sm:$0xff]
  %v6137 = vld [vmem:[%s16 + $0x200] sm:$0xff]
  %v6138 = vld [vmem:[%s16 + $0x208] sm:$0xff]
  %v6139 = vld [vmem:[%s16 + $0x210] sm:$0xff]
  %v6140 = vld [vmem:[%s16 + $0x218] sm:$0xff]
  %v6141 = vld [vmem:[%s16 + $0x220] sm:$0xff]
  %v6142 = vld [vmem:[%s16 + $0x228] sm:$0xff]
  %v6143 = vld [vmem:[%s16 + $0x230] sm:$0xff]
  %v6144 = vld [vmem:[%s16 + $0x238] sm:$0xff]
  %v6145 = vld [vmem:[%s16 + $0x240] sm:$0xff]
  %v6146 = vld [vmem:[%s16 + $0x248] sm:$0xff]
  %v6147 = vld [vmem:[%s16 + $0x250] sm:$0xff]
  %v6148 = vld [vmem:[%s16 + $0x258] sm:$0xff]
  %v6149 = vld [vmem:[%s16 + $0x260] sm:$0xff]
  %v6150 = vld [vmem:[%s16 + $0x268] sm:$0xff]
  %v6151 = vld [vmem:[%s16 + $0x270] sm:$0xff]
  %v6152 = vld [vmem:[%s16 + $0x278] sm:$0xff]
  %v6153 = vld [vmem:[%s16 + $0x280] sm:$0xff]
  %v6154 = vld [vmem:[%s16 + $0x288] sm:$0xff]
  %v6155 = vld [vmem:[%s16 + $0x290] sm:$0xff]
  %v6156 = vld [vmem:[%s16 + $0x298] sm:$0xff]
  %v6157 = vld [vmem:[%s16 + $0x2a0] sm:$0xff]
  %v6158 = vld [vmem:[%s16 + $0x2a8] sm:$0xff]
  %v6159 = vld [vmem:[%s16 + $0x2b0] sm:$0xff]
  %v6160 = vld [vmem:[%s16 + $0x2b8] sm:$0xff]
  %v6161 = vld [vmem:[%s16 + $0x2c0] sm:$0xff]
  %v6162 = vld [vmem:[%s16 + $0x2c8] sm:$0xff]
  %v6163 = vld [vmem:[%s16 + $0x2d0] sm:$0xff]
  %v6164 = vld [vmem:[%s16 + $0x2d8] sm:$0xff]
  %v6165 = vld [vmem:[%s16 + $0x2e0] sm:$0xff]
  %v6166 = vld [vmem:[%s16 + $0x2e8] sm:$0xff]
  %v6167 = vld [vmem:[%s16 + $0x2f0] sm:$0xff]
  %v6168 = vld [vmem:[%s16 + $0x2f8] sm:$0xff]
  %v6169 = vld [vmem:[%s16 + $0x300] sm:$0xff]
  %v6170 = vld [vmem:[%s16 + $0x308] sm:$0xff]
  %v6171 = vld [vmem:[%s16 + $0x310] sm:$0xff]
  %v6172 = vld [vmem:[%s16 + $0x318] sm:$0xff]
  %v6173 = vld [vmem:[%s16 + $0x320] sm:$0xff]
  %v6174 = vld [vmem:[%s16 + $0x328] sm:$0xff]
  %v6175 = vld [vmem:[%s16 + $0x330] sm:$0xff]
  %v6176 = vld [vmem:[%s16 + $0x338] sm:$0xff]
  %v6177 = vld [vmem:[%s16 + $0x340] sm:$0xff]
  %v6178 = vld [vmem:[%s16 + $0x348] sm:$0xff]
  %v6179 = vld [vmem:[%s16 + $0x350] sm:$0xff]
  %v6180 = vld [vmem:[%s16 + $0x358] sm:$0xff]
  %v6181 = vld [vmem:[%s16 + $0x360] sm:$0xff]
  %v6182 = vld [vmem:[%s16 + $0x368] sm:$0xff]
  %v6183 = vld [vmem:[%s16 + $0x370] sm:$0xff]
  %v6184 = vld [vmem:[%s16 + $0x378] sm:$0xff]
  %v6185 = vld [vmem:[%s16 + $0x380] sm:$0xff]
  %v6186 = vld [vmem:[%s16 + $0x388] sm:$0xff]
  %v6187 = vld [vmem:[%s16 + $0x390] sm:$0xff]
  %v6188 = vld [vmem:[%s16 + $0x398] sm:$0xff]
  %v6189 = vld [vmem:[%s16 + $0x3a0] sm:$0xff]
  %v6190 = vld [vmem:[%s16 + $0x3a8] sm:$0xff]
  %v6191 = vld [vmem:[%s16 + $0x3b0] sm:$0xff]
  %v6192 = vld [vmem:[%s16 + $0x3b8] sm:$0xff]
  %v6193 = vld [vmem:[%s16 + $0x3c0] sm:$0xff]
  %v6194 = vld [vmem:[%s16 + $0x3c8] sm:$0xff]
  %v6195 = vld [vmem:[%s16 + $0x3d0] sm:$0xff]
  %v6196 = vld [vmem:[%s16 + $0x3d8] sm:$0xff]
  %v6197 = vld [vmem:[%s16 + $0x3e0] sm:$0xff]
  %v6198 = vld [vmem:[%s16 + $0x3e8] sm:$0xff]
  %v6199 = vld [vmem:[%s16 + $0x3f0] sm:$0xff]
  %v6200 = vld [vmem:[%s16 + $0x3f8] sm:$0xff]
  %s6201 = scalar_lea.vmem %s16, 1024
  %v6202 = vld [vmem:[%s6201] sm:$0xff]
  %v6203 = vld [vmem:[%s6201 + $0x8] sm:$0xff]
  %v6204 = vld [vmem:[%s6201 + $0x10] sm:$0xff]
  %v6205 = vld [vmem:[%s6201 + $0x18] sm:$0xff]
  %v6206 = vld [vmem:[%s6201 + $0x20] sm:$0xff]
  %v6207 = vld [vmem:[%s6201 + $0x28] sm:$0xff]
  %v6208 = vld [vmem:[%s6201 + $0x30] sm:$0xff]
  %v6209 = vld [vmem:[%s6201 + $0x38] sm:$0xff]
  %v6210 = vld [vmem:[%s6201 + $0x40] sm:$0xff]
  %v6211 = vld [vmem:[%s6201 + $0x48] sm:$0xff]
  %v6212 = vld [vmem:[%s6201 + $0x50] sm:$0xff]
  %v6213 = vld [vmem:[%s6201 + $0x58] sm:$0xff]
  %v6214 = vld [vmem:[%s6201 + $0x60] sm:$0xff]
  %v6215 = vld [vmem:[%s6201 + $0x68] sm:$0xff]
  %v6216 = vld [vmem:[%s6201 + $0x70] sm:$0xff]
  %v6217 = vld [vmem:[%s6201 + $0x78] sm:$0xff]
  %v6218 = vld [vmem:[%s6201 + $0x80] sm:$0xff]
  %v6219 = vld [vmem:[%s6201 + $0x88] sm:$0xff]
  %v6220 = vld [vmem:[%s6201 + $0x90] sm:$0xff]
  %v6221 = vld [vmem:[%s6201 + $0x98] sm:$0xff]
  %v6222 = vld [vmem:[%s6201 + $0xa0] sm:$0xff]
  %v6223 = vld [vmem:[%s6201 + $0xa8] sm:$0xff]
  %v6224 = vld [vmem:[%s6201 + $0xb0] sm:$0xff]
  %v6225 = vld [vmem:[%s6201 + $0xb8] sm:$0xff]
  %v6226 = vld [vmem:[%s6201 + $0xc0] sm:$0xff]
  %v6227 = vld [vmem:[%s6201 + $0xc8] sm:$0xff]
  %v6228 = vld [vmem:[%s6201 + $0xd0] sm:$0xff]
  %v6229 = vld [vmem:[%s6201 + $0xd8] sm:$0xff]
  %v6230 = vld [vmem:[%s6201 + $0xe0] sm:$0xff]
  %v6231 = vld [vmem:[%s6201 + $0xe8] sm:$0xff]
  %v6232 = vld [vmem:[%s6201 + $0xf0] sm:$0xff]
  %v6233 = vld [vmem:[%s6201 + $0xf8] sm:$0xff]
  %v6234 = vld [vmem:[%s6201 + $0x100] sm:$0xff]
  %v6235 = vld [vmem:[%s6201 + $0x108] sm:$0xff]
  %v6236 = vld [vmem:[%s6201 + $0x110] sm:$0xff]
  %v6237 = vld [vmem:[%s6201 + $0x118] sm:$0xff]
  %v6238 = vld [vmem:[%s6201 + $0x120] sm:$0xff]
  %v6239 = vld [vmem:[%s6201 + $0x128] sm:$0xff]
  %v6240 = vld [vmem:[%s6201 + $0x130] sm:$0xff]
  %v6241 = vld [vmem:[%s6201 + $0x138] sm:$0xff]
  %v6242 = vld [vmem:[%s6201 + $0x140] sm:$0xff]
  %v6243 = vld [vmem:[%s6201 + $0x148] sm:$0xff]
  %v6244 = vld [vmem:[%s6201 + $0x150] sm:$0xff]
  %v6245 = vld [vmem:[%s6201 + $0x158] sm:$0xff]
  %v6246 = vld [vmem:[%s6201 + $0x160] sm:$0xff]
  %v6247 = vld [vmem:[%s6201 + $0x168] sm:$0xff]
  %v6248 = vld [vmem:[%s6201 + $0x170] sm:$0xff]
  %v6249 = vld [vmem:[%s6201 + $0x178] sm:$0xff]
  %v6250 = vld [vmem:[%s6201 + $0x180] sm:$0xff]
  %v6251 = vld [vmem:[%s6201 + $0x188] sm:$0xff]
  %v6252 = vld [vmem:[%s6201 + $0x190] sm:$0xff]
  %v6253 = vld [vmem:[%s6201 + $0x198] sm:$0xff]
  %v6254 = vld [vmem:[%s6201 + $0x1a0] sm:$0xff]
  %v6255 = vld [vmem:[%s6201 + $0x1a8] sm:$0xff]
  %v6256 = vld [vmem:[%s6201 + $0x1b0] sm:$0xff]
  %v6257 = vld [vmem:[%s6201 + $0x1b8] sm:$0xff]
  %v6258 = vld [vmem:[%s6201 + $0x1c0] sm:$0xff]
  %v6259 = vld [vmem:[%s6201 + $0x1c8] sm:$0xff]
  %v6260 = vld [vmem:[%s6201 + $0x1d0] sm:$0xff]
  %v6261 = vld [vmem:[%s6201 + $0x1d8] sm:$0xff]
  %v6262 = vld [vmem:[%s6201 + $0x1e0] sm:$0xff]
  %v6263 = vld [vmem:[%s6201 + $0x1e8] sm:$0xff]
  %v6264 = vld [vmem:[%s6201 + $0x1f0] sm:$0xff]
  %v6265 = vld [vmem:[%s6201 + $0x1f8] sm:$0xff]
  %v6266 = vld [vmem:[%s6201 + $0x200] sm:$0xff]
  %v6267 = vld [vmem:[%s6201 + $0x208] sm:$0xff]
  %v6268 = vld [vmem:[%s6201 + $0x210] sm:$0xff]
  %v6269 = vld [vmem:[%s6201 + $0x218] sm:$0xff]
  %v6270 = vld [vmem:[%s6201 + $0x220] sm:$0xff]
  %v6271 = vld [vmem:[%s6201 + $0x228] sm:$0xff]
  %v6272 = vld [vmem:[%s6201 + $0x230] sm:$0xff]
  %v6273 = vld [vmem:[%s6201 + $0x238] sm:$0xff]
  %v6274 = vld [vmem:[%s6201 + $0x240] sm:$0xff]
  %v6275 = vld [vmem:[%s6201 + $0x248] sm:$0xff]
  %v6276 = vld [vmem:[%s6201 + $0x250] sm:$0xff]
  %v6277 = vld [vmem:[%s6201 + $0x258] sm:$0xff]
  %v6278 = vld [vmem:[%s6201 + $0x260] sm:$0xff]
  %v6279 = vld [vmem:[%s6201 + $0x268] sm:$0xff]
  %v6280 = vld [vmem:[%s6201 + $0x270] sm:$0xff]
  %v6281 = vld [vmem:[%s6201 + $0x278] sm:$0xff]
  %v6282 = vld [vmem:[%s6201 + $0x280] sm:$0xff]
  %v6283 = vld [vmem:[%s6201 + $0x288] sm:$0xff]
  %v6284 = vld [vmem:[%s6201 + $0x290] sm:$0xff]
  %v6285 = vld [vmem:[%s6201 + $0x298] sm:$0xff]
  %v6286 = vld [vmem:[%s6201 + $0x2a0] sm:$0xff]
  %v6287 = vld [vmem:[%s6201 + $0x2a8] sm:$0xff]
  %v6288 = vld [vmem:[%s6201 + $0x2b0] sm:$0xff]
  %v6289 = vld [vmem:[%s6201 + $0x2b8] sm:$0xff]
  %v6290 = vld [vmem:[%s6201 + $0x2c0] sm:$0xff]
  %v6291 = vld [vmem:[%s6201 + $0x2c8] sm:$0xff]
  %v6292 = vld [vmem:[%s6201 + $0x2d0] sm:$0xff]
  %v6293 = vld [vmem:[%s6201 + $0x2d8] sm:$0xff]
  %v6294 = vld [vmem:[%s6201 + $0x2e0] sm:$0xff]
  %v6295 = vld [vmem:[%s6201 + $0x2e8] sm:$0xff]
  %v6296 = vld [vmem:[%s6201 + $0x2f0] sm:$0xff]
  %v6297 = vld [vmem:[%s6201 + $0x2f8] sm:$0xff]
  %v6298 = vld [vmem:[%s6201 + $0x300] sm:$0xff]
  %v6299 = vld [vmem:[%s6201 + $0x308] sm:$0xff]
  %v6300 = vld [vmem:[%s6201 + $0x310] sm:$0xff]
  %v6301 = vld [vmem:[%s6201 + $0x318] sm:$0xff]
  %v6302 = vld [vmem:[%s6201 + $0x320] sm:$0xff]
  %v6303 = vld [vmem:[%s6201 + $0x328] sm:$0xff]
  %v6304 = vld [vmem:[%s6201 + $0x330] sm:$0xff]
  %v6305 = vld [vmem:[%s6201 + $0x338] sm:$0xff]
  %v6306 = vld [vmem:[%s6201 + $0x340] sm:$0xff]
  %v6307 = vld [vmem:[%s6201 + $0x348] sm:$0xff]
  %v6308 = vld [vmem:[%s6201 + $0x350] sm:$0xff]
  %v6309 = vld [vmem:[%s6201 + $0x358] sm:$0xff]
  %v6310 = vld [vmem:[%s6201 + $0x360] sm:$0xff]
  %v6311 = vld [vmem:[%s6201 + $0x368] sm:$0xff]
  %v6312 = vld [vmem:[%s6201 + $0x370] sm:$0xff]
  %v6313 = vld [vmem:[%s6201 + $0x378] sm:$0xff]
  %v6314 = vld [vmem:[%s6201 + $0x380] sm:$0xff]
  %v6315 = vld [vmem:[%s6201 + $0x388] sm:$0xff]
  %v6316 = vld [vmem:[%s6201 + $0x390] sm:$0xff]
  %v6317 = vld [vmem:[%s6201 + $0x398] sm:$0xff]
  %v6318 = vld [vmem:[%s6201 + $0x3a0] sm:$0xff]
  %v6319 = vld [vmem:[%s6201 + $0x3a8] sm:$0xff]
  %v6320 = vld [vmem:[%s6201 + $0x3b0] sm:$0xff]
  %v6321 = vld [vmem:[%s6201 + $0x3b8] sm:$0xff]
  %v6322 = vld [vmem:[%s6201 + $0x3c0] sm:$0xff]
  %v6323 = vld [vmem:[%s6201 + $0x3c8] sm:$0xff]
  %v6324 = vld [vmem:[%s6201 + $0x3d0] sm:$0xff]
  %v6325 = vld [vmem:[%s6201 + $0x3d8] sm:$0xff]
  %v6326 = vld [vmem:[%s6201 + $0x3e0] sm:$0xff]
  %v6327 = vld [vmem:[%s6201 + $0x3e8] sm:$0xff]
  %v6328 = vld [vmem:[%s6201 + $0x3f0] sm:$0xff]
  %v6329 = vld [vmem:[%s6201 + $0x3f8] sm:$0xff]
  %6351 = vrot.lane.b32.xlu0 %v6052, 125
  %v6352 = vpop.permute.xlu0 %6351
  %6353 = vrot.lane.b32.xlu0 %v6053, 125
  %v6354 = vpop.permute.xlu0 %6353
  %6355 = vrot.lane.b32.xlu0 %v6054, 125
  %v6356 = vpop.permute.xlu0 %6355
  %6357 = vrot.lane.b32.xlu0 %v6055, 125
  %v6358 = vpop.permute.xlu0 %6357
  %6359 = vrot.lane.b32.xlu0 %v6056, 125
  %v6360 = vpop.permute.xlu0 %6359
  %6361 = vrot.lane.b32.xlu0 %v6057, 125
  %v6362 = vpop.permute.xlu0 %6361
  %6363 = vrot.lane.b32.xlu0 %v6058, 125
  %v6364 = vpop.permute.xlu0 %6363
  %6365 = vrot.lane.b32.xlu0 %v6059, 125
  %v6366 = vpop.permute.xlu0 %6365
  %6367 = vrot.lane.b32.xlu0 %v6060, 125
  %v6368 = vpop.permute.xlu0 %6367
  %6369 = vrot.lane.b32.xlu0 %v6061, 125
  %v6370 = vpop.permute.xlu0 %6369
  %6371 = vrot.lane.b32.xlu0 %v6062, 125
  %v6372 = vpop.permute.xlu0 %6371
  %6373 = vrot.lane.b32.xlu0 %v6063, 125
  %v6374 = vpop.permute.xlu0 %6373
  %6375 = vrot.lane.b32.xlu0 %v6064, 125
  %v6376 = vpop.permute.xlu0 %6375
  %6377 = vrot.lane.b32.xlu0 %v6065, 125
  %v6378 = vpop.permute.xlu0 %6377
  %6379 = vrot.lane.b32.xlu0 %v6066, 125
  %v6380 = vpop.permute.xlu0 %6379
  %6381 = vrot.lane.b32.xlu0 %v6067, 125
  %v6382 = vpop.permute.xlu0 %6381
  %6383 = vrot.lane.b32.xlu0 %v6068, 125
  %v6384 = vpop.permute.xlu0 %6383
  %6385 = vrot.lane.b32.xlu0 %v6069, 125
  %v6386 = vpop.permute.xlu0 %6385
  %6387 = vrot.lane.b32.xlu0 %v6070, 125
  %v6388 = vpop.permute.xlu0 %6387
  %6389 = vrot.lane.b32.xlu0 %v6071, 125
  %v6390 = vpop.permute.xlu0 %6389
  %6391 = vrot.lane.b32.xlu0 %v6072, 125
  %v6392 = vpop.permute.xlu0 %6391
  %vm6414 = vcmask 326656
  %v6416 = vsel %vm6414, %v6203, 0
  %v6419 = vsel %vm6414, %v6205, 0
  %v6422 = vsel %vm6414, %v6207, 0
  %v6425 = vsel %vm6414, %v6209, 0
  %v6428 = vsel %vm6414, %v6211, 0
  %v6431 = vsel %vm6414, %v6213, 0
  %v6434 = vsel %vm6414, %v6215, 0
  %v6437 = vsel %vm6414, %v6217, 0
  %v6440 = vsel %vm6414, %v6219, 0
  %v6443 = vsel %vm6414, %v6221, 0
  %v6446 = vsel %vm6414, %v6223, 0
  %v6449 = vsel %vm6414, %v6225, 0
  %v6452 = vsel %vm6414, %v6227, 0
  %v6455 = vsel %vm6414, %v6229, 0
  %v6458 = vsel %vm6414, %v6231, 0
  %v6461 = vsel %vm6414, %v6233, 0
  %v6464 = vsel %vm6414, %v6235, 0
  %v6467 = vsel %vm6414, %v6237, 0
  %v6470 = vsel %vm6414, %v6239, 0
  %v6473 = vsel %vm6414, %v6241, 0
  %v6476 = vsel %vm6414, %v6243, 0
  %v6479 = vsel %vm6414, %v6245, 0
  %v6482 = vsel %vm6414, %v6247, 0
  %v6485 = vsel %vm6414, %v6249, 0
  %v6488 = vsel %vm6414, %v6251, 0
  %v6491 = vsel %vm6414, %v6253, 0
  %v6494 = vsel %vm6414, %v6255, 0
  %v6497 = vsel %vm6414, %v6257, 0
  %v6500 = vsel %vm6414, %v6259, 0
  %v6503 = vsel %vm6414, %v6261, 0
  %v6506 = vsel %vm6414, %v6263, 0
  %v6509 = vsel %vm6414, %v6265, 0
  %v6512 = vsel %vm6414, %v6267, 0
  %v6515 = vsel %vm6414, %v6269, 0
  %v6518 = vsel %vm6414, %v6271, 0
  %v6521 = vsel %vm6414, %v6273, 0
  %v6524 = vsel %vm6414, %v6275, 0
  %v6527 = vsel %vm6414, %v6277, 0
  %v6530 = vsel %vm6414, %v6279, 0
  %v6533 = vsel %vm6414, %v6281, 0
  %v6536 = vsel %vm6414, %v6283, 0
  %v6539 = vsel %vm6414, %v6285, 0
  %v6542 = vsel %vm6414, %v6287, 0
  %v6545 = vsel %vm6414, %v6289, 0
  %v6548 = vsel %vm6414, %v6291, 0
  %v6551 = vsel %vm6414, %v6293, 0
  %v6554 = vsel %vm6414, %v6295, 0
  %v6557 = vsel %vm6414, %v6297, 0
  %v6560 = vsel %vm6414, %v6299, 0
  %v6563 = vsel %vm6414, %v6301, 0
  %v6566 = vsel %vm6414, %v6303, 0
  %v6569 = vsel %vm6414, %v6305, 0
  %v6572 = vsel %vm6414, %v6307, 0
  %v6575 = vsel %vm6414, %v6309, 0
  %v6578 = vsel %vm6414, %v6311, 0
  %v6581 = vsel %vm6414, %v6313, 0
  %v6584 = vsel %vm6414, %v6315, 0
  %v6587 = vsel %vm6414, %v6317, 0
  %v6590 = vsel %vm6414, %v6319, 0
  %v6593 = vsel %vm6414, %v6321, 0
  %v6596 = vsel %vm6414, %v6323, 0
  %v6599 = vsel %vm6414, %v6325, 0
  %v6602 = vsel %vm6414, %v6327, 0
  %v6605 = vsel %vm6414, %v6329, 0
  %6607 = vmatprep.subr.mxu0 0.0
  %6608 = vmatpush1.msra.mxu0 %v6382
  %6609 = vmatprep.subr.mxu0 0.0
  %6610 = vmatpush1.msra.mxu0 %v6380
  %6611 = vmatprep.subr.mxu0 0.0
  %6612 = vmatpush1.msra.mxu0 %v6378
  %6613 = vmatprep.subr.mxu0 0.0
  %6614 = vmatpush1.msra.mxu0 %v6376
  %6615 = vmatprep.subr.mxu0 0.0
  %6616 = vmatpush1.msra.mxu0 %v6374
  %6617 = vmatprep.subr.mxu0 0.0
  %6618 = vmatpush1.msra.mxu0 %v6372
  %6619 = vmatprep.subr.mxu0 0.0
  %6620 = vmatpush1.msra.mxu0 %v6370
  %6621 = vmatprep.subr.mxu0 0.0
  %6622 = vmatpush1.msra.mxu0 %v6368
  %6623 = vmatprep.subr.mxu0 0.0
  %6624 = vmatpush1.msra.mxu0 %v6366
  %6625 = vmatprep.subr.mxu0 0.0
  %6626 = vmatpush1.msra.mxu0 %v6364
  %6627 = vmatprep.subr.mxu0 0.0
  %6628 = vmatpush1.msra.mxu0 %v6362
  %6629 = vmatprep.subr.mxu0 0.0
  %6630 = vmatpush1.msra.mxu0 %v6360
  %6631 = vmatprep.subr.mxu0 0.0
  %6632 = vmatpush1.msra.mxu0 %v6358
  %6633 = vmatprep.subr.mxu0 0.0
  %6634 = vmatpush1.msra.mxu0 %v6356
  %6635 = vmatprep.subr.mxu0 0.0
  %6636 = vmatpush1.msra.mxu0 %v6354
  %6637 = vmatprep.subr.mxu0 0.0
  %6638 = vmatpush1.msra.mxu0 %v6352
  %6639 = vmatprep.subr.mxu0 0.0
  %6640 = vmatpush2.msra.mxu0 0.0
  %6641 = vmatprep.subr.mxu0 0.0
  %6642 = vmatpush2.msra.mxu0 0.0
  %6643 = vmatprep.subr.mxu0 0.0
  %6644 = vmatpush2.msra.mxu0 0.0
  %6645 = vmatprep.subr.mxu0 0.0
  %6646 = vmatpush2.msra.mxu0 0.0
  %6647 = vmatprep.subr.mxu0 0.0
  %6648 = vmatpush2.msra.mxu0 0.0
  %6649 = vmatprep.subr.mxu0 0.0
  %6650 = vmatpush2.msra.mxu0 0.0
  %6651 = vmatprep.subr.mxu0 0.0
  %6652 = vmatpush2.msra.mxu0 0.0
  %6653 = vmatprep.subr.mxu0 0.0
  %6654 = vmatpush2.msra.mxu0 0.0
  %6655 = vmatprep.subr.mxu0 0.0
  %6656 = vmatpush2.msra.mxu0 0.0
  %6657 = vmatprep.subr.mxu0 0.0
  %6658 = vmatpush2.msra.mxu0 0.0
  %6659 = vmatprep.subr.mxu0 0.0
  %6660 = vmatpush2.msra.mxu0 0.0
  %6661 = vmatprep.subr.mxu0 0.0
  %6662 = vmatpush2.msra.mxu0 %v6392
  %6663 = vmatprep.subr.mxu0 0.0
  %6664 = vmatpush2.msra.mxu0 %v6390
  %6665 = vmatprep.subr.mxu0 0.0
  %6666 = vmatpush2.msra.mxu0 %v6388
  %6667 = vmatprep.subr.mxu0 0.0
  %6668 = vmatpush2.msra.mxu0 %v6386
  %6669 = vmatprep.subr.mxu0 0.0
  %6670 = vmatpush2.msra.mxu0 %v6384
  %6671 = vmatprep.mubr.f32.mxu0 %v6416
  %6672 = vmatmul.mubr.f32.gmra.mxu0 %v6202
  %v6673 = vpop.f32.mrf.mxu0
  %v6674 = vadd.f32 0.0, %v6673
  %v6675 = vpop.f32.mrf.mxu0
  %6676 = vmatprep.mubr.f32.mxu0 %v6419
  %6677 = vmatmul.mubr.f32.gmra.mxu0 %v6204
  %v6678 = vpop.f32.mrf.mxu0
  %v6679 = vadd.f32 0.0, %v6678
  %v6680 = vpop.f32.mrf.mxu0
  %6681 = vmatprep.mubr.f32.mxu0 %v6422
  %6682 = vmatmul.mubr.f32.gmra.mxu0 %v6206
  %v6683 = vpop.f32.mrf.mxu0
  %v6684 = vadd.f32 0.0, %v6683
  %v6685 = vpop.f32.mrf.mxu0
  %6686 = vmatprep.mubr.f32.mxu0 %v6425
  %6687 = vmatmul.mubr.f32.gmra.mxu0 %v6208
  %v6688 = vpop.f32.mrf.mxu0
  %v6689 = vadd.f32 0.0, %v6688
  %v6690 = vpop.f32.mrf.mxu0
  %6691 = vmatprep.mubr.f32.mxu0 %v6428
  %6692 = vmatmul.mubr.f32.gmra.mxu0 %v6210
  %v6693 = vpop.f32.mrf.mxu0
  %v6694 = vadd.f32 0.0, %v6693
  %v6695 = vpop.f32.mrf.mxu0
  %6696 = vmatprep.mubr.f32.mxu0 %v6431
  %6697 = vmatmul.mubr.f32.gmra.mxu0 %v6212
  %v6698 = vpop.f32.mrf.mxu0
  %v6699 = vadd.f32 0.0, %v6698
  %v6700 = vpop.f32.mrf.mxu0
  %6701 = vmatprep.mubr.f32.mxu0 %v6434
  %6702 = vmatmul.mubr.f32.gmra.mxu0 %v6214
  %v6703 = vpop.f32.mrf.mxu0
  %v6704 = vadd.f32 0.0, %v6703
  %v6705 = vpop.f32.mrf.mxu0
  %6706 = vmatprep.mubr.f32.mxu0 %v6437
  %6707 = vmatmul.mubr.f32.gmra.mxu0 %v6216
  %v6708 = vpop.f32.mrf.mxu0
  %v6709 = vadd.f32 0.0, %v6708
  %v6710 = vpop.f32.mrf.mxu0
  %6711 = vmatprep.mubr.f32.mxu0 %v6440
  %6712 = vmatmul.mubr.f32.gmra.mxu0 %v6218
  %v6713 = vpop.f32.mrf.mxu0
  %v6714 = vadd.f32 0.0, %v6713
  %v6715 = vpop.f32.mrf.mxu0
  %6716 = vmatprep.mubr.f32.mxu0 %v6443
  %6717 = vmatmul.mubr.f32.gmra.mxu0 %v6220
  %v6718 = vpop.f32.mrf.mxu0
  %v6719 = vadd.f32 0.0, %v6718
  %v6720 = vpop.f32.mrf.mxu0
  %6721 = vmatprep.mubr.f32.mxu0 %v6446
  %6722 = vmatmul.mubr.f32.gmra.mxu0 %v6222
  %v6723 = vpop.f32.mrf.mxu0
  %v6724 = vadd.f32 0.0, %v6723
  %v6725 = vpop.f32.mrf.mxu0
  %6726 = vmatprep.mubr.f32.mxu0 %v6449
  %6727 = vmatmul.mubr.f32.gmra.mxu0 %v6224
  %v6728 = vpop.f32.mrf.mxu0
  %v6729 = vadd.f32 0.0, %v6728
  %v6730 = vpop.f32.mrf.mxu0
  %6731 = vmatprep.mubr.f32.mxu0 %v6452
  %6732 = vmatmul.mubr.f32.gmra.mxu0 %v6226
  %v6733 = vpop.f32.mrf.mxu0
  %v6734 = vadd.f32 0.0, %v6733
  %v6735 = vpop.f32.mrf.mxu0
  %6736 = vmatprep.mubr.f32.mxu0 %v6455
  %6737 = vmatmul.mubr.f32.gmra.mxu0 %v6228
  %v6738 = vpop.f32.mrf.mxu0
  %v6739 = vadd.f32 0.0, %v6738
  %v6740 = vpop.f32.mrf.mxu0
  %6741 = vmatprep.mubr.f32.mxu0 %v6458
  %6742 = vmatmul.mubr.f32.gmra.mxu0 %v6230
  %v6743 = vpop.f32.mrf.mxu0
  %v6744 = vadd.f32 0.0, %v6743
  %v6745 = vpop.f32.mrf.mxu0
  %6746 = vmatprep.mubr.f32.mxu0 %v6461
  %6747 = vmatmul.mubr.f32.gmra.mxu0 %v6232
  %v6748 = vpop.f32.mrf.mxu0
  %v6749 = vadd.f32 0.0, %v6748
  %v6750 = vpop.f32.mrf.mxu0
  %6751 = vmatprep.mubr.f32.mxu0 %v6464
  %6752 = vmatmul.mubr.f32.gmra.mxu0 %v6234
  %v6753 = vpop.f32.mrf.mxu0
  %v6754 = vadd.f32 0.0, %v6753
  %v6755 = vpop.f32.mrf.mxu0
  %6756 = vmatprep.mubr.f32.mxu0 %v6467
  %6757 = vmatmul.mubr.f32.gmra.mxu0 %v6236
  %v6758 = vpop.f32.mrf.mxu0
  %v6759 = vadd.f32 0.0, %v6758
  %v6760 = vpop.f32.mrf.mxu0
  %6761 = vmatprep.mubr.f32.mxu0 %v6470
  %6762 = vmatmul.mubr.f32.gmra.mxu0 %v6238
  %v6763 = vpop.f32.mrf.mxu0
  %v6764 = vadd.f32 0.0, %v6763
  %v6765 = vpop.f32.mrf.mxu0
  %6766 = vmatprep.mubr.f32.mxu0 %v6473
  %6767 = vmatmul.mubr.f32.gmra.mxu0 %v6240
  %v6768 = vpop.f32.mrf.mxu0
  %v6769 = vadd.f32 0.0, %v6768
  %v6770 = vpop.f32.mrf.mxu0
  %6771 = vmatprep.mubr.f32.mxu0 %v6476
  %6772 = vmatmul.mubr.f32.gmra.mxu0 %v6242
  %v6773 = vpop.f32.mrf.mxu0
  %v6774 = vadd.f32 0.0, %v6773
  %v6775 = vpop.f32.mrf.mxu0
  %6776 = vmatprep.mubr.f32.mxu0 %v6479
  %6777 = vmatmul.mubr.f32.gmra.mxu0 %v6244
  %v6778 = vpop.f32.mrf.mxu0
  %v6779 = vadd.f32 0.0, %v6778
  %v6780 = vpop.f32.mrf.mxu0
  %6781 = vmatprep.mubr.f32.mxu0 %v6482
  %6782 = vmatmul.mubr.f32.gmra.mxu0 %v6246
  %v6783 = vpop.f32.mrf.mxu0
  %v6784 = vadd.f32 0.0, %v6783
  %v6785 = vpop.f32.mrf.mxu0
  %6786 = vmatprep.mubr.f32.mxu0 %v6485
  %6787 = vmatmul.mubr.f32.gmra.mxu0 %v6248
  %v6788 = vpop.f32.mrf.mxu0
  %v6789 = vadd.f32 0.0, %v6788
  %v6790 = vpop.f32.mrf.mxu0
  %6791 = vmatprep.mubr.f32.mxu0 %v6488
  %6792 = vmatmul.mubr.f32.gmra.mxu0 %v6250
  %v6793 = vpop.f32.mrf.mxu0
  %v6794 = vadd.f32 0.0, %v6793
  %v6795 = vpop.f32.mrf.mxu0
  %6796 = vmatprep.mubr.f32.mxu0 %v6491
  %6797 = vmatmul.mubr.f32.gmra.mxu0 %v6252
  %v6798 = vpop.f32.mrf.mxu0
  %v6799 = vadd.f32 0.0, %v6798
  %v6800 = vpop.f32.mrf.mxu0
  %6801 = vmatprep.mubr.f32.mxu0 %v6494
  %6802 = vmatmul.mubr.f32.gmra.mxu0 %v6254
  %v6803 = vpop.f32.mrf.mxu0
  %v6804 = vadd.f32 0.0, %v6803
  %v6805 = vpop.f32.mrf.mxu0
  %6806 = vmatprep.mubr.f32.mxu0 %v6497
  %6807 = vmatmul.mubr.f32.gmra.mxu0 %v6256
  %v6808 = vpop.f32.mrf.mxu0
  %v6809 = vadd.f32 0.0, %v6808
  %v6810 = vpop.f32.mrf.mxu0
  %6811 = vmatprep.mubr.f32.mxu0 %v6500
  %6812 = vmatmul.mubr.f32.gmra.mxu0 %v6258
  %v6813 = vpop.f32.mrf.mxu0
  %v6814 = vadd.f32 0.0, %v6813
  %v6815 = vpop.f32.mrf.mxu0
  %6816 = vmatprep.mubr.f32.mxu0 %v6503
  %6817 = vmatmul.mubr.f32.gmra.mxu0 %v6260
  %v6818 = vpop.f32.mrf.mxu0
  %v6819 = vadd.f32 0.0, %v6818
  %v6820 = vpop.f32.mrf.mxu0
  %6821 = vmatprep.mubr.f32.mxu0 %v6506
  %6822 = vmatmul.mubr.f32.gmra.mxu0 %v6262
  %v6823 = vpop.f32.mrf.mxu0
  %v6824 = vadd.f32 0.0, %v6823
  %v6825 = vpop.f32.mrf.mxu0
  %6826 = vmatprep.mubr.f32.mxu0 %v6509
  %6827 = vmatmul.mubr.f32.gmra.mxu0 %v6264
  %v6828 = vpop.f32.mrf.mxu0
  %v6829 = vadd.f32 0.0, %v6828
  %v6830 = vpop.f32.mrf.mxu0
  %6831 = vmatprep.mubr.f32.mxu0 %v6512
  %6832 = vmatmul.mubr.f32.gmra.mxu0 %v6266
  %v6833 = vpop.f32.mrf.mxu0
  %v6834 = vadd.f32 0.0, %v6833
  %v6835 = vpop.f32.mrf.mxu0
  %6836 = vmatprep.mubr.f32.mxu0 %v6515
  %6837 = vmatmul.mubr.f32.gmra.mxu0 %v6268
  %v6838 = vpop.f32.mrf.mxu0
  %v6839 = vadd.f32 0.0, %v6838
  %v6840 = vpop.f32.mrf.mxu0
  %6841 = vmatprep.mubr.f32.mxu0 %v6518
  %6842 = vmatmul.mubr.f32.gmra.mxu0 %v6270
  %v6843 = vpop.f32.mrf.mxu0
  %v6844 = vadd.f32 0.0, %v6843
  %v6845 = vpop.f32.mrf.mxu0
  %6846 = vmatprep.mubr.f32.mxu0 %v6521
  %6847 = vmatmul.mubr.f32.gmra.mxu0 %v6272
  %v6848 = vpop.f32.mrf.mxu0
  %v6849 = vadd.f32 0.0, %v6848
  %v6850 = vpop.f32.mrf.mxu0
  %6851 = vmatprep.mubr.f32.mxu0 %v6524
  %6852 = vmatmul.mubr.f32.gmra.mxu0 %v6274
  %v6853 = vpop.f32.mrf.mxu0
  %v6854 = vadd.f32 0.0, %v6853
  %v6855 = vpop.f32.mrf.mxu0
  %6856 = vmatprep.mubr.f32.mxu0 %v6527
  %6857 = vmatmul.mubr.f32.gmra.mxu0 %v6276
  %v6858 = vpop.f32.mrf.mxu0
  %v6859 = vadd.f32 0.0, %v6858
  %v6860 = vpop.f32.mrf.mxu0
  %6861 = vmatprep.mubr.f32.mxu0 %v6530
  %6862 = vmatmul.mubr.f32.gmra.mxu0 %v6278
  %v6863 = vpop.f32.mrf.mxu0
  %v6864 = vadd.f32 0.0, %v6863
  %v6865 = vpop.f32.mrf.mxu0
  %6866 = vmatprep.mubr.f32.mxu0 %v6533
  %6867 = vmatmul.mubr.f32.gmra.mxu0 %v6280
  %v6868 = vpop.f32.mrf.mxu0
  %v6869 = vadd.f32 0.0, %v6868
  %v6870 = vpop.f32.mrf.mxu0
  %6871 = vmatprep.mubr.f32.mxu0 %v6536
  %6872 = vmatmul.mubr.f32.gmra.mxu0 %v6282
  %v6873 = vpop.f32.mrf.mxu0
  %v6874 = vadd.f32 0.0, %v6873
  %v6875 = vpop.f32.mrf.mxu0
  %6876 = vmatprep.mubr.f32.mxu0 %v6539
  %6877 = vmatmul.mubr.f32.gmra.mxu0 %v6284
  %v6878 = vpop.f32.mrf.mxu0
  %v6879 = vadd.f32 0.0, %v6878
  %v6880 = vpop.f32.mrf.mxu0
  %6881 = vmatprep.mubr.f32.mxu0 %v6542
  %6882 = vmatmul.mubr.f32.gmra.mxu0 %v6286
  %v6883 = vpop.f32.mrf.mxu0
  %v6884 = vadd.f32 0.0, %v6883
  %v6885 = vpop.f32.mrf.mxu0
  %6886 = vmatprep.mubr.f32.mxu0 %v6545
  %6887 = vmatmul.mubr.f32.gmra.mxu0 %v6288
  %v6888 = vpop.f32.mrf.mxu0
  %v6889 = vadd.f32 0.0, %v6888
  %v6890 = vpop.f32.mrf.mxu0
  %6891 = vmatprep.mubr.f32.mxu0 %v6548
  %6892 = vmatmul.mubr.f32.gmra.mxu0 %v6290
  %v6893 = vpop.f32.mrf.mxu0
  %v6894 = vadd.f32 0.0, %v6893
  %v6895 = vpop.f32.mrf.mxu0
  %6896 = vmatprep.mubr.f32.mxu0 %v6551
  %6897 = vmatmul.mubr.f32.gmra.mxu0 %v6292
  %v6898 = vpop.f32.mrf.mxu0
  %v6899 = vadd.f32 0.0, %v6898
  %v6900 = vpop.f32.mrf.mxu0
  %6901 = vmatprep.mubr.f32.mxu0 %v6554
  %6902 = vmatmul.mubr.f32.gmra.mxu0 %v6294
  %v6903 = vpop.f32.mrf.mxu0
  %v6904 = vadd.f32 0.0, %v6903
  %v6905 = vpop.f32.mrf.mxu0
  %6906 = vmatprep.mubr.f32.mxu0 %v6557
  %6907 = vmatmul.mubr.f32.gmra.mxu0 %v6296
  %v6908 = vpop.f32.mrf.mxu0
  %v6909 = vadd.f32 0.0, %v6908
  %v6910 = vpop.f32.mrf.mxu0
  %6911 = vmatprep.mubr.f32.mxu0 %v6560
  %6912 = vmatmul.mubr.f32.gmra.mxu0 %v6298
  %v6913 = vpop.f32.mrf.mxu0
  %v6914 = vadd.f32 0.0, %v6913
  %v6915 = vpop.f32.mrf.mxu0
  %6916 = vmatprep.mubr.f32.mxu0 %v6563
  %6917 = vmatmul.mubr.f32.gmra.mxu0 %v6300
  %v6918 = vpop.f32.mrf.mxu0
  %v6919 = vadd.f32 0.0, %v6918
  %v6920 = vpop.f32.mrf.mxu0
  %6921 = vmatprep.mubr.f32.mxu0 %v6566
  %6922 = vmatmul.mubr.f32.gmra.mxu0 %v6302
  %v6923 = vpop.f32.mrf.mxu0
  %v6924 = vadd.f32 0.0, %v6923
  %v6925 = vpop.f32.mrf.mxu0
  %6926 = vmatprep.mubr.f32.mxu0 %v6569
  %6927 = vmatmul.mubr.f32.gmra.mxu0 %v6304
  %v6928 = vpop.f32.mrf.mxu0
  %v6929 = vadd.f32 0.0, %v6928
  %v6930 = vpop.f32.mrf.mxu0
  %6931 = vmatprep.mubr.f32.mxu0 %v6572
  %6932 = vmatmul.mubr.f32.gmra.mxu0 %v6306
  %v6933 = vpop.f32.mrf.mxu0
  %v6934 = vadd.f32 0.0, %v6933
  %v6935 = vpop.f32.mrf.mxu0
  %6936 = vmatprep.mubr.f32.mxu0 %v6575
  %6937 = vmatmul.mubr.f32.gmra.mxu0 %v6308
  %v6938 = vpop.f32.mrf.mxu0
  %v6939 = vadd.f32 0.0, %v6938
  %v6940 = vpop.f32.mrf.mxu0
  %6941 = vmatprep.mubr.f32.mxu0 %v6578
  %6942 = vmatmul.mubr.f32.gmra.mxu0 %v6310
  %v6943 = vpop.f32.mrf.mxu0
  %v6944 = vadd.f32 0.0, %v6943
  %v6945 = vpop.f32.mrf.mxu0
  %6946 = vmatprep.mubr.f32.mxu0 %v6581
  %6947 = vmatmul.mubr.f32.gmra.mxu0 %v6312
  %v6948 = vpop.f32.mrf.mxu0
  %v6949 = vadd.f32 0.0, %v6948
  %v6950 = vpop.f32.mrf.mxu0
  %6951 = vmatprep.mubr.f32.mxu0 %v6584
  %6952 = vmatmul.mubr.f32.gmra.mxu0 %v6314
  %v6953 = vpop.f32.mrf.mxu0
  %v6954 = vadd.f32 0.0, %v6953
  %v6955 = vpop.f32.mrf.mxu0
  %6956 = vmatprep.mubr.f32.mxu0 %v6587
  %6957 = vmatmul.mubr.f32.gmra.mxu0 %v6316
  %v6958 = vpop.f32.mrf.mxu0
  %v6959 = vadd.f32 0.0, %v6958
  %v6960 = vpop.f32.mrf.mxu0
  %6961 = vmatprep.mubr.f32.mxu0 %v6590
  %6962 = vmatmul.mubr.f32.gmra.mxu0 %v6318
  %v6963 = vpop.f32.mrf.mxu0
  %v6964 = vadd.f32 0.0, %v6963
  %v6965 = vpop.f32.mrf.mxu0
  %6966 = vmatprep.mubr.f32.mxu0 %v6593
  %6967 = vmatmul.mubr.f32.gmra.mxu0 %v6320
  %v6968 = vpop.f32.mrf.mxu0
  %v6969 = vadd.f32 0.0, %v6968
  %v6970 = vpop.f32.mrf.mxu0
  %6971 = vmatprep.mubr.f32.mxu0 %v6596
  %6972 = vmatmul.mubr.f32.gmra.mxu0 %v6322
  %v6973 = vpop.f32.mrf.mxu0
  %v6974 = vadd.f32 0.0, %v6973
  %v6975 = vpop.f32.mrf.mxu0
  %6976 = vmatprep.mubr.f32.mxu0 %v6599
  %6977 = vmatmul.mubr.f32.gmra.mxu0 %v6324
  %v6978 = vpop.f32.mrf.mxu0
  %v6979 = vadd.f32 0.0, %v6978
  %v6980 = vpop.f32.mrf.mxu0
  %6981 = vmatprep.mubr.f32.mxu0 %v6602
  %6982 = vmatmul.mubr.f32.gmra.mxu0 %v6326
  %v6983 = vpop.f32.mrf.mxu0
  %v6984 = vadd.f32 0.0, %v6983
  %v6985 = vpop.f32.mrf.mxu0
  %6986 = vmatprep.mubr.f32.mxu0 %v6605
  %6987 = vmatmul.mubr.f32.gmra.mxu0 %v6328
  %v6988 = vpop.f32.mrf.mxu0
  %v6989 = vadd.f32 0.0, %v6988
  %v6990 = vpop.f32.mrf.mxu0
  %6991 = vdwg.mxu0
  %v6993 = vsel %vm6414, %v6074, 0
  %v6996 = vsel %vm6414, %v6076, 0
  %v6999 = vsel %vm6414, %v6078, 0
  %v7002 = vsel %vm6414, %v6080, 0
  %v7005 = vsel %vm6414, %v6082, 0
  %v7008 = vsel %vm6414, %v6084, 0
  %v7011 = vsel %vm6414, %v6086, 0
  %v7014 = vsel %vm6414, %v6088, 0
  %v7017 = vsel %vm6414, %v6090, 0
  %v7020 = vsel %vm6414, %v6092, 0
  %v7023 = vsel %vm6414, %v6094, 0
  %v7026 = vsel %vm6414, %v6096, 0
  %v7029 = vsel %vm6414, %v6098, 0
  %v7032 = vsel %vm6414, %v6100, 0
  %v7035 = vsel %vm6414, %v6102, 0
  %v7038 = vsel %vm6414, %v6104, 0
  %v7041 = vsel %vm6414, %v6106, 0
  %v7044 = vsel %vm6414, %v6108, 0
  %v7047 = vsel %vm6414, %v6110, 0
  %v7050 = vsel %vm6414, %v6112, 0
  %v7053 = vsel %vm6414, %v6114, 0
  %v7056 = vsel %vm6414, %v6116, 0
  %v7059 = vsel %vm6414, %v6118, 0
  %v7062 = vsel %vm6414, %v6120, 0
  %v7065 = vsel %vm6414, %v6122, 0
  %v7068 = vsel %vm6414, %v6124, 0
  %v7071 = vsel %vm6414, %v6126, 0
  %v7074 = vsel %vm6414, %v6128, 0
  %v7077 = vsel %vm6414, %v6130, 0
  %v7080 = vsel %vm6414, %v6132, 0
  %v7083 = vsel %vm6414, %v6134, 0
  %v7086 = vsel %vm6414, %v6136, 0
  %v7089 = vsel %vm6414, %v6138, 0
  %v7092 = vsel %vm6414, %v6140, 0
  %v7095 = vsel %vm6414, %v6142, 0
  %v7098 = vsel %vm6414, %v6144, 0
  %v7101 = vsel %vm6414, %v6146, 0
  %v7104 = vsel %vm6414, %v6148, 0
  %v7107 = vsel %vm6414, %v6150, 0
  %v7110 = vsel %vm6414, %v6152, 0
  %v7113 = vsel %vm6414, %v6154, 0
  %v7116 = vsel %vm6414, %v6156, 0
  %v7119 = vsel %vm6414, %v6158, 0
  %v7122 = vsel %vm6414, %v6160, 0
  %v7125 = vsel %vm6414, %v6162, 0
  %v7128 = vsel %vm6414, %v6164, 0
  %v7131 = vsel %vm6414, %v6166, 0
  %v7134 = vsel %vm6414, %v6168, 0
  %v7137 = vsel %vm6414, %v6170, 0
  %v7140 = vsel %vm6414, %v6172, 0
  %v7143 = vsel %vm6414, %v6174, 0
  %v7146 = vsel %vm6414, %v6176, 0
  %v7149 = vsel %vm6414, %v6178, 0
  %v7152 = vsel %vm6414, %v6180, 0
  %v7155 = vsel %vm6414, %v6182, 0
  %v7158 = vsel %vm6414, %v6184, 0
  %v7161 = vsel %vm6414, %v6186, 0
  %v7164 = vsel %vm6414, %v6188, 0
  %v7167 = vsel %vm6414, %v6190, 0
  %v7170 = vsel %vm6414, %v6192, 0
  %v7173 = vsel %vm6414, %v6194, 0
  %v7176 = vsel %vm6414, %v6196, 0
  %v7179 = vsel %vm6414, %v6198, 0
  %v7182 = vsel %vm6414, %v6200, 0
  %7184 = vmatprep.subr.mxu0 0.0
  %7185 = vmatpush1.msra.mxu0 %v6067
  %7186 = vmatprep.subr.mxu0 0.0
  %7187 = vmatpush1.msra.mxu0 %v6066
  %7188 = vmatprep.subr.mxu0 0.0
  %7189 = vmatpush1.msra.mxu0 %v6065
  %7190 = vmatprep.subr.mxu0 0.0
  %7191 = vmatpush1.msra.mxu0 %v6064
  %7192 = vmatprep.subr.mxu0 0.0
  %7193 = vmatpush1.msra.mxu0 %v6063
  %7194 = vmatprep.subr.mxu0 0.0
  %7195 = vmatpush1.msra.mxu0 %v6062
  %7196 = vmatprep.subr.mxu0 0.0
  %7197 = vmatpush1.msra.mxu0 %v6061
  %7198 = vmatprep.subr.mxu0 0.0
  %7199 = vmatpush1.msra.mxu0 %v6060
  %7200 = vmatprep.subr.mxu0 0.0
  %7201 = vmatpush1.msra.mxu0 %v6059
  %7202 = vmatprep.subr.mxu0 0.0
  %7203 = vmatpush1.msra.mxu0 %v6058
  %7204 = vmatprep.subr.mxu0 0.0
  %7205 = vmatpush1.msra.mxu0 %v6057
  %7206 = vmatprep.subr.mxu0 0.0
  %7207 = vmatpush1.msra.mxu0 %v6056
  %7208 = vmatprep.subr.mxu0 0.0
  %7209 = vmatpush1.msra.mxu0 %v6055
  %7210 = vmatprep.subr.mxu0 0.0
  %7211 = vmatpush1.msra.mxu0 %v6054
  %7212 = vmatprep.subr.mxu0 0.0
  %7213 = vmatpush1.msra.mxu0 %v6053
  %7214 = vmatprep.subr.mxu0 0.0
  %7215 = vmatpush1.msra.mxu0 %v6052
  %7216 = vmatprep.subr.mxu0 0.0
  %7217 = vmatpush2.msra.mxu0 0.0
  %7218 = vmatprep.subr.mxu0 0.0
  %7219 = vmatpush2.msra.mxu0 0.0
  %7220 = vmatprep.subr.mxu0 0.0
  %7221 = vmatpush2.msra.mxu0 0.0
  %7222 = vmatprep.subr.mxu0 0.0
  %7223 = vmatpush2.msra.mxu0 0.0
  %7224 = vmatprep.subr.mxu0 0.0
  %7225 = vmatpush2.msra.mxu0 0.0
  %7226 = vmatprep.subr.mxu0 0.0
  %7227 = vmatpush2.msra.mxu0 0.0
  %7228 = vmatprep.subr.mxu0 0.0
  %7229 = vmatpush2.msra.mxu0 0.0
  %7230 = vmatprep.subr.mxu0 0.0
  %7231 = vmatpush2.msra.mxu0 0.0
  %7232 = vmatprep.subr.mxu0 0.0
  %7233 = vmatpush2.msra.mxu0 0.0
  %7234 = vmatprep.subr.mxu0 0.0
  %7235 = vmatpush2.msra.mxu0 0.0
  %7236 = vmatprep.subr.mxu0 0.0
  %7237 = vmatpush2.msra.mxu0 0.0
  %7238 = vmatprep.subr.mxu0 0.0
  %7239 = vmatpush2.msra.mxu0 %v6072
  %7240 = vmatprep.subr.mxu0 0.0
  %7241 = vmatpush2.msra.mxu0 %v6071
  %7242 = vmatprep.subr.mxu0 0.0
  %7243 = vmatpush2.msra.mxu0 %v6070
  %7244 = vmatprep.subr.mxu0 0.0
  %7245 = vmatpush2.msra.mxu0 %v6069
  %7246 = vmatprep.subr.mxu0 0.0
  %7247 = vmatpush2.msra.mxu0 %v6068
  %7248 = vmatprep.mubr.f32.mxu0 %v6993
  %7249 = vmatmul.mubr.f32.gmra.mxu0 %v6073
  %v7250 = vpop.f32.mrf.mxu0
  %v7251 = vadd.f32 %v6674, %v7250
  %v7252 = vpop.f32.mrf.mxu0
  %7253 = vmatprep.mubr.f32.mxu0 %v6996
  %7254 = vmatmul.mubr.f32.gmra.mxu0 %v6075
  %v7255 = vpop.f32.mrf.mxu0
  %v7256 = vadd.f32 %v6679, %v7255
  %v7257 = vpop.f32.mrf.mxu0
  %7258 = vmatprep.mubr.f32.mxu0 %v6999
  %7259 = vmatmul.mubr.f32.gmra.mxu0 %v6077
  %v7260 = vpop.f32.mrf.mxu0
  %v7261 = vadd.f32 %v6684, %v7260
  %v7262 = vpop.f32.mrf.mxu0
  %7263 = vmatprep.mubr.f32.mxu0 %v7002
  %7264 = vmatmul.mubr.f32.gmra.mxu0 %v6079
  %v7265 = vpop.f32.mrf.mxu0
  %v7266 = vadd.f32 %v6689, %v7265
  %v7267 = vpop.f32.mrf.mxu0
  %7268 = vmatprep.mubr.f32.mxu0 %v7005
  %7269 = vmatmul.mubr.f32.gmra.mxu0 %v6081
  %v7270 = vpop.f32.mrf.mxu0
  %v7271 = vadd.f32 %v6694, %v7270
  %v7272 = vpop.f32.mrf.mxu0
  %7273 = vmatprep.mubr.f32.mxu0 %v7008
  %7274 = vmatmul.mubr.f32.gmra.mxu0 %v6083
  %v7275 = vpop.f32.mrf.mxu0
  %v7276 = vadd.f32 %v6699, %v7275
  %v7277 = vpop.f32.mrf.mxu0
  %7278 = vmatprep.mubr.f32.mxu0 %v7011
  %7279 = vmatmul.mubr.f32.gmra.mxu0 %v6085
  %v7280 = vpop.f32.mrf.mxu0
  %v7281 = vadd.f32 %v6704, %v7280
  %v7282 = vpop.f32.mrf.mxu0
  %7283 = vmatprep.mubr.f32.mxu0 %v7014
  %7284 = vmatmul.mubr.f32.gmra.mxu0 %v6087
  %v7285 = vpop.f32.mrf.mxu0
  %v7286 = vadd.f32 %v6709, %v7285
  %v7287 = vpop.f32.mrf.mxu0
  %7288 = vmatprep.mubr.f32.mxu0 %v7017
  %7289 = vmatmul.mubr.f32.gmra.mxu0 %v6089
  %v7290 = vpop.f32.mrf.mxu0
  %v7291 = vadd.f32 %v6714, %v7290
  %v7292 = vpop.f32.mrf.mxu0
  %7293 = vmatprep.mubr.f32.mxu0 %v7020
  %7294 = vmatmul.mubr.f32.gmra.mxu0 %v6091
  %v7295 = vpop.f32.mrf.mxu0
  %v7296 = vadd.f32 %v6719, %v7295
  %v7297 = vpop.f32.mrf.mxu0
  %7298 = vmatprep.mubr.f32.mxu0 %v7023
  %7299 = vmatmul.mubr.f32.gmra.mxu0 %v6093
  %v7300 = vpop.f32.mrf.mxu0
  %v7301 = vadd.f32 %v6724, %v7300
  %v7302 = vpop.f32.mrf.mxu0
  %7303 = vmatprep.mubr.f32.mxu0 %v7026
  %7304 = vmatmul.mubr.f32.gmra.mxu0 %v6095
  %v7305 = vpop.f32.mrf.mxu0
  %v7306 = vadd.f32 %v6729, %v7305
  %v7307 = vpop.f32.mrf.mxu0
  %7308 = vmatprep.mubr.f32.mxu0 %v7029
  %7309 = vmatmul.mubr.f32.gmra.mxu0 %v6097
  %v7310 = vpop.f32.mrf.mxu0
  %v7311 = vadd.f32 %v6734, %v7310
  %v7312 = vpop.f32.mrf.mxu0
  %7313 = vmatprep.mubr.f32.mxu0 %v7032
  %7314 = vmatmul.mubr.f32.gmra.mxu0 %v6099
  %v7315 = vpop.f32.mrf.mxu0
  %v7316 = vadd.f32 %v6739, %v7315
  %v7317 = vpop.f32.mrf.mxu0
  %7318 = vmatprep.mubr.f32.mxu0 %v7035
  %7319 = vmatmul.mubr.f32.gmra.mxu0 %v6101
  %v7320 = vpop.f32.mrf.mxu0
  %v7321 = vadd.f32 %v6744, %v7320
  %v7322 = vpop.f32.mrf.mxu0
  %7323 = vmatprep.mubr.f32.mxu0 %v7038
  %7324 = vmatmul.mubr.f32.gmra.mxu0 %v6103
  %v7325 = vpop.f32.mrf.mxu0
  %v7326 = vadd.f32 %v6749, %v7325
  %v7327 = vpop.f32.mrf.mxu0
  %7328 = vmatprep.mubr.f32.mxu0 %v7041
  %7329 = vmatmul.mubr.f32.gmra.mxu0 %v6105
  %v7330 = vpop.f32.mrf.mxu0
  %v7331 = vadd.f32 %v6754, %v7330
  %v7332 = vpop.f32.mrf.mxu0
  %7333 = vmatprep.mubr.f32.mxu0 %v7044
  %7334 = vmatmul.mubr.f32.gmra.mxu0 %v6107
  %v7335 = vpop.f32.mrf.mxu0
  %v7336 = vadd.f32 %v6759, %v7335
  %v7337 = vpop.f32.mrf.mxu0
  %7338 = vmatprep.mubr.f32.mxu0 %v7047
  %7339 = vmatmul.mubr.f32.gmra.mxu0 %v6109
  %v7340 = vpop.f32.mrf.mxu0
  %v7341 = vadd.f32 %v6764, %v7340
  %v7342 = vpop.f32.mrf.mxu0
  %7343 = vmatprep.mubr.f32.mxu0 %v7050
  %7344 = vmatmul.mubr.f32.gmra.mxu0 %v6111
  %v7345 = vpop.f32.mrf.mxu0
  %v7346 = vadd.f32 %v6769, %v7345
  %v7347 = vpop.f32.mrf.mxu0
  %7348 = vmatprep.mubr.f32.mxu0 %v7053
  %7349 = vmatmul.mubr.f32.gmra.mxu0 %v6113
  %v7350 = vpop.f32.mrf.mxu0
  %v7351 = vadd.f32 %v6774, %v7350
  %v7352 = vpop.f32.mrf.mxu0
  %7353 = vmatprep.mubr.f32.mxu0 %v7056
  %7354 = vmatmul.mubr.f32.gmra.mxu0 %v6115
  %v7355 = vpop.f32.mrf.mxu0
  %v7356 = vadd.f32 %v6779, %v7355
  %v7357 = vpop.f32.mrf.mxu0
  %7358 = vmatprep.mubr.f32.mxu0 %v7059
  %7359 = vmatmul.mubr.f32.gmra.mxu0 %v6117
  %v7360 = vpop.f32.mrf.mxu0
  %v7361 = vadd.f32 %v6784, %v7360
  %v7362 = vpop.f32.mrf.mxu0
  %7363 = vmatprep.mubr.f32.mxu0 %v7062
  %7364 = vmatmul.mubr.f32.gmra.mxu0 %v6119
  %v7365 = vpop.f32.mrf.mxu0
  %v7366 = vadd.f32 %v6789, %v7365
  %v7367 = vpop.f32.mrf.mxu0
  %7368 = vmatprep.mubr.f32.mxu0 %v7065
  %7369 = vmatmul.mubr.f32.gmra.mxu0 %v6121
  %v7370 = vpop.f32.mrf.mxu0
  %v7371 = vadd.f32 %v6794, %v7370
  %v7372 = vpop.f32.mrf.mxu0
  %7373 = vmatprep.mubr.f32.mxu0 %v7068
  %7374 = vmatmul.mubr.f32.gmra.mxu0 %v6123
  %v7375 = vpop.f32.mrf.mxu0
  %v7376 = vadd.f32 %v6799, %v7375
  %v7377 = vpop.f32.mrf.mxu0
  %7378 = vmatprep.mubr.f32.mxu0 %v7071
  %7379 = vmatmul.mubr.f32.gmra.mxu0 %v6125
  %v7380 = vpop.f32.mrf.mxu0
  %v7381 = vadd.f32 %v6804, %v7380
  %v7382 = vpop.f32.mrf.mxu0
  %7383 = vmatprep.mubr.f32.mxu0 %v7074
  %7384 = vmatmul.mubr.f32.gmra.mxu0 %v6127
  %v7385 = vpop.f32.mrf.mxu0
  %v7386 = vadd.f32 %v6809, %v7385
  %v7387 = vpop.f32.mrf.mxu0
  %7388 = vmatprep.mubr.f32.mxu0 %v7077
  %7389 = vmatmul.mubr.f32.gmra.mxu0 %v6129
  %v7390 = vpop.f32.mrf.mxu0
  %v7391 = vadd.f32 %v6814, %v7390
  %v7392 = vpop.f32.mrf.mxu0
  %7393 = vmatprep.mubr.f32.mxu0 %v7080
  %7394 = vmatmul.mubr.f32.gmra.mxu0 %v6131
  %v7395 = vpop.f32.mrf.mxu0
  %v7396 = vadd.f32 %v6819, %v7395
  %v7397 = vpop.f32.mrf.mxu0
  %7398 = vmatprep.mubr.f32.mxu0 %v7083
  %7399 = vmatmul.mubr.f32.gmra.mxu0 %v6133
  %v7400 = vpop.f32.mrf.mxu0
  %v7401 = vadd.f32 %v6824, %v7400
  %v7402 = vpop.f32.mrf.mxu0
  %7403 = vmatprep.mubr.f32.mxu0 %v7086
  %7404 = vmatmul.mubr.f32.gmra.mxu0 %v6135
  %v7405 = vpop.f32.mrf.mxu0
  %v7406 = vadd.f32 %v6829, %v7405
  %v7407 = vpop.f32.mrf.mxu0
  %7408 = vmatprep.mubr.f32.mxu0 %v7089
  %7409 = vmatmul.mubr.f32.gmra.mxu0 %v6137
  %v7410 = vpop.f32.mrf.mxu0
  %v7411 = vadd.f32 %v6834, %v7410
  %v7412 = vpop.f32.mrf.mxu0
  %7413 = vmatprep.mubr.f32.mxu0 %v7092
  %7414 = vmatmul.mubr.f32.gmra.mxu0 %v6139
  %v7415 = vpop.f32.mrf.mxu0
  %v7416 = vadd.f32 %v6839, %v7415
  %v7417 = vpop.f32.mrf.mxu0
  %7418 = vmatprep.mubr.f32.mxu0 %v7095
  %7419 = vmatmul.mubr.f32.gmra.mxu0 %v6141
  %v7420 = vpop.f32.mrf.mxu0
  %v7421 = vadd.f32 %v6844, %v7420
  %v7422 = vpop.f32.mrf.mxu0
  %7423 = vmatprep.mubr.f32.mxu0 %v7098
  %7424 = vmatmul.mubr.f32.gmra.mxu0 %v6143
  %v7425 = vpop.f32.mrf.mxu0
  %v7426 = vadd.f32 %v6849, %v7425
  %v7427 = vpop.f32.mrf.mxu0
  %7428 = vmatprep.mubr.f32.mxu0 %v7101
  %7429 = vmatmul.mubr.f32.gmra.mxu0 %v6145
  %v7430 = vpop.f32.mrf.mxu0
  %v7431 = vadd.f32 %v6854, %v7430
  %v7432 = vpop.f32.mrf.mxu0
  %7433 = vmatprep.mubr.f32.mxu0 %v7104
  %7434 = vmatmul.mubr.f32.gmra.mxu0 %v6147
  %v7435 = vpop.f32.mrf.mxu0
  %v7436 = vadd.f32 %v6859, %v7435
  %v7437 = vpop.f32.mrf.mxu0
  %7438 = vmatprep.mubr.f32.mxu0 %v7107
  %7439 = vmatmul.mubr.f32.gmra.mxu0 %v6149
  %v7440 = vpop.f32.mrf.mxu0
  %v7441 = vadd.f32 %v6864, %v7440
  %v7442 = vpop.f32.mrf.mxu0
  %7443 = vmatprep.mubr.f32.mxu0 %v7110
  %7444 = vmatmul.mubr.f32.gmra.mxu0 %v6151
  %v7445 = vpop.f32.mrf.mxu0
  %v7446 = vadd.f32 %v6869, %v7445
  %v7447 = vpop.f32.mrf.mxu0
  %7448 = vmatprep.mubr.f32.mxu0 %v7113
  %7449 = vmatmul.mubr.f32.gmra.mxu0 %v6153
  %v7450 = vpop.f32.mrf.mxu0
  %v7451 = vadd.f32 %v6874, %v7450
  %v7452 = vpop.f32.mrf.mxu0
  %7453 = vmatprep.mubr.f32.mxu0 %v7116
  %7454 = vmatmul.mubr.f32.gmra.mxu0 %v6155
  %v7455 = vpop.f32.mrf.mxu0
  %v7456 = vadd.f32 %v6879, %v7455
  %v7457 = vpop.f32.mrf.mxu0
  %7458 = vmatprep.mubr.f32.mxu0 %v7119
  %7459 = vmatmul.mubr.f32.gmra.mxu0 %v6157
  %v7460 = vpop.f32.mrf.mxu0
  %v7461 = vadd.f32 %v6884, %v7460
  %v7462 = vpop.f32.mrf.mxu0
  %7463 = vmatprep.mubr.f32.mxu0 %v7122
  %7464 = vmatmul.mubr.f32.gmra.mxu0 %v6159
  %v7465 = vpop.f32.mrf.mxu0
  %v7466 = vadd.f32 %v6889, %v7465
  %v7467 = vpop.f32.mrf.mxu0
  %7468 = vmatprep.mubr.f32.mxu0 %v7125
  %7469 = vmatmul.mubr.f32.gmra.mxu0 %v6161
  %v7470 = vpop.f32.mrf.mxu0
  %v7471 = vadd.f32 %v6894, %v7470
  %v7472 = vpop.f32.mrf.mxu0
  %7473 = vmatprep.mubr.f32.mxu0 %v7128
  %7474 = vmatmul.mubr.f32.gmra.mxu0 %v6163
  %v7475 = vpop.f32.mrf.mxu0
  %v7476 = vadd.f32 %v6899, %v7475
  %v7477 = vpop.f32.mrf.mxu0
  %7478 = vmatprep.mubr.f32.mxu0 %v7131
  %7479 = vmatmul.mubr.f32.gmra.mxu0 %v6165
  %v7480 = vpop.f32.mrf.mxu0
  %v7481 = vadd.f32 %v6904, %v7480
  %v7482 = vpop.f32.mrf.mxu0
  %7483 = vmatprep.mubr.f32.mxu0 %v7134
  %7484 = vmatmul.mubr.f32.gmra.mxu0 %v6167
  %v7485 = vpop.f32.mrf.mxu0
  %v7486 = vadd.f32 %v6909, %v7485
  %v7487 = vpop.f32.mrf.mxu0
  %7488 = vmatprep.mubr.f32.mxu0 %v7137
  %7489 = vmatmul.mubr.f32.gmra.mxu0 %v6169
  %v7490 = vpop.f32.mrf.mxu0
  %v7491 = vadd.f32 %v6914, %v7490
  %v7492 = vpop.f32.mrf.mxu0
  %7493 = vmatprep.mubr.f32.mxu0 %v7140
  %7494 = vmatmul.mubr.f32.gmra.mxu0 %v6171
  %v7495 = vpop.f32.mrf.mxu0
  %v7496 = vadd.f32 %v6919, %v7495
  %v7497 = vpop.f32.mrf.mxu0
  %7498 = vmatprep.mubr.f32.mxu0 %v7143
  %7499 = vmatmul.mubr.f32.gmra.mxu0 %v6173
  %v7500 = vpop.f32.mrf.mxu0
  %v7501 = vadd.f32 %v6924, %v7500
  %v7502 = vpop.f32.mrf.mxu0
  %7503 = vmatprep.mubr.f32.mxu0 %v7146
  %7504 = vmatmul.mubr.f32.gmra.mxu0 %v6175
  %v7505 = vpop.f32.mrf.mxu0
  %v7506 = vadd.f32 %v6929, %v7505
  %v7507 = vpop.f32.mrf.mxu0
  %7508 = vmatprep.mubr.f32.mxu0 %v7149
  %7509 = vmatmul.mubr.f32.gmra.mxu0 %v6177
  %v7510 = vpop.f32.mrf.mxu0
  %v7511 = vadd.f32 %v6934, %v7510
  %v7512 = vpop.f32.mrf.mxu0
  %7513 = vmatprep.mubr.f32.mxu0 %v7152
  %7514 = vmatmul.mubr.f32.gmra.mxu0 %v6179
  %v7515 = vpop.f32.mrf.mxu0
  %v7516 = vadd.f32 %v6939, %v7515
  %v7517 = vpop.f32.mrf.mxu0
  %7518 = vmatprep.mubr.f32.mxu0 %v7155
  %7519 = vmatmul.mubr.f32.gmra.mxu0 %v6181
  %v7520 = vpop.f32.mrf.mxu0
  %v7521 = vadd.f32 %v6944, %v7520
  %v7522 = vpop.f32.mrf.mxu0
  %7523 = vmatprep.mubr.f32.mxu0 %v7158
  %7524 = vmatmul.mubr.f32.gmra.mxu0 %v6183
  %v7525 = vpop.f32.mrf.mxu0
  %v7526 = vadd.f32 %v6949, %v7525
  %v7527 = vpop.f32.mrf.mxu0
  %7528 = vmatprep.mubr.f32.mxu0 %v7161
  %7529 = vmatmul.mubr.f32.gmra.mxu0 %v6185
  %v7530 = vpop.f32.mrf.mxu0
  %v7531 = vadd.f32 %v6954, %v7530
  %v7532 = vpop.f32.mrf.mxu0
  %7533 = vmatprep.mubr.f32.mxu0 %v7164
  %7534 = vmatmul.mubr.f32.gmra.mxu0 %v6187
  %v7535 = vpop.f32.mrf.mxu0
  %v7536 = vadd.f32 %v6959, %v7535
  %v7537 = vpop.f32.mrf.mxu0
  %7538 = vmatprep.mubr.f32.mxu0 %v7167
  %7539 = vmatmul.mubr.f32.gmra.mxu0 %v6189
  %v7540 = vpop.f32.mrf.mxu0
  %v7541 = vadd.f32 %v6964, %v7540
  %v7542 = vpop.f32.mrf.mxu0
  %7543 = vmatprep.mubr.f32.mxu0 %v7170
  %7544 = vmatmul.mubr.f32.gmra.mxu0 %v6191
  %v7545 = vpop.f32.mrf.mxu0
  %v7546 = vadd.f32 %v6969, %v7545
  %v7547 = vpop.f32.mrf.mxu0
  %7548 = vmatprep.mubr.f32.mxu0 %v7173
  %7549 = vmatmul.mubr.f32.gmra.mxu0 %v6193
  %v7550 = vpop.f32.mrf.mxu0
  %v7551 = vadd.f32 %v6974, %v7550
  %v7552 = vpop.f32.mrf.mxu0
  %7553 = vmatprep.mubr.f32.mxu0 %v7176
  %7554 = vmatmul.mubr.f32.gmra.mxu0 %v6195
  %v7555 = vpop.f32.mrf.mxu0
  %v7556 = vadd.f32 %v6979, %v7555
  %v7557 = vpop.f32.mrf.mxu0
  %7558 = vmatprep.mubr.f32.mxu0 %v7179
  %7559 = vmatmul.mubr.f32.gmra.mxu0 %v6197
  %v7560 = vpop.f32.mrf.mxu0
  %v7561 = vadd.f32 %v6984, %v7560
  %v7562 = vpop.f32.mrf.mxu0
  %7563 = vmatprep.mubr.f32.mxu0 %v7182
  %7564 = vmatmul.mubr.f32.gmra.mxu0 %v6199
  %v7565 = vpop.f32.mrf.mxu0
  %v7566 = vadd.f32 %v6989, %v7565
  %v7567 = vpop.f32.mrf.mxu0
  %7568 = vdwg.mxu0
  %s7569 = scalar_lea.vmem %s16, 2048
  %v7570 = vld [vmem:[%s7569] sm:$0xff]
  %v7571 = vld [vmem:[%s7569 + $0x8] sm:$0xff]
  %v7572 = vld [vmem:[%s7569 + $0x10] sm:$0xff]
  %v7573 = vld [vmem:[%s7569 + $0x18] sm:$0xff]
  %v7574 = vld [vmem:[%s7569 + $0x20] sm:$0xff]
  %v7575 = vld [vmem:[%s7569 + $0x28] sm:$0xff]
  %v7576 = vld [vmem:[%s7569 + $0x30] sm:$0xff]
  %v7577 = vld [vmem:[%s7569 + $0x38] sm:$0xff]
  %v7578 = vld [vmem:[%s7569 + $0x40] sm:$0xff]
  %v7579 = vld [vmem:[%s7569 + $0x48] sm:$0xff]
  %v7580 = vld [vmem:[%s7569 + $0x50] sm:$0xff]
  %v7581 = vld [vmem:[%s7569 + $0x58] sm:$0xff]
  %v7582 = vld [vmem:[%s7569 + $0x60] sm:$0xff]
  %v7583 = vld [vmem:[%s7569 + $0x68] sm:$0xff]
  %v7584 = vld [vmem:[%s7569 + $0x70] sm:$0xff]
  %v7585 = vld [vmem:[%s7569 + $0x78] sm:$0xff]
  %v7586 = vld [vmem:[%s7569 + $0x80] sm:$0xff]
  %v7587 = vld [vmem:[%s7569 + $0x88] sm:$0xff]
  %v7588 = vld [vmem:[%s7569 + $0x90] sm:$0xff]
  %v7589 = vld [vmem:[%s7569 + $0x98] sm:$0xff]
  %v7590 = vld [vmem:[%s7569 + $0xa0] sm:$0xff]
  %v7591 = vld [vmem:[%s7569 + $0xa8] sm:$0xff]
  %v7592 = vld [vmem:[%s7569 + $0xb0] sm:$0xff]
  %v7593 = vld [vmem:[%s7569 + $0xb8] sm:$0xff]
  %v7594 = vld [vmem:[%s7569 + $0xc0] sm:$0xff]
  %v7595 = vld [vmem:[%s7569 + $0xc8] sm:$0xff]
  %v7596 = vld [vmem:[%s7569 + $0xd0] sm:$0xff]
  %v7597 = vld [vmem:[%s7569 + $0xd8] sm:$0xff]
  %v7598 = vld [vmem:[%s7569 + $0xe0] sm:$0xff]
  %v7599 = vld [vmem:[%s7569 + $0xe8] sm:$0xff]
  %v7600 = vld [vmem:[%s7569 + $0xf0] sm:$0xff]
  %v7601 = vld [vmem:[%s7569 + $0xf8] sm:$0xff]
  %v7602 = vld [vmem:[%s7569 + $0x100] sm:$0xff]
  %v7603 = vld [vmem:[%s7569 + $0x108] sm:$0xff]
  %v7604 = vld [vmem:[%s7569 + $0x110] sm:$0xff]
  %v7605 = vld [vmem:[%s7569 + $0x118] sm:$0xff]
  %v7606 = vld [vmem:[%s7569 + $0x120] sm:$0xff]
  %v7607 = vld [vmem:[%s7569 + $0x128] sm:$0xff]
  %v7608 = vld [vmem:[%s7569 + $0x130] sm:$0xff]
  %v7609 = vld [vmem:[%s7569 + $0x138] sm:$0xff]
  %v7610 = vld [vmem:[%s7569 + $0x140] sm:$0xff]
  %v7611 = vld [vmem:[%s7569 + $0x148] sm:$0xff]
  %v7612 = vld [vmem:[%s7569 + $0x150] sm:$0xff]
  %v7613 = vld [vmem:[%s7569 + $0x158] sm:$0xff]
  %v7614 = vld [vmem:[%s7569 + $0x160] sm:$0xff]
  %v7615 = vld [vmem:[%s7569 + $0x168] sm:$0xff]
  %v7616 = vld [vmem:[%s7569 + $0x170] sm:$0xff]
  %v7617 = vld [vmem:[%s7569 + $0x178] sm:$0xff]
  %v7618 = vld [vmem:[%s7569 + $0x180] sm:$0xff]
  %v7619 = vld [vmem:[%s7569 + $0x188] sm:$0xff]
  %v7620 = vld [vmem:[%s7569 + $0x190] sm:$0xff]
  %v7621 = vld [vmem:[%s7569 + $0x198] sm:$0xff]
  %v7622 = vld [vmem:[%s7569 + $0x1a0] sm:$0xff]
  %v7623 = vld [vmem:[%s7569 + $0x1a8] sm:$0xff]
  %v7624 = vld [vmem:[%s7569 + $0x1b0] sm:$0xff]
  %v7625 = vld [vmem:[%s7569 + $0x1b8] sm:$0xff]
  %v7626 = vld [vmem:[%s7569 + $0x1c0] sm:$0xff]
  %v7627 = vld [vmem:[%s7569 + $0x1c8] sm:$0xff]
  %v7628 = vld [vmem:[%s7569 + $0x1d0] sm:$0xff]
  %v7629 = vld [vmem:[%s7569 + $0x1d8] sm:$0xff]
  %v7630 = vld [vmem:[%s7569 + $0x1e0] sm:$0xff]
  %v7631 = vld [vmem:[%s7569 + $0x1e8] sm:$0xff]
  %v7632 = vld [vmem:[%s7569 + $0x1f0] sm:$0xff]
  %v7633 = vld [vmem:[%s7569 + $0x1f8] sm:$0xff]
  %v7634 = vld [vmem:[%s7569 + $0x200] sm:$0xff]
  %v7635 = vld [vmem:[%s7569 + $0x208] sm:$0xff]
  %v7636 = vld [vmem:[%s7569 + $0x210] sm:$0xff]
  %v7637 = vld [vmem:[%s7569 + $0x218] sm:$0xff]
  %v7638 = vld [vmem:[%s7569 + $0x220] sm:$0xff]
  %v7639 = vld [vmem:[%s7569 + $0x228] sm:$0xff]
  %v7640 = vld [vmem:[%s7569 + $0x230] sm:$0xff]
  %v7641 = vld [vmem:[%s7569 + $0x238] sm:$0xff]
  %v7642 = vld [vmem:[%s7569 + $0x240] sm:$0xff]
  %v7643 = vld [vmem:[%s7569 + $0x248] sm:$0xff]
  %v7644 = vld [vmem:[%s7569 + $0x250] sm:$0xff]
  %v7645 = vld [vmem:[%s7569 + $0x258] sm:$0xff]
  %v7646 = vld [vmem:[%s7569 + $0x260] sm:$0xff]
  %v7647 = vld [vmem:[%s7569 + $0x268] sm:$0xff]
  %v7648 = vld [vmem:[%s7569 + $0x270] sm:$0xff]
  %v7649 = vld [vmem:[%s7569 + $0x278] sm:$0xff]
  %v7650 = vld [vmem:[%s7569 + $0x280] sm:$0xff]
  %v7651 = vld [vmem:[%s7569 + $0x288] sm:$0xff]
  %v7652 = vld [vmem:[%s7569 + $0x290] sm:$0xff]
  %v7653 = vld [vmem:[%s7569 + $0x298] sm:$0xff]
  %v7654 = vld [vmem:[%s7569 + $0x2a0] sm:$0xff]
  %v7655 = vld [vmem:[%s7569 + $0x2a8] sm:$0xff]
  %v7656 = vld [vmem:[%s7569 + $0x2b0] sm:$0xff]
  %v7657 = vld [vmem:[%s7569 + $0x2b8] sm:$0xff]
  %v7658 = vld [vmem:[%s7569 + $0x2c0] sm:$0xff]
  %v7659 = vld [vmem:[%s7569 + $0x2c8] sm:$0xff]
  %v7660 = vld [vmem:[%s7569 + $0x2d0] sm:$0xff]
  %v7661 = vld [vmem:[%s7569 + $0x2d8] sm:$0xff]
  %v7662 = vld [vmem:[%s7569 + $0x2e0] sm:$0xff]
  %v7663 = vld [vmem:[%s7569 + $0x2e8] sm:$0xff]
  %v7664 = vld [vmem:[%s7569 + $0x2f0] sm:$0xff]
  %v7665 = vld [vmem:[%s7569 + $0x2f8] sm:$0xff]
  %v7666 = vld [vmem:[%s7569 + $0x300] sm:$0xff]
  %v7667 = vld [vmem:[%s7569 + $0x308] sm:$0xff]
  %v7668 = vld [vmem:[%s7569 + $0x310] sm:$0xff]
  %v7669 = vld [vmem:[%s7569 + $0x318] sm:$0xff]
  %v7670 = vld [vmem:[%s7569 + $0x320] sm:$0xff]
  %v7671 = vld [vmem:[%s7569 + $0x328] sm:$0xff]
  %v7672 = vld [vmem:[%s7569 + $0x330] sm:$0xff]
  %v7673 = vld [vmem:[%s7569 + $0x338] sm:$0xff]
  %v7674 = vld [vmem:[%s7569 + $0x340] sm:$0xff]
  %v7675 = vld [vmem:[%s7569 + $0x348] sm:$0xff]
  %v7676 = vld [vmem:[%s7569 + $0x350] sm:$0xff]
  %v7677 = vld [vmem:[%s7569 + $0x358] sm:$0xff]
  %v7678 = vld [vmem:[%s7569 + $0x360] sm:$0xff]
  %v7679 = vld [vmem:[%s7569 + $0x368] sm:$0xff]
  %v7680 = vld [vmem:[%s7569 + $0x370] sm:$0xff]
  %v7681 = vld [vmem:[%s7569 + $0x378] sm:$0xff]
  %v7682 = vld [vmem:[%s7569 + $0x380] sm:$0xff]
  %v7683 = vld [vmem:[%s7569 + $0x388] sm:$0xff]
  %v7684 = vld [vmem:[%s7569 + $0x390] sm:$0xff]
  %v7685 = vld [vmem:[%s7569 + $0x398] sm:$0xff]
  %v7686 = vld [vmem:[%s7569 + $0x3a0] sm:$0xff]
  %v7687 = vld [vmem:[%s7569 + $0x3a8] sm:$0xff]
  %v7688 = vld [vmem:[%s7569 + $0x3b0] sm:$0xff]
  %v7689 = vld [vmem:[%s7569 + $0x3b8] sm:$0xff]
  %v7690 = vld [vmem:[%s7569 + $0x3c0] sm:$0xff]
  %v7691 = vld [vmem:[%s7569 + $0x3c8] sm:$0xff]
  %v7692 = vld [vmem:[%s7569 + $0x3d0] sm:$0xff]
  %v7693 = vld [vmem:[%s7569 + $0x3d8] sm:$0xff]
  %v7694 = vld [vmem:[%s7569 + $0x3e0] sm:$0xff]
  %v7695 = vld [vmem:[%s7569 + $0x3e8] sm:$0xff]
  %v7696 = vld [vmem:[%s7569 + $0x3f0] sm:$0xff]
  %v7697 = vld [vmem:[%s7569 + $0x3f8] sm:$0xff]
  %7698 = vrot.lane.b32.xlu0 %v6052, 122
  %v7699 = vpop.permute.xlu0 %7698
  %7700 = vrot.lane.b32.xlu0 %v6053, 122
  %v7701 = vpop.permute.xlu0 %7700
  %7702 = vrot.lane.b32.xlu0 %v6054, 122
  %v7703 = vpop.permute.xlu0 %7702
  %7704 = vrot.lane.b32.xlu0 %v6055, 122
  %v7705 = vpop.permute.xlu0 %7704
  %7706 = vrot.lane.b32.xlu0 %v6056, 122
  %v7707 = vpop.permute.xlu0 %7706
  %7708 = vrot.lane.b32.xlu0 %v6057, 122
  %v7709 = vpop.permute.xlu0 %7708
  %7710 = vrot.lane.b32.xlu0 %v6058, 122
  %v7711 = vpop.permute.xlu0 %7710
  %7712 = vrot.lane.b32.xlu0 %v6059, 122
  %v7713 = vpop.permute.xlu0 %7712
  %7714 = vrot.lane.b32.xlu0 %v6060, 122
  %v7715 = vpop.permute.xlu0 %7714
  %7716 = vrot.lane.b32.xlu0 %v6061, 122
  %v7717 = vpop.permute.xlu0 %7716
  %7718 = vrot.lane.b32.xlu0 %v6062, 122
  %v7719 = vpop.permute.xlu0 %7718
  %7720 = vrot.lane.b32.xlu0 %v6063, 122
  %v7721 = vpop.permute.xlu0 %7720
  %7722 = vrot.lane.b32.xlu0 %v6064, 122
  %v7723 = vpop.permute.xlu0 %7722
  %7724 = vrot.lane.b32.xlu0 %v6065, 122
  %v7725 = vpop.permute.xlu0 %7724
  %7726 = vrot.lane.b32.xlu0 %v6066, 122
  %v7727 = vpop.permute.xlu0 %7726
  %7728 = vrot.lane.b32.xlu0 %v6067, 122
  %v7729 = vpop.permute.xlu0 %7728
  %7730 = vrot.lane.b32.xlu0 %v6068, 122
  %v7731 = vpop.permute.xlu0 %7730
  %7732 = vrot.lane.b32.xlu0 %v6069, 122
  %v7733 = vpop.permute.xlu0 %7732
  %7734 = vrot.lane.b32.xlu0 %v6070, 122
  %v7735 = vpop.permute.xlu0 %7734
  %7736 = vrot.lane.b32.xlu0 %v6071, 122
  %v7737 = vpop.permute.xlu0 %7736
  %7738 = vrot.lane.b32.xlu0 %v6072, 122
  %v7739 = vpop.permute.xlu0 %7738
  %v7762 = vsel %vm6414, %v7571, 0
  %v7765 = vsel %vm6414, %v7573, 0
  %v7768 = vsel %vm6414, %v7575, 0
  %v7771 = vsel %vm6414, %v7577, 0
  %v7774 = vsel %vm6414, %v7579, 0
  %v7777 = vsel %vm6414, %v7581, 0
  %v7780 = vsel %vm6414, %v7583, 0
  %v7783 = vsel %vm6414, %v7585, 0
  %v7786 = vsel %vm6414, %v7587, 0
  %v7789 = vsel %vm6414, %v7589, 0
  %v7792 = vsel %vm6414, %v7591, 0
  %v7795 = vsel %vm6414, %v7593, 0
  %v7798 = vsel %vm6414, %v7595, 0
  %v7801 = vsel %vm6414, %v7597, 0
  %v7804 = vsel %vm6414, %v7599, 0
  %v7807 = vsel %vm6414, %v7601, 0
  %v7810 = vsel %vm6414, %v7603, 0
  %v7813 = vsel %vm6414, %v7605, 0
  %v7816 = vsel %vm6414, %v7607, 0
  %v7819 = vsel %vm6414, %v7609, 0
  %v7822 = vsel %vm6414, %v7611, 0
  %v7825 = vsel %vm6414, %v7613, 0
  %v7828 = vsel %vm6414, %v7615, 0
  %v7831 = vsel %vm6414, %v7617, 0
  %v7834 = vsel %vm6414, %v7619, 0
  %v7837 = vsel %vm6414, %v7621, 0
  %v7840 = vsel %vm6414, %v7623, 0
  %v7843 = vsel %vm6414, %v7625, 0
  %v7846 = vsel %vm6414, %v7627, 0
  %v7849 = vsel %vm6414, %v7629, 0
  %v7852 = vsel %vm6414, %v7631, 0
  %v7855 = vsel %vm6414, %v7633, 0
  %v7858 = vsel %vm6414, %v7635, 0
  %v7861 = vsel %vm6414, %v7637, 0
  %v7864 = vsel %vm6414, %v7639, 0
  %v7867 = vsel %vm6414, %v7641, 0
  %v7870 = vsel %vm6414, %v7643, 0
  %v7873 = vsel %vm6414, %v7645, 0
  %v7876 = vsel %vm6414, %v7647, 0
  %v7879 = vsel %vm6414, %v7649, 0
  %v7882 = vsel %vm6414, %v7651, 0
  %v7885 = vsel %vm6414, %v7653, 0
  %v7888 = vsel %vm6414, %v7655, 0
  %v7891 = vsel %vm6414, %v7657, 0
  %v7894 = vsel %vm6414, %v7659, 0
  %v7897 = vsel %vm6414, %v7661, 0
  %v7900 = vsel %vm6414, %v7663, 0
  %v7903 = vsel %vm6414, %v7665, 0
  %v7906 = vsel %vm6414, %v7667, 0
  %v7909 = vsel %vm6414, %v7669, 0
  %v7912 = vsel %vm6414, %v7671, 0
  %v7915 = vsel %vm6414, %v7673, 0
  %v7918 = vsel %vm6414, %v7675, 0
  %v7921 = vsel %vm6414, %v7677, 0
  %v7924 = vsel %vm6414, %v7679, 0
  %v7927 = vsel %vm6414, %v7681, 0
  %v7930 = vsel %vm6414, %v7683, 0
  %v7933 = vsel %vm6414, %v7685, 0
  %v7936 = vsel %vm6414, %v7687, 0
  %v7939 = vsel %vm6414, %v7689, 0
  %v7942 = vsel %vm6414, %v7691, 0
  %v7945 = vsel %vm6414, %v7693, 0
  %v7948 = vsel %vm6414, %v7695, 0
  %v7951 = vsel %vm6414, %v7697, 0
  %7953 = vmatprep.subr.mxu0 0.0
  %7954 = vmatpush1.msra.mxu0 %v7729
  %7955 = vmatprep.subr.mxu0 0.0
  %7956 = vmatpush1.msra.mxu0 %v7727
  %7957 = vmatprep.subr.mxu0 0.0
  %7958 = vmatpush1.msra.mxu0 %v7725
  %7959 = vmatprep.subr.mxu0 0.0
  %7960 = vmatpush1.msra.mxu0 %v7723
  %7961 = vmatprep.subr.mxu0 0.0
  %7962 = vmatpush1.msra.mxu0 %v7721
  %7963 = vmatprep.subr.mxu0 0.0
  %7964 = vmatpush1.msra.mxu0 %v7719
  %7965 = vmatprep.subr.mxu0 0.0
  %7966 = vmatpush1.msra.mxu0 %v7717
  %7967 = vmatprep.subr.mxu0 0.0
  %7968 = vmatpush1.msra.mxu0 %v7715
  %7969 = vmatprep.subr.mxu0 0.0
  %7970 = vmatpush1.msra.mxu0 %v7713
  %7971 = vmatprep.subr.mxu0 0.0
  %7972 = vmatpush1.msra.mxu0 %v7711
  %7973 = vmatprep.subr.mxu0 0.0
  %7974 = vmatpush1.msra.mxu0 %v7709
  %7975 = vmatprep.subr.mxu0 0.0
  %7976 = vmatpush1.msra.mxu0 %v7707
  %7977 = vmatprep.subr.mxu0 0.0
  %7978 = vmatpush1.msra.mxu0 %v7705
  %7979 = vmatprep.subr.mxu0 0.0
  %7980 = vmatpush1.msra.mxu0 %v7703
  %7981 = vmatprep.subr.mxu0 0.0
  %7982 = vmatpush1.msra.mxu0 %v7701
  %7983 = vmatprep.subr.mxu0 0.0
  %7984 = vmatpush1.msra.mxu0 %v7699
  %7985 = vmatprep.subr.mxu0 0.0
  %7986 = vmatpush2.msra.mxu0 0.0
  %7987 = vmatprep.subr.mxu0 0.0
  %7988 = vmatpush2.msra.mxu0 0.0
  %7989 = vmatprep.subr.mxu0 0.0
  %7990 = vmatpush2.msra.mxu0 0.0
  %7991 = vmatprep.subr.mxu0 0.0
  %7992 = vmatpush2.msra.mxu0 0.0
  %7993 = vmatprep.subr.mxu0 0.0
  %7994 = vmatpush2.msra.mxu0 0.0
  %7995 = vmatprep.subr.mxu0 0.0
  %7996 = vmatpush2.msra.mxu0 0.0
  %7997 = vmatprep.subr.mxu0 0.0
  %7998 = vmatpush2.msra.mxu0 0.0
  %7999 = vmatprep.subr.mxu0 0.0
  %8000 = vmatpush2.msra.mxu0 0.0
  %8001 = vmatprep.subr.mxu0 0.0
  %8002 = vmatpush2.msra.mxu0 0.0
  %8003 = vmatprep.subr.mxu0 0.0
  %8004 = vmatpush2.msra.mxu0 0.0
  %8005 = vmatprep.subr.mxu0 0.0
  %8006 = vmatpush2.msra.mxu0 0.0
  %8007 = vmatprep.subr.mxu0 0.0
  %8008 = vmatpush2.msra.mxu0 %v7739
  %8009 = vmatprep.subr.mxu0 0.0
  %8010 = vmatpush2.msra.mxu0 %v7737
  %8011 = vmatprep.subr.mxu0 0.0
  %8012 = vmatpush2.msra.mxu0 %v7735
  %8013 = vmatprep.subr.mxu0 0.0
  %8014 = vmatpush2.msra.mxu0 %v7733
  %8015 = vmatprep.subr.mxu0 0.0
  %8016 = vmatpush2.msra.mxu0 %v7731
  %8017 = vmatprep.mubr.f32.mxu0 %v7762
  %8018 = vmatmul.mubr.f32.gmra.mxu0 %v7570
  %v8019 = vpop.f32.mrf.mxu0
  %v8020 = vadd.f32 0.0, %v8019
  %v8021 = vpop.f32.mrf.mxu0
  %8022 = vmatprep.mubr.f32.mxu0 %v7765
  %8023 = vmatmul.mubr.f32.gmra.mxu0 %v7572
  %v8024 = vpop.f32.mrf.mxu0
  %v8025 = vadd.f32 0.0, %v8024
  %v8026 = vpop.f32.mrf.mxu0
  %8027 = vmatprep.mubr.f32.mxu0 %v7768
  %8028 = vmatmul.mubr.f32.gmra.mxu0 %v7574
  %v8029 = vpop.f32.mrf.mxu0
  %v8030 = vadd.f32 0.0, %v8029
  %v8031 = vpop.f32.mrf.mxu0
  %8032 = vmatprep.mubr.f32.mxu0 %v7771
  %8033 = vmatmul.mubr.f32.gmra.mxu0 %v7576
  %v8034 = vpop.f32.mrf.mxu0
  %v8035 = vadd.f32 0.0, %v8034
  %v8036 = vpop.f32.mrf.mxu0
  %8037 = vmatprep.mubr.f32.mxu0 %v7774
  %8038 = vmatmul.mubr.f32.gmra.mxu0 %v7578
  %v8039 = vpop.f32.mrf.mxu0
  %v8040 = vadd.f32 0.0, %v8039
  %v8041 = vpop.f32.mrf.mxu0
  %8042 = vmatprep.mubr.f32.mxu0 %v7777
  %8043 = vmatmul.mubr.f32.gmra.mxu0 %v7580
  %v8044 = vpop.f32.mrf.mxu0
  %v8045 = vadd.f32 0.0, %v8044
  %v8046 = vpop.f32.mrf.mxu0
  %8047 = vmatprep.mubr.f32.mxu0 %v7780
  %8048 = vmatmul.mubr.f32.gmra.mxu0 %v7582
  %v8049 = vpop.f32.mrf.mxu0
  %v8050 = vadd.f32 0.0, %v8049
  %v8051 = vpop.f32.mrf.mxu0
  %8052 = vmatprep.mubr.f32.mxu0 %v7783
  %8053 = vmatmul.mubr.f32.gmra.mxu0 %v7584
  %v8054 = vpop.f32.mrf.mxu0
  %v8055 = vadd.f32 0.0, %v8054
  %v8056 = vpop.f32.mrf.mxu0
  %8057 = vmatprep.mubr.f32.mxu0 %v7786
  %8058 = vmatmul.mubr.f32.gmra.mxu0 %v7586
  %v8059 = vpop.f32.mrf.mxu0
  %v8060 = vadd.f32 0.0, %v8059
  %v8061 = vpop.f32.mrf.mxu0
  %8062 = vmatprep.mubr.f32.mxu0 %v7789
  %8063 = vmatmul.mubr.f32.gmra.mxu0 %v7588
  %v8064 = vpop.f32.mrf.mxu0
  %v8065 = vadd.f32 0.0, %v8064
  %v8066 = vpop.f32.mrf.mxu0
  %8067 = vmatprep.mubr.f32.mxu0 %v7792
  %8068 = vmatmul.mubr.f32.gmra.mxu0 %v7590
  %v8069 = vpop.f32.mrf.mxu0
  %v8070 = vadd.f32 0.0, %v8069
  %v8071 = vpop.f32.mrf.mxu0
  %8072 = vmatprep.mubr.f32.mxu0 %v7795
  %8073 = vmatmul.mubr.f32.gmra.mxu0 %v7592
  %v8074 = vpop.f32.mrf.mxu0
  %v8075 = vadd.f32 0.0, %v8074
  %v8076 = vpop.f32.mrf.mxu0
  %8077 = vmatprep.mubr.f32.mxu0 %v7798
  %8078 = vmatmul.mubr.f32.gmra.mxu0 %v7594
  %v8079 = vpop.f32.mrf.mxu0
  %v8080 = vadd.f32 0.0, %v8079
  %v8081 = vpop.f32.mrf.mxu0
  %8082 = vmatprep.mubr.f32.mxu0 %v7801
  %8083 = vmatmul.mubr.f32.gmra.mxu0 %v7596
  %v8084 = vpop.f32.mrf.mxu0
  %v8085 = vadd.f32 0.0, %v8084
  %v8086 = vpop.f32.mrf.mxu0
  %8087 = vmatprep.mubr.f32.mxu0 %v7804
  %8088 = vmatmul.mubr.f32.gmra.mxu0 %v7598
  %v8089 = vpop.f32.mrf.mxu0
  %v8090 = vadd.f32 0.0, %v8089
  %v8091 = vpop.f32.mrf.mxu0
  %8092 = vmatprep.mubr.f32.mxu0 %v7807
  %8093 = vmatmul.mubr.f32.gmra.mxu0 %v7600
  %v8094 = vpop.f32.mrf.mxu0
  %v8095 = vadd.f32 0.0, %v8094
  %v8096 = vpop.f32.mrf.mxu0
  %8097 = vmatprep.mubr.f32.mxu0 %v7810
  %8098 = vmatmul.mubr.f32.gmra.mxu0 %v7602
  %v8099 = vpop.f32.mrf.mxu0
  %v8100 = vadd.f32 0.0, %v8099
  %v8101 = vpop.f32.mrf.mxu0
  %8102 = vmatprep.mubr.f32.mxu0 %v7813
  %8103 = vmatmul.mubr.f32.gmra.mxu0 %v7604
  %v8104 = vpop.f32.mrf.mxu0
  %v8105 = vadd.f32 0.0, %v8104
  %v8106 = vpop.f32.mrf.mxu0
  %8107 = vmatprep.mubr.f32.mxu0 %v7816
  %8108 = vmatmul.mubr.f32.gmra.mxu0 %v7606
  %v8109 = vpop.f32.mrf.mxu0
  %v8110 = vadd.f32 0.0, %v8109
  %v8111 = vpop.f32.mrf.mxu0
  %8112 = vmatprep.mubr.f32.mxu0 %v7819
  %8113 = vmatmul.mubr.f32.gmra.mxu0 %v7608
  %v8114 = vpop.f32.mrf.mxu0
  %v8115 = vadd.f32 0.0, %v8114
  %v8116 = vpop.f32.mrf.mxu0
  %8117 = vmatprep.mubr.f32.mxu0 %v7822
  %8118 = vmatmul.mubr.f32.gmra.mxu0 %v7610
  %v8119 = vpop.f32.mrf.mxu0
  %v8120 = vadd.f32 0.0, %v8119
  %v8121 = vpop.f32.mrf.mxu0
  %8122 = vmatprep.mubr.f32.mxu0 %v7825
  %8123 = vmatmul.mubr.f32.gmra.mxu0 %v7612
  %v8124 = vpop.f32.mrf.mxu0
  %v8125 = vadd.f32 0.0, %v8124
  %v8126 = vpop.f32.mrf.mxu0
  %8127 = vmatprep.mubr.f32.mxu0 %v7828
  %8128 = vmatmul.mubr.f32.gmra.mxu0 %v7614
  %v8129 = vpop.f32.mrf.mxu0
  %v8130 = vadd.f32 0.0, %v8129
  %v8131 = vpop.f32.mrf.mxu0
  %8132 = vmatprep.mubr.f32.mxu0 %v7831
  %8133 = vmatmul.mubr.f32.gmra.mxu0 %v7616
  %v8134 = vpop.f32.mrf.mxu0
  %v8135 = vadd.f32 0.0, %v8134
  %v8136 = vpop.f32.mrf.mxu0
  %8137 = vmatprep.mubr.f32.mxu0 %v7834
  %8138 = vmatmul.mubr.f32.gmra.mxu0 %v7618
  %v8139 = vpop.f32.mrf.mxu0
  %v8140 = vadd.f32 0.0, %v8139
  %v8141 = vpop.f32.mrf.mxu0
  %8142 = vmatprep.mubr.f32.mxu0 %v7837
  %8143 = vmatmul.mubr.f32.gmra.mxu0 %v7620
  %v8144 = vpop.f32.mrf.mxu0
  %v8145 = vadd.f32 0.0, %v8144
  %v8146 = vpop.f32.mrf.mxu0
  %8147 = vmatprep.mubr.f32.mxu0 %v7840
  %8148 = vmatmul.mubr.f32.gmra.mxu0 %v7622
  %v8149 = vpop.f32.mrf.mxu0
  %v8150 = vadd.f32 0.0, %v8149
  %v8151 = vpop.f32.mrf.mxu0
  %8152 = vmatprep.mubr.f32.mxu0 %v7843
  %8153 = vmatmul.mubr.f32.gmra.mxu0 %v7624
  %v8154 = vpop.f32.mrf.mxu0
  %v8155 = vadd.f32 0.0, %v8154
  %v8156 = vpop.f32.mrf.mxu0
  %8157 = vmatprep.mubr.f32.mxu0 %v7846
  %8158 = vmatmul.mubr.f32.gmra.mxu0 %v7626
  %v8159 = vpop.f32.mrf.mxu0
  %v8160 = vadd.f32 0.0, %v8159
  %v8161 = vpop.f32.mrf.mxu0
  %8162 = vmatprep.mubr.f32.mxu0 %v7849
  %8163 = vmatmul.mubr.f32.gmra.mxu0 %v7628
  %v8164 = vpop.f32.mrf.mxu0
  %v8165 = vadd.f32 0.0, %v8164
  %v8166 = vpop.f32.mrf.mxu0
  %8167 = vmatprep.mubr.f32.mxu0 %v7852
  %8168 = vmatmul.mubr.f32.gmra.mxu0 %v7630
  %v8169 = vpop.f32.mrf.mxu0
  %v8170 = vadd.f32 0.0, %v8169
  %v8171 = vpop.f32.mrf.mxu0
  %8172 = vmatprep.mubr.f32.mxu0 %v7855
  %8173 = vmatmul.mubr.f32.gmra.mxu0 %v7632
  %v8174 = vpop.f32.mrf.mxu0
  %v8175 = vadd.f32 0.0, %v8174
  %v8176 = vpop.f32.mrf.mxu0
  %8177 = vmatprep.mubr.f32.mxu0 %v7858
  %8178 = vmatmul.mubr.f32.gmra.mxu0 %v7634
  %v8179 = vpop.f32.mrf.mxu0
  %v8180 = vadd.f32 0.0, %v8179
  %v8181 = vpop.f32.mrf.mxu0
  %8182 = vmatprep.mubr.f32.mxu0 %v7861
  %8183 = vmatmul.mubr.f32.gmra.mxu0 %v7636
  %v8184 = vpop.f32.mrf.mxu0
  %v8185 = vadd.f32 0.0, %v8184
  %v8186 = vpop.f32.mrf.mxu0
  %8187 = vmatprep.mubr.f32.mxu0 %v7864
  %8188 = vmatmul.mubr.f32.gmra.mxu0 %v7638
  %v8189 = vpop.f32.mrf.mxu0
  %v8190 = vadd.f32 0.0, %v8189
  %v8191 = vpop.f32.mrf.mxu0
  %8192 = vmatprep.mubr.f32.mxu0 %v7867
  %8193 = vmatmul.mubr.f32.gmra.mxu0 %v7640
  %v8194 = vpop.f32.mrf.mxu0
  %v8195 = vadd.f32 0.0, %v8194
  %v8196 = vpop.f32.mrf.mxu0
  %8197 = vmatprep.mubr.f32.mxu0 %v7870
  %8198 = vmatmul.mubr.f32.gmra.mxu0 %v7642
  %v8199 = vpop.f32.mrf.mxu0
  %v8200 = vadd.f32 0.0, %v8199
  %v8201 = vpop.f32.mrf.mxu0
  %8202 = vmatprep.mubr.f32.mxu0 %v7873
  %8203 = vmatmul.mubr.f32.gmra.mxu0 %v7644
  %v8204 = vpop.f32.mrf.mxu0
  %v8205 = vadd.f32 0.0, %v8204
  %v8206 = vpop.f32.mrf.mxu0
  %8207 = vmatprep.mubr.f32.mxu0 %v7876
  %8208 = vmatmul.mubr.f32.gmra.mxu0 %v7646
  %v8209 = vpop.f32.mrf.mxu0
  %v8210 = vadd.f32 0.0, %v8209
  %v8211 = vpop.f32.mrf.mxu0
  %8212 = vmatprep.mubr.f32.mxu0 %v7879
  %8213 = vmatmul.mubr.f32.gmra.mxu0 %v7648
  %v8214 = vpop.f32.mrf.mxu0
  %v8215 = vadd.f32 0.0, %v8214
  %v8216 = vpop.f32.mrf.mxu0
  %8217 = vmatprep.mubr.f32.mxu0 %v7882
  %8218 = vmatmul.mubr.f32.gmra.mxu0 %v7650
  %v8219 = vpop.f32.mrf.mxu0
  %v8220 = vadd.f32 0.0, %v8219
  %v8221 = vpop.f32.mrf.mxu0
  %8222 = vmatprep.mubr.f32.mxu0 %v7885
  %8223 = vmatmul.mubr.f32.gmra.mxu0 %v7652
  %v8224 = vpop.f32.mrf.mxu0
  %v8225 = vadd.f32 0.0, %v8224
  %v8226 = vpop.f32.mrf.mxu0
  %8227 = vmatprep.mubr.f32.mxu0 %v7888
  %8228 = vmatmul.mubr.f32.gmra.mxu0 %v7654
  %v8229 = vpop.f32.mrf.mxu0
  %v8230 = vadd.f32 0.0, %v8229
  %v8231 = vpop.f32.mrf.mxu0
  %8232 = vmatprep.mubr.f32.mxu0 %v7891
  %8233 = vmatmul.mubr.f32.gmra.mxu0 %v7656
  %v8234 = vpop.f32.mrf.mxu0
  %v8235 = vadd.f32 0.0, %v8234
  %v8236 = vpop.f32.mrf.mxu0
  %8237 = vmatprep.mubr.f32.mxu0 %v7894
  %8238 = vmatmul.mubr.f32.gmra.mxu0 %v7658
  %v8239 = vpop.f32.mrf.mxu0
  %v8240 = vadd.f32 0.0, %v8239
  %v8241 = vpop.f32.mrf.mxu0
  %8242 = vmatprep.mubr.f32.mxu0 %v7897
  %8243 = vmatmul.mubr.f32.gmra.mxu0 %v7660
  %v8244 = vpop.f32.mrf.mxu0
  %v8245 = vadd.f32 0.0, %v8244
  %v8246 = vpop.f32.mrf.mxu0
  %8247 = vmatprep.mubr.f32.mxu0 %v7900
  %8248 = vmatmul.mubr.f32.gmra.mxu0 %v7662
  %v8249 = vpop.f32.mrf.mxu0
  %v8250 = vadd.f32 0.0, %v8249
  %v8251 = vpop.f32.mrf.mxu0
  %8252 = vmatprep.mubr.f32.mxu0 %v7903
  %8253 = vmatmul.mubr.f32.gmra.mxu0 %v7664
  %v8254 = vpop.f32.mrf.mxu0
  %v8255 = vadd.f32 0.0, %v8254
  %v8256 = vpop.f32.mrf.mxu0
  %8257 = vmatprep.mubr.f32.mxu0 %v7906
  %8258 = vmatmul.mubr.f32.gmra.mxu0 %v7666
  %v8259 = vpop.f32.mrf.mxu0
  %v8260 = vadd.f32 0.0, %v8259
  %v8261 = vpop.f32.mrf.mxu0
  %8262 = vmatprep.mubr.f32.mxu0 %v7909
  %8263 = vmatmul.mubr.f32.gmra.mxu0 %v7668
  %v8264 = vpop.f32.mrf.mxu0
  %v8265 = vadd.f32 0.0, %v8264
  %v8266 = vpop.f32.mrf.mxu0
  %8267 = vmatprep.mubr.f32.mxu0 %v7912
  %8268 = vmatmul.mubr.f32.gmra.mxu0 %v7670
  %v8269 = vpop.f32.mrf.mxu0
  %v8270 = vadd.f32 0.0, %v8269
  %v8271 = vpop.f32.mrf.mxu0
  %8272 = vmatprep.mubr.f32.mxu0 %v7915
  %8273 = vmatmul.mubr.f32.gmra.mxu0 %v7672
  %v8274 = vpop.f32.mrf.mxu0
  %v8275 = vadd.f32 0.0, %v8274
  %v8276 = vpop.f32.mrf.mxu0
  %8277 = vmatprep.mubr.f32.mxu0 %v7918
  %8278 = vmatmul.mubr.f32.gmra.mxu0 %v7674
  %v8279 = vpop.f32.mrf.mxu0
  %v8280 = vadd.f32 0.0, %v8279
  %v8281 = vpop.f32.mrf.mxu0
  %8282 = vmatprep.mubr.f32.mxu0 %v7921
  %8283 = vmatmul.mubr.f32.gmra.mxu0 %v7676
  %v8284 = vpop.f32.mrf.mxu0
  %v8285 = vadd.f32 0.0, %v8284
  %v8286 = vpop.f32.mrf.mxu0
  %8287 = vmatprep.mubr.f32.mxu0 %v7924
  %8288 = vmatmul.mubr.f32.gmra.mxu0 %v7678
  %v8289 = vpop.f32.mrf.mxu0
  %v8290 = vadd.f32 0.0, %v8289
  %v8291 = vpop.f32.mrf.mxu0
  %8292 = vmatprep.mubr.f32.mxu0 %v7927
  %8293 = vmatmul.mubr.f32.gmra.mxu0 %v7680
  %v8294 = vpop.f32.mrf.mxu0
  %v8295 = vadd.f32 0.0, %v8294
  %v8296 = vpop.f32.mrf.mxu0
  %8297 = vmatprep.mubr.f32.mxu0 %v7930
  %8298 = vmatmul.mubr.f32.gmra.mxu0 %v7682
  %v8299 = vpop.f32.mrf.mxu0
  %v8300 = vadd.f32 0.0, %v8299
  %v8301 = vpop.f32.mrf.mxu0
  %8302 = vmatprep.mubr.f32.mxu0 %v7933
  %8303 = vmatmul.mubr.f32.gmra.mxu0 %v7684
  %v8304 = vpop.f32.mrf.mxu0
  %v8305 = vadd.f32 0.0, %v8304
  %v8306 = vpop.f32.mrf.mxu0
  %8307 = vmatprep.mubr.f32.mxu0 %v7936
  %8308 = vmatmul.mubr.f32.gmra.mxu0 %v7686
  %v8309 = vpop.f32.mrf.mxu0
  %v8310 = vadd.f32 0.0, %v8309
  %v8311 = vpop.f32.mrf.mxu0
  %8312 = vmatprep.mubr.f32.mxu0 %v7939
  %8313 = vmatmul.mubr.f32.gmra.mxu0 %v7688
  %v8314 = vpop.f32.mrf.mxu0
  %v8315 = vadd.f32 0.0, %v8314
  %v8316 = vpop.f32.mrf.mxu0
  %8317 = vmatprep.mubr.f32.mxu0 %v7942
  %8318 = vmatmul.mubr.f32.gmra.mxu0 %v7690
  %v8319 = vpop.f32.mrf.mxu0
  %v8320 = vadd.f32 0.0, %v8319
  %v8321 = vpop.f32.mrf.mxu0
  %8322 = vmatprep.mubr.f32.mxu0 %v7945
  %8323 = vmatmul.mubr.f32.gmra.mxu0 %v7692
  %v8324 = vpop.f32.mrf.mxu0
  %v8325 = vadd.f32 0.0, %v8324
  %v8326 = vpop.f32.mrf.mxu0
  %8327 = vmatprep.mubr.f32.mxu0 %v7948
  %8328 = vmatmul.mubr.f32.gmra.mxu0 %v7694
  %v8329 = vpop.f32.mrf.mxu0
  %v8330 = vadd.f32 0.0, %v8329
  %v8331 = vpop.f32.mrf.mxu0
  %8332 = vmatprep.mubr.f32.mxu0 %v7951
  %8333 = vmatmul.mubr.f32.gmra.mxu0 %v7696
  %v8334 = vpop.f32.mrf.mxu0
  %v8335 = vadd.f32 0.0, %v8334
  %v8336 = vpop.f32.mrf.mxu0
  %8337 = vdwg.mxu0
  %v8338 = vadd.f32 %v7251, %v8020
  %v8339 = vadd.f32 %v7256, %v8025
  %v8340 = vadd.f32 %v7261, %v8030
  %v8341 = vadd.f32 %v7266, %v8035
  %v8342 = vadd.f32 %v7271, %v8040
  %v8343 = vadd.f32 %v7276, %v8045
  %v8344 = vadd.f32 %v7281, %v8050
  %v8345 = vadd.f32 %v7286, %v8055
  %v8346 = vadd.f32 %v7291, %v8060
  %v8347 = vadd.f32 %v7296, %v8065
  %v8348 = vadd.f32 %v7301, %v8070
  %v8349 = vadd.f32 %v7306, %v8075
  %v8350 = vadd.f32 %v7311, %v8080
  %v8351 = vadd.f32 %v7316, %v8085
  %v8352 = vadd.f32 %v7321, %v8090
  %v8353 = vadd.f32 %v7326, %v8095
  %v8354 = vadd.f32 %v7331, %v8100
  %v8355 = vadd.f32 %v7336, %v8105
  %v8356 = vadd.f32 %v7341, %v8110
  %v8357 = vadd.f32 %v7346, %v8115
  %v8358 = vadd.f32 %v7351, %v8120
  %v8359 = vadd.f32 %v7356, %v8125
  %v8360 = vadd.f32 %v7361, %v8130
  %v8361 = vadd.f32 %v7366, %v8135
  %v8362 = vadd.f32 %v7371, %v8140
  %v8363 = vadd.f32 %v7376, %v8145
  %v8364 = vadd.f32 %v7381, %v8150
  %v8365 = vadd.f32 %v7386, %v8155
  %v8366 = vadd.f32 %v7391, %v8160
  %v8367 = vadd.f32 %v7396, %v8165
  %v8368 = vadd.f32 %v7401, %v8170
  %v8369 = vadd.f32 %v7406, %v8175
  %v8370 = vadd.f32 %v7411, %v8180
  %v8371 = vadd.f32 %v7416, %v8185
  %v8372 = vadd.f32 %v7421, %v8190
  %v8373 = vadd.f32 %v7426, %v8195
  %v8374 = vadd.f32 %v7431, %v8200
  %v8375 = vadd.f32 %v7436, %v8205
  %v8376 = vadd.f32 %v7441, %v8210
  %v8377 = vadd.f32 %v7446, %v8215
  %v8378 = vadd.f32 %v7451, %v8220
  %v8379 = vadd.f32 %v7456, %v8225
  %v8380 = vadd.f32 %v7461, %v8230
  %v8381 = vadd.f32 %v7466, %v8235
  %v8382 = vadd.f32 %v7471, %v8240
  %v8383 = vadd.f32 %v7476, %v8245
  %v8384 = vadd.f32 %v7481, %v8250
  %v8385 = vadd.f32 %v7486, %v8255
  %v8386 = vadd.f32 %v7491, %v8260
  %v8387 = vadd.f32 %v7496, %v8265
  %v8388 = vadd.f32 %v7501, %v8270
  %v8389 = vadd.f32 %v7506, %v8275
  %v8390 = vadd.f32 %v7511, %v8280
  %v8391 = vadd.f32 %v7516, %v8285
  %v8392 = vadd.f32 %v7521, %v8290
  %v8393 = vadd.f32 %v7526, %v8295
  %v8394 = vadd.f32 %v7531, %v8300
  %v8395 = vadd.f32 %v7536, %v8305
  %v8396 = vadd.f32 %v7541, %v8310
  %v8397 = vadd.f32 %v7546, %v8315
  %v8398 = vadd.f32 %v7551, %v8320
  %v8399 = vadd.f32 %v7556, %v8325
  %v8400 = vadd.f32 %v7561, %v8330
  %v8401 = vadd.f32 %v7566, %v8335
  %s8402 = scalar_lea.vmem %s16, 3072
  %v8403 = vld [vmem:[%s8402] sm:$0xff]
  %v8404 = vld [vmem:[%s8402 + $0x8] sm:$0xff]
  %v8405 = vld [vmem:[%s8402 + $0x10] sm:$0xff]
  %v8406 = vld [vmem:[%s8402 + $0x18] sm:$0xff]
  %v8407 = vld [vmem:[%s8402 + $0x20] sm:$0xff]
  %v8408 = vld [vmem:[%s8402 + $0x28] sm:$0xff]
  %v8409 = vld [vmem:[%s8402 + $0x30] sm:$0xff]
  %v8410 = vld [vmem:[%s8402 + $0x38] sm:$0xff]
  %v8411 = vld [vmem:[%s8402 + $0x40] sm:$0xff]
  %v8412 = vld [vmem:[%s8402 + $0x48] sm:$0xff]
  %v8413 = vld [vmem:[%s8402 + $0x50] sm:$0xff]
  %v8414 = vld [vmem:[%s8402 + $0x58] sm:$0xff]
  %v8415 = vld [vmem:[%s8402 + $0x60] sm:$0xff]
  %v8416 = vld [vmem:[%s8402 + $0x68] sm:$0xff]
  %v8417 = vld [vmem:[%s8402 + $0x70] sm:$0xff]
  %v8418 = vld [vmem:[%s8402 + $0x78] sm:$0xff]
  %v8419 = vld [vmem:[%s8402 + $0x80] sm:$0xff]
  %v8420 = vld [vmem:[%s8402 + $0x88] sm:$0xff]
  %v8421 = vld [vmem:[%s8402 + $0x90] sm:$0xff]
  %v8422 = vld [vmem:[%s8402 + $0x98] sm:$0xff]
  %v8423 = vld [vmem:[%s8402 + $0xa0] sm:$0xff]
  %v8424 = vld [vmem:[%s8402 + $0xa8] sm:$0xff]
  %v8425 = vld [vmem:[%s8402 + $0xb0] sm:$0xff]
  %v8426 = vld [vmem:[%s8402 + $0xb8] sm:$0xff]
  %v8427 = vld [vmem:[%s8402 + $0xc0] sm:$0xff]
  %v8428 = vld [vmem:[%s8402 + $0xc8] sm:$0xff]
  %v8429 = vld [vmem:[%s8402 + $0xd0] sm:$0xff]
  %v8430 = vld [vmem:[%s8402 + $0xd8] sm:$0xff]
  %v8431 = vld [vmem:[%s8402 + $0xe0] sm:$0xff]
  %v8432 = vld [vmem:[%s8402 + $0xe8] sm:$0xff]
  %v8433 = vld [vmem:[%s8402 + $0xf0] sm:$0xff]
  %v8434 = vld [vmem:[%s8402 + $0xf8] sm:$0xff]
  %v8435 = vld [vmem:[%s8402 + $0x100] sm:$0xff]
  %v8436 = vld [vmem:[%s8402 + $0x108] sm:$0xff]
  %v8437 = vld [vmem:[%s8402 + $0x110] sm:$0xff]
  %v8438 = vld [vmem:[%s8402 + $0x118] sm:$0xff]
  %v8439 = vld [vmem:[%s8402 + $0x120] sm:$0xff]
  %v8440 = vld [vmem:[%s8402 + $0x128] sm:$0xff]
  %v8441 = vld [vmem:[%s8402 + $0x130] sm:$0xff]
  %v8442 = vld [vmem:[%s8402 + $0x138] sm:$0xff]
  %v8443 = vld [vmem:[%s8402 + $0x140] sm:$0xff]
  %v8444 = vld [vmem:[%s8402 + $0x148] sm:$0xff]
  %v8445 = vld [vmem:[%s8402 + $0x150] sm:$0xff]
  %v8446 = vld [vmem:[%s8402 + $0x158] sm:$0xff]
  %v8447 = vld [vmem:[%s8402 + $0x160] sm:$0xff]
  %v8448 = vld [vmem:[%s8402 + $0x168] sm:$0xff]
  %v8449 = vld [vmem:[%s8402 + $0x170] sm:$0xff]
  %v8450 = vld [vmem:[%s8402 + $0x178] sm:$0xff]
  %v8451 = vld [vmem:[%s8402 + $0x180] sm:$0xff]
  %v8452 = vld [vmem:[%s8402 + $0x188] sm:$0xff]
  %v8453 = vld [vmem:[%s8402 + $0x190] sm:$0xff]
  %v8454 = vld [vmem:[%s8402 + $0x198] sm:$0xff]
  %v8455 = vld [vmem:[%s8402 + $0x1a0] sm:$0xff]
  %v8456 = vld [vmem:[%s8402 + $0x1a8] sm:$0xff]
  %v8457 = vld [vmem:[%s8402 + $0x1b0] sm:$0xff]
  %v8458 = vld [vmem:[%s8402 + $0x1b8] sm:$0xff]
  %v8459 = vld [vmem:[%s8402 + $0x1c0] sm:$0xff]
  %v8460 = vld [vmem:[%s8402 + $0x1c8] sm:$0xff]
  %v8461 = vld [vmem:[%s8402 + $0x1d0] sm:$0xff]
  %v8462 = vld [vmem:[%s8402 + $0x1d8] sm:$0xff]
  %v8463 = vld [vmem:[%s8402 + $0x1e0] sm:$0xff]
  %v8464 = vld [vmem:[%s8402 + $0x1e8] sm:$0xff]
  %v8465 = vld [vmem:[%s8402 + $0x1f0] sm:$0xff]
  %v8466 = vld [vmem:[%s8402 + $0x1f8] sm:$0xff]
  %v8467 = vld [vmem:[%s8402 + $0x200] sm:$0xff]
  %v8468 = vld [vmem:[%s8402 + $0x208] sm:$0xff]
  %v8469 = vld [vmem:[%s8402 + $0x210] sm:$0xff]
  %v8470 = vld [vmem:[%s8402 + $0x218] sm:$0xff]
  %v8471 = vld [vmem:[%s8402 + $0x220] sm:$0xff]
  %v8472 = vld [vmem:[%s8402 + $0x228] sm:$0xff]
  %v8473 = vld [vmem:[%s8402 + $0x230] sm:$0xff]
  %v8474 = vld [vmem:[%s8402 + $0x238] sm:$0xff]
  %v8475 = vld [vmem:[%s8402 + $0x240] sm:$0xff]
  %v8476 = vld [vmem:[%s8402 + $0x248] sm:$0xff]
  %v8477 = vld [vmem:[%s8402 + $0x250] sm:$0xff]
  %v8478 = vld [vmem:[%s8402 + $0x258] sm:$0xff]
  %v8479 = vld [vmem:[%s8402 + $0x260] sm:$0xff]
  %v8480 = vld [vmem:[%s8402 + $0x268] sm:$0xff]
  %v8481 = vld [vmem:[%s8402 + $0x270] sm:$0xff]
  %v8482 = vld [vmem:[%s8402 + $0x278] sm:$0xff]
  %v8483 = vld [vmem:[%s8402 + $0x280] sm:$0xff]
  %v8484 = vld [vmem:[%s8402 + $0x288] sm:$0xff]
  %v8485 = vld [vmem:[%s8402 + $0x290] sm:$0xff]
  %v8486 = vld [vmem:[%s8402 + $0x298] sm:$0xff]
  %v8487 = vld [vmem:[%s8402 + $0x2a0] sm:$0xff]
  %v8488 = vld [vmem:[%s8402 + $0x2a8] sm:$0xff]
  %v8489 = vld [vmem:[%s8402 + $0x2b0] sm:$0xff]
  %v8490 = vld [vmem:[%s8402 + $0x2b8] sm:$0xff]
  %v8491 = vld [vmem:[%s8402 + $0x2c0] sm:$0xff]
  %v8492 = vld [vmem:[%s8402 + $0x2c8] sm:$0xff]
  %v8493 = vld [vmem:[%s8402 + $0x2d0] sm:$0xff]
  %v8494 = vld [vmem:[%s8402 + $0x2d8] sm:$0xff]
  %v8495 = vld [vmem:[%s8402 + $0x2e0] sm:$0xff]
  %v8496 = vld [vmem:[%s8402 + $0x2e8] sm:$0xff]
  %v8497 = vld [vmem:[%s8402 + $0x2f0] sm:$0xff]
  %v8498 = vld [vmem:[%s8402 + $0x2f8] sm:$0xff]
  %v8499 = vld [vmem:[%s8402 + $0x300] sm:$0xff]
  %v8500 = vld [vmem:[%s8402 + $0x308] sm:$0xff]
  %v8501 = vld [vmem:[%s8402 + $0x310] sm:$0xff]
  %v8502 = vld [vmem:[%s8402 + $0x318] sm:$0xff]
  %v8503 = vld [vmem:[%s8402 + $0x320] sm:$0xff]
  %v8504 = vld [vmem:[%s8402 + $0x328] sm:$0xff]
  %v8505 = vld [vmem:[%s8402 + $0x330] sm:$0xff]
  %v8506 = vld [vmem:[%s8402 + $0x338] sm:$0xff]
  %v8507 = vld [vmem:[%s8402 + $0x340] sm:$0xff]
  %v8508 = vld [vmem:[%s8402 + $0x348] sm:$0xff]
  %v8509 = vld [vmem:[%s8402 + $0x350] sm:$0xff]
  %v8510 = vld [vmem:[%s8402 + $0x358] sm:$0xff]
  %v8511 = vld [vmem:[%s8402 + $0x360] sm:$0xff]
  %v8512 = vld [vmem:[%s8402 + $0x368] sm:$0xff]
  %v8513 = vld [vmem:[%s8402 + $0x370] sm:$0xff]
  %v8514 = vld [vmem:[%s8402 + $0x378] sm:$0xff]
  %v8515 = vld [vmem:[%s8402 + $0x380] sm:$0xff]
  %v8516 = vld [vmem:[%s8402 + $0x388] sm:$0xff]
  %v8517 = vld [vmem:[%s8402 + $0x390] sm:$0xff]
  %v8518 = vld [vmem:[%s8402 + $0x398] sm:$0xff]
  %v8519 = vld [vmem:[%s8402 + $0x3a0] sm:$0xff]
  %v8520 = vld [vmem:[%s8402 + $0x3a8] sm:$0xff]
  %v8521 = vld [vmem:[%s8402 + $0x3b0] sm:$0xff]
  %v8522 = vld [vmem:[%s8402 + $0x3b8] sm:$0xff]
  %v8523 = vld [vmem:[%s8402 + $0x3c0] sm:$0xff]
  %v8524 = vld [vmem:[%s8402 + $0x3c8] sm:$0xff]
  %v8525 = vld [vmem:[%s8402 + $0x3d0] sm:$0xff]
  %v8526 = vld [vmem:[%s8402 + $0x3d8] sm:$0xff]
  %v8527 = vld [vmem:[%s8402 + $0x3e0] sm:$0xff]
  %v8528 = vld [vmem:[%s8402 + $0x3e8] sm:$0xff]
  %v8529 = vld [vmem:[%s8402 + $0x3f0] sm:$0xff]
  %v8530 = vld [vmem:[%s8402 + $0x3f8] sm:$0xff]
  %8531 = vrot.lane.b32.xlu0 %v6052, 119
  %v8532 = vpop.permute.xlu0 %8531
  %8533 = vrot.lane.b32.xlu0 %v6053, 119
  %v8534 = vpop.permute.xlu0 %8533
  %8535 = vrot.lane.b32.xlu0 %v6054, 119
  %v8536 = vpop.permute.xlu0 %8535
  %8537 = vrot.lane.b32.xlu0 %v6055, 119
  %v8538 = vpop.permute.xlu0 %8537
  %8539 = vrot.lane.b32.xlu0 %v6056, 119
  %v8540 = vpop.permute.xlu0 %8539
  %8541 = vrot.lane.b32.xlu0 %v6057, 119
  %v8542 = vpop.permute.xlu0 %8541
  %8543 = vrot.lane.b32.xlu0 %v6058, 119
  %v8544 = vpop.permute.xlu0 %8543
  %8545 = vrot.lane.b32.xlu0 %v6059, 119
  %v8546 = vpop.permute.xlu0 %8545
  %8547 = vrot.lane.b32.xlu0 %v6060, 119
  %v8548 = vpop.permute.xlu0 %8547
  %8549 = vrot.lane.b32.xlu0 %v6061, 119
  %v8550 = vpop.permute.xlu0 %8549
  %8551 = vrot.lane.b32.xlu0 %v6062, 119
  %v8552 = vpop.permute.xlu0 %8551
  %8553 = vrot.lane.b32.xlu0 %v6063, 119
  %v8554 = vpop.permute.xlu0 %8553
  %8555 = vrot.lane.b32.xlu0 %v6064, 119
  %v8556 = vpop.permute.xlu0 %8555
  %8557 = vrot.lane.b32.xlu0 %v6065, 119
  %v8558 = vpop.permute.xlu0 %8557
  %8559 = vrot.lane.b32.xlu0 %v6066, 119
  %v8560 = vpop.permute.xlu0 %8559
  %8561 = vrot.lane.b32.xlu0 %v6067, 119
  %v8562 = vpop.permute.xlu0 %8561
  %8563 = vrot.lane.b32.xlu0 %v6068, 119
  %v8564 = vpop.permute.xlu0 %8563
  %8565 = vrot.lane.b32.xlu0 %v6069, 119
  %v8566 = vpop.permute.xlu0 %8565
  %8567 = vrot.lane.b32.xlu0 %v6070, 119
  %v8568 = vpop.permute.xlu0 %8567
  %8569 = vrot.lane.b32.xlu0 %v6071, 119
  %v8570 = vpop.permute.xlu0 %8569
  %8571 = vrot.lane.b32.xlu0 %v6072, 119
  %v8572 = vpop.permute.xlu0 %8571
  %v8595 = vsel %vm6414, %v8404, 0
  %v8598 = vsel %vm6414, %v8406, 0
  %v8601 = vsel %vm6414, %v8408, 0
  %v8604 = vsel %vm6414, %v8410, 0
  %v8607 = vsel %vm6414, %v8412, 0
  %v8610 = vsel %vm6414, %v8414, 0
  %v8613 = vsel %vm6414, %v8416, 0
  %v8616 = vsel %vm6414, %v8418, 0
  %v8619 = vsel %vm6414, %v8420, 0
  %v8622 = vsel %vm6414, %v8422, 0
  %v8625 = vsel %vm6414, %v8424, 0
  %v8628 = vsel %vm6414, %v8426, 0
  %v8631 = vsel %vm6414, %v8428, 0
  %v8634 = vsel %vm6414, %v8430, 0
  %v8637 = vsel %vm6414, %v8432, 0
  %v8640 = vsel %vm6414, %v8434, 0
  %v8643 = vsel %vm6414, %v8436, 0
  %v8646 = vsel %vm6414, %v8438, 0
  %v8649 = vsel %vm6414, %v8440, 0
  %v8652 = vsel %vm6414, %v8442, 0
  %v8655 = vsel %vm6414, %v8444, 0
  %v8658 = vsel %vm6414, %v8446, 0
  %v8661 = vsel %vm6414, %v8448, 0
  %v8664 = vsel %vm6414, %v8450, 0
  %v8667 = vsel %vm6414, %v8452, 0
  %v8670 = vsel %vm6414, %v8454, 0
  %v8673 = vsel %vm6414, %v8456, 0
  %v8676 = vsel %vm6414, %v8458, 0
  %v8679 = vsel %vm6414, %v8460, 0
  %v8682 = vsel %vm6414, %v8462, 0
  %v8685 = vsel %vm6414, %v8464, 0
  %v8688 = vsel %vm6414, %v8466, 0
  %v8691 = vsel %vm6414, %v8468, 0
  %v8694 = vsel %vm6414, %v8470, 0
  %v8697 = vsel %vm6414, %v8472, 0
  %v8700 = vsel %vm6414, %v8474, 0
  %v8703 = vsel %vm6414, %v8476, 0
  %v8706 = vsel %vm6414, %v8478, 0
  %v8709 = vsel %vm6414, %v8480, 0
  %v8712 = vsel %vm6414, %v8482, 0
  %v8715 = vsel %vm6414, %v8484, 0
  %v8718 = vsel %vm6414, %v8486, 0
  %v8721 = vsel %vm6414, %v8488, 0
  %v8724 = vsel %vm6414, %v8490, 0
  %v8727 = vsel %vm6414, %v8492, 0
  %v8730 = vsel %vm6414, %v8494, 0
  %v8733 = vsel %vm6414, %v8496, 0
  %v8736 = vsel %vm6414, %v8498, 0
  %v8739 = vsel %vm6414, %v8500, 0
  %v8742 = vsel %vm6414, %v8502, 0
  %v8745 = vsel %vm6414, %v8504, 0
  %v8748 = vsel %vm6414, %v8506, 0
  %v8751 = vsel %vm6414, %v8508, 0
  %v8754 = vsel %vm6414, %v8510, 0
  %v8757 = vsel %vm6414, %v8512, 0
  %v8760 = vsel %vm6414, %v8514, 0
  %v8763 = vsel %vm6414, %v8516, 0
  %v8766 = vsel %vm6414, %v8518, 0
  %v8769 = vsel %vm6414, %v8520, 0
  %v8772 = vsel %vm6414, %v8522, 0
  %v8775 = vsel %vm6414, %v8524, 0
  %v8778 = vsel %vm6414, %v8526, 0
  %v8781 = vsel %vm6414, %v8528, 0
  %v8784 = vsel %vm6414, %v8530, 0
  %8786 = vmatprep.subr.mxu0 0.0
  %8787 = vmatpush1.msra.mxu0 %v8562
  %8788 = vmatprep.subr.mxu0 0.0
  %8789 = vmatpush1.msra.mxu0 %v8560
  %8790 = vmatprep.subr.mxu0 0.0
  %8791 = vmatpush1.msra.mxu0 %v8558
  %8792 = vmatprep.subr.mxu0 0.0
  %8793 = vmatpush1.msra.mxu0 %v8556
  %8794 = vmatprep.subr.mxu0 0.0
  %8795 = vmatpush1.msra.mxu0 %v8554
  %8796 = vmatprep.subr.mxu0 0.0
  %8797 = vmatpush1.msra.mxu0 %v8552
  %8798 = vmatprep.subr.mxu0 0.0
  %8799 = vmatpush1.msra.mxu0 %v8550
  %8800 = vmatprep.subr.mxu0 0.0
  %8801 = vmatpush1.msra.mxu0 %v8548
  %8802 = vmatprep.subr.mxu0 0.0
  %8803 = vmatpush1.msra.mxu0 %v8546
  %8804 = vmatprep.subr.mxu0 0.0
  %8805 = vmatpush1.msra.mxu0 %v8544
  %8806 = vmatprep.subr.mxu0 0.0
  %8807 = vmatpush1.msra.mxu0 %v8542
  %8808 = vmatprep.subr.mxu0 0.0
  %8809 = vmatpush1.msra.mxu0 %v8540
  %8810 = vmatprep.subr.mxu0 0.0
  %8811 = vmatpush1.msra.mxu0 %v8538
  %8812 = vmatprep.subr.mxu0 0.0
  %8813 = vmatpush1.msra.mxu0 %v8536
  %8814 = vmatprep.subr.mxu0 0.0
  %8815 = vmatpush1.msra.mxu0 %v8534
  %8816 = vmatprep.subr.mxu0 0.0
  %8817 = vmatpush1.msra.mxu0 %v8532
  %8818 = vmatprep.subr.mxu0 0.0
  %8819 = vmatpush2.msra.mxu0 0.0
  %8820 = vmatprep.subr.mxu0 0.0
  %8821 = vmatpush2.msra.mxu0 0.0
  %8822 = vmatprep.subr.mxu0 0.0
  %8823 = vmatpush2.msra.mxu0 0.0
  %8824 = vmatprep.subr.mxu0 0.0
  %8825 = vmatpush2.msra.mxu0 0.0
  %8826 = vmatprep.subr.mxu0 0.0
  %8827 = vmatpush2.msra.mxu0 0.0
  %8828 = vmatprep.subr.mxu0 0.0
  %8829 = vmatpush2.msra.mxu0 0.0
  %8830 = vmatprep.subr.mxu0 0.0
  %8831 = vmatpush2.msra.mxu0 0.0
  %8832 = vmatprep.subr.mxu0 0.0
  %8833 = vmatpush2.msra.mxu0 0.0
  %8834 = vmatprep.subr.mxu0 0.0
  %8835 = vmatpush2.msra.mxu0 0.0
  %8836 = vmatprep.subr.mxu0 0.0
  %8837 = vmatpush2.msra.mxu0 0.0
  %8838 = vmatprep.subr.mxu0 0.0
  %8839 = vmatpush2.msra.mxu0 0.0
  %8840 = vmatprep.subr.mxu0 0.0
  %8841 = vmatpush2.msra.mxu0 %v8572
  %8842 = vmatprep.subr.mxu0 0.0
  %8843 = vmatpush2.msra.mxu0 %v8570
  %8844 = vmatprep.subr.mxu0 0.0
  %8845 = vmatpush2.msra.mxu0 %v8568
  %8846 = vmatprep.subr.mxu0 0.0
  %8847 = vmatpush2.msra.mxu0 %v8566
  %8848 = vmatprep.subr.mxu0 0.0
  %8849 = vmatpush2.msra.mxu0 %v8564
  %8850 = vmatprep.mubr.f32.mxu0 %v8595
  %8851 = vmatmul.mubr.f32.gmra.mxu0 %v8403
  %v8852 = vpop.f32.mrf.mxu0
  %v8853 = vadd.f32 0.0, %v8852
  %v8854 = vpop.f32.mrf.mxu0
  %8855 = vmatprep.mubr.f32.mxu0 %v8598
  %8856 = vmatmul.mubr.f32.gmra.mxu0 %v8405
  %v8857 = vpop.f32.mrf.mxu0
  %v8858 = vadd.f32 0.0, %v8857
  %v8859 = vpop.f32.mrf.mxu0
  %8860 = vmatprep.mubr.f32.mxu0 %v8601
  %8861 = vmatmul.mubr.f32.gmra.mxu0 %v8407
  %v8862 = vpop.f32.mrf.mxu0
  %v8863 = vadd.f32 0.0, %v8862
  %v8864 = vpop.f32.mrf.mxu0
  %8865 = vmatprep.mubr.f32.mxu0 %v8604
  %8866 = vmatmul.mubr.f32.gmra.mxu0 %v8409
  %v8867 = vpop.f32.mrf.mxu0
  %v8868 = vadd.f32 0.0, %v8867
  %v8869 = vpop.f32.mrf.mxu0
  %8870 = vmatprep.mubr.f32.mxu0 %v8607
  %8871 = vmatmul.mubr.f32.gmra.mxu0 %v8411
  %v8872 = vpop.f32.mrf.mxu0
  %v8873 = vadd.f32 0.0, %v8872
  %v8874 = vpop.f32.mrf.mxu0
  %8875 = vmatprep.mubr.f32.mxu0 %v8610
  %8876 = vmatmul.mubr.f32.gmra.mxu0 %v8413
  %v8877 = vpop.f32.mrf.mxu0
  %v8878 = vadd.f32 0.0, %v8877
  %v8879 = vpop.f32.mrf.mxu0
  %8880 = vmatprep.mubr.f32.mxu0 %v8613
  %8881 = vmatmul.mubr.f32.gmra.mxu0 %v8415
  %v8882 = vpop.f32.mrf.mxu0
  %v8883 = vadd.f32 0.0, %v8882
  %v8884 = vpop.f32.mrf.mxu0
  %8885 = vmatprep.mubr.f32.mxu0 %v8616
  %8886 = vmatmul.mubr.f32.gmra.mxu0 %v8417
  %v8887 = vpop.f32.mrf.mxu0
  %v8888 = vadd.f32 0.0, %v8887
  %v8889 = vpop.f32.mrf.mxu0
  %8890 = vmatprep.mubr.f32.mxu0 %v8619
  %8891 = vmatmul.mubr.f32.gmra.mxu0 %v8419
  %v8892 = vpop.f32.mrf.mxu0
  %v8893 = vadd.f32 0.0, %v8892
  %v8894 = vpop.f32.mrf.mxu0
  %8895 = vmatprep.mubr.f32.mxu0 %v8622
  %8896 = vmatmul.mubr.f32.gmra.mxu0 %v8421
  %v8897 = vpop.f32.mrf.mxu0
  %v8898 = vadd.f32 0.0, %v8897
  %v8899 = vpop.f32.mrf.mxu0
  %8900 = vmatprep.mubr.f32.mxu0 %v8625
  %8901 = vmatmul.mubr.f32.gmra.mxu0 %v8423
  %v8902 = vpop.f32.mrf.mxu0
  %v8903 = vadd.f32 0.0, %v8902
  %v8904 = vpop.f32.mrf.mxu0
  %8905 = vmatprep.mubr.f32.mxu0 %v8628
  %8906 = vmatmul.mubr.f32.gmra.mxu0 %v8425
  %v8907 = vpop.f32.mrf.mxu0
  %v8908 = vadd.f32 0.0, %v8907
  %v8909 = vpop.f32.mrf.mxu0
  %8910 = vmatprep.mubr.f32.mxu0 %v8631
  %8911 = vmatmul.mubr.f32.gmra.mxu0 %v8427
  %v8912 = vpop.f32.mrf.mxu0
  %v8913 = vadd.f32 0.0, %v8912
  %v8914 = vpop.f32.mrf.mxu0
  %8915 = vmatprep.mubr.f32.mxu0 %v8634
  %8916 = vmatmul.mubr.f32.gmra.mxu0 %v8429
  %v8917 = vpop.f32.mrf.mxu0
  %v8918 = vadd.f32 0.0, %v8917
  %v8919 = vpop.f32.mrf.mxu0
  %8920 = vmatprep.mubr.f32.mxu0 %v8637
  %8921 = vmatmul.mubr.f32.gmra.mxu0 %v8431
  %v8922 = vpop.f32.mrf.mxu0
  %v8923 = vadd.f32 0.0, %v8922
  %v8924 = vpop.f32.mrf.mxu0
  %8925 = vmatprep.mubr.f32.mxu0 %v8640
  %8926 = vmatmul.mubr.f32.gmra.mxu0 %v8433
  %v8927 = vpop.f32.mrf.mxu0
  %v8928 = vadd.f32 0.0, %v8927
  %v8929 = vpop.f32.mrf.mxu0
  %8930 = vmatprep.mubr.f32.mxu0 %v8643
  %8931 = vmatmul.mubr.f32.gmra.mxu0 %v8435
  %v8932 = vpop.f32.mrf.mxu0
  %v8933 = vadd.f32 0.0, %v8932
  %v8934 = vpop.f32.mrf.mxu0
  %8935 = vmatprep.mubr.f32.mxu0 %v8646
  %8936 = vmatmul.mubr.f32.gmra.mxu0 %v8437
  %v8937 = vpop.f32.mrf.mxu0
  %v8938 = vadd.f32 0.0, %v8937
  %v8939 = vpop.f32.mrf.mxu0
  %8940 = vmatprep.mubr.f32.mxu0 %v8649
  %8941 = vmatmul.mubr.f32.gmra.mxu0 %v8439
  %v8942 = vpop.f32.mrf.mxu0
  %v8943 = vadd.f32 0.0, %v8942
  %v8944 = vpop.f32.mrf.mxu0
  %8945 = vmatprep.mubr.f32.mxu0 %v8652
  %8946 = vmatmul.mubr.f32.gmra.mxu0 %v8441
  %v8947 = vpop.f32.mrf.mxu0
  %v8948 = vadd.f32 0.0, %v8947
  %v8949 = vpop.f32.mrf.mxu0
  %8950 = vmatprep.mubr.f32.mxu0 %v8655
  %8951 = vmatmul.mubr.f32.gmra.mxu0 %v8443
  %v8952 = vpop.f32.mrf.mxu0
  %v8953 = vadd.f32 0.0, %v8952
  %v8954 = vpop.f32.mrf.mxu0
  %8955 = vmatprep.mubr.f32.mxu0 %v8658
  %8956 = vmatmul.mubr.f32.gmra.mxu0 %v8445
  %v8957 = vpop.f32.mrf.mxu0
  %v8958 = vadd.f32 0.0, %v8957
  %v8959 = vpop.f32.mrf.mxu0
  %8960 = vmatprep.mubr.f32.mxu0 %v8661
  %8961 = vmatmul.mubr.f32.gmra.mxu0 %v8447
  %v8962 = vpop.f32.mrf.mxu0
  %v8963 = vadd.f32 0.0, %v8962
  %v8964 = vpop.f32.mrf.mxu0
  %8965 = vmatprep.mubr.f32.mxu0 %v8664
  %8966 = vmatmul.mubr.f32.gmra.mxu0 %v8449
  %v8967 = vpop.f32.mrf.mxu0
  %v8968 = vadd.f32 0.0, %v8967
  %v8969 = vpop.f32.mrf.mxu0
  %8970 = vmatprep.mubr.f32.mxu0 %v8667
  %8971 = vmatmul.mubr.f32.gmra.mxu0 %v8451
  %v8972 = vpop.f32.mrf.mxu0
  %v8973 = vadd.f32 0.0, %v8972
  %v8974 = vpop.f32.mrf.mxu0
  %8975 = vmatprep.mubr.f32.mxu0 %v8670
  %8976 = vmatmul.mubr.f32.gmra.mxu0 %v8453
  %v8977 = vpop.f32.mrf.mxu0
  %v8978 = vadd.f32 0.0, %v8977
  %v8979 = vpop.f32.mrf.mxu0
  %8980 = vmatprep.mubr.f32.mxu0 %v8673
  %8981 = vmatmul.mubr.f32.gmra.mxu0 %v8455
  %v8982 = vpop.f32.mrf.mxu0
  %v8983 = vadd.f32 0.0, %v8982
  %v8984 = vpop.f32.mrf.mxu0
  %8985 = vmatprep.mubr.f32.mxu0 %v8676
  %8986 = vmatmul.mubr.f32.gmra.mxu0 %v8457
  %v8987 = vpop.f32.mrf.mxu0
  %v8988 = vadd.f32 0.0, %v8987
  %v8989 = vpop.f32.mrf.mxu0
  %8990 = vmatprep.mubr.f32.mxu0 %v8679
  %8991 = vmatmul.mubr.f32.gmra.mxu0 %v8459
  %v8992 = vpop.f32.mrf.mxu0
  %v8993 = vadd.f32 0.0, %v8992
  %v8994 = vpop.f32.mrf.mxu0
  %8995 = vmatprep.mubr.f32.mxu0 %v8682
  %8996 = vmatmul.mubr.f32.gmra.mxu0 %v8461
  %v8997 = vpop.f32.mrf.mxu0
  %v8998 = vadd.f32 0.0, %v8997
  %v8999 = vpop.f32.mrf.mxu0
  %9000 = vmatprep.mubr.f32.mxu0 %v8685
  %9001 = vmatmul.mubr.f32.gmra.mxu0 %v8463
  %v9002 = vpop.f32.mrf.mxu0
  %v9003 = vadd.f32 0.0, %v9002
  %v9004 = vpop.f32.mrf.mxu0
  %9005 = vmatprep.mubr.f32.mxu0 %v8688
  %9006 = vmatmul.mubr.f32.gmra.mxu0 %v8465
  %v9007 = vpop.f32.mrf.mxu0
  %v9008 = vadd.f32 0.0, %v9007
  %v9009 = vpop.f32.mrf.mxu0
  %9010 = vmatprep.mubr.f32.mxu0 %v8691
  %9011 = vmatmul.mubr.f32.gmra.mxu0 %v8467
  %v9012 = vpop.f32.mrf.mxu0
  %v9013 = vadd.f32 0.0, %v9012
  %v9014 = vpop.f32.mrf.mxu0
  %9015 = vmatprep.mubr.f32.mxu0 %v8694
  %9016 = vmatmul.mubr.f32.gmra.mxu0 %v8469
  %v9017 = vpop.f32.mrf.mxu0
  %v9018 = vadd.f32 0.0, %v9017
  %v9019 = vpop.f32.mrf.mxu0
  %9020 = vmatprep.mubr.f32.mxu0 %v8697
  %9021 = vmatmul.mubr.f32.gmra.mxu0 %v8471
  %v9022 = vpop.f32.mrf.mxu0
  %v9023 = vadd.f32 0.0, %v9022
  %v9024 = vpop.f32.mrf.mxu0
  %9025 = vmatprep.mubr.f32.mxu0 %v8700
  %9026 = vmatmul.mubr.f32.gmra.mxu0 %v8473
  %v9027 = vpop.f32.mrf.mxu0
  %v9028 = vadd.f32 0.0, %v9027
  %v9029 = vpop.f32.mrf.mxu0
  %9030 = vmatprep.mubr.f32.mxu0 %v8703
  %9031 = vmatmul.mubr.f32.gmra.mxu0 %v8475
  %v9032 = vpop.f32.mrf.mxu0
  %v9033 = vadd.f32 0.0, %v9032
  %v9034 = vpop.f32.mrf.mxu0
  %9035 = vmatprep.mubr.f32.mxu0 %v8706
  %9036 = vmatmul.mubr.f32.gmra.mxu0 %v8477
  %v9037 = vpop.f32.mrf.mxu0
  %v9038 = vadd.f32 0.0, %v9037
  %v9039 = vpop.f32.mrf.mxu0
  %9040 = vmatprep.mubr.f32.mxu0 %v8709
  %9041 = vmatmul.mubr.f32.gmra.mxu0 %v8479
  %v9042 = vpop.f32.mrf.mxu0
  %v9043 = vadd.f32 0.0, %v9042
  %v9044 = vpop.f32.mrf.mxu0
  %9045 = vmatprep.mubr.f32.mxu0 %v8712
  %9046 = vmatmul.mubr.f32.gmra.mxu0 %v8481
  %v9047 = vpop.f32.mrf.mxu0
  %v9048 = vadd.f32 0.0, %v9047
  %v9049 = vpop.f32.mrf.mxu0
  %9050 = vmatprep.mubr.f32.mxu0 %v8715
  %9051 = vmatmul.mubr.f32.gmra.mxu0 %v8483
  %v9052 = vpop.f32.mrf.mxu0
  %v9053 = vadd.f32 0.0, %v9052
  %v9054 = vpop.f32.mrf.mxu0
  %9055 = vmatprep.mubr.f32.mxu0 %v8718
  %9056 = vmatmul.mubr.f32.gmra.mxu0 %v8485
  %v9057 = vpop.f32.mrf.mxu0
  %v9058 = vadd.f32 0.0, %v9057
  %v9059 = vpop.f32.mrf.mxu0
  %9060 = vmatprep.mubr.f32.mxu0 %v8721
  %9061 = vmatmul.mubr.f32.gmra.mxu0 %v8487
  %v9062 = vpop.f32.mrf.mxu0
  %v9063 = vadd.f32 0.0, %v9062
  %v9064 = vpop.f32.mrf.mxu0
  %9065 = vmatprep.mubr.f32.mxu0 %v8724
  %9066 = vmatmul.mubr.f32.gmra.mxu0 %v8489
  %v9067 = vpop.f32.mrf.mxu0
  %v9068 = vadd.f32 0.0, %v9067
  %v9069 = vpop.f32.mrf.mxu0
  %9070 = vmatprep.mubr.f32.mxu0 %v8727
  %9071 = vmatmul.mubr.f32.gmra.mxu0 %v8491
  %v9072 = vpop.f32.mrf.mxu0
  %v9073 = vadd.f32 0.0, %v9072
  %v9074 = vpop.f32.mrf.mxu0
  %9075 = vmatprep.mubr.f32.mxu0 %v8730
  %9076 = vmatmul.mubr.f32.gmra.mxu0 %v8493
  %v9077 = vpop.f32.mrf.mxu0
  %v9078 = vadd.f32 0.0, %v9077
  %v9079 = vpop.f32.mrf.mxu0
  %9080 = vmatprep.mubr.f32.mxu0 %v8733
  %9081 = vmatmul.mubr.f32.gmra.mxu0 %v8495
  %v9082 = vpop.f32.mrf.mxu0
  %v9083 = vadd.f32 0.0, %v9082
  %v9084 = vpop.f32.mrf.mxu0
  %9085 = vmatprep.mubr.f32.mxu0 %v8736
  %9086 = vmatmul.mubr.f32.gmra.mxu0 %v8497
  %v9087 = vpop.f32.mrf.mxu0
  %v9088 = vadd.f32 0.0, %v9087
  %v9089 = vpop.f32.mrf.mxu0
  %9090 = vmatprep.mubr.f32.mxu0 %v8739
  %9091 = vmatmul.mubr.f32.gmra.mxu0 %v8499
  %v9092 = vpop.f32.mrf.mxu0
  %v9093 = vadd.f32 0.0, %v9092
  %v9094 = vpop.f32.mrf.mxu0
  %9095 = vmatprep.mubr.f32.mxu0 %v8742
  %9096 = vmatmul.mubr.f32.gmra.mxu0 %v8501
  %v9097 = vpop.f32.mrf.mxu0
  %v9098 = vadd.f32 0.0, %v9097
  %v9099 = vpop.f32.mrf.mxu0
  %9100 = vmatprep.mubr.f32.mxu0 %v8745
  %9101 = vmatmul.mubr.f32.gmra.mxu0 %v8503
  %v9102 = vpop.f32.mrf.mxu0
  %v9103 = vadd.f32 0.0, %v9102
  %v9104 = vpop.f32.mrf.mxu0
  %9105 = vmatprep.mubr.f32.mxu0 %v8748
  %9106 = vmatmul.mubr.f32.gmra.mxu0 %v8505
  %v9107 = vpop.f32.mrf.mxu0
  %v9108 = vadd.f32 0.0, %v9107
  %v9109 = vpop.f32.mrf.mxu0
  %9110 = vmatprep.mubr.f32.mxu0 %v8751
  %9111 = vmatmul.mubr.f32.gmra.mxu0 %v8507
  %v9112 = vpop.f32.mrf.mxu0
  %v9113 = vadd.f32 0.0, %v9112
  %v9114 = vpop.f32.mrf.mxu0
  %9115 = vmatprep.mubr.f32.mxu0 %v8754
  %9116 = vmatmul.mubr.f32.gmra.mxu0 %v8509
  %v9117 = vpop.f32.mrf.mxu0
  %v9118 = vadd.f32 0.0, %v9117
  %v9119 = vpop.f32.mrf.mxu0
  %9120 = vmatprep.mubr.f32.mxu0 %v8757
  %9121 = vmatmul.mubr.f32.gmra.mxu0 %v8511
  %v9122 = vpop.f32.mrf.mxu0
  %v9123 = vadd.f32 0.0, %v9122
  %v9124 = vpop.f32.mrf.mxu0
  %9125 = vmatprep.mubr.f32.mxu0 %v8760
  %9126 = vmatmul.mubr.f32.gmra.mxu0 %v8513
  %v9127 = vpop.f32.mrf.mxu0
  %v9128 = vadd.f32 0.0, %v9127
  %v9129 = vpop.f32.mrf.mxu0
  %9130 = vmatprep.mubr.f32.mxu0 %v8763
  %9131 = vmatmul.mubr.f32.gmra.mxu0 %v8515
  %v9132 = vpop.f32.mrf.mxu0
  %v9133 = vadd.f32 0.0, %v9132
  %v9134 = vpop.f32.mrf.mxu0
  %9135 = vmatprep.mubr.f32.mxu0 %v8766
  %9136 = vmatmul.mubr.f32.gmra.mxu0 %v8517
  %v9137 = vpop.f32.mrf.mxu0
  %v9138 = vadd.f32 0.0, %v9137
  %v9139 = vpop.f32.mrf.mxu0
  %9140 = vmatprep.mubr.f32.mxu0 %v8769
  %9141 = vmatmul.mubr.f32.gmra.mxu0 %v8519
  %v9142 = vpop.f32.mrf.mxu0
  %v9143 = vadd.f32 0.0, %v9142
  %v9144 = vpop.f32.mrf.mxu0
  %9145 = vmatprep.mubr.f32.mxu0 %v8772
  %9146 = vmatmul.mubr.f32.gmra.mxu0 %v8521
  %v9147 = vpop.f32.mrf.mxu0
  %v9148 = vadd.f32 0.0, %v9147
  %v9149 = vpop.f32.mrf.mxu0
  %9150 = vmatprep.mubr.f32.mxu0 %v8775
  %9151 = vmatmul.mubr.f32.gmra.mxu0 %v8523
  %v9152 = vpop.f32.mrf.mxu0
  %v9153 = vadd.f32 0.0, %v9152
  %v9154 = vpop.f32.mrf.mxu0
  %9155 = vmatprep.mubr.f32.mxu0 %v8778
  %9156 = vmatmul.mubr.f32.gmra.mxu0 %v8525
  %v9157 = vpop.f32.mrf.mxu0
  %v9158 = vadd.f32 0.0, %v9157
  %v9159 = vpop.f32.mrf.mxu0
  %9160 = vmatprep.mubr.f32.mxu0 %v8781
  %9161 = vmatmul.mubr.f32.gmra.mxu0 %v8527
  %v9162 = vpop.f32.mrf.mxu0
  %v9163 = vadd.f32 0.0, %v9162
  %v9164 = vpop.f32.mrf.mxu0
  %9165 = vmatprep.mubr.f32.mxu0 %v8784
  %9166 = vmatmul.mubr.f32.gmra.mxu0 %v8529
  %v9167 = vpop.f32.mrf.mxu0
  %v9168 = vadd.f32 0.0, %v9167
  %v9169 = vpop.f32.mrf.mxu0
  %9170 = vdwg.mxu0
  %v9171 = vadd.f32 %v8338, %v8853
  %v9172 = vadd.f32 %v8339, %v8858
  %v9173 = vadd.f32 %v8340, %v8863
  %v9174 = vadd.f32 %v8341, %v8868
  %v9175 = vadd.f32 %v8342, %v8873
  %v9176 = vadd.f32 %v8343, %v8878
  %v9177 = vadd.f32 %v8344, %v8883
  %v9178 = vadd.f32 %v8345, %v8888
  %v9179 = vadd.f32 %v8346, %v8893
  %v9180 = vadd.f32 %v8347, %v8898
  %v9181 = vadd.f32 %v8348, %v8903
  %v9182 = vadd.f32 %v8349, %v8908
  %v9183 = vadd.f32 %v8350, %v8913
  %v9184 = vadd.f32 %v8351, %v8918
  %v9185 = vadd.f32 %v8352, %v8923
  %v9186 = vadd.f32 %v8353, %v8928
  %v9187 = vadd.f32 %v8354, %v8933
  %v9188 = vadd.f32 %v8355, %v8938
  %v9189 = vadd.f32 %v8356, %v8943
  %v9190 = vadd.f32 %v8357, %v8948
  %v9191 = vadd.f32 %v8358, %v8953
  %v9192 = vadd.f32 %v8359, %v8958
  %v9193 = vadd.f32 %v8360, %v8963
  %v9194 = vadd.f32 %v8361, %v8968
  %v9195 = vadd.f32 %v8362, %v8973
  %v9196 = vadd.f32 %v8363, %v8978
  %v9197 = vadd.f32 %v8364, %v8983
  %v9198 = vadd.f32 %v8365, %v8988
  %v9199 = vadd.f32 %v8366, %v8993
  %v9200 = vadd.f32 %v8367, %v8998
  %v9201 = vadd.f32 %v8368, %v9003
  %v9202 = vadd.f32 %v8369, %v9008
  %v9203 = vadd.f32 %v8370, %v9013
  %v9204 = vadd.f32 %v8371, %v9018
  %v9205 = vadd.f32 %v8372, %v9023
  %v9206 = vadd.f32 %v8373, %v9028
  %v9207 = vadd.f32 %v8374, %v9033
  %v9208 = vadd.f32 %v8375, %v9038
  %v9209 = vadd.f32 %v8376, %v9043
  %v9210 = vadd.f32 %v8377, %v9048
  %v9211 = vadd.f32 %v8378, %v9053
  %v9212 = vadd.f32 %v8379, %v9058
  %v9213 = vadd.f32 %v8380, %v9063
  %v9214 = vadd.f32 %v8381, %v9068
  %v9215 = vadd.f32 %v8382, %v9073
  %v9216 = vadd.f32 %v8383, %v9078
  %v9217 = vadd.f32 %v8384, %v9083
  %v9218 = vadd.f32 %v8385, %v9088
  %v9219 = vadd.f32 %v8386, %v9093
  %v9220 = vadd.f32 %v8387, %v9098
  %v9221 = vadd.f32 %v8388, %v9103
  %v9222 = vadd.f32 %v8389, %v9108
  %v9223 = vadd.f32 %v8390, %v9113
  %v9224 = vadd.f32 %v8391, %v9118
  %v9225 = vadd.f32 %v8392, %v9123
  %v9226 = vadd.f32 %v8393, %v9128
  %v9227 = vadd.f32 %v8394, %v9133
  %v9228 = vadd.f32 %v8395, %v9138
  %v9229 = vadd.f32 %v8396, %v9143
  %v9230 = vadd.f32 %v8397, %v9148
  %v9231 = vadd.f32 %v8398, %v9153
  %v9232 = vadd.f32 %v8399, %v9158
  %v9233 = vadd.f32 %v8400, %v9163
  %v9234 = vadd.f32 %v8401, %v9168
  %v9235 = vld [vmem:[%s17] sm:$0x1]
  %v9237 = vlaneseq
  %v9238 = vshrl.u32 %v9237, 7
  %v9239 = vsub.s32 0, %v9238
  %v9240 = vrot.slane %v9235, %v9239
  %v9242 = vadd.f32 %v9171, %v9240
  %v9243 = vadd.f32 %v9172, %v9240
  %v9244 = vadd.f32 %v9173, %v9240
  %v9245 = vadd.f32 %v9174, %v9240
  %v9246 = vadd.f32 %v9175, %v9240
  %v9247 = vadd.f32 %v9176, %v9240
  %v9248 = vadd.f32 %v9177, %v9240
  %v9249 = vadd.f32 %v9178, %v9240
  %v9250 = vadd.f32 %v9179, %v9240
  %v9251 = vadd.f32 %v9180, %v9240
  %v9252 = vadd.f32 %v9181, %v9240
  %v9253 = vadd.f32 %v9182, %v9240
  %v9254 = vadd.f32 %v9183, %v9240
  %v9255 = vadd.f32 %v9184, %v9240
  %v9256 = vadd.f32 %v9185, %v9240
  %v9257 = vadd.f32 %v9186, %v9240
  %v9258 = vadd.f32 %v9187, %v9240
  %v9259 = vadd.f32 %v9188, %v9240
  %v9260 = vadd.f32 %v9189, %v9240
  %v9261 = vadd.f32 %v9190, %v9240
  %v9262 = vadd.f32 %v9191, %v9240
  %v9263 = vadd.f32 %v9192, %v9240
  %v9264 = vadd.f32 %v9193, %v9240
  %v9265 = vadd.f32 %v9194, %v9240
  %v9266 = vadd.f32 %v9195, %v9240
  %v9267 = vadd.f32 %v9196, %v9240
  %v9268 = vadd.f32 %v9197, %v9240
  %v9269 = vadd.f32 %v9198, %v9240
  %v9270 = vadd.f32 %v9199, %v9240
  %v9271 = vadd.f32 %v9200, %v9240
  %v9272 = vadd.f32 %v9201, %v9240
  %v9273 = vadd.f32 %v9202, %v9240
  %v9274 = vadd.f32 %v9203, %v9240
  %v9275 = vadd.f32 %v9204, %v9240
  %v9276 = vadd.f32 %v9205, %v9240
  %v9277 = vadd.f32 %v9206, %v9240
  %v9278 = vadd.f32 %v9207, %v9240
  %v9279 = vadd.f32 %v9208, %v9240
  %v9280 = vadd.f32 %v9209, %v9240
  %v9281 = vadd.f32 %v9210, %v9240
  %v9282 = vadd.f32 %v9211, %v9240
  %v9283 = vadd.f32 %v9212, %v9240
  %v9284 = vadd.f32 %v9213, %v9240
  %v9285 = vadd.f32 %v9214, %v9240
  %v9286 = vadd.f32 %v9215, %v9240
  %v9287 = vadd.f32 %v9216, %v9240
  %v9288 = vadd.f32 %v9217, %v9240
  %v9289 = vadd.f32 %v9218, %v9240
  %v9290 = vadd.f32 %v9219, %v9240
  %v9291 = vadd.f32 %v9220, %v9240
  %v9292 = vadd.f32 %v9221, %v9240
  %v9293 = vadd.f32 %v9222, %v9240
  %v9294 = vadd.f32 %v9223, %v9240
  %v9295 = vadd.f32 %v9224, %v9240
  %v9296 = vadd.f32 %v9225, %v9240
  %v9297 = vadd.f32 %v9226, %v9240
  %v9298 = vadd.f32 %v9227, %v9240
  %v9299 = vadd.f32 %v9228, %v9240
  %v9300 = vadd.f32 %v9229, %v9240
  %v9301 = vadd.f32 %v9230, %v9240
  %v9302 = vadd.f32 %v9231, %v9240
  %v9303 = vadd.f32 %v9232, %v9240
  %v9304 = vadd.f32 %v9233, %v9240
  %v9305 = vadd.f32 %v9234, %v9240
  %v9306 = vxor.u32 %v9242, 2147483648
  %v9307 = vxor.u32 %v9243, 2147483648
  %v9308 = vxor.u32 %v9244, 2147483648
  %v9309 = vxor.u32 %v9245, 2147483648
  %v9310 = vxor.u32 %v9246, 2147483648
  %v9311 = vxor.u32 %v9247, 2147483648
  %v9312 = vxor.u32 %v9248, 2147483648
  %v9313 = vxor.u32 %v9249, 2147483648
  %v9314 = vxor.u32 %v9250, 2147483648
  %v9315 = vxor.u32 %v9251, 2147483648
  %v9316 = vxor.u32 %v9252, 2147483648
  %v9317 = vxor.u32 %v9253, 2147483648
  %v9318 = vxor.u32 %v9254, 2147483648
  %v9319 = vxor.u32 %v9255, 2147483648
  %v9320 = vxor.u32 %v9256, 2147483648
  %v9321 = vxor.u32 %v9257, 2147483648
  %v9322 = vxor.u32 %v9258, 2147483648
  %v9323 = vxor.u32 %v9259, 2147483648
  %v9324 = vxor.u32 %v9260, 2147483648
  %v9325 = vxor.u32 %v9261, 2147483648
  %v9326 = vxor.u32 %v9262, 2147483648
  %v9327 = vxor.u32 %v9263, 2147483648
  %v9328 = vxor.u32 %v9264, 2147483648
  %v9329 = vxor.u32 %v9265, 2147483648
  %v9330 = vxor.u32 %v9266, 2147483648
  %v9331 = vxor.u32 %v9267, 2147483648
  %v9332 = vxor.u32 %v9268, 2147483648
  %v9333 = vxor.u32 %v9269, 2147483648
  %v9334 = vxor.u32 %v9270, 2147483648
  %v9335 = vxor.u32 %v9271, 2147483648
  %v9336 = vxor.u32 %v9272, 2147483648
  %v9337 = vxor.u32 %v9273, 2147483648
  %v9338 = vxor.u32 %v9274, 2147483648
  %v9339 = vxor.u32 %v9275, 2147483648
  %v9340 = vxor.u32 %v9276, 2147483648
  %v9341 = vxor.u32 %v9277, 2147483648
  %v9342 = vxor.u32 %v9278, 2147483648
  %v9343 = vxor.u32 %v9279, 2147483648
  %v9344 = vxor.u32 %v9280, 2147483648
  %v9345 = vxor.u32 %v9281, 2147483648
  %v9346 = vxor.u32 %v9282, 2147483648
  %v9347 = vxor.u32 %v9283, 2147483648
  %v9348 = vxor.u32 %v9284, 2147483648
  %v9349 = vxor.u32 %v9285, 2147483648
  %v9350 = vxor.u32 %v9286, 2147483648
  %v9351 = vxor.u32 %v9287, 2147483648
  %v9352 = vxor.u32 %v9288, 2147483648
  %v9353 = vxor.u32 %v9289, 2147483648
  %v9354 = vxor.u32 %v9290, 2147483648
  %v9355 = vxor.u32 %v9291, 2147483648
  %v9356 = vxor.u32 %v9292, 2147483648
  %v9357 = vxor.u32 %v9293, 2147483648
  %v9358 = vxor.u32 %v9294, 2147483648
  %v9359 = vxor.u32 %v9295, 2147483648
  %v9360 = vxor.u32 %v9296, 2147483648
  %v9361 = vxor.u32 %v9297, 2147483648
  %v9362 = vxor.u32 %v9298, 2147483648
  %v9363 = vxor.u32 %v9299, 2147483648
  %v9364 = vxor.u32 %v9300, 2147483648
  %v9365 = vxor.u32 %v9301, 2147483648
  %v9366 = vxor.u32 %v9302, 2147483648
  %v9367 = vxor.u32 %v9303, 2147483648
  %v9368 = vxor.u32 %v9304, 2147483648
  %v9369 = vxor.u32 %v9305, 2147483648
  %v9370 = vmul.f32 %v9306, 1.442695
  %v9371 = vpow.pop %v9370
  %v9372 = vmul.f32 %v9307, 1.442695
  %v9373 = vpow.pop %v9372
  %v9374 = vmul.f32 %v9308, 1.442695
  %v9375 = vpow.pop %v9374
  %v9376 = vmul.f32 %v9309, 1.442695
  %v9377 = vpow.pop %v9376
  %v9378 = vmul.f32 %v9310, 1.442695
  %v9379 = vpow.pop %v9378
  %v9380 = vmul.f32 %v9311, 1.442695
  %v9381 = vpow.pop %v9380
  %v9382 = vmul.f32 %v9312, 1.442695
  %v9383 = vpow.pop %v9382
  %v9384 = vmul.f32 %v9313, 1.442695
  %v9385 = vpow.pop %v9384
  %v9386 = vmul.f32 %v9314, 1.442695
  %v9387 = vpow.pop %v9386
  %v9388 = vmul.f32 %v9315, 1.442695
  %v9389 = vpow.pop %v9388
  %v9390 = vmul.f32 %v9316, 1.442695
  %v9391 = vpow.pop %v9390
  %v9392 = vmul.f32 %v9317, 1.442695
  %v9393 = vpow.pop %v9392
  %v9394 = vmul.f32 %v9318, 1.442695
  %v9395 = vpow.pop %v9394
  %v9396 = vmul.f32 %v9319, 1.442695
  %v9397 = vpow.pop %v9396
  %v9398 = vmul.f32 %v9320, 1.442695
  %v9399 = vpow.pop %v9398
  %v9400 = vmul.f32 %v9321, 1.442695
  %v9401 = vpow.pop %v9400
  %v9402 = vmul.f32 %v9322, 1.442695
  %v9403 = vpow.pop %v9402
  %v9404 = vmul.f32 %v9323, 1.442695
  %v9405 = vpow.pop %v9404
  %v9406 = vmul.f32 %v9324, 1.442695
  %v9407 = vpow.pop %v9406
  %v9408 = vmul.f32 %v9325, 1.442695
  %v9409 = vpow.pop %v9408
  %v9410 = vmul.f32 %v9326, 1.442695
  %v9411 = vpow.pop %v9410
  %v9412 = vmul.f32 %v9327, 1.442695
  %v9413 = vpow.pop %v9412
  %v9414 = vmul.f32 %v9328, 1.442695
  %v9415 = vpow.pop %v9414
  %v9416 = vmul.f32 %v9329, 1.442695
  %v9417 = vpow.pop %v9416
  %v9418 = vmul.f32 %v9330, 1.442695
  %v9419 = vpow.pop %v9418
  %v9420 = vmul.f32 %v9331, 1.442695
  %v9421 = vpow.pop %v9420
  %v9422 = vmul.f32 %v9332, 1.442695
  %v9423 = vpow.pop %v9422
  %v9424 = vmul.f32 %v9333, 1.442695
  %v9425 = vpow.pop %v9424
  %v9426 = vmul.f32 %v9334, 1.442695
  %v9427 = vpow.pop %v9426
  %v9428 = vmul.f32 %v9335, 1.442695
  %v9429 = vpow.pop %v9428
  %v9430 = vmul.f32 %v9336, 1.442695
  %v9431 = vpow.pop %v9430
  %v9432 = vmul.f32 %v9337, 1.442695
  %v9433 = vpow.pop %v9432
  %v9434 = vmul.f32 %v9338, 1.442695
  %v9435 = vpow.pop %v9434
  %v9436 = vmul.f32 %v9339, 1.442695
  %v9437 = vpow.pop %v9436
  %v9438 = vmul.f32 %v9340, 1.442695
  %v9439 = vpow.pop %v9438
  %v9440 = vmul.f32 %v9341, 1.442695
  %v9441 = vpow.pop %v9440
  %v9442 = vmul.f32 %v9342, 1.442695
  %v9443 = vpow.pop %v9442
  %v9444 = vmul.f32 %v9343, 1.442695
  %v9445 = vpow.pop %v9444
  %v9446 = vmul.f32 %v9344, 1.442695
  %v9447 = vpow.pop %v9446
  %v9448 = vmul.f32 %v9345, 1.442695
  %v9449 = vpow.pop %v9448
  %v9450 = vmul.f32 %v9346, 1.442695
  %v9451 = vpow.pop %v9450
  %v9452 = vmul.f32 %v9347, 1.442695
  %v9453 = vpow.pop %v9452
  %v9454 = vmul.f32 %v9348, 1.442695
  %v9455 = vpow.pop %v9454
  %v9456 = vmul.f32 %v9349, 1.442695
  %v9457 = vpow.pop %v9456
  %v9458 = vmul.f32 %v9350, 1.442695
  %v9459 = vpow.pop %v9458
  %v9460 = vmul.f32 %v9351, 1.442695
  %v9461 = vpow.pop %v9460
  %v9462 = vmul.f32 %v9352, 1.442695
  %v9463 = vpow.pop %v9462
  %v9464 = vmul.f32 %v9353, 1.442695
  %v9465 = vpow.pop %v9464
  %v9466 = vmul.f32 %v9354, 1.442695
  %v9467 = vpow.pop %v9466
  %v9468 = vmul.f32 %v9355, 1.442695
  %v9469 = vpow.pop %v9468
  %v9470 = vmul.f32 %v9356, 1.442695
  %v9471 = vpow.pop %v9470
  %v9472 = vmul.f32 %v9357, 1.442695
  %v9473 = vpow.pop %v9472
  %v9474 = vmul.f32 %v9358, 1.442695
  %v9475 = vpow.pop %v9474
  %v9476 = vmul.f32 %v9359, 1.442695
  %v9477 = vpow.pop %v9476
  %v9478 = vmul.f32 %v9360, 1.442695
  %v9479 = vpow.pop %v9478
  %v9480 = vmul.f32 %v9361, 1.442695
  %v9481 = vpow.pop %v9480
  %v9482 = vmul.f32 %v9362, 1.442695
  %v9483 = vpow.pop %v9482
  %v9484 = vmul.f32 %v9363, 1.442695
  %v9485 = vpow.pop %v9484
  %v9486 = vmul.f32 %v9364, 1.442695
  %v9487 = vpow.pop %v9486
  %v9488 = vmul.f32 %v9365, 1.442695
  %v9489 = vpow.pop %v9488
  %v9490 = vmul.f32 %v9366, 1.442695
  %v9491 = vpow.pop %v9490
  %v9492 = vmul.f32 %v9367, 1.442695
  %v9493 = vpow.pop %v9492
  %v9494 = vmul.f32 %v9368, 1.442695
  %v9495 = vpow.pop %v9494
  %v9496 = vmul.f32 %v9369, 1.442695
  %v9497 = vpow.pop %v9496
  %v9498 = vadd.f32 %v9371, 1.0
  %v9499 = vadd.f32 %v9373, 1.0
  %v9500 = vadd.f32 %v9375, 1.0
  %v9501 = vadd.f32 %v9377, 1.0
  %v9502 = vadd.f32 %v9379, 1.0
  %v9503 = vadd.f32 %v9381, 1.0
  %v9504 = vadd.f32 %v9383, 1.0
  %v9505 = vadd.f32 %v9385, 1.0
  %v9506 = vadd.f32 %v9387, 1.0
  %v9507 = vadd.f32 %v9389, 1.0
  %v9508 = vadd.f32 %v9391, 1.0
  %v9509 = vadd.f32 %v9393, 1.0
  %v9510 = vadd.f32 %v9395, 1.0
  %v9511 = vadd.f32 %v9397, 1.0
  %v9512 = vadd.f32 %v9399, 1.0
  %v9513 = vadd.f32 %v9401, 1.0
  %v9514 = vadd.f32 %v9403, 1.0
  %v9515 = vadd.f32 %v9405, 1.0
  %v9516 = vadd.f32 %v9407, 1.0
  %v9517 = vadd.f32 %v9409, 1.0
  %v9518 = vadd.f32 %v9411, 1.0
  %v9519 = vadd.f32 %v9413, 1.0
  %v9520 = vadd.f32 %v9415, 1.0
  %v9521 = vadd.f32 %v9417, 1.0
  %v9522 = vadd.f32 %v9419, 1.0
  %v9523 = vadd.f32 %v9421, 1.0
  %v9524 = vadd.f32 %v9423, 1.0
  %v9525 = vadd.f32 %v9425, 1.0
  %v9526 = vadd.f32 %v9427, 1.0
  %v9527 = vadd.f32 %v9429, 1.0
  %v9528 = vadd.f32 %v9431, 1.0
  %v9529 = vadd.f32 %v9433, 1.0
  %v9530 = vadd.f32 %v9435, 1.0
  %v9531 = vadd.f32 %v9437, 1.0
  %v9532 = vadd.f32 %v9439, 1.0
  %v9533 = vadd.f32 %v9441, 1.0
  %v9534 = vadd.f32 %v9443, 1.0
  %v9535 = vadd.f32 %v9445, 1.0
  %v9536 = vadd.f32 %v9447, 1.0
  %v9537 = vadd.f32 %v9449, 1.0
  %v9538 = vadd.f32 %v9451, 1.0
  %v9539 = vadd.f32 %v9453, 1.0
  %v9540 = vadd.f32 %v9455, 1.0
  %v9541 = vadd.f32 %v9457, 1.0
  %v9542 = vadd.f32 %v9459, 1.0
  %v9543 = vadd.f32 %v9461, 1.0
  %v9544 = vadd.f32 %v9463, 1.0
  %v9545 = vadd.f32 %v9465, 1.0
  %v9546 = vadd.f32 %v9467, 1.0
  %v9547 = vadd.f32 %v9469, 1.0
  %v9548 = vadd.f32 %v9471, 1.0
  %v9549 = vadd.f32 %v9473, 1.0
  %v9550 = vadd.f32 %v9475, 1.0
  %v9551 = vadd.f32 %v9477, 1.0
  %v9552 = vadd.f32 %v9479, 1.0
  %v9553 = vadd.f32 %v9481, 1.0
  %v9554 = vadd.f32 %v9483, 1.0
  %v9555 = vadd.f32 %v9485, 1.0
  %v9556 = vadd.f32 %v9487, 1.0
  %v9557 = vadd.f32 %v9489, 1.0
  %v9558 = vadd.f32 %v9491, 1.0
  %v9559 = vadd.f32 %v9493, 1.0
  %v9560 = vadd.f32 %v9495, 1.0
  %v9561 = vadd.f32 %v9497, 1.0
  %v9562 = vrcp.pop %v9498
  %v9563 = vmul.f32 1.0, %v9562
  %v9564 = vrcp.pop %v9499
  %v9565 = vmul.f32 1.0, %v9564
  %v9566 = vrcp.pop %v9500
  %v9567 = vmul.f32 1.0, %v9566
  %v9568 = vrcp.pop %v9501
  %v9569 = vmul.f32 1.0, %v9568
  %v9570 = vrcp.pop %v9502
  %v9571 = vmul.f32 1.0, %v9570
  %v9572 = vrcp.pop %v9503
  %v9573 = vmul.f32 1.0, %v9572
  %v9574 = vrcp.pop %v9504
  %v9575 = vmul.f32 1.0, %v9574
  %v9576 = vrcp.pop %v9505
  %v9577 = vmul.f32 1.0, %v9576
  %v9578 = vrcp.pop %v9506
  %v9579 = vmul.f32 1.0, %v9578
  %v9580 = vrcp.pop %v9507
  %v9581 = vmul.f32 1.0, %v9580
  %v9582 = vrcp.pop %v9508
  %v9583 = vmul.f32 1.0, %v9582
  %v9584 = vrcp.pop %v9509
  %v9585 = vmul.f32 1.0, %v9584
  %v9586 = vrcp.pop %v9510
  %v9587 = vmul.f32 1.0, %v9586
  %v9588 = vrcp.pop %v9511
  %v9589 = vmul.f32 1.0, %v9588
  %v9590 = vrcp.pop %v9512
  %v9591 = vmul.f32 1.0, %v9590
  %v9592 = vrcp.pop %v9513
  %v9593 = vmul.f32 1.0, %v9592
  %v9594 = vrcp.pop %v9514
  %v9595 = vmul.f32 1.0, %v9594
  %v9596 = vrcp.pop %v9515
  %v9597 = vmul.f32 1.0, %v9596
  %v9598 = vrcp.pop %v9516
  %v9599 = vmul.f32 1.0, %v9598
  %v9600 = vrcp.pop %v9517
  %v9601 = vmul.f32 1.0, %v9600
  %v9602 = vrcp.pop %v9518
  %v9603 = vmul.f32 1.0, %v9602
  %v9604 = vrcp.pop %v9519
  %v9605 = vmul.f32 1.0, %v9604
  %v9606 = vrcp.pop %v9520
  %v9607 = vmul.f32 1.0, %v9606
  %v9608 = vrcp.pop %v9521
  %v9609 = vmul.f32 1.0, %v9608
  %v9610 = vrcp.pop %v9522
  %v9611 = vmul.f32 1.0, %v9610
  %v9612 = vrcp.pop %v9523
  %v9613 = vmul.f32 1.0, %v9612
  %v9614 = vrcp.pop %v9524
  %v9615 = vmul.f32 1.0, %v9614
  %v9616 = vrcp.pop %v9525
  %v9617 = vmul.f32 1.0, %v9616
  %v9618 = vrcp.pop %v9526
  %v9619 = vmul.f32 1.0, %v9618
  %v9620 = vrcp.pop %v9527
  %v9621 = vmul.f32 1.0, %v9620
  %v9622 = vrcp.pop %v9528
  %v9623 = vmul.f32 1.0, %v9622
  %v9624 = vrcp.pop %v9529
  %v9625 = vmul.f32 1.0, %v9624
  %v9626 = vrcp.pop %v9530
  %v9627 = vmul.f32 1.0, %v9626
  %v9628 = vrcp.pop %v9531
  %v9629 = vmul.f32 1.0, %v9628
  %v9630 = vrcp.pop %v9532
  %v9631 = vmul.f32 1.0, %v9630
  %v9632 = vrcp.pop %v9533
  %v9633 = vmul.f32 1.0, %v9632
  %v9634 = vrcp.pop %v9534
  %v9635 = vmul.f32 1.0, %v9634
  %v9636 = vrcp.pop %v9535
  %v9637 = vmul.f32 1.0, %v9636
  %v9638 = vrcp.pop %v9536
  %v9639 = vmul.f32 1.0, %v9638
  %v9640 = vrcp.pop %v9537
  %v9641 = vmul.f32 1.0, %v9640
  %v9642 = vrcp.pop %v9538
  %v9643 = vmul.f32 1.0, %v9642
  %v9644 = vrcp.pop %v9539
  %v9645 = vmul.f32 1.0, %v9644
  %v9646 = vrcp.pop %v9540
  %v9647 = vmul.f32 1.0, %v9646
  %v9648 = vrcp.pop %v9541
  %v9649 = vmul.f32 1.0, %v9648
  %v9650 = vrcp.pop %v9542
  %v9651 = vmul.f32 1.0, %v9650
  %v9652 = vrcp.pop %v9543
  %v9653 = vmul.f32 1.0, %v9652
  %v9654 = vrcp.pop %v9544
  %v9655 = vmul.f32 1.0, %v9654
  %v9656 = vrcp.pop %v9545
  %v9657 = vmul.f32 1.0, %v9656
  %v9658 = vrcp.pop %v9546
  %v9659 = vmul.f32 1.0, %v9658
  %v9660 = vrcp.pop %v9547
  %v9661 = vmul.f32 1.0, %v9660
  %v9662 = vrcp.pop %v9548
  %v9663 = vmul.f32 1.0, %v9662
  %v9664 = vrcp.pop %v9549
  %v9665 = vmul.f32 1.0, %v9664
  %v9666 = vrcp.pop %v9550
  %v9667 = vmul.f32 1.0, %v9666
  %v9668 = vrcp.pop %v9551
  %v9669 = vmul.f32 1.0, %v9668
  %v9670 = vrcp.pop %v9552
  %v9671 = vmul.f32 1.0, %v9670
  %v9672 = vrcp.pop %v9553
  %v9673 = vmul.f32 1.0, %v9672
  %v9674 = vrcp.pop %v9554
  %v9675 = vmul.f32 1.0, %v9674
  %v9676 = vrcp.pop %v9555
  %v9677 = vmul.f32 1.0, %v9676
  %v9678 = vrcp.pop %v9556
  %v9679 = vmul.f32 1.0, %v9678
  %v9680 = vrcp.pop %v9557
  %v9681 = vmul.f32 1.0, %v9680
  %v9682 = vrcp.pop %v9558
  %v9683 = vmul.f32 1.0, %v9682
  %v9684 = vrcp.pop %v9559
  %v9685 = vmul.f32 1.0, %v9684
  %v9686 = vrcp.pop %v9560
  %v9687 = vmul.f32 1.0, %v9686
  %v9688 = vrcp.pop %v9561
  %v9689 = vmul.f32 1.0, %v9688
  %vm9690 = vcmask 23552
  %9691 = vst.msk [vmem:[%s18] sm:$0xff] %vm9690, %v9563
  %9692 = vst.msk [vmem:[%s18 + $0x8] sm:$0xff] %vm9690, %v9565
  %9693 = vst.msk [vmem:[%s18 + $0x10] sm:$0xff] %vm9690, %v9567
  %9694 = vst.msk [vmem:[%s18 + $0x18] sm:$0xff] %vm9690, %v9569
  %9695 = vst.msk [vmem:[%s18 + $0x20] sm:$0xff] %vm9690, %v9571
  %9696 = vst.msk [vmem:[%s18 + $0x28] sm:$0xff] %vm9690, %v9573
  %9697 = vst.msk [vmem:[%s18 + $0x30] sm:$0xff] %vm9690, %v9575
  %9698 = vst.msk [vmem:[%s18 + $0x38] sm:$0xff] %vm9690, %v9577
  %9699 = vst.msk [vmem:[%s18 + $0x40] sm:$0xff] %vm9690, %v9579
  %9700 = vst.msk [vmem:[%s18 + $0x48] sm:$0xff] %vm9690, %v9581
  %9701 = vst.msk [vmem:[%s18 + $0x50] sm:$0xff] %vm9690, %v9583
  %9702 = vst.msk [vmem:[%s18 + $0x58] sm:$0xff] %vm9690, %v9585
  %9703 = vst.msk [vmem:[%s18 + $0x60] sm:$0xff] %vm9690, %v9587
  %9704 = vst.msk [vmem:[%s18 + $0x68] sm:$0xff] %vm9690, %v9589
  %9705 = vst.msk [vmem:[%s18 + $0x70] sm:$0xff] %vm9690, %v9591
  %9706 = vst.msk [vmem:[%s18 + $0x78] sm:$0xff] %vm9690, %v9593
  %9707 = vst.msk [vmem:[%s18 + $0x80] sm:$0xff] %vm9690, %v9595
  %9708 = vst.msk [vmem:[%s18 + $0x88] sm:$0xff] %vm9690, %v9597
  %9709 = vst.msk [vmem:[%s18 + $0x90] sm:$0xff] %vm9690, %v9599
  %9710 = vst.msk [vmem:[%s18 + $0x98] sm:$0xff] %vm9690, %v9601
  %9711 = vst.msk [vmem:[%s18 + $0xa0] sm:$0xff] %vm9690, %v9603
  %9712 = vst.msk [vmem:[%s18 + $0xa8] sm:$0xff] %vm9690, %v9605
  %9713 = vst.msk [vmem:[%s18 + $0xb0] sm:$0xff] %vm9690, %v9607
  %9714 = vst.msk [vmem:[%s18 + $0xb8] sm:$0xff] %vm9690, %v9609
  %9715 = vst.msk [vmem:[%s18 + $0xc0] sm:$0xff] %vm9690, %v9611
  %9716 = vst.msk [vmem:[%s18 + $0xc8] sm:$0xff] %vm9690, %v9613
  %9717 = vst.msk [vmem:[%s18 + $0xd0] sm:$0xff] %vm9690, %v9615
  %9718 = vst.msk [vmem:[%s18 + $0xd8] sm:$0xff] %vm9690, %v9617
  %9719 = vst.msk [vmem:[%s18 + $0xe0] sm:$0xff] %vm9690, %v9619
  %9720 = vst.msk [vmem:[%s18 + $0xe8] sm:$0xff] %vm9690, %v9621
  %9721 = vst.msk [vmem:[%s18 + $0xf0] sm:$0xff] %vm9690, %v9623
  %9722 = vst.msk [vmem:[%s18 + $0xf8] sm:$0xff] %vm9690, %v9625
  %9723 = vst.msk [vmem:[%s18 + $0x100] sm:$0xff] %vm9690, %v9627
  %9724 = vst.msk [vmem:[%s18 + $0x108] sm:$0xff] %vm9690, %v9629
  %9725 = vst.msk [vmem:[%s18 + $0x110] sm:$0xff] %vm9690, %v9631
  %9726 = vst.msk [vmem:[%s18 + $0x118] sm:$0xff] %vm9690, %v9633
  %9727 = vst.msk [vmem:[%s18 + $0x120] sm:$0xff] %vm9690, %v9635
  %9728 = vst.msk [vmem:[%s18 + $0x128] sm:$0xff] %vm9690, %v9637
  %9729 = vst.msk [vmem:[%s18 + $0x130] sm:$0xff] %vm9690, %v9639
  %9730 = vst.msk [vmem:[%s18 + $0x138] sm:$0xff] %vm9690, %v9641
  %9731 = vst.msk [vmem:[%s18 + $0x140] sm:$0xff] %vm9690, %v9643
  %9732 = vst.msk [vmem:[%s18 + $0x148] sm:$0xff] %vm9690, %v9645
  %9733 = vst.msk [vmem:[%s18 + $0x150] sm:$0xff] %vm9690, %v9647
  %9734 = vst.msk [vmem:[%s18 + $0x158] sm:$0xff] %vm9690, %v9649
  %9735 = vst.msk [vmem:[%s18 + $0x160] sm:$0xff] %vm9690, %v9651
  %9736 = vst.msk [vmem:[%s18 + $0x168] sm:$0xff] %vm9690, %v9653
  %9737 = vst.msk [vmem:[%s18 + $0x170] sm:$0xff] %vm9690, %v9655
  %9738 = vst.msk [vmem:[%s18 + $0x178] sm:$0xff] %vm9690, %v9657
  %9739 = vst.msk [vmem:[%s18 + $0x180] sm:$0xff] %vm9690, %v9659
  %9740 = vst.msk [vmem:[%s18 + $0x188] sm:$0xff] %vm9690, %v9661
  %9741 = vst.msk [vmem:[%s18 + $0x190] sm:$0xff] %vm9690, %v9663
  %9742 = vst.msk [vmem:[%s18 + $0x198] sm:$0xff] %vm9690, %v9665
  %9743 = vst.msk [vmem:[%s18 + $0x1a0] sm:$0xff] %vm9690, %v9667
  %9744 = vst.msk [vmem:[%s18 + $0x1a8] sm:$0xff] %vm9690, %v9669
  %9745 = vst.msk [vmem:[%s18 + $0x1b0] sm:$0xff] %vm9690, %v9671
  %9746 = vst.msk [vmem:[%s18 + $0x1b8] sm:$0xff] %vm9690, %v9673
  %9747 = vst.msk [vmem:[%s18 + $0x1c0] sm:$0xff] %vm9690, %v9675
  %9748 = vst.msk [vmem:[%s18 + $0x1c8] sm:$0xff] %vm9690, %v9677
  %9749 = vst.msk [vmem:[%s18 + $0x1d0] sm:$0xff] %vm9690, %v9679
  %9750 = vst.msk [vmem:[%s18 + $0x1d8] sm:$0xff] %vm9690, %v9681
  %9751 = vst.msk [vmem:[%s18 + $0x1e0] sm:$0xff] %vm9690, %v9683
  %9752 = vst.msk [vmem:[%s18 + $0x1e8] sm:$0xff] %vm9690, %v9685
  %9753 = vst.msk [vmem:[%s18 + $0x1f0] sm:$0xff] %vm9690, %v9687
  %9754 = vst.msk [vmem:[%s18 + $0x1f8] sm:$0xff] %vm9690, %v9689
  // Predicated region
  $region74: #{generator_forward.1} parent=0 // pred_check
    _
  $region75: #{generator_forward.1} parent=0 // pred_check_branch
    %9756 = sbr.rel (0) target = $region77
  $region76: #{generator_forward.1} parent=0 // pred_region
    _
  $region77: #{generator_forward.1} parent=0 // pred_fallthru
    _
  // Predicated region
  $region78: #{generator_forward.1} parent=0 // pred_check
    _
  $region79: #{generator_forward.1} parent=0 // pred_check_branch
    %9758 = sbr.rel (0) target = $region81
  $region80: #{generator_forward.1} parent=0 // pred_region
    _
  $region81: #{generator_forward.1} parent=0 // pred_fallthru
    _

</llo_original>
